<compile_context>
chip_gen: v6e
topology: v6e:2x2x1
jax: 0.10.0
libtpu: 0.0.40
codegen_flags: <defaults>
</compile_context>

<pallas_src>
import jax
import jax.numpy as jnp
from jax.experimental import pallas as pl
from jax.experimental.pallas import tpu as pltpu


# ---------------- fused kernel: 2x2/stride-2 avg-pool + flatten + linear ----------------
def reglog_fused_kernel(x_ref, w_ref, b_ref, o_ref):
    # x_ref: (BN, H, W, C)  f32 NHWC activations
    # w_ref: (Ho*Wo, C, L)  bf16 weight, spatial axis in (h, w) order
    # b_ref: (1, L)         f32 bias
    # o_ref: (BN, L)        f32 output
    ho = x_ref.shape[1] // 2          # AvgPool2d(2, stride=2, pad=0) output height
    wo = x_ref.shape[2] // 2          # ... and width (floor, e.g. 13 -> 6)

    acc = jnp.zeros(o_ref.shape, jnp.float32)
    for h in range(ho):               # statically unrolled: Ho*Wo = 36 positions
        for w in range(wo):
            # 2x2 average pool for this output position (f32).
            px = (x_ref[:, 2 * h, 2 * w, :]
                  + x_ref[:, 2 * h, 2 * w + 1, :]
                  + x_ref[:, 2 * h + 1, 2 * w, :]
                  + x_ref[:, 2 * h + 1, 2 * w + 1, :]) * 0.25
            # Accumulate this position's contribution to the linear layer on the MXU.
            acc = acc + jnp.dot(px.astype(jnp.bfloat16), w_ref[h * wo + w],
                                preferred_element_type=jnp.float32)

    o_ref[...] = (acc + b_ref[...]).astype(o_ref.dtype)


def prepare_reglog_params(w_torch, bias, C, Ho, Wo):
    """Hoisted parameter prep -- run ONCE at model-load time, not per forward.

    torch's Linear weight is (L, S) with S flattened in (c, h, w) order; the
    kernel consumes it as (h*Wo + w, c, l) in bf16.
    """
    L = w_torch.shape[0]
    w_k = jnp.transpose(w_torch.reshape(L, C, Ho, Wo), (2, 3, 1, 0))   # (Ho, Wo, C, L)
    w_k = w_k.reshape(Ho * Wo, C, L).astype(jnp.bfloat16)
    b_k = bias.reshape(1, L).astype(jnp.float32)
    return w_k, b_k


@jax.jit
def reglog_forward(x_nchw, w_k, b_k):
    """RegLog(conv=5) forward: AvgPool2d(2,2,0) + flatten + Linear."""
    N, C, H, W = x_nchw.shape
    Ho, Wo = H // 2, W // 2
    L = b_k.shape[-1]
    assert w_k.shape == (Ho * Wo, C, L)

    # NCHW -> NHWC so channels sit on the TPU lane axis (single fused XLA copy under jit).
    x_nhwc = jnp.transpose(x_nchw, (0, 2, 3, 1))

    BN = N if N <= 8 else 8           # batch tile; one grid step for the demo batch
    assert N % BN == 0

    return pl.pallas_call(
        reglog_fused_kernel,
        out_shape=jax.ShapeDtypeStruct((N, L), jnp.float32),
        grid=(N // BN,),
        in_specs=[
            pl.BlockSpec((BN, H, W, C), lambda n: (n, 0, 0, 0)),
            pl.BlockSpec((Ho * Wo, C, L), lambda n: (0, 0, 0)),   # resident across steps
            pl.BlockSpec((1, L), lambda n: (0, 0)),
        ],
        out_specs=pl.BlockSpec((BN, L), lambda n: (n, 0)),
        compiler_params=pltpu.CompilerParams(
            dimension_semantics=("parallel",)),
    )(x_nhwc, w_k, b_k)


if __name__ == "__main__":
    # conv=5 config of RegLog: AlexNet conv5 feature map (256, 13, 13) -> s = 256*6*6 = 9216
    N, C, H, W = 2, 256, 13, 13
    num_labels = 10

    key = jax.random.PRNGKey(0)
    k1, k2, k3 = jax.random.split(key, 3)
    x = jax.random.normal(k1, (N, C, H, W), jnp.float32)
    w_torch = jax.random.normal(k2, (num_labels, C * 6 * 6), jnp.float32) * 0.01
    b = jax.random.normal(k3, (num_labels,), jnp.float32) * 0.01

    # Weight permutation / casts hoisted out of the per-call path (done once).
    w_k, b_k = jax.block_until_ready(prepare_reglog_params(w_torch, b, C, 6, 6))

    out = jax.block_until_ready(reglog_forward(x, w_k, b_k))

    # pure-JAX reference mimicking torch (NCHW avg-pool, (c,h,w) flatten, Linear)
    pooled_ref = x[:, :, :12, :12].reshape(N, C, 6, 2, 6, 2).mean(axis=(3, 5))
    flat_ref = pooled_ref.reshape(N, C * 6 * 6)
    ref = jnp.dot(flat_ref, w_torch.T, precision=jax.lax.Precision.HIGHEST) + b

    assert out.shape == (N, num_labels)
    assert jnp.allclose(out, ref, atol=3e-2, rtol=3e-2), (
        f"max abs diff {jnp.max(jnp.abs(out - ref))}")

    print("KERNEL_OK")
</pallas_src>

<mosaic_0001>
module attributes {stable_mosaic.version = 11 : i64} {
  func.func @reglog_fused_kernel(%arg0: i32, %arg1: memref<2x13x13x256xf32, #tpu.memory_space<vmem>>, %arg2: memref<36x256x10xbf16, #tpu.memory_space<vmem>>, %arg3: memref<1x10xf32, #tpu.memory_space<vmem>>, %arg4: memref<2x10xf32, #tpu.memory_space<vmem>>) attributes {dimension_semantics = [#tpu.dimension_semantics<parallel>], iteration_bounds = array<i64: 1>, scalar_prefetch = 0 : i64, scratch_operands = 0 : i64, tpu.core_type = #tpu.core_type<tc>, window_params = [{transform_indices = @transform_0, window_bounds = array<i64: 2, 13, 13, 256>}, {pipeline_mode = #tpu.pipeline_mode<synchronous>, transform_indices = @transform_1, window_bounds = array<i64: 36, 256, 10>}, {pipeline_mode = #tpu.pipeline_mode<synchronous>, transform_indices = @transform_2, window_bounds = array<i64: 1, 10>}, {transform_indices = @transform_3, window_bounds = array<i64: 2, 10>}]} {
    %cst = arith.constant 0.000000e+00 : f32
    %0 = vector.broadcast %cst : f32 to vector<2x10xf32>
    %c0 = arith.constant 0 : index
    %c0_0 = arith.constant 0 : index
    %c0_1 = arith.constant 0 : index
    %c0_2 = arith.constant 0 : index
    %1 = vector.load %arg1[%c0, %c0_0, %c0_1, %c0_2] : memref<2x13x13x256xf32, #tpu.memory_space<vmem>>, vector<2x1x1x256xf32>
    %2 = vector.shape_cast %1 : vector<2x1x1x256xf32> to vector<2x256xf32>
    %c0_3 = arith.constant 0 : index
    %c0_4 = arith.constant 0 : index
    %c1 = arith.constant 1 : index
    %c0_5 = arith.constant 0 : index
    %3 = vector.load %arg1[%c0_3, %c0_4, %c1, %c0_5] : memref<2x13x13x256xf32, #tpu.memory_space<vmem>>, vector<2x1x1x256xf32>
    %4 = vector.shape_cast %3 : vector<2x1x1x256xf32> to vector<2x256xf32>
    %5 = arith.addf %2, %4 : vector<2x256xf32>
    %c0_6 = arith.constant 0 : index
    %c1_7 = arith.constant 1 : index
    %c0_8 = arith.constant 0 : index
    %c0_9 = arith.constant 0 : index
    %6 = vector.load %arg1[%c0_6, %c1_7, %c0_8, %c0_9] : memref<2x13x13x256xf32, #tpu.memory_space<vmem>>, vector<2x1x1x256xf32>
    %7 = vector.shape_cast %6 : vector<2x1x1x256xf32> to vector<2x256xf32>
    %8 = arith.addf %5, %7 : vector<2x256xf32>
    %c0_10 = arith.constant 0 : index
    %c1_11 = arith.constant 1 : index
    %c1_12 = arith.constant 1 : index
    %c0_13 = arith.constant 0 : index
    %9 = vector.load %arg1[%c0_10, %c1_11, %c1_12, %c0_13] : memref<2x13x13x256xf32, #tpu.memory_space<vmem>>, vector<2x1x1x256xf32>
    %10 = vector.shape_cast %9 : vector<2x1x1x256xf32> to vector<2x256xf32>
    %11 = arith.addf %8, %10 : vector<2x256xf32>
    %cst_14 = arith.constant 2.500000e-01 : f32
    %12 = vector.broadcast %cst_14 : f32 to vector<2x256xf32>
    %13 = arith.mulf %11, %12 : vector<2x256xf32>
    %14 = arith.truncf %13 : vector<2x256xf32> to vector<2x256xbf16>
    %c0_15 = arith.constant 0 : index
    %c0_16 = arith.constant 0 : index
    %c0_17 = arith.constant 0 : index
    %15 = vector.load %arg2[%c0_15, %c0_16, %c0_17] : memref<36x256x10xbf16, #tpu.memory_space<vmem>>, vector<1x256x10xbf16>
    %16 = vector.shape_cast %15 : vector<1x256x10xbf16> to vector<256x10xbf16>
    %cst_18 = arith.constant dense<0.000000e+00> : vector<2x10xf32>
    %17 = tpu.matmul %14, %16, %cst_18 {dimension_numbers = #tpu.dot_dimension_numbers<[1], [0], [0], [1], [0, 0, 1, 1], [], []>} : vector<2x256xbf16>, vector<256x10xbf16>, vector<2x10xf32> -> vector<2x10xf32>
    %18 = arith.addf %0, %17 : vector<2x10xf32>
    %c0_19 = arith.constant 0 : index
    %c0_20 = arith.constant 0 : index
    %c2 = arith.constant 2 : index
    %c0_21 = arith.constant 0 : index
    %19 = vector.load %arg1[%c0_19, %c0_20, %c2, %c0_21] : memref<2x13x13x256xf32, #tpu.memory_space<vmem>>, vector<2x1x1x256xf32>
    %20 = vector.shape_cast %19 : vector<2x1x1x256xf32> to vector<2x256xf32>
    %c0_22 = arith.constant 0 : index
    %c0_23 = arith.constant 0 : index
    %c3 = arith.constant 3 : index
    %c0_24 = arith.constant 0 : index
    %21 = vector.load %arg1[%c0_22, %c0_23, %c3, %c0_24] : memref<2x13x13x256xf32, #tpu.memory_space<vmem>>, vector<2x1x1x256xf32>
    %22 = vector.shape_cast %21 : vector<2x1x1x256xf32> to vector<2x256xf32>
    %23 = arith.addf %20, %22 : vector<2x256xf32>
    %c0_25 = arith.constant 0 : index
    %c1_26 = arith.constant 1 : index
    %c2_27 = arith.constant 2 : index
    %c0_28 = arith.constant 0 : index
    %24 = vector.load %arg1[%c0_25, %c1_26, %c2_27, %c0_28] : memref<2x13x13x256xf32, #tpu.memory_space<vmem>>, vector<2x1x1x256xf32>
    %25 = vector.shape_cast %24 : vector<2x1x1x256xf32> to vector<2x256xf32>
    %26 = arith.addf %23, %25 : vector<2x256xf32>
    %c0_29 = arith.constant 0 : index
    %c1_30 = arith.constant 1 : index
    %c3_31 = arith.constant 3 : index
    %c0_32 = arith.constant 0 : index
    %27 = vector.load %arg1[%c0_29, %c1_30, %c3_31, %c0_32] : memref<2x13x13x256xf32, #tpu.memory_space<vmem>>, vector<2x1x1x256xf32>
    %28 = vector.shape_cast %27 : vector<2x1x1x256xf32> to vector<2x256xf32>
    %29 = arith.addf %26, %28 : vector<2x256xf32>
    %cst_33 = arith.constant 2.500000e-01 : f32
    %30 = vector.broadcast %cst_33 : f32 to vector<2x256xf32>
    %31 = arith.mulf %29, %30 : vector<2x256xf32>
    %32 = arith.truncf %31 : vector<2x256xf32> to vector<2x256xbf16>
    %c1_34 = arith.constant 1 : index
    %c0_35 = arith.constant 0 : index
    %c0_36 = arith.constant 0 : index
    %33 = vector.load %arg2[%c1_34, %c0_35, %c0_36] : memref<36x256x10xbf16, #tpu.memory_space<vmem>>, vector<1x256x10xbf16>
    %34 = vector.shape_cast %33 : vector<1x256x10xbf16> to vector<256x10xbf16>
    %cst_37 = arith.constant dense<0.000000e+00> : vector<2x10xf32>
    %35 = tpu.matmul %32, %34, %cst_37 {dimension_numbers = #tpu.dot_dimension_numbers<[1], [0], [0], [1], [0, 0, 1, 1], [], []>} : vector<2x256xbf16>, vector<256x10xbf16>, vector<2x10xf32> -> vector<2x10xf32>
    %36 = arith.addf %18, %35 : vector<2x10xf32>
    %c0_38 = arith.constant 0 : index
    %c0_39 = arith.constant 0 : index
    %c4 = arith.constant 4 : index
    %c0_40 = arith.constant 0 : index
    %37 = vector.load %arg1[%c0_38, %c0_39, %c4, %c0_40] : memref<2x13x13x256xf32, #tpu.memory_space<vmem>>, vector<2x1x1x256xf32>
    %38 = vector.shape_cast %37 : vector<2x1x1x256xf32> to vector<2x256xf32>
    %c0_41 = arith.constant 0 : index
    %c0_42 = arith.constant 0 : index
    %c5 = arith.constant 5 : index
    %c0_43 = arith.constant 0 : index
    %39 = vector.load %arg1[%c0_41, %c0_42, %c5, %c0_43] : memref<2x13x13x256xf32, #tpu.memory_space<vmem>>, vector<2x1x1x256xf32>
    %40 = vector.shape_cast %39 : vector<2x1x1x256xf32> to vector<2x256xf32>
    %41 = arith.addf %38, %40 : vector<2x256xf32>
    %c0_44 = arith.constant 0 : index
    %c1_45 = arith.constant 1 : index
    %c4_46 = arith.constant 4 : index
    %c0_47 = arith.constant 0 : index
    %42 = vector.load %arg1[%c0_44, %c1_45, %c4_46, %c0_47] : memref<2x13x13x256xf32, #tpu.memory_space<vmem>>, vector<2x1x1x256xf32>
    %43 = vector.shape_cast %42 : vector<2x1x1x256xf32> to vector<2x256xf32>
    %44 = arith.addf %41, %43 : vector<2x256xf32>
    %c0_48 = arith.constant 0 : index
    %c1_49 = arith.constant 1 : index
    %c5_50 = arith.constant 5 : index
    %c0_51 = arith.constant 0 : index
    %45 = vector.load %arg1[%c0_48, %c1_49, %c5_50, %c0_51] : memref<2x13x13x256xf32, #tpu.memory_space<vmem>>, vector<2x1x1x256xf32>
    %46 = vector.shape_cast %45 : vector<2x1x1x256xf32> to vector<2x256xf32>
    %47 = arith.addf %44, %46 : vector<2x256xf32>
    %cst_52 = arith.constant 2.500000e-01 : f32
    %48 = vector.broadcast %cst_52 : f32 to vector<2x256xf32>
    %49 = arith.mulf %47, %48 : vector<2x256xf32>
    %50 = arith.truncf %49 : vector<2x256xf32> to vector<2x256xbf16>
    %c2_53 = arith.constant 2 : index
    %c0_54 = arith.constant 0 : index
    %c0_55 = arith.constant 0 : index
    %51 = vector.load %arg2[%c2_53, %c0_54, %c0_55] : memref<36x256x10xbf16, #tpu.memory_space<vmem>>, vector<1x256x10xbf16>
    %52 = vector.shape_cast %51 : vector<1x256x10xbf16> to vector<256x10xbf16>
    %cst_56 = arith.constant dense<0.000000e+00> : vector<2x10xf32>
    %53 = tpu.matmul %50, %52, %cst_56 {dimension_numbers = #tpu.dot_dimension_numbers<[1], [0], [0], [1], [0, 0, 1, 1], [], []>} : vector<2x256xbf16>, vector<256x10xbf16>, vector<2x10xf32> -> vector<2x10xf32>
    %54 = arith.addf %36, %53 : vector<2x10xf32>
    %c0_57 = arith.constant 0 : index
    %c0_58 = arith.constant 0 : index
    %c6 = arith.constant 6 : index
    %c0_59 = arith.constant 0 : index
    %55 = vector.load %arg1[%c0_57, %c0_58, %c6, %c0_59] : memref<2x13x13x256xf32, #tpu.memory_space<vmem>>, vector<2x1x1x256xf32>
    %56 = vector.shape_cast %55 : vector<2x1x1x256xf32> to vector<2x256xf32>
    %c0_60 = arith.constant 0 : index
    %c0_61 = arith.constant 0 : index
    %c7 = arith.constant 7 : index
    %c0_62 = arith.constant 0 : index
    %57 = vector.load %arg1[%c0_60, %c0_61, %c7, %c0_62] : memref<2x13x13x256xf32, #tpu.memory_space<vmem>>, vector<2x1x1x256xf32>
    %58 = vector.shape_cast %57 : vector<2x1x1x256xf32> to vector<2x256xf32>
    %59 = arith.addf %56, %58 : vector<2x256xf32>
    %c0_63 = arith.constant 0 : index
    %c1_64 = arith.constant 1 : index
    %c6_65 = arith.constant 6 : index
    %c0_66 = arith.constant 0 : index
    %60 = vector.load %arg1[%c0_63, %c1_64, %c6_65, %c0_66] : memref<2x13x13x256xf32, #tpu.memory_space<vmem>>, vector<2x1x1x256xf32>
    %61 = vector.shape_cast %60 : vector<2x1x1x256xf32> to vector<2x256xf32>
    %62 = arith.addf %59, %61 : vector<2x256xf32>
    %c0_67 = arith.constant 0 : index
    %c1_68 = arith.constant 1 : index
    %c7_69 = arith.constant 7 : index
    %c0_70 = arith.constant 0 : index
    %63 = vector.load %arg1[%c0_67, %c1_68, %c7_69, %c0_70] : memref<2x13x13x256xf32, #tpu.memory_space<vmem>>, vector<2x1x1x256xf32>
    %64 = vector.shape_cast %63 : vector<2x1x1x256xf32> to vector<2x256xf32>
    %65 = arith.addf %62, %64 : vector<2x256xf32>
    %cst_71 = arith.constant 2.500000e-01 : f32
    %66 = vector.broadcast %cst_71 : f32 to vector<2x256xf32>
    %67 = arith.mulf %65, %66 : vector<2x256xf32>
    %68 = arith.truncf %67 : vector<2x256xf32> to vector<2x256xbf16>
    %c3_72 = arith.constant 3 : index
    %c0_73 = arith.constant 0 : index
    %c0_74 = arith.constant 0 : index
    %69 = vector.load %arg2[%c3_72, %c0_73, %c0_74] : memref<36x256x10xbf16, #tpu.memory_space<vmem>>, vector<1x256x10xbf16>
    %70 = vector.shape_cast %69 : vector<1x256x10xbf16> to vector<256x10xbf16>
    %cst_75 = arith.constant dense<0.000000e+00> : vector<2x10xf32>
    %71 = tpu.matmul %68, %70, %cst_75 {dimension_numbers = #tpu.dot_dimension_numbers<[1], [0], [0], [1], [0, 0, 1, 1], [], []>} : vector<2x256xbf16>, vector<256x10xbf16>, vector<2x10xf32> -> vector<2x10xf32>
    %72 = arith.addf %54, %71 : vector<2x10xf32>
    %c0_76 = arith.constant 0 : index
    %c0_77 = arith.constant 0 : index
    %c8 = arith.constant 8 : index
    %c0_78 = arith.constant 0 : index
    %73 = vector.load %arg1[%c0_76, %c0_77, %c8, %c0_78] : memref<2x13x13x256xf32, #tpu.memory_space<vmem>>, vector<2x1x1x256xf32>
    %74 = vector.shape_cast %73 : vector<2x1x1x256xf32> to vector<2x256xf32>
    %c0_79 = arith.constant 0 : index
    %c0_80 = arith.constant 0 : index
    %c9 = arith.constant 9 : index
    %c0_81 = arith.constant 0 : index
    %75 = vector.load %arg1[%c0_79, %c0_80, %c9, %c0_81] : memref<2x13x13x256xf32, #tpu.memory_space<vmem>>, vector<2x1x1x256xf32>
    %76 = vector.shape_cast %75 : vector<2x1x1x256xf32> to vector<2x256xf32>
    %77 = arith.addf %74, %76 : vector<2x256xf32>
    %c0_82 = arith.constant 0 : index
    %c1_83 = arith.constant 1 : index
    %c8_84 = arith.constant 8 : index
    %c0_85 = arith.constant 0 : index
    %78 = vector.load %arg1[%c0_82, %c1_83, %c8_84, %c0_85] : memref<2x13x13x256xf32, #tpu.memory_space<vmem>>, vector<2x1x1x256xf32>
    %79 = vector.shape_cast %78 : vector<2x1x1x256xf32> to vector<2x256xf32>
    %80 = arith.addf %77, %79 : vector<2x256xf32>
    %c0_86 = arith.constant 0 : index
    %c1_87 = arith.constant 1 : index
    %c9_88 = arith.constant 9 : index
    %c0_89 = arith.constant 0 : index
    %81 = vector.load %arg1[%c0_86, %c1_87, %c9_88, %c0_89] : memref<2x13x13x256xf32, #tpu.memory_space<vmem>>, vector<2x1x1x256xf32>
    %82 = vector.shape_cast %81 : vector<2x1x1x256xf32> to vector<2x256xf32>
    %83 = arith.addf %80, %82 : vector<2x256xf32>
    %cst_90 = arith.constant 2.500000e-01 : f32
    %84 = vector.broadcast %cst_90 : f32 to vector<2x256xf32>
    %85 = arith.mulf %83, %84 : vector<2x256xf32>
    %86 = arith.truncf %85 : vector<2x256xf32> to vector<2x256xbf16>
    %c4_91 = arith.constant 4 : index
    %c0_92 = arith.constant 0 : index
    %c0_93 = arith.constant 0 : index
    %87 = vector.load %arg2[%c4_91, %c0_92, %c0_93] : memref<36x256x10xbf16, #tpu.memory_space<vmem>>, vector<1x256x10xbf16>
    %88 = vector.shape_cast %87 : vector<1x256x10xbf16> to vector<256x10xbf16>
    %cst_94 = arith.constant dense<0.000000e+00> : vector<2x10xf32>
    %89 = tpu.matmul %86, %88, %cst_94 {dimension_numbers = #tpu.dot_dimension_numbers<[1], [0], [0], [1], [0, 0, 1, 1], [], []>} : vector<2x256xbf16>, vector<256x10xbf16>, vector<2x10xf32> -> vector<2x10xf32>
    %90 = arith.addf %72, %89 : vector<2x10xf32>
    %c0_95 = arith.constant 0 : index
    %c0_96 = arith.constant 0 : index
    %c10 = arith.constant 10 : index
    %c0_97 = arith.constant 0 : index
    %91 = vector.load %arg1[%c0_95, %c0_96, %c10, %c0_97] : memref<2x13x13x256xf32, #tpu.memory_space<vmem>>, vector<2x1x1x256xf32>
    %92 = vector.shape_cast %91 : vector<2x1x1x256xf32> to vector<2x256xf32>
    %c0_98 = arith.constant 0 : index
    %c0_99 = arith.constant 0 : index
    %c11 = arith.constant 11 : index
    %c0_100 = arith.constant 0 : index
    %93 = vector.load %arg1[%c0_98, %c0_99, %c11, %c0_100] : memref<2x13x13x256xf32, #tpu.memory_space<vmem>>, vector<2x1x1x256xf32>
    %94 = vector.shape_cast %93 : vector<2x1x1x256xf32> to vector<2x256xf32>
    %95 = arith.addf %92, %94 : vector<2x256xf32>
    %c0_101 = arith.constant 0 : index
    %c1_102 = arith.constant 1 : index
    %c10_103 = arith.constant 10 : index
    %c0_104 = arith.constant 0 : index
    %96 = vector.load %arg1[%c0_101, %c1_102, %c10_103, %c0_104] : memref<2x13x13x256xf32, #tpu.memory_space<vmem>>, vector<2x1x1x256xf32>
    %97 = vector.shape_cast %96 : vector<2x1x1x256xf32> to vector<2x256xf32>
    %98 = arith.addf %95, %97 : vector<2x256xf32>
    %c0_105 = arith.constant 0 : index
    %c1_106 = arith.constant 1 : index
    %c11_107 = arith.constant 11 : index
    %c0_108 = arith.constant 0 : index
    %99 = vector.load %arg1[%c0_105, %c1_106, %c11_107, %c0_108] : memref<2x13x13x256xf32, #tpu.memory_space<vmem>>, vector<2x1x1x256xf32>
    %100 = vector.shape_cast %99 : vector<2x1x1x256xf32> to vector<2x256xf32>
    %101 = arith.addf %98, %100 : vector<2x256xf32>
    %cst_109 = arith.constant 2.500000e-01 : f32
    %102 = vector.broadcast %cst_109 : f32 to vector<2x256xf32>
    %103 = arith.mulf %101, %102 : vector<2x256xf32>
    %104 = arith.truncf %103 : vector<2x256xf32> to vector<2x256xbf16>
    %c5_110 = arith.constant 5 : index
    %c0_111 = arith.constant 0 : index
    %c0_112 = arith.constant 0 : index
    %105 = vector.load %arg2[%c5_110, %c0_111, %c0_112] : memref<36x256x10xbf16, #tpu.memory_space<vmem>>, vector<1x256x10xbf16>
    %106 = vector.shape_cast %105 : vector<1x256x10xbf16> to vector<256x10xbf16>
    %cst_113 = arith.constant dense<0.000000e+00> : vector<2x10xf32>
    %107 = tpu.matmul %104, %106, %cst_113 {dimension_numbers = #tpu.dot_dimension_numbers<[1], [0], [0], [1], [0, 0, 1, 1], [], []>} : vector<2x256xbf16>, vector<256x10xbf16>, vector<2x10xf32> -> vector<2x10xf32>
    %108 = arith.addf %90, %107 : vector<2x10xf32>
    %c0_114 = arith.constant 0 : index
    %c2_115 = arith.constant 2 : index
    %c0_116 = arith.constant 0 : index
    %c0_117 = arith.constant 0 : index
    %109 = vector.load %arg1[%c0_114, %c2_115, %c0_116, %c0_117] : memref<2x13x13x256xf32, #tpu.memory_space<vmem>>, vector<2x1x1x256xf32>
    %110 = vector.shape_cast %109 : vector<2x1x1x256xf32> to vector<2x256xf32>
    %c0_118 = arith.constant 0 : index
    %c2_119 = arith.constant 2 : index
    %c1_120 = arith.constant 1 : index
    %c0_121 = arith.constant 0 : index
    %111 = vector.load %arg1[%c0_118, %c2_119, %c1_120, %c0_121] : memref<2x13x13x256xf32, #tpu.memory_space<vmem>>, vector<2x1x1x256xf32>
    %112 = vector.shape_cast %111 : vector<2x1x1x256xf32> to vector<2x256xf32>
    %113 = arith.addf %110, %112 : vector<2x256xf32>
    %c0_122 = arith.constant 0 : index
    %c3_123 = arith.constant 3 : index
    %c0_124 = arith.constant 0 : index
    %c0_125 = arith.constant 0 : index
    %114 = vector.load %arg1[%c0_122, %c3_123, %c0_124, %c0_125] : memref<2x13x13x256xf32, #tpu.memory_space<vmem>>, vector<2x1x1x256xf32>
    %115 = vector.shape_cast %114 : vector<2x1x1x256xf32> to vector<2x256xf32>
    %116 = arith.addf %113, %115 : vector<2x256xf32>
    %c0_126 = arith.constant 0 : index
    %c3_127 = arith.constant 3 : index
    %c1_128 = arith.constant 1 : index
    %c0_129 = arith.constant 0 : index
    %117 = vector.load %arg1[%c0_126, %c3_127, %c1_128, %c0_129] : memref<2x13x13x256xf32, #tpu.memory_space<vmem>>, vector<2x1x1x256xf32>
    %118 = vector.shape_cast %117 : vector<2x1x1x256xf32> to vector<2x256xf32>
    %119 = arith.addf %116, %118 : vector<2x256xf32>
    %cst_130 = arith.constant 2.500000e-01 : f32
    %120 = vector.broadcast %cst_130 : f32 to vector<2x256xf32>
    %121 = arith.mulf %119, %120 : vector<2x256xf32>
    %122 = arith.truncf %121 : vector<2x256xf32> to vector<2x256xbf16>
    %c6_131 = arith.constant 6 : index
    %c0_132 = arith.constant 0 : index
    %c0_133 = arith.constant 0 : index
    %123 = vector.load %arg2[%c6_131, %c0_132, %c0_133] : memref<36x256x10xbf16, #tpu.memory_space<vmem>>, vector<1x256x10xbf16>
    %124 = vector.shape_cast %123 : vector<1x256x10xbf16> to vector<256x10xbf16>
    %cst_134 = arith.constant dense<0.000000e+00> : vector<2x10xf32>
    %125 = tpu.matmul %122, %124, %cst_134 {dimension_numbers = #tpu.dot_dimension_numbers<[1], [0], [0], [1], [0, 0, 1, 1], [], []>} : vector<2x256xbf16>, vector<256x10xbf16>, vector<2x10xf32> -> vector<2x10xf32>
    %126 = arith.addf %108, %125 : vector<2x10xf32>
    %c0_135 = arith.constant 0 : index
    %c2_136 = arith.constant 2 : index
    %c2_137 = arith.constant 2 : index
    %c0_138 = arith.constant 0 : index
    %127 = vector.load %arg1[%c0_135, %c2_136, %c2_137, %c0_138] : memref<2x13x13x256xf32, #tpu.memory_space<vmem>>, vector<2x1x1x256xf32>
    %128 = vector.shape_cast %127 : vector<2x1x1x256xf32> to vector<2x256xf32>
    %c0_139 = arith.constant 0 : index
    %c2_140 = arith.constant 2 : index
    %c3_141 = arith.constant 3 : index
    %c0_142 = arith.constant 0 : index
    %129 = vector.load %arg1[%c0_139, %c2_140, %c3_141, %c0_142] : memref<2x13x13x256xf32, #tpu.memory_space<vmem>>, vector<2x1x1x256xf32>
    %130 = vector.shape_cast %129 : vector<2x1x1x256xf32> to vector<2x256xf32>
    %131 = arith.addf %128, %130 : vector<2x256xf32>
    %c0_143 = arith.constant 0 : index
    %c3_144 = arith.constant 3 : index
    %c2_145 = arith.constant 2 : index
    %c0_146 = arith.constant 0 : index
    %132 = vector.load %arg1[%c0_143, %c3_144, %c2_145, %c0_146] : memref<2x13x13x256xf32, #tpu.memory_space<vmem>>, vector<2x1x1x256xf32>
    %133 = vector.shape_cast %132 : vector<2x1x1x256xf32> to vector<2x256xf32>
    %134 = arith.addf %131, %133 : vector<2x256xf32>
    %c0_147 = arith.constant 0 : index
    %c3_148 = arith.constant 3 : index
    %c3_149 = arith.constant 3 : index
    %c0_150 = arith.constant 0 : index
    %135 = vector.load %arg1[%c0_147, %c3_148, %c3_149, %c0_150] : memref<2x13x13x256xf32, #tpu.memory_space<vmem>>, vector<2x1x1x256xf32>
    %136 = vector.shape_cast %135 : vector<2x1x1x256xf32> to vector<2x256xf32>
    %137 = arith.addf %134, %136 : vector<2x256xf32>
    %cst_151 = arith.constant 2.500000e-01 : f32
    %138 = vector.broadcast %cst_151 : f32 to vector<2x256xf32>
    %139 = arith.mulf %137, %138 : vector<2x256xf32>
    %140 = arith.truncf %139 : vector<2x256xf32> to vector<2x256xbf16>
    %c7_152 = arith.constant 7 : index
    %c0_153 = arith.constant 0 : index
    %c0_154 = arith.constant 0 : index
    %141 = vector.load %arg2[%c7_152, %c0_153, %c0_154] : memref<36x256x10xbf16, #tpu.memory_space<vmem>>, vector<1x256x10xbf16>
    %142 = vector.shape_cast %141 : vector<1x256x10xbf16> to vector<256x10xbf16>
    %cst_155 = arith.constant dense<0.000000e+00> : vector<2x10xf32>
    %143 = tpu.matmul %140, %142, %cst_155 {dimension_numbers = #tpu.dot_dimension_numbers<[1], [0], [0], [1], [0, 0, 1, 1], [], []>} : vector<2x256xbf16>, vector<256x10xbf16>, vector<2x10xf32> -> vector<2x10xf32>
    %144 = arith.addf %126, %143 : vector<2x10xf32>
    %c0_156 = arith.constant 0 : index
    %c2_157 = arith.constant 2 : index
    %c4_158 = arith.constant 4 : index
    %c0_159 = arith.constant 0 : index
    %145 = vector.load %arg1[%c0_156, %c2_157, %c4_158, %c0_159] : memref<2x13x13x256xf32, #tpu.memory_space<vmem>>, vector<2x1x1x256xf32>
    %146 = vector.shape_cast %145 : vector<2x1x1x256xf32> to vector<2x256xf32>
    %c0_160 = arith.constant 0 : index
    %c2_161 = arith.constant 2 : index
    %c5_162 = arith.constant 5 : index
    %c0_163 = arith.constant 0 : index
    %147 = vector.load %arg1[%c0_160, %c2_161, %c5_162, %c0_163] : memref<2x13x13x256xf32, #tpu.memory_space<vmem>>, vector<2x1x1x256xf32>
    %148 = vector.shape_cast %147 : vector<2x1x1x256xf32> to vector<2x256xf32>
    %149 = arith.addf %146, %148 : vector<2x256xf32>
    %c0_164 = arith.constant 0 : index
    %c3_165 = arith.constant 3 : index
    %c4_166 = arith.constant 4 : index
    %c0_167 = arith.constant 0 : index
    %150 = vector.load %arg1[%c0_164, %c3_165, %c4_166, %c0_167] : memref<2x13x13x256xf32, #tpu.memory_space<vmem>>, vector<2x1x1x256xf32>
    %151 = vector.shape_cast %150 : vector<2x1x1x256xf32> to vector<2x256xf32>
    %152 = arith.addf %149, %151 : vector<2x256xf32>
    %c0_168 = arith.constant 0 : index
    %c3_169 = arith.constant 3 : index
    %c5_170 = arith.constant 5 : index
    %c0_171 = arith.constant 0 : index
    %153 = vector.load %arg1[%c0_168, %c3_169, %c5_170, %c0_171] : memref<2x13x13x256xf32, #tpu.memory_space<vmem>>, vector<2x1x1x256xf32>
    %154 = vector.shape_cast %153 : vector<2x1x1x256xf32> to vector<2x256xf32>
    %155 = arith.addf %152, %154 : vector<2x256xf32>
    %cst_172 = arith.constant 2.500000e-01 : f32
    %156 = vector.broadcast %cst_172 : f32 to vector<2x256xf32>
    %157 = arith.mulf %155, %156 : vector<2x256xf32>
    %158 = arith.truncf %157 : vector<2x256xf32> to vector<2x256xbf16>
    %c8_173 = arith.constant 8 : index
    %c0_174 = arith.constant 0 : index
    %c0_175 = arith.constant 0 : index
    %159 = vector.load %arg2[%c8_173, %c0_174, %c0_175] : memref<36x256x10xbf16, #tpu.memory_space<vmem>>, vector<1x256x10xbf16>
    %160 = vector.shape_cast %159 : vector<1x256x10xbf16> to vector<256x10xbf16>
    %cst_176 = arith.constant dense<0.000000e+00> : vector<2x10xf32>
    %161 = tpu.matmul %158, %160, %cst_176 {dimension_numbers = #tpu.dot_dimension_numbers<[1], [0], [0], [1], [0, 0, 1, 1], [], []>} : vector<2x256xbf16>, vector<256x10xbf16>, vector<2x10xf32> -> vector<2x10xf32>
    %162 = arith.addf %144, %161 : vector<2x10xf32>
    %c0_177 = arith.constant 0 : index
    %c2_178 = arith.constant 2 : index
    %c6_179 = arith.constant 6 : index
    %c0_180 = arith.constant 0 : index
    %163 = vector.load %arg1[%c0_177, %c2_178, %c6_179, %c0_180] : memref<2x13x13x256xf32, #tpu.memory_space<vmem>>, vector<2x1x1x256xf32>
    %164 = vector.shape_cast %163 : vector<2x1x1x256xf32> to vector<2x256xf32>
    %c0_181 = arith.constant 0 : index
    %c2_182 = arith.constant 2 : index
    %c7_183 = arith.constant 7 : index
    %c0_184 = arith.constant 0 : index
    %165 = vector.load %arg1[%c0_181, %c2_182, %c7_183, %c0_184] : memref<2x13x13x256xf32, #tpu.memory_space<vmem>>, vector<2x1x1x256xf32>
    %166 = vector.shape_cast %165 : vector<2x1x1x256xf32> to vector<2x256xf32>
    %167 = arith.addf %164, %166 : vector<2x256xf32>
    %c0_185 = arith.constant 0 : index
    %c3_186 = arith.constant 3 : index
    %c6_187 = arith.constant 6 : index
    %c0_188 = arith.constant 0 : index
    %168 = vector.load %arg1[%c0_185, %c3_186, %c6_187, %c0_188] : memref<2x13x13x256xf32, #tpu.memory_space<vmem>>, vector<2x1x1x256xf32>
    %169 = vector.shape_cast %168 : vector<2x1x1x256xf32> to vector<2x256xf32>
    %170 = arith.addf %167, %169 : vector<2x256xf32>
    %c0_189 = arith.constant 0 : index
    %c3_190 = arith.constant 3 : index
    %c7_191 = arith.constant 7 : index
    %c0_192 = arith.constant 0 : index
    %171 = vector.load %arg1[%c0_189, %c3_190, %c7_191, %c0_192] : memref<2x13x13x256xf32, #tpu.memory_space<vmem>>, vector<2x1x1x256xf32>
    %172 = vector.shape_cast %171 : vector<2x1x1x256xf32> to vector<2x256xf32>
    %173 = arith.addf %170, %172 : vector<2x256xf32>
    %cst_193 = arith.constant 2.500000e-01 : f32
    %174 = vector.broadcast %cst_193 : f32 to vector<2x256xf32>
    %175 = arith.mulf %173, %174 : vector<2x256xf32>
    %176 = arith.truncf %175 : vector<2x256xf32> to vector<2x256xbf16>
    %c9_194 = arith.constant 9 : index
    %c0_195 = arith.constant 0 : index
    %c0_196 = arith.constant 0 : index
    %177 = vector.load %arg2[%c9_194, %c0_195, %c0_196] : memref<36x256x10xbf16, #tpu.memory_space<vmem>>, vector<1x256x10xbf16>
    %178 = vector.shape_cast %177 : vector<1x256x10xbf16> to vector<256x10xbf16>
    %cst_197 = arith.constant dense<0.000000e+00> : vector<2x10xf32>
    %179 = tpu.matmul %176, %178, %cst_197 {dimension_numbers = #tpu.dot_dimension_numbers<[1], [0], [0], [1], [0, 0, 1, 1], [], []>} : vector<2x256xbf16>, vector<256x10xbf16>, vector<2x10xf32> -> vector<2x10xf32>
    %180 = arith.addf %162, %179 : vector<2x10xf32>
    %c0_198 = arith.constant 0 : index
    %c2_199 = arith.constant 2 : index
    %c8_200 = arith.constant 8 : index
    %c0_201 = arith.constant 0 : index
    %181 = vector.load %arg1[%c0_198, %c2_199, %c8_200, %c0_201] : memref<2x13x13x256xf32, #tpu.memory_space<vmem>>, vector<2x1x1x256xf32>
    %182 = vector.shape_cast %181 : vector<2x1x1x256xf32> to vector<2x256xf32>
    %c0_202 = arith.constant 0 : index
    %c2_203 = arith.constant 2 : index
    %c9_204 = arith.constant 9 : index
    %c0_205 = arith.constant 0 : index
    %183 = vector.load %arg1[%c0_202, %c2_203, %c9_204, %c0_205] : memref<2x13x13x256xf32, #tpu.memory_space<vmem>>, vector<2x1x1x256xf32>
    %184 = vector.shape_cast %183 : vector<2x1x1x256xf32> to vector<2x256xf32>
    %185 = arith.addf %182, %184 : vector<2x256xf32>
    %c0_206 = arith.constant 0 : index
    %c3_207 = arith.constant 3 : index
    %c8_208 = arith.constant 8 : index
    %c0_209 = arith.constant 0 : index
    %186 = vector.load %arg1[%c0_206, %c3_207, %c8_208, %c0_209] : memref<2x13x13x256xf32, #tpu.memory_space<vmem>>, vector<2x1x1x256xf32>
    %187 = vector.shape_cast %186 : vector<2x1x1x256xf32> to vector<2x256xf32>
    %188 = arith.addf %185, %187 : vector<2x256xf32>
    %c0_210 = arith.constant 0 : index
    %c3_211 = arith.constant 3 : index
    %c9_212 = arith.constant 9 : index
    %c0_213 = arith.constant 0 : index
    %189 = vector.load %arg1[%c0_210, %c3_211, %c9_212, %c0_213] : memref<2x13x13x256xf32, #tpu.memory_space<vmem>>, vector<2x1x1x256xf32>
    %190 = vector.shape_cast %189 : vector<2x1x1x256xf32> to vector<2x256xf32>
    %191 = arith.addf %188, %190 : vector<2x256xf32>
    %cst_214 = arith.constant 2.500000e-01 : f32
    %192 = vector.broadcast %cst_214 : f32 to vector<2x256xf32>
    %193 = arith.mulf %191, %192 : vector<2x256xf32>
    %194 = arith.truncf %193 : vector<2x256xf32> to vector<2x256xbf16>
    %c10_215 = arith.constant 10 : index
    %c0_216 = arith.constant 0 : index
    %c0_217 = arith.constant 0 : index
    %195 = vector.load %arg2[%c10_215, %c0_216, %c0_217] : memref<36x256x10xbf16, #tpu.memory_space<vmem>>, vector<1x256x10xbf16>
    %196 = vector.shape_cast %195 : vector<1x256x10xbf16> to vector<256x10xbf16>
    %cst_218 = arith.constant dense<0.000000e+00> : vector<2x10xf32>
    %197 = tpu.matmul %194, %196, %cst_218 {dimension_numbers = #tpu.dot_dimension_numbers<[1], [0], [0], [1], [0, 0, 1, 1], [], []>} : vector<2x256xbf16>, vector<256x10xbf16>, vector<2x10xf32> -> vector<2x10xf32>
    %198 = arith.addf %180, %197 : vector<2x10xf32>
    %c0_219 = arith.constant 0 : index
    %c2_220 = arith.constant 2 : index
    %c10_221 = arith.constant 10 : index
    %c0_222 = arith.constant 0 : index
    %199 = vector.load %arg1[%c0_219, %c2_220, %c10_221, %c0_222] : memref<2x13x13x256xf32, #tpu.memory_space<vmem>>, vector<2x1x1x256xf32>
    %200 = vector.shape_cast %199 : vector<2x1x1x256xf32> to vector<2x256xf32>
    %c0_223 = arith.constant 0 : index
    %c2_224 = arith.constant 2 : index
    %c11_225 = arith.constant 11 : index
    %c0_226 = arith.constant 0 : index
    %201 = vector.load %arg1[%c0_223, %c2_224, %c11_225, %c0_226] : memref<2x13x13x256xf32, #tpu.memory_space<vmem>>, vector<2x1x1x256xf32>
    %202 = vector.shape_cast %201 : vector<2x1x1x256xf32> to vector<2x256xf32>
    %203 = arith.addf %200, %202 : vector<2x256xf32>
    %c0_227 = arith.constant 0 : index
    %c3_228 = arith.constant 3 : index
    %c10_229 = arith.constant 10 : index
    %c0_230 = arith.constant 0 : index
    %204 = vector.load %arg1[%c0_227, %c3_228, %c10_229, %c0_230] : memref<2x13x13x256xf32, #tpu.memory_space<vmem>>, vector<2x1x1x256xf32>
    %205 = vector.shape_cast %204 : vector<2x1x1x256xf32> to vector<2x256xf32>
    %206 = arith.addf %203, %205 : vector<2x256xf32>
    %c0_231 = arith.constant 0 : index
    %c3_232 = arith.constant 3 : index
    %c11_233 = arith.constant 11 : index
    %c0_234 = arith.constant 0 : index
    %207 = vector.load %arg1[%c0_231, %c3_232, %c11_233, %c0_234] : memref<2x13x13x256xf32, #tpu.memory_space<vmem>>, vector<2x1x1x256xf32>
    %208 = vector.shape_cast %207 : vector<2x1x1x256xf32> to vector<2x256xf32>
    %209 = arith.addf %206, %208 : vector<2x256xf32>
    %cst_235 = arith.constant 2.500000e-01 : f32
    %210 = vector.broadcast %cst_235 : f32 to vector<2x256xf32>
    %211 = arith.mulf %209, %210 : vector<2x256xf32>
    %212 = arith.truncf %211 : vector<2x256xf32> to vector<2x256xbf16>
    %c11_236 = arith.constant 11 : index
    %c0_237 = arith.constant 0 : index
    %c0_238 = arith.constant 0 : index
    %213 = vector.load %arg2[%c11_236, %c0_237, %c0_238] : memref<36x256x10xbf16, #tpu.memory_space<vmem>>, vector<1x256x10xbf16>
    %214 = vector.shape_cast %213 : vector<1x256x10xbf16> to vector<256x10xbf16>
    %cst_239 = arith.constant dense<0.000000e+00> : vector<2x10xf32>
    %215 = tpu.matmul %212, %214, %cst_239 {dimension_numbers = #tpu.dot_dimension_numbers<[1], [0], [0], [1], [0, 0, 1, 1], [], []>} : vector<2x256xbf16>, vector<256x10xbf16>, vector<2x10xf32> -> vector<2x10xf32>
    %216 = arith.addf %198, %215 : vector<2x10xf32>
    %c0_240 = arith.constant 0 : index
    %c4_241 = arith.constant 4 : index
    %c0_242 = arith.constant 0 : index
    %c0_243 = arith.constant 0 : index
    %217 = vector.load %arg1[%c0_240, %c4_241, %c0_242, %c0_243] : memref<2x13x13x256xf32, #tpu.memory_space<vmem>>, vector<2x1x1x256xf32>
    %218 = vector.shape_cast %217 : vector<2x1x1x256xf32> to vector<2x256xf32>
    %c0_244 = arith.constant 0 : index
    %c4_245 = arith.constant 4 : index
    %c1_246 = arith.constant 1 : index
    %c0_247 = arith.constant 0 : index
    %219 = vector.load %arg1[%c0_244, %c4_245, %c1_246, %c0_247] : memref<2x13x13x256xf32, #tpu.memory_space<vmem>>, vector<2x1x1x256xf32>
    %220 = vector.shape_cast %219 : vector<2x1x1x256xf32> to vector<2x256xf32>
    %221 = arith.addf %218, %220 : vector<2x256xf32>
    %c0_248 = arith.constant 0 : index
    %c5_249 = arith.constant 5 : index
    %c0_250 = arith.constant 0 : index
    %c0_251 = arith.constant 0 : index
    %222 = vector.load %arg1[%c0_248, %c5_249, %c0_250, %c0_251] : memref<2x13x13x256xf32, #tpu.memory_space<vmem>>, vector<2x1x1x256xf32>
    %223 = vector.shape_cast %222 : vector<2x1x1x256xf32> to vector<2x256xf32>
    %224 = arith.addf %221, %223 : vector<2x256xf32>
    %c0_252 = arith.constant 0 : index
    %c5_253 = arith.constant 5 : index
    %c1_254 = arith.constant 1 : index
    %c0_255 = arith.constant 0 : index
    %225 = vector.load %arg1[%c0_252, %c5_253, %c1_254, %c0_255] : memref<2x13x13x256xf32, #tpu.memory_space<vmem>>, vector<2x1x1x256xf32>
    %226 = vector.shape_cast %225 : vector<2x1x1x256xf32> to vector<2x256xf32>
    %227 = arith.addf %224, %226 : vector<2x256xf32>
    %cst_256 = arith.constant 2.500000e-01 : f32
    %228 = vector.broadcast %cst_256 : f32 to vector<2x256xf32>
    %229 = arith.mulf %227, %228 : vector<2x256xf32>
    %230 = arith.truncf %229 : vector<2x256xf32> to vector<2x256xbf16>
    %c12 = arith.constant 12 : index
    %c0_257 = arith.constant 0 : index
    %c0_258 = arith.constant 0 : index
    %231 = vector.load %arg2[%c12, %c0_257, %c0_258] : memref<36x256x10xbf16, #tpu.memory_space<vmem>>, vector<1x256x10xbf16>
    %232 = vector.shape_cast %231 : vector<1x256x10xbf16> to vector<256x10xbf16>
    %cst_259 = arith.constant dense<0.000000e+00> : vector<2x10xf32>
    %233 = tpu.matmul %230, %232, %cst_259 {dimension_numbers = #tpu.dot_dimension_numbers<[1], [0], [0], [1], [0, 0, 1, 1], [], []>} : vector<2x256xbf16>, vector<256x10xbf16>, vector<2x10xf32> -> vector<2x10xf32>
    %234 = arith.addf %216, %233 : vector<2x10xf32>
    %c0_260 = arith.constant 0 : index
    %c4_261 = arith.constant 4 : index
    %c2_262 = arith.constant 2 : index
    %c0_263 = arith.constant 0 : index
    %235 = vector.load %arg1[%c0_260, %c4_261, %c2_262, %c0_263] : memref<2x13x13x256xf32, #tpu.memory_space<vmem>>, vector<2x1x1x256xf32>
    %236 = vector.shape_cast %235 : vector<2x1x1x256xf32> to vector<2x256xf32>
    %c0_264 = arith.constant 0 : index
    %c4_265 = arith.constant 4 : index
    %c3_266 = arith.constant 3 : index
    %c0_267 = arith.constant 0 : index
    %237 = vector.load %arg1[%c0_264, %c4_265, %c3_266, %c0_267] : memref<2x13x13x256xf32, #tpu.memory_space<vmem>>, vector<2x1x1x256xf32>
    %238 = vector.shape_cast %237 : vector<2x1x1x256xf32> to vector<2x256xf32>
    %239 = arith.addf %236, %238 : vector<2x256xf32>
    %c0_268 = arith.constant 0 : index
    %c5_269 = arith.constant 5 : index
    %c2_270 = arith.constant 2 : index
    %c0_271 = arith.constant 0 : index
    %240 = vector.load %arg1[%c0_268, %c5_269, %c2_270, %c0_271] : memref<2x13x13x256xf32, #tpu.memory_space<vmem>>, vector<2x1x1x256xf32>
    %241 = vector.shape_cast %240 : vector<2x1x1x256xf32> to vector<2x256xf32>
    %242 = arith.addf %239, %241 : vector<2x256xf32>
    %c0_272 = arith.constant 0 : index
    %c5_273 = arith.constant 5 : index
    %c3_274 = arith.constant 3 : index
    %c0_275 = arith.constant 0 : index
    %243 = vector.load %arg1[%c0_272, %c5_273, %c3_274, %c0_275] : memref<2x13x13x256xf32, #tpu.memory_space<vmem>>, vector<2x1x1x256xf32>
    %244 = vector.shape_cast %243 : vector<2x1x1x256xf32> to vector<2x256xf32>
    %245 = arith.addf %242, %244 : vector<2x256xf32>
    %cst_276 = arith.constant 2.500000e-01 : f32
    %246 = vector.broadcast %cst_276 : f32 to vector<2x256xf32>
    %247 = arith.mulf %245, %246 : vector<2x256xf32>
    %248 = arith.truncf %247 : vector<2x256xf32> to vector<2x256xbf16>
    %c13 = arith.constant 13 : index
    %c0_277 = arith.constant 0 : index
    %c0_278 = arith.constant 0 : index
    %249 = vector.load %arg2[%c13, %c0_277, %c0_278] : memref<36x256x10xbf16, #tpu.memory_space<vmem>>, vector<1x256x10xbf16>
    %250 = vector.shape_cast %249 : vector<1x256x10xbf16> to vector<256x10xbf16>
    %cst_279 = arith.constant dense<0.000000e+00> : vector<2x10xf32>
    %251 = tpu.matmul %248, %250, %cst_279 {dimension_numbers = #tpu.dot_dimension_numbers<[1], [0], [0], [1], [0, 0, 1, 1], [], []>} : vector<2x256xbf16>, vector<256x10xbf16>, vector<2x10xf32> -> vector<2x10xf32>
    %252 = arith.addf %234, %251 : vector<2x10xf32>
    %c0_280 = arith.constant 0 : index
    %c4_281 = arith.constant 4 : index
    %c4_282 = arith.constant 4 : index
    %c0_283 = arith.constant 0 : index
    %253 = vector.load %arg1[%c0_280, %c4_281, %c4_282, %c0_283] : memref<2x13x13x256xf32, #tpu.memory_space<vmem>>, vector<2x1x1x256xf32>
    %254 = vector.shape_cast %253 : vector<2x1x1x256xf32> to vector<2x256xf32>
    %c0_284 = arith.constant 0 : index
    %c4_285 = arith.constant 4 : index
    %c5_286 = arith.constant 5 : index
    %c0_287 = arith.constant 0 : index
    %255 = vector.load %arg1[%c0_284, %c4_285, %c5_286, %c0_287] : memref<2x13x13x256xf32, #tpu.memory_space<vmem>>, vector<2x1x1x256xf32>
    %256 = vector.shape_cast %255 : vector<2x1x1x256xf32> to vector<2x256xf32>
    %257 = arith.addf %254, %256 : vector<2x256xf32>
    %c0_288 = arith.constant 0 : index
    %c5_289 = arith.constant 5 : index
    %c4_290 = arith.constant 4 : index
    %c0_291 = arith.constant 0 : index
    %258 = vector.load %arg1[%c0_288, %c5_289, %c4_290, %c0_291] : memref<2x13x13x256xf32, #tpu.memory_space<vmem>>, vector<2x1x1x256xf32>
    %259 = vector.shape_cast %258 : vector<2x1x1x256xf32> to vector<2x256xf32>
    %260 = arith.addf %257, %259 : vector<2x256xf32>
    %c0_292 = arith.constant 0 : index
    %c5_293 = arith.constant 5 : index
    %c5_294 = arith.constant 5 : index
    %c0_295 = arith.constant 0 : index
    %261 = vector.load %arg1[%c0_292, %c5_293, %c5_294, %c0_295] : memref<2x13x13x256xf32, #tpu.memory_space<vmem>>, vector<2x1x1x256xf32>
    %262 = vector.shape_cast %261 : vector<2x1x1x256xf32> to vector<2x256xf32>
    %263 = arith.addf %260, %262 : vector<2x256xf32>
    %cst_296 = arith.constant 2.500000e-01 : f32
    %264 = vector.broadcast %cst_296 : f32 to vector<2x256xf32>
    %265 = arith.mulf %263, %264 : vector<2x256xf32>
    %266 = arith.truncf %265 : vector<2x256xf32> to vector<2x256xbf16>
    %c14 = arith.constant 14 : index
    %c0_297 = arith.constant 0 : index
    %c0_298 = arith.constant 0 : index
    %267 = vector.load %arg2[%c14, %c0_297, %c0_298] : memref<36x256x10xbf16, #tpu.memory_space<vmem>>, vector<1x256x10xbf16>
    %268 = vector.shape_cast %267 : vector<1x256x10xbf16> to vector<256x10xbf16>
    %cst_299 = arith.constant dense<0.000000e+00> : vector<2x10xf32>
    %269 = tpu.matmul %266, %268, %cst_299 {dimension_numbers = #tpu.dot_dimension_numbers<[1], [0], [0], [1], [0, 0, 1, 1], [], []>} : vector<2x256xbf16>, vector<256x10xbf16>, vector<2x10xf32> -> vector<2x10xf32>
    %270 = arith.addf %252, %269 : vector<2x10xf32>
    %c0_300 = arith.constant 0 : index
    %c4_301 = arith.constant 4 : index
    %c6_302 = arith.constant 6 : index
    %c0_303 = arith.constant 0 : index
    %271 = vector.load %arg1[%c0_300, %c4_301, %c6_302, %c0_303] : memref<2x13x13x256xf32, #tpu.memory_space<vmem>>, vector<2x1x1x256xf32>
    %272 = vector.shape_cast %271 : vector<2x1x1x256xf32> to vector<2x256xf32>
    %c0_304 = arith.constant 0 : index
    %c4_305 = arith.constant 4 : index
    %c7_306 = arith.constant 7 : index
    %c0_307 = arith.constant 0 : index
    %273 = vector.load %arg1[%c0_304, %c4_305, %c7_306, %c0_307] : memref<2x13x13x256xf32, #tpu.memory_space<vmem>>, vector<2x1x1x256xf32>
    %274 = vector.shape_cast %273 : vector<2x1x1x256xf32> to vector<2x256xf32>
    %275 = arith.addf %272, %274 : vector<2x256xf32>
    %c0_308 = arith.constant 0 : index
    %c5_309 = arith.constant 5 : index
    %c6_310 = arith.constant 6 : index
    %c0_311 = arith.constant 0 : index
    %276 = vector.load %arg1[%c0_308, %c5_309, %c6_310, %c0_311] : memref<2x13x13x256xf32, #tpu.memory_space<vmem>>, vector<2x1x1x256xf32>
    %277 = vector.shape_cast %276 : vector<2x1x1x256xf32> to vector<2x256xf32>
    %278 = arith.addf %275, %277 : vector<2x256xf32>
    %c0_312 = arith.constant 0 : index
    %c5_313 = arith.constant 5 : index
    %c7_314 = arith.constant 7 : index
    %c0_315 = arith.constant 0 : index
    %279 = vector.load %arg1[%c0_312, %c5_313, %c7_314, %c0_315] : memref<2x13x13x256xf32, #tpu.memory_space<vmem>>, vector<2x1x1x256xf32>
    %280 = vector.shape_cast %279 : vector<2x1x1x256xf32> to vector<2x256xf32>
    %281 = arith.addf %278, %280 : vector<2x256xf32>
    %cst_316 = arith.constant 2.500000e-01 : f32
    %282 = vector.broadcast %cst_316 : f32 to vector<2x256xf32>
    %283 = arith.mulf %281, %282 : vector<2x256xf32>
    %284 = arith.truncf %283 : vector<2x256xf32> to vector<2x256xbf16>
    %c15 = arith.constant 15 : index
    %c0_317 = arith.constant 0 : index
    %c0_318 = arith.constant 0 : index
    %285 = vector.load %arg2[%c15, %c0_317, %c0_318] : memref<36x256x10xbf16, #tpu.memory_space<vmem>>, vector<1x256x10xbf16>
    %286 = vector.shape_cast %285 : vector<1x256x10xbf16> to vector<256x10xbf16>
    %cst_319 = arith.constant dense<0.000000e+00> : vector<2x10xf32>
    %287 = tpu.matmul %284, %286, %cst_319 {dimension_numbers = #tpu.dot_dimension_numbers<[1], [0], [0], [1], [0, 0, 1, 1], [], []>} : vector<2x256xbf16>, vector<256x10xbf16>, vector<2x10xf32> -> vector<2x10xf32>
    %288 = arith.addf %270, %287 : vector<2x10xf32>
    %c0_320 = arith.constant 0 : index
    %c4_321 = arith.constant 4 : index
    %c8_322 = arith.constant 8 : index
    %c0_323 = arith.constant 0 : index
    %289 = vector.load %arg1[%c0_320, %c4_321, %c8_322, %c0_323] : memref<2x13x13x256xf32, #tpu.memory_space<vmem>>, vector<2x1x1x256xf32>
    %290 = vector.shape_cast %289 : vector<2x1x1x256xf32> to vector<2x256xf32>
    %c0_324 = arith.constant 0 : index
    %c4_325 = arith.constant 4 : index
    %c9_326 = arith.constant 9 : index
    %c0_327 = arith.constant 0 : index
    %291 = vector.load %arg1[%c0_324, %c4_325, %c9_326, %c0_327] : memref<2x13x13x256xf32, #tpu.memory_space<vmem>>, vector<2x1x1x256xf32>
    %292 = vector.shape_cast %291 : vector<2x1x1x256xf32> to vector<2x256xf32>
    %293 = arith.addf %290, %292 : vector<2x256xf32>
    %c0_328 = arith.constant 0 : index
    %c5_329 = arith.constant 5 : index
    %c8_330 = arith.constant 8 : index
    %c0_331 = arith.constant 0 : index
    %294 = vector.load %arg1[%c0_328, %c5_329, %c8_330, %c0_331] : memref<2x13x13x256xf32, #tpu.memory_space<vmem>>, vector<2x1x1x256xf32>
    %295 = vector.shape_cast %294 : vector<2x1x1x256xf32> to vector<2x256xf32>
    %296 = arith.addf %293, %295 : vector<2x256xf32>
    %c0_332 = arith.constant 0 : index
    %c5_333 = arith.constant 5 : index
    %c9_334 = arith.constant 9 : index
    %c0_335 = arith.constant 0 : index
    %297 = vector.load %arg1[%c0_332, %c5_333, %c9_334, %c0_335] : memref<2x13x13x256xf32, #tpu.memory_space<vmem>>, vector<2x1x1x256xf32>
    %298 = vector.shape_cast %297 : vector<2x1x1x256xf32> to vector<2x256xf32>
    %299 = arith.addf %296, %298 : vector<2x256xf32>
    %cst_336 = arith.constant 2.500000e-01 : f32
    %300 = vector.broadcast %cst_336 : f32 to vector<2x256xf32>
    %301 = arith.mulf %299, %300 : vector<2x256xf32>
    %302 = arith.truncf %301 : vector<2x256xf32> to vector<2x256xbf16>
    %c16 = arith.constant 16 : index
    %c0_337 = arith.constant 0 : index
    %c0_338 = arith.constant 0 : index
    %303 = vector.load %arg2[%c16, %c0_337, %c0_338] : memref<36x256x10xbf16, #tpu.memory_space<vmem>>, vector<1x256x10xbf16>
    %304 = vector.shape_cast %303 : vector<1x256x10xbf16> to vector<256x10xbf16>
    %cst_339 = arith.constant dense<0.000000e+00> : vector<2x10xf32>
    %305 = tpu.matmul %302, %304, %cst_339 {dimension_numbers = #tpu.dot_dimension_numbers<[1], [0], [0], [1], [0, 0, 1, 1], [], []>} : vector<2x256xbf16>, vector<256x10xbf16>, vector<2x10xf32> -> vector<2x10xf32>
    %306 = arith.addf %288, %305 : vector<2x10xf32>
    %c0_340 = arith.constant 0 : index
    %c4_341 = arith.constant 4 : index
    %c10_342 = arith.constant 10 : index
    %c0_343 = arith.constant 0 : index
    %307 = vector.load %arg1[%c0_340, %c4_341, %c10_342, %c0_343] : memref<2x13x13x256xf32, #tpu.memory_space<vmem>>, vector<2x1x1x256xf32>
    %308 = vector.shape_cast %307 : vector<2x1x1x256xf32> to vector<2x256xf32>
    %c0_344 = arith.constant 0 : index
    %c4_345 = arith.constant 4 : index
    %c11_346 = arith.constant 11 : index
    %c0_347 = arith.constant 0 : index
    %309 = vector.load %arg1[%c0_344, %c4_345, %c11_346, %c0_347] : memref<2x13x13x256xf32, #tpu.memory_space<vmem>>, vector<2x1x1x256xf32>
    %310 = vector.shape_cast %309 : vector<2x1x1x256xf32> to vector<2x256xf32>
    %311 = arith.addf %308, %310 : vector<2x256xf32>
    %c0_348 = arith.constant 0 : index
    %c5_349 = arith.constant 5 : index
    %c10_350 = arith.constant 10 : index
    %c0_351 = arith.constant 0 : index
    %312 = vector.load %arg1[%c0_348, %c5_349, %c10_350, %c0_351] : memref<2x13x13x256xf32, #tpu.memory_space<vmem>>, vector<2x1x1x256xf32>
    %313 = vector.shape_cast %312 : vector<2x1x1x256xf32> to vector<2x256xf32>
    %314 = arith.addf %311, %313 : vector<2x256xf32>
    %c0_352 = arith.constant 0 : index
    %c5_353 = arith.constant 5 : index
    %c11_354 = arith.constant 11 : index
    %c0_355 = arith.constant 0 : index
    %315 = vector.load %arg1[%c0_352, %c5_353, %c11_354, %c0_355] : memref<2x13x13x256xf32, #tpu.memory_space<vmem>>, vector<2x1x1x256xf32>
    %316 = vector.shape_cast %315 : vector<2x1x1x256xf32> to vector<2x256xf32>
    %317 = arith.addf %314, %316 : vector<2x256xf32>
    %cst_356 = arith.constant 2.500000e-01 : f32
    %318 = vector.broadcast %cst_356 : f32 to vector<2x256xf32>
    %319 = arith.mulf %317, %318 : vector<2x256xf32>
    %320 = arith.truncf %319 : vector<2x256xf32> to vector<2x256xbf16>
    %c17 = arith.constant 17 : index
    %c0_357 = arith.constant 0 : index
    %c0_358 = arith.constant 0 : index
    %321 = vector.load %arg2[%c17, %c0_357, %c0_358] : memref<36x256x10xbf16, #tpu.memory_space<vmem>>, vector<1x256x10xbf16>
    %322 = vector.shape_cast %321 : vector<1x256x10xbf16> to vector<256x10xbf16>
    %cst_359 = arith.constant dense<0.000000e+00> : vector<2x10xf32>
    %323 = tpu.matmul %320, %322, %cst_359 {dimension_numbers = #tpu.dot_dimension_numbers<[1], [0], [0], [1], [0, 0, 1, 1], [], []>} : vector<2x256xbf16>, vector<256x10xbf16>, vector<2x10xf32> -> vector<2x10xf32>
    %324 = arith.addf %306, %323 : vector<2x10xf32>
    %c0_360 = arith.constant 0 : index
    %c6_361 = arith.constant 6 : index
    %c0_362 = arith.constant 0 : index
    %c0_363 = arith.constant 0 : index
    %325 = vector.load %arg1[%c0_360, %c6_361, %c0_362, %c0_363] : memref<2x13x13x256xf32, #tpu.memory_space<vmem>>, vector<2x1x1x256xf32>
    %326 = vector.shape_cast %325 : vector<2x1x1x256xf32> to vector<2x256xf32>
    %c0_364 = arith.constant 0 : index
    %c6_365 = arith.constant 6 : index
    %c1_366 = arith.constant 1 : index
    %c0_367 = arith.constant 0 : index
    %327 = vector.load %arg1[%c0_364, %c6_365, %c1_366, %c0_367] : memref<2x13x13x256xf32, #tpu.memory_space<vmem>>, vector<2x1x1x256xf32>
    %328 = vector.shape_cast %327 : vector<2x1x1x256xf32> to vector<2x256xf32>
    %329 = arith.addf %326, %328 : vector<2x256xf32>
    %c0_368 = arith.constant 0 : index
    %c7_369 = arith.constant 7 : index
    %c0_370 = arith.constant 0 : index
    %c0_371 = arith.constant 0 : index
    %330 = vector.load %arg1[%c0_368, %c7_369, %c0_370, %c0_371] : memref<2x13x13x256xf32, #tpu.memory_space<vmem>>, vector<2x1x1x256xf32>
    %331 = vector.shape_cast %330 : vector<2x1x1x256xf32> to vector<2x256xf32>
    %332 = arith.addf %329, %331 : vector<2x256xf32>
    %c0_372 = arith.constant 0 : index
    %c7_373 = arith.constant 7 : index
    %c1_374 = arith.constant 1 : index
    %c0_375 = arith.constant 0 : index
    %333 = vector.load %arg1[%c0_372, %c7_373, %c1_374, %c0_375] : memref<2x13x13x256xf32, #tpu.memory_space<vmem>>, vector<2x1x1x256xf32>
    %334 = vector.shape_cast %333 : vector<2x1x1x256xf32> to vector<2x256xf32>
    %335 = arith.addf %332, %334 : vector<2x256xf32>
    %cst_376 = arith.constant 2.500000e-01 : f32
    %336 = vector.broadcast %cst_376 : f32 to vector<2x256xf32>
    %337 = arith.mulf %335, %336 : vector<2x256xf32>
    %338 = arith.truncf %337 : vector<2x256xf32> to vector<2x256xbf16>
    %c18 = arith.constant 18 : index
    %c0_377 = arith.constant 0 : index
    %c0_378 = arith.constant 0 : index
    %339 = vector.load %arg2[%c18, %c0_377, %c0_378] : memref<36x256x10xbf16, #tpu.memory_space<vmem>>, vector<1x256x10xbf16>
    %340 = vector.shape_cast %339 : vector<1x256x10xbf16> to vector<256x10xbf16>
    %cst_379 = arith.constant dense<0.000000e+00> : vector<2x10xf32>
    %341 = tpu.matmul %338, %340, %cst_379 {dimension_numbers = #tpu.dot_dimension_numbers<[1], [0], [0], [1], [0, 0, 1, 1], [], []>} : vector<2x256xbf16>, vector<256x10xbf16>, vector<2x10xf32> -> vector<2x10xf32>
    %342 = arith.addf %324, %341 : vector<2x10xf32>
    %c0_380 = arith.constant 0 : index
    %c6_381 = arith.constant 6 : index
    %c2_382 = arith.constant 2 : index
    %c0_383 = arith.constant 0 : index
    %343 = vector.load %arg1[%c0_380, %c6_381, %c2_382, %c0_383] : memref<2x13x13x256xf32, #tpu.memory_space<vmem>>, vector<2x1x1x256xf32>
    %344 = vector.shape_cast %343 : vector<2x1x1x256xf32> to vector<2x256xf32>
    %c0_384 = arith.constant 0 : index
    %c6_385 = arith.constant 6 : index
    %c3_386 = arith.constant 3 : index
    %c0_387 = arith.constant 0 : index
    %345 = vector.load %arg1[%c0_384, %c6_385, %c3_386, %c0_387] : memref<2x13x13x256xf32, #tpu.memory_space<vmem>>, vector<2x1x1x256xf32>
    %346 = vector.shape_cast %345 : vector<2x1x1x256xf32> to vector<2x256xf32>
    %347 = arith.addf %344, %346 : vector<2x256xf32>
    %c0_388 = arith.constant 0 : index
    %c7_389 = arith.constant 7 : index
    %c2_390 = arith.constant 2 : index
    %c0_391 = arith.constant 0 : index
    %348 = vector.load %arg1[%c0_388, %c7_389, %c2_390, %c0_391] : memref<2x13x13x256xf32, #tpu.memory_space<vmem>>, vector<2x1x1x256xf32>
    %349 = vector.shape_cast %348 : vector<2x1x1x256xf32> to vector<2x256xf32>
    %350 = arith.addf %347, %349 : vector<2x256xf32>
    %c0_392 = arith.constant 0 : index
    %c7_393 = arith.constant 7 : index
    %c3_394 = arith.constant 3 : index
    %c0_395 = arith.constant 0 : index
    %351 = vector.load %arg1[%c0_392, %c7_393, %c3_394, %c0_395] : memref<2x13x13x256xf32, #tpu.memory_space<vmem>>, vector<2x1x1x256xf32>
    %352 = vector.shape_cast %351 : vector<2x1x1x256xf32> to vector<2x256xf32>
    %353 = arith.addf %350, %352 : vector<2x256xf32>
    %cst_396 = arith.constant 2.500000e-01 : f32
    %354 = vector.broadcast %cst_396 : f32 to vector<2x256xf32>
    %355 = arith.mulf %353, %354 : vector<2x256xf32>
    %356 = arith.truncf %355 : vector<2x256xf32> to vector<2x256xbf16>
    %c19 = arith.constant 19 : index
    %c0_397 = arith.constant 0 : index
    %c0_398 = arith.constant 0 : index
    %357 = vector.load %arg2[%c19, %c0_397, %c0_398] : memref<36x256x10xbf16, #tpu.memory_space<vmem>>, vector<1x256x10xbf16>
    %358 = vector.shape_cast %357 : vector<1x256x10xbf16> to vector<256x10xbf16>
    %cst_399 = arith.constant dense<0.000000e+00> : vector<2x10xf32>
    %359 = tpu.matmul %356, %358, %cst_399 {dimension_numbers = #tpu.dot_dimension_numbers<[1], [0], [0], [1], [0, 0, 1, 1], [], []>} : vector<2x256xbf16>, vector<256x10xbf16>, vector<2x10xf32> -> vector<2x10xf32>
    %360 = arith.addf %342, %359 : vector<2x10xf32>
    %c0_400 = arith.constant 0 : index
    %c6_401 = arith.constant 6 : index
    %c4_402 = arith.constant 4 : index
    %c0_403 = arith.constant 0 : index
    %361 = vector.load %arg1[%c0_400, %c6_401, %c4_402, %c0_403] : memref<2x13x13x256xf32, #tpu.memory_space<vmem>>, vector<2x1x1x256xf32>
    %362 = vector.shape_cast %361 : vector<2x1x1x256xf32> to vector<2x256xf32>
    %c0_404 = arith.constant 0 : index
    %c6_405 = arith.constant 6 : index
    %c5_406 = arith.constant 5 : index
    %c0_407 = arith.constant 0 : index
    %363 = vector.load %arg1[%c0_404, %c6_405, %c5_406, %c0_407] : memref<2x13x13x256xf32, #tpu.memory_space<vmem>>, vector<2x1x1x256xf32>
    %364 = vector.shape_cast %363 : vector<2x1x1x256xf32> to vector<2x256xf32>
    %365 = arith.addf %362, %364 : vector<2x256xf32>
    %c0_408 = arith.constant 0 : index
    %c7_409 = arith.constant 7 : index
    %c4_410 = arith.constant 4 : index
    %c0_411 = arith.constant 0 : index
    %366 = vector.load %arg1[%c0_408, %c7_409, %c4_410, %c0_411] : memref<2x13x13x256xf32, #tpu.memory_space<vmem>>, vector<2x1x1x256xf32>
    %367 = vector.shape_cast %366 : vector<2x1x1x256xf32> to vector<2x256xf32>
    %368 = arith.addf %365, %367 : vector<2x256xf32>
    %c0_412 = arith.constant 0 : index
    %c7_413 = arith.constant 7 : index
    %c5_414 = arith.constant 5 : index
    %c0_415 = arith.constant 0 : index
    %369 = vector.load %arg1[%c0_412, %c7_413, %c5_414, %c0_415] : memref<2x13x13x256xf32, #tpu.memory_space<vmem>>, vector<2x1x1x256xf32>
    %370 = vector.shape_cast %369 : vector<2x1x1x256xf32> to vector<2x256xf32>
    %371 = arith.addf %368, %370 : vector<2x256xf32>
    %cst_416 = arith.constant 2.500000e-01 : f32
    %372 = vector.broadcast %cst_416 : f32 to vector<2x256xf32>
    %373 = arith.mulf %371, %372 : vector<2x256xf32>
    %374 = arith.truncf %373 : vector<2x256xf32> to vector<2x256xbf16>
    %c20 = arith.constant 20 : index
    %c0_417 = arith.constant 0 : index
    %c0_418 = arith.constant 0 : index
    %375 = vector.load %arg2[%c20, %c0_417, %c0_418] : memref<36x256x10xbf16, #tpu.memory_space<vmem>>, vector<1x256x10xbf16>
    %376 = vector.shape_cast %375 : vector<1x256x10xbf16> to vector<256x10xbf16>
    %cst_419 = arith.constant dense<0.000000e+00> : vector<2x10xf32>
    %377 = tpu.matmul %374, %376, %cst_419 {dimension_numbers = #tpu.dot_dimension_numbers<[1], [0], [0], [1], [0, 0, 1, 1], [], []>} : vector<2x256xbf16>, vector<256x10xbf16>, vector<2x10xf32> -> vector<2x10xf32>
    %378 = arith.addf %360, %377 : vector<2x10xf32>
    %c0_420 = arith.constant 0 : index
    %c6_421 = arith.constant 6 : index
    %c6_422 = arith.constant 6 : index
    %c0_423 = arith.constant 0 : index
    %379 = vector.load %arg1[%c0_420, %c6_421, %c6_422, %c0_423] : memref<2x13x13x256xf32, #tpu.memory_space<vmem>>, vector<2x1x1x256xf32>
    %380 = vector.shape_cast %379 : vector<2x1x1x256xf32> to vector<2x256xf32>
    %c0_424 = arith.constant 0 : index
    %c6_425 = arith.constant 6 : index
    %c7_426 = arith.constant 7 : index
    %c0_427 = arith.constant 0 : index
    %381 = vector.load %arg1[%c0_424, %c6_425, %c7_426, %c0_427] : memref<2x13x13x256xf32, #tpu.memory_space<vmem>>, vector<2x1x1x256xf32>
    %382 = vector.shape_cast %381 : vector<2x1x1x256xf32> to vector<2x256xf32>
    %383 = arith.addf %380, %382 : vector<2x256xf32>
    %c0_428 = arith.constant 0 : index
    %c7_429 = arith.constant 7 : index
    %c6_430 = arith.constant 6 : index
    %c0_431 = arith.constant 0 : index
    %384 = vector.load %arg1[%c0_428, %c7_429, %c6_430, %c0_431] : memref<2x13x13x256xf32, #tpu.memory_space<vmem>>, vector<2x1x1x256xf32>
    %385 = vector.shape_cast %384 : vector<2x1x1x256xf32> to vector<2x256xf32>
    %386 = arith.addf %383, %385 : vector<2x256xf32>
    %c0_432 = arith.constant 0 : index
    %c7_433 = arith.constant 7 : index
    %c7_434 = arith.constant 7 : index
    %c0_435 = arith.constant 0 : index
    %387 = vector.load %arg1[%c0_432, %c7_433, %c7_434, %c0_435] : memref<2x13x13x256xf32, #tpu.memory_space<vmem>>, vector<2x1x1x256xf32>
    %388 = vector.shape_cast %387 : vector<2x1x1x256xf32> to vector<2x256xf32>
    %389 = arith.addf %386, %388 : vector<2x256xf32>
    %cst_436 = arith.constant 2.500000e-01 : f32
    %390 = vector.broadcast %cst_436 : f32 to vector<2x256xf32>
    %391 = arith.mulf %389, %390 : vector<2x256xf32>
    %392 = arith.truncf %391 : vector<2x256xf32> to vector<2x256xbf16>
    %c21 = arith.constant 21 : index
    %c0_437 = arith.constant 0 : index
    %c0_438 = arith.constant 0 : index
    %393 = vector.load %arg2[%c21, %c0_437, %c0_438] : memref<36x256x10xbf16, #tpu.memory_space<vmem>>, vector<1x256x10xbf16>
    %394 = vector.shape_cast %393 : vector<1x256x10xbf16> to vector<256x10xbf16>
    %cst_439 = arith.constant dense<0.000000e+00> : vector<2x10xf32>
    %395 = tpu.matmul %392, %394, %cst_439 {dimension_numbers = #tpu.dot_dimension_numbers<[1], [0], [0], [1], [0, 0, 1, 1], [], []>} : vector<2x256xbf16>, vector<256x10xbf16>, vector<2x10xf32> -> vector<2x10xf32>
    %396 = arith.addf %378, %395 : vector<2x10xf32>
    %c0_440 = arith.constant 0 : index
    %c6_441 = arith.constant 6 : index
    %c8_442 = arith.constant 8 : index
    %c0_443 = arith.constant 0 : index
    %397 = vector.load %arg1[%c0_440, %c6_441, %c8_442, %c0_443] : memref<2x13x13x256xf32, #tpu.memory_space<vmem>>, vector<2x1x1x256xf32>
    %398 = vector.shape_cast %397 : vector<2x1x1x256xf32> to vector<2x256xf32>
    %c0_444 = arith.constant 0 : index
    %c6_445 = arith.constant 6 : index
    %c9_446 = arith.constant 9 : index
    %c0_447 = arith.constant 0 : index
    %399 = vector.load %arg1[%c0_444, %c6_445, %c9_446, %c0_447] : memref<2x13x13x256xf32, #tpu.memory_space<vmem>>, vector<2x1x1x256xf32>
    %400 = vector.shape_cast %399 : vector<2x1x1x256xf32> to vector<2x256xf32>
    %401 = arith.addf %398, %400 : vector<2x256xf32>
    %c0_448 = arith.constant 0 : index
    %c7_449 = arith.constant 7 : index
    %c8_450 = arith.constant 8 : index
    %c0_451 = arith.constant 0 : index
    %402 = vector.load %arg1[%c0_448, %c7_449, %c8_450, %c0_451] : memref<2x13x13x256xf32, #tpu.memory_space<vmem>>, vector<2x1x1x256xf32>
    %403 = vector.shape_cast %402 : vector<2x1x1x256xf32> to vector<2x256xf32>
    %404 = arith.addf %401, %403 : vector<2x256xf32>
    %c0_452 = arith.constant 0 : index
    %c7_453 = arith.constant 7 : index
    %c9_454 = arith.constant 9 : index
    %c0_455 = arith.constant 0 : index
    %405 = vector.load %arg1[%c0_452, %c7_453, %c9_454, %c0_455] : memref<2x13x13x256xf32, #tpu.memory_space<vmem>>, vector<2x1x1x256xf32>
    %406 = vector.shape_cast %405 : vector<2x1x1x256xf32> to vector<2x256xf32>
    %407 = arith.addf %404, %406 : vector<2x256xf32>
    %cst_456 = arith.constant 2.500000e-01 : f32
    %408 = vector.broadcast %cst_456 : f32 to vector<2x256xf32>
    %409 = arith.mulf %407, %408 : vector<2x256xf32>
    %410 = arith.truncf %409 : vector<2x256xf32> to vector<2x256xbf16>
    %c22 = arith.constant 22 : index
    %c0_457 = arith.constant 0 : index
    %c0_458 = arith.constant 0 : index
    %411 = vector.load %arg2[%c22, %c0_457, %c0_458] : memref<36x256x10xbf16, #tpu.memory_space<vmem>>, vector<1x256x10xbf16>
    %412 = vector.shape_cast %411 : vector<1x256x10xbf16> to vector<256x10xbf16>
    %cst_459 = arith.constant dense<0.000000e+00> : vector<2x10xf32>
    %413 = tpu.matmul %410, %412, %cst_459 {dimension_numbers = #tpu.dot_dimension_numbers<[1], [0], [0], [1], [0, 0, 1, 1], [], []>} : vector<2x256xbf16>, vector<256x10xbf16>, vector<2x10xf32> -> vector<2x10xf32>
    %414 = arith.addf %396, %413 : vector<2x10xf32>
    %c0_460 = arith.constant 0 : index
    %c6_461 = arith.constant 6 : index
    %c10_462 = arith.constant 10 : index
    %c0_463 = arith.constant 0 : index
    %415 = vector.load %arg1[%c0_460, %c6_461, %c10_462, %c0_463] : memref<2x13x13x256xf32, #tpu.memory_space<vmem>>, vector<2x1x1x256xf32>
    %416 = vector.shape_cast %415 : vector<2x1x1x256xf32> to vector<2x256xf32>
    %c0_464 = arith.constant 0 : index
    %c6_465 = arith.constant 6 : index
    %c11_466 = arith.constant 11 : index
    %c0_467 = arith.constant 0 : index
    %417 = vector.load %arg1[%c0_464, %c6_465, %c11_466, %c0_467] : memref<2x13x13x256xf32, #tpu.memory_space<vmem>>, vector<2x1x1x256xf32>
    %418 = vector.shape_cast %417 : vector<2x1x1x256xf32> to vector<2x256xf32>
    %419 = arith.addf %416, %418 : vector<2x256xf32>
    %c0_468 = arith.constant 0 : index
    %c7_469 = arith.constant 7 : index
    %c10_470 = arith.constant 10 : index
    %c0_471 = arith.constant 0 : index
    %420 = vector.load %arg1[%c0_468, %c7_469, %c10_470, %c0_471] : memref<2x13x13x256xf32, #tpu.memory_space<vmem>>, vector<2x1x1x256xf32>
    %421 = vector.shape_cast %420 : vector<2x1x1x256xf32> to vector<2x256xf32>
    %422 = arith.addf %419, %421 : vector<2x256xf32>
    %c0_472 = arith.constant 0 : index
    %c7_473 = arith.constant 7 : index
    %c11_474 = arith.constant 11 : index
    %c0_475 = arith.constant 0 : index
    %423 = vector.load %arg1[%c0_472, %c7_473, %c11_474, %c0_475] : memref<2x13x13x256xf32, #tpu.memory_space<vmem>>, vector<2x1x1x256xf32>
    %424 = vector.shape_cast %423 : vector<2x1x1x256xf32> to vector<2x256xf32>
    %425 = arith.addf %422, %424 : vector<2x256xf32>
    %cst_476 = arith.constant 2.500000e-01 : f32
    %426 = vector.broadcast %cst_476 : f32 to vector<2x256xf32>
    %427 = arith.mulf %425, %426 : vector<2x256xf32>
    %428 = arith.truncf %427 : vector<2x256xf32> to vector<2x256xbf16>
    %c23 = arith.constant 23 : index
    %c0_477 = arith.constant 0 : index
    %c0_478 = arith.constant 0 : index
    %429 = vector.load %arg2[%c23, %c0_477, %c0_478] : memref<36x256x10xbf16, #tpu.memory_space<vmem>>, vector<1x256x10xbf16>
    %430 = vector.shape_cast %429 : vector<1x256x10xbf16> to vector<256x10xbf16>
    %cst_479 = arith.constant dense<0.000000e+00> : vector<2x10xf32>
    %431 = tpu.matmul %428, %430, %cst_479 {dimension_numbers = #tpu.dot_dimension_numbers<[1], [0], [0], [1], [0, 0, 1, 1], [], []>} : vector<2x256xbf16>, vector<256x10xbf16>, vector<2x10xf32> -> vector<2x10xf32>
    %432 = arith.addf %414, %431 : vector<2x10xf32>
    %c0_480 = arith.constant 0 : index
    %c8_481 = arith.constant 8 : index
    %c0_482 = arith.constant 0 : index
    %c0_483 = arith.constant 0 : index
    %433 = vector.load %arg1[%c0_480, %c8_481, %c0_482, %c0_483] : memref<2x13x13x256xf32, #tpu.memory_space<vmem>>, vector<2x1x1x256xf32>
    %434 = vector.shape_cast %433 : vector<2x1x1x256xf32> to vector<2x256xf32>
    %c0_484 = arith.constant 0 : index
    %c8_485 = arith.constant 8 : index
    %c1_486 = arith.constant 1 : index
    %c0_487 = arith.constant 0 : index
    %435 = vector.load %arg1[%c0_484, %c8_485, %c1_486, %c0_487] : memref<2x13x13x256xf32, #tpu.memory_space<vmem>>, vector<2x1x1x256xf32>
    %436 = vector.shape_cast %435 : vector<2x1x1x256xf32> to vector<2x256xf32>
    %437 = arith.addf %434, %436 : vector<2x256xf32>
    %c0_488 = arith.constant 0 : index
    %c9_489 = arith.constant 9 : index
    %c0_490 = arith.constant 0 : index
    %c0_491 = arith.constant 0 : index
    %438 = vector.load %arg1[%c0_488, %c9_489, %c0_490, %c0_491] : memref<2x13x13x256xf32, #tpu.memory_space<vmem>>, vector<2x1x1x256xf32>
    %439 = vector.shape_cast %438 : vector<2x1x1x256xf32> to vector<2x256xf32>
    %440 = arith.addf %437, %439 : vector<2x256xf32>
    %c0_492 = arith.constant 0 : index
    %c9_493 = arith.constant 9 : index
    %c1_494 = arith.constant 1 : index
    %c0_495 = arith.constant 0 : index
    %441 = vector.load %arg1[%c0_492, %c9_493, %c1_494, %c0_495] : memref<2x13x13x256xf32, #tpu.memory_space<vmem>>, vector<2x1x1x256xf32>
    %442 = vector.shape_cast %441 : vector<2x1x1x256xf32> to vector<2x256xf32>
    %443 = arith.addf %440, %442 : vector<2x256xf32>
    %cst_496 = arith.constant 2.500000e-01 : f32
    %444 = vector.broadcast %cst_496 : f32 to vector<2x256xf32>
    %445 = arith.mulf %443, %444 : vector<2x256xf32>
    %446 = arith.truncf %445 : vector<2x256xf32> to vector<2x256xbf16>
    %c24 = arith.constant 24 : index
    %c0_497 = arith.constant 0 : index
    %c0_498 = arith.constant 0 : index
    %447 = vector.load %arg2[%c24, %c0_497, %c0_498] : memref<36x256x10xbf16, #tpu.memory_space<vmem>>, vector<1x256x10xbf16>
    %448 = vector.shape_cast %447 : vector<1x256x10xbf16> to vector<256x10xbf16>
    %cst_499 = arith.constant dense<0.000000e+00> : vector<2x10xf32>
    %449 = tpu.matmul %446, %448, %cst_499 {dimension_numbers = #tpu.dot_dimension_numbers<[1], [0], [0], [1], [0, 0, 1, 1], [], []>} : vector<2x256xbf16>, vector<256x10xbf16>, vector<2x10xf32> -> vector<2x10xf32>
    %450 = arith.addf %432, %449 : vector<2x10xf32>
    %c0_500 = arith.constant 0 : index
    %c8_501 = arith.constant 8 : index
    %c2_502 = arith.constant 2 : index
    %c0_503 = arith.constant 0 : index
    %451 = vector.load %arg1[%c0_500, %c8_501, %c2_502, %c0_503] : memref<2x13x13x256xf32, #tpu.memory_space<vmem>>, vector<2x1x1x256xf32>
    %452 = vector.shape_cast %451 : vector<2x1x1x256xf32> to vector<2x256xf32>
    %c0_504 = arith.constant 0 : index
    %c8_505 = arith.constant 8 : index
    %c3_506 = arith.constant 3 : index
    %c0_507 = arith.constant 0 : index
    %453 = vector.load %arg1[%c0_504, %c8_505, %c3_506, %c0_507] : memref<2x13x13x256xf32, #tpu.memory_space<vmem>>, vector<2x1x1x256xf32>
    %454 = vector.shape_cast %453 : vector<2x1x1x256xf32> to vector<2x256xf32>
    %455 = arith.addf %452, %454 : vector<2x256xf32>
    %c0_508 = arith.constant 0 : index
    %c9_509 = arith.constant 9 : index
    %c2_510 = arith.constant 2 : index
    %c0_511 = arith.constant 0 : index
    %456 = vector.load %arg1[%c0_508, %c9_509, %c2_510, %c0_511] : memref<2x13x13x256xf32, #tpu.memory_space<vmem>>, vector<2x1x1x256xf32>
    %457 = vector.shape_cast %456 : vector<2x1x1x256xf32> to vector<2x256xf32>
    %458 = arith.addf %455, %457 : vector<2x256xf32>
    %c0_512 = arith.constant 0 : index
    %c9_513 = arith.constant 9 : index
    %c3_514 = arith.constant 3 : index
    %c0_515 = arith.constant 0 : index
    %459 = vector.load %arg1[%c0_512, %c9_513, %c3_514, %c0_515] : memref<2x13x13x256xf32, #tpu.memory_space<vmem>>, vector<2x1x1x256xf32>
    %460 = vector.shape_cast %459 : vector<2x1x1x256xf32> to vector<2x256xf32>
    %461 = arith.addf %458, %460 : vector<2x256xf32>
    %cst_516 = arith.constant 2.500000e-01 : f32
    %462 = vector.broadcast %cst_516 : f32 to vector<2x256xf32>
    %463 = arith.mulf %461, %462 : vector<2x256xf32>
    %464 = arith.truncf %463 : vector<2x256xf32> to vector<2x256xbf16>
    %c25 = arith.constant 25 : index
    %c0_517 = arith.constant 0 : index
    %c0_518 = arith.constant 0 : index
    %465 = vector.load %arg2[%c25, %c0_517, %c0_518] : memref<36x256x10xbf16, #tpu.memory_space<vmem>>, vector<1x256x10xbf16>
    %466 = vector.shape_cast %465 : vector<1x256x10xbf16> to vector<256x10xbf16>
    %cst_519 = arith.constant dense<0.000000e+00> : vector<2x10xf32>
    %467 = tpu.matmul %464, %466, %cst_519 {dimension_numbers = #tpu.dot_dimension_numbers<[1], [0], [0], [1], [0, 0, 1, 1], [], []>} : vector<2x256xbf16>, vector<256x10xbf16>, vector<2x10xf32> -> vector<2x10xf32>
    %468 = arith.addf %450, %467 : vector<2x10xf32>
    %c0_520 = arith.constant 0 : index
    %c8_521 = arith.constant 8 : index
    %c4_522 = arith.constant 4 : index
    %c0_523 = arith.constant 0 : index
    %469 = vector.load %arg1[%c0_520, %c8_521, %c4_522, %c0_523] : memref<2x13x13x256xf32, #tpu.memory_space<vmem>>, vector<2x1x1x256xf32>
    %470 = vector.shape_cast %469 : vector<2x1x1x256xf32> to vector<2x256xf32>
    %c0_524 = arith.constant 0 : index
    %c8_525 = arith.constant 8 : index
    %c5_526 = arith.constant 5 : index
    %c0_527 = arith.constant 0 : index
    %471 = vector.load %arg1[%c0_524, %c8_525, %c5_526, %c0_527] : memref<2x13x13x256xf32, #tpu.memory_space<vmem>>, vector<2x1x1x256xf32>
    %472 = vector.shape_cast %471 : vector<2x1x1x256xf32> to vector<2x256xf32>
    %473 = arith.addf %470, %472 : vector<2x256xf32>
    %c0_528 = arith.constant 0 : index
    %c9_529 = arith.constant 9 : index
    %c4_530 = arith.constant 4 : index
    %c0_531 = arith.constant 0 : index
    %474 = vector.load %arg1[%c0_528, %c9_529, %c4_530, %c0_531] : memref<2x13x13x256xf32, #tpu.memory_space<vmem>>, vector<2x1x1x256xf32>
    %475 = vector.shape_cast %474 : vector<2x1x1x256xf32> to vector<2x256xf32>
    %476 = arith.addf %473, %475 : vector<2x256xf32>
    %c0_532 = arith.constant 0 : index
    %c9_533 = arith.constant 9 : index
    %c5_534 = arith.constant 5 : index
    %c0_535 = arith.constant 0 : index
    %477 = vector.load %arg1[%c0_532, %c9_533, %c5_534, %c0_535] : memref<2x13x13x256xf32, #tpu.memory_space<vmem>>, vector<2x1x1x256xf32>
    %478 = vector.shape_cast %477 : vector<2x1x1x256xf32> to vector<2x256xf32>
    %479 = arith.addf %476, %478 : vector<2x256xf32>
    %cst_536 = arith.constant 2.500000e-01 : f32
    %480 = vector.broadcast %cst_536 : f32 to vector<2x256xf32>
    %481 = arith.mulf %479, %480 : vector<2x256xf32>
    %482 = arith.truncf %481 : vector<2x256xf32> to vector<2x256xbf16>
    %c26 = arith.constant 26 : index
    %c0_537 = arith.constant 0 : index
    %c0_538 = arith.constant 0 : index
    %483 = vector.load %arg2[%c26, %c0_537, %c0_538] : memref<36x256x10xbf16, #tpu.memory_space<vmem>>, vector<1x256x10xbf16>
    %484 = vector.shape_cast %483 : vector<1x256x10xbf16> to vector<256x10xbf16>
    %cst_539 = arith.constant dense<0.000000e+00> : vector<2x10xf32>
    %485 = tpu.matmul %482, %484, %cst_539 {dimension_numbers = #tpu.dot_dimension_numbers<[1], [0], [0], [1], [0, 0, 1, 1], [], []>} : vector<2x256xbf16>, vector<256x10xbf16>, vector<2x10xf32> -> vector<2x10xf32>
    %486 = arith.addf %468, %485 : vector<2x10xf32>
    %c0_540 = arith.constant 0 : index
    %c8_541 = arith.constant 8 : index
    %c6_542 = arith.constant 6 : index
    %c0_543 = arith.constant 0 : index
    %487 = vector.load %arg1[%c0_540, %c8_541, %c6_542, %c0_543] : memref<2x13x13x256xf32, #tpu.memory_space<vmem>>, vector<2x1x1x256xf32>
    %488 = vector.shape_cast %487 : vector<2x1x1x256xf32> to vector<2x256xf32>
    %c0_544 = arith.constant 0 : index
    %c8_545 = arith.constant 8 : index
    %c7_546 = arith.constant 7 : index
    %c0_547 = arith.constant 0 : index
    %489 = vector.load %arg1[%c0_544, %c8_545, %c7_546, %c0_547] : memref<2x13x13x256xf32, #tpu.memory_space<vmem>>, vector<2x1x1x256xf32>
    %490 = vector.shape_cast %489 : vector<2x1x1x256xf32> to vector<2x256xf32>
    %491 = arith.addf %488, %490 : vector<2x256xf32>
    %c0_548 = arith.constant 0 : index
    %c9_549 = arith.constant 9 : index
    %c6_550 = arith.constant 6 : index
    %c0_551 = arith.constant 0 : index
    %492 = vector.load %arg1[%c0_548, %c9_549, %c6_550, %c0_551] : memref<2x13x13x256xf32, #tpu.memory_space<vmem>>, vector<2x1x1x256xf32>
    %493 = vector.shape_cast %492 : vector<2x1x1x256xf32> to vector<2x256xf32>
    %494 = arith.addf %491, %493 : vector<2x256xf32>
    %c0_552 = arith.constant 0 : index
    %c9_553 = arith.constant 9 : index
    %c7_554 = arith.constant 7 : index
    %c0_555 = arith.constant 0 : index
    %495 = vector.load %arg1[%c0_552, %c9_553, %c7_554, %c0_555] : memref<2x13x13x256xf32, #tpu.memory_space<vmem>>, vector<2x1x1x256xf32>
    %496 = vector.shape_cast %495 : vector<2x1x1x256xf32> to vector<2x256xf32>
    %497 = arith.addf %494, %496 : vector<2x256xf32>
    %cst_556 = arith.constant 2.500000e-01 : f32
    %498 = vector.broadcast %cst_556 : f32 to vector<2x256xf32>
    %499 = arith.mulf %497, %498 : vector<2x256xf32>
    %500 = arith.truncf %499 : vector<2x256xf32> to vector<2x256xbf16>
    %c27 = arith.constant 27 : index
    %c0_557 = arith.constant 0 : index
    %c0_558 = arith.constant 0 : index
    %501 = vector.load %arg2[%c27, %c0_557, %c0_558] : memref<36x256x10xbf16, #tpu.memory_space<vmem>>, vector<1x256x10xbf16>
    %502 = vector.shape_cast %501 : vector<1x256x10xbf16> to vector<256x10xbf16>
    %cst_559 = arith.constant dense<0.000000e+00> : vector<2x10xf32>
    %503 = tpu.matmul %500, %502, %cst_559 {dimension_numbers = #tpu.dot_dimension_numbers<[1], [0], [0], [1], [0, 0, 1, 1], [], []>} : vector<2x256xbf16>, vector<256x10xbf16>, vector<2x10xf32> -> vector<2x10xf32>
    %504 = arith.addf %486, %503 : vector<2x10xf32>
    %c0_560 = arith.constant 0 : index
    %c8_561 = arith.constant 8 : index
    %c8_562 = arith.constant 8 : index
    %c0_563 = arith.constant 0 : index
    %505 = vector.load %arg1[%c0_560, %c8_561, %c8_562, %c0_563] : memref<2x13x13x256xf32, #tpu.memory_space<vmem>>, vector<2x1x1x256xf32>
    %506 = vector.shape_cast %505 : vector<2x1x1x256xf32> to vector<2x256xf32>
    %c0_564 = arith.constant 0 : index
    %c8_565 = arith.constant 8 : index
    %c9_566 = arith.constant 9 : index
    %c0_567 = arith.constant 0 : index
    %507 = vector.load %arg1[%c0_564, %c8_565, %c9_566, %c0_567] : memref<2x13x13x256xf32, #tpu.memory_space<vmem>>, vector<2x1x1x256xf32>
    %508 = vector.shape_cast %507 : vector<2x1x1x256xf32> to vector<2x256xf32>
    %509 = arith.addf %506, %508 : vector<2x256xf32>
    %c0_568 = arith.constant 0 : index
    %c9_569 = arith.constant 9 : index
    %c8_570 = arith.constant 8 : index
    %c0_571 = arith.constant 0 : index
    %510 = vector.load %arg1[%c0_568, %c9_569, %c8_570, %c0_571] : memref<2x13x13x256xf32, #tpu.memory_space<vmem>>, vector<2x1x1x256xf32>
    %511 = vector.shape_cast %510 : vector<2x1x1x256xf32> to vector<2x256xf32>
    %512 = arith.addf %509, %511 : vector<2x256xf32>
    %c0_572 = arith.constant 0 : index
    %c9_573 = arith.constant 9 : index
    %c9_574 = arith.constant 9 : index
    %c0_575 = arith.constant 0 : index
    %513 = vector.load %arg1[%c0_572, %c9_573, %c9_574, %c0_575] : memref<2x13x13x256xf32, #tpu.memory_space<vmem>>, vector<2x1x1x256xf32>
    %514 = vector.shape_cast %513 : vector<2x1x1x256xf32> to vector<2x256xf32>
    %515 = arith.addf %512, %514 : vector<2x256xf32>
    %cst_576 = arith.constant 2.500000e-01 : f32
    %516 = vector.broadcast %cst_576 : f32 to vector<2x256xf32>
    %517 = arith.mulf %515, %516 : vector<2x256xf32>
    %518 = arith.truncf %517 : vector<2x256xf32> to vector<2x256xbf16>
    %c28 = arith.constant 28 : index
    %c0_577 = arith.constant 0 : index
    %c0_578 = arith.constant 0 : index
    %519 = vector.load %arg2[%c28, %c0_577, %c0_578] : memref<36x256x10xbf16, #tpu.memory_space<vmem>>, vector<1x256x10xbf16>
    %520 = vector.shape_cast %519 : vector<1x256x10xbf16> to vector<256x10xbf16>
    %cst_579 = arith.constant dense<0.000000e+00> : vector<2x10xf32>
    %521 = tpu.matmul %518, %520, %cst_579 {dimension_numbers = #tpu.dot_dimension_numbers<[1], [0], [0], [1], [0, 0, 1, 1], [], []>} : vector<2x256xbf16>, vector<256x10xbf16>, vector<2x10xf32> -> vector<2x10xf32>
    %522 = arith.addf %504, %521 : vector<2x10xf32>
    %c0_580 = arith.constant 0 : index
    %c8_581 = arith.constant 8 : index
    %c10_582 = arith.constant 10 : index
    %c0_583 = arith.constant 0 : index
    %523 = vector.load %arg1[%c0_580, %c8_581, %c10_582, %c0_583] : memref<2x13x13x256xf32, #tpu.memory_space<vmem>>, vector<2x1x1x256xf32>
    %524 = vector.shape_cast %523 : vector<2x1x1x256xf32> to vector<2x256xf32>
    %c0_584 = arith.constant 0 : index
    %c8_585 = arith.constant 8 : index
    %c11_586 = arith.constant 11 : index
    %c0_587 = arith.constant 0 : index
    %525 = vector.load %arg1[%c0_584, %c8_585, %c11_586, %c0_587] : memref<2x13x13x256xf32, #tpu.memory_space<vmem>>, vector<2x1x1x256xf32>
    %526 = vector.shape_cast %525 : vector<2x1x1x256xf32> to vector<2x256xf32>
    %527 = arith.addf %524, %526 : vector<2x256xf32>
    %c0_588 = arith.constant 0 : index
    %c9_589 = arith.constant 9 : index
    %c10_590 = arith.constant 10 : index
    %c0_591 = arith.constant 0 : index
    %528 = vector.load %arg1[%c0_588, %c9_589, %c10_590, %c0_591] : memref<2x13x13x256xf32, #tpu.memory_space<vmem>>, vector<2x1x1x256xf32>
    %529 = vector.shape_cast %528 : vector<2x1x1x256xf32> to vector<2x256xf32>
    %530 = arith.addf %527, %529 : vector<2x256xf32>
    %c0_592 = arith.constant 0 : index
    %c9_593 = arith.constant 9 : index
    %c11_594 = arith.constant 11 : index
    %c0_595 = arith.constant 0 : index
    %531 = vector.load %arg1[%c0_592, %c9_593, %c11_594, %c0_595] : memref<2x13x13x256xf32, #tpu.memory_space<vmem>>, vector<2x1x1x256xf32>
    %532 = vector.shape_cast %531 : vector<2x1x1x256xf32> to vector<2x256xf32>
    %533 = arith.addf %530, %532 : vector<2x256xf32>
    %cst_596 = arith.constant 2.500000e-01 : f32
    %534 = vector.broadcast %cst_596 : f32 to vector<2x256xf32>
    %535 = arith.mulf %533, %534 : vector<2x256xf32>
    %536 = arith.truncf %535 : vector<2x256xf32> to vector<2x256xbf16>
    %c29 = arith.constant 29 : index
    %c0_597 = arith.constant 0 : index
    %c0_598 = arith.constant 0 : index
    %537 = vector.load %arg2[%c29, %c0_597, %c0_598] : memref<36x256x10xbf16, #tpu.memory_space<vmem>>, vector<1x256x10xbf16>
    %538 = vector.shape_cast %537 : vector<1x256x10xbf16> to vector<256x10xbf16>
    %cst_599 = arith.constant dense<0.000000e+00> : vector<2x10xf32>
    %539 = tpu.matmul %536, %538, %cst_599 {dimension_numbers = #tpu.dot_dimension_numbers<[1], [0], [0], [1], [0, 0, 1, 1], [], []>} : vector<2x256xbf16>, vector<256x10xbf16>, vector<2x10xf32> -> vector<2x10xf32>
    %540 = arith.addf %522, %539 : vector<2x10xf32>
    %c0_600 = arith.constant 0 : index
    %c10_601 = arith.constant 10 : index
    %c0_602 = arith.constant 0 : index
    %c0_603 = arith.constant 0 : index
    %541 = vector.load %arg1[%c0_600, %c10_601, %c0_602, %c0_603] : memref<2x13x13x256xf32, #tpu.memory_space<vmem>>, vector<2x1x1x256xf32>
    %542 = vector.shape_cast %541 : vector<2x1x1x256xf32> to vector<2x256xf32>
    %c0_604 = arith.constant 0 : index
    %c10_605 = arith.constant 10 : index
    %c1_606 = arith.constant 1 : index
    %c0_607 = arith.constant 0 : index
    %543 = vector.load %arg1[%c0_604, %c10_605, %c1_606, %c0_607] : memref<2x13x13x256xf32, #tpu.memory_space<vmem>>, vector<2x1x1x256xf32>
    %544 = vector.shape_cast %543 : vector<2x1x1x256xf32> to vector<2x256xf32>
    %545 = arith.addf %542, %544 : vector<2x256xf32>
    %c0_608 = arith.constant 0 : index
    %c11_609 = arith.constant 11 : index
    %c0_610 = arith.constant 0 : index
    %c0_611 = arith.constant 0 : index
    %546 = vector.load %arg1[%c0_608, %c11_609, %c0_610, %c0_611] : memref<2x13x13x256xf32, #tpu.memory_space<vmem>>, vector<2x1x1x256xf32>
    %547 = vector.shape_cast %546 : vector<2x1x1x256xf32> to vector<2x256xf32>
    %548 = arith.addf %545, %547 : vector<2x256xf32>
    %c0_612 = arith.constant 0 : index
    %c11_613 = arith.constant 11 : index
    %c1_614 = arith.constant 1 : index
    %c0_615 = arith.constant 0 : index
    %549 = vector.load %arg1[%c0_612, %c11_613, %c1_614, %c0_615] : memref<2x13x13x256xf32, #tpu.memory_space<vmem>>, vector<2x1x1x256xf32>
    %550 = vector.shape_cast %549 : vector<2x1x1x256xf32> to vector<2x256xf32>
    %551 = arith.addf %548, %550 : vector<2x256xf32>
    %cst_616 = arith.constant 2.500000e-01 : f32
    %552 = vector.broadcast %cst_616 : f32 to vector<2x256xf32>
    %553 = arith.mulf %551, %552 : vector<2x256xf32>
    %554 = arith.truncf %553 : vector<2x256xf32> to vector<2x256xbf16>
    %c30 = arith.constant 30 : index
    %c0_617 = arith.constant 0 : index
    %c0_618 = arith.constant 0 : index
    %555 = vector.load %arg2[%c30, %c0_617, %c0_618] : memref<36x256x10xbf16, #tpu.memory_space<vmem>>, vector<1x256x10xbf16>
    %556 = vector.shape_cast %555 : vector<1x256x10xbf16> to vector<256x10xbf16>
    %cst_619 = arith.constant dense<0.000000e+00> : vector<2x10xf32>
    %557 = tpu.matmul %554, %556, %cst_619 {dimension_numbers = #tpu.dot_dimension_numbers<[1], [0], [0], [1], [0, 0, 1, 1], [], []>} : vector<2x256xbf16>, vector<256x10xbf16>, vector<2x10xf32> -> vector<2x10xf32>
    %558 = arith.addf %540, %557 : vector<2x10xf32>
    %c0_620 = arith.constant 0 : index
    %c10_621 = arith.constant 10 : index
    %c2_622 = arith.constant 2 : index
    %c0_623 = arith.constant 0 : index
    %559 = vector.load %arg1[%c0_620, %c10_621, %c2_622, %c0_623] : memref<2x13x13x256xf32, #tpu.memory_space<vmem>>, vector<2x1x1x256xf32>
    %560 = vector.shape_cast %559 : vector<2x1x1x256xf32> to vector<2x256xf32>
    %c0_624 = arith.constant 0 : index
    %c10_625 = arith.constant 10 : index
    %c3_626 = arith.constant 3 : index
    %c0_627 = arith.constant 0 : index
    %561 = vector.load %arg1[%c0_624, %c10_625, %c3_626, %c0_627] : memref<2x13x13x256xf32, #tpu.memory_space<vmem>>, vector<2x1x1x256xf32>
    %562 = vector.shape_cast %561 : vector<2x1x1x256xf32> to vector<2x256xf32>
    %563 = arith.addf %560, %562 : vector<2x256xf32>
    %c0_628 = arith.constant 0 : index
    %c11_629 = arith.constant 11 : index
    %c2_630 = arith.constant 2 : index
    %c0_631 = arith.constant 0 : index
    %564 = vector.load %arg1[%c0_628, %c11_629, %c2_630, %c0_631] : memref<2x13x13x256xf32, #tpu.memory_space<vmem>>, vector<2x1x1x256xf32>
    %565 = vector.shape_cast %564 : vector<2x1x1x256xf32> to vector<2x256xf32>
    %566 = arith.addf %563, %565 : vector<2x256xf32>
    %c0_632 = arith.constant 0 : index
    %c11_633 = arith.constant 11 : index
    %c3_634 = arith.constant 3 : index
    %c0_635 = arith.constant 0 : index
    %567 = vector.load %arg1[%c0_632, %c11_633, %c3_634, %c0_635] : memref<2x13x13x256xf32, #tpu.memory_space<vmem>>, vector<2x1x1x256xf32>
    %568 = vector.shape_cast %567 : vector<2x1x1x256xf32> to vector<2x256xf32>
    %569 = arith.addf %566, %568 : vector<2x256xf32>
    %cst_636 = arith.constant 2.500000e-01 : f32
    %570 = vector.broadcast %cst_636 : f32 to vector<2x256xf32>
    %571 = arith.mulf %569, %570 : vector<2x256xf32>
    %572 = arith.truncf %571 : vector<2x256xf32> to vector<2x256xbf16>
    %c31 = arith.constant 31 : index
    %c0_637 = arith.constant 0 : index
    %c0_638 = arith.constant 0 : index
    %573 = vector.load %arg2[%c31, %c0_637, %c0_638] : memref<36x256x10xbf16, #tpu.memory_space<vmem>>, vector<1x256x10xbf16>
    %574 = vector.shape_cast %573 : vector<1x256x10xbf16> to vector<256x10xbf16>
    %cst_639 = arith.constant dense<0.000000e+00> : vector<2x10xf32>
    %575 = tpu.matmul %572, %574, %cst_639 {dimension_numbers = #tpu.dot_dimension_numbers<[1], [0], [0], [1], [0, 0, 1, 1], [], []>} : vector<2x256xbf16>, vector<256x10xbf16>, vector<2x10xf32> -> vector<2x10xf32>
    %576 = arith.addf %558, %575 : vector<2x10xf32>
    %c0_640 = arith.constant 0 : index
    %c10_641 = arith.constant 10 : index
    %c4_642 = arith.constant 4 : index
    %c0_643 = arith.constant 0 : index
    %577 = vector.load %arg1[%c0_640, %c10_641, %c4_642, %c0_643] : memref<2x13x13x256xf32, #tpu.memory_space<vmem>>, vector<2x1x1x256xf32>
    %578 = vector.shape_cast %577 : vector<2x1x1x256xf32> to vector<2x256xf32>
    %c0_644 = arith.constant 0 : index
    %c10_645 = arith.constant 10 : index
    %c5_646 = arith.constant 5 : index
    %c0_647 = arith.constant 0 : index
    %579 = vector.load %arg1[%c0_644, %c10_645, %c5_646, %c0_647] : memref<2x13x13x256xf32, #tpu.memory_space<vmem>>, vector<2x1x1x256xf32>
    %580 = vector.shape_cast %579 : vector<2x1x1x256xf32> to vector<2x256xf32>
    %581 = arith.addf %578, %580 : vector<2x256xf32>
    %c0_648 = arith.constant 0 : index
    %c11_649 = arith.constant 11 : index
    %c4_650 = arith.constant 4 : index
    %c0_651 = arith.constant 0 : index
    %582 = vector.load %arg1[%c0_648, %c11_649, %c4_650, %c0_651] : memref<2x13x13x256xf32, #tpu.memory_space<vmem>>, vector<2x1x1x256xf32>
    %583 = vector.shape_cast %582 : vector<2x1x1x256xf32> to vector<2x256xf32>
    %584 = arith.addf %581, %583 : vector<2x256xf32>
    %c0_652 = arith.constant 0 : index
    %c11_653 = arith.constant 11 : index
    %c5_654 = arith.constant 5 : index
    %c0_655 = arith.constant 0 : index
    %585 = vector.load %arg1[%c0_652, %c11_653, %c5_654, %c0_655] : memref<2x13x13x256xf32, #tpu.memory_space<vmem>>, vector<2x1x1x256xf32>
    %586 = vector.shape_cast %585 : vector<2x1x1x256xf32> to vector<2x256xf32>
    %587 = arith.addf %584, %586 : vector<2x256xf32>
    %cst_656 = arith.constant 2.500000e-01 : f32
    %588 = vector.broadcast %cst_656 : f32 to vector<2x256xf32>
    %589 = arith.mulf %587, %588 : vector<2x256xf32>
    %590 = arith.truncf %589 : vector<2x256xf32> to vector<2x256xbf16>
    %c32 = arith.constant 32 : index
    %c0_657 = arith.constant 0 : index
    %c0_658 = arith.constant 0 : index
    %591 = vector.load %arg2[%c32, %c0_657, %c0_658] : memref<36x256x10xbf16, #tpu.memory_space<vmem>>, vector<1x256x10xbf16>
    %592 = vector.shape_cast %591 : vector<1x256x10xbf16> to vector<256x10xbf16>
    %cst_659 = arith.constant dense<0.000000e+00> : vector<2x10xf32>
    %593 = tpu.matmul %590, %592, %cst_659 {dimension_numbers = #tpu.dot_dimension_numbers<[1], [0], [0], [1], [0, 0, 1, 1], [], []>} : vector<2x256xbf16>, vector<256x10xbf16>, vector<2x10xf32> -> vector<2x10xf32>
    %594 = arith.addf %576, %593 : vector<2x10xf32>
    %c0_660 = arith.constant 0 : index
    %c10_661 = arith.constant 10 : index
    %c6_662 = arith.constant 6 : index
    %c0_663 = arith.constant 0 : index
    %595 = vector.load %arg1[%c0_660, %c10_661, %c6_662, %c0_663] : memref<2x13x13x256xf32, #tpu.memory_space<vmem>>, vector<2x1x1x256xf32>
    %596 = vector.shape_cast %595 : vector<2x1x1x256xf32> to vector<2x256xf32>
    %c0_664 = arith.constant 0 : index
    %c10_665 = arith.constant 10 : index
    %c7_666 = arith.constant 7 : index
    %c0_667 = arith.constant 0 : index
    %597 = vector.load %arg1[%c0_664, %c10_665, %c7_666, %c0_667] : memref<2x13x13x256xf32, #tpu.memory_space<vmem>>, vector<2x1x1x256xf32>
    %598 = vector.shape_cast %597 : vector<2x1x1x256xf32> to vector<2x256xf32>
    %599 = arith.addf %596, %598 : vector<2x256xf32>
    %c0_668 = arith.constant 0 : index
    %c11_669 = arith.constant 11 : index
    %c6_670 = arith.constant 6 : index
    %c0_671 = arith.constant 0 : index
    %600 = vector.load %arg1[%c0_668, %c11_669, %c6_670, %c0_671] : memref<2x13x13x256xf32, #tpu.memory_space<vmem>>, vector<2x1x1x256xf32>
    %601 = vector.shape_cast %600 : vector<2x1x1x256xf32> to vector<2x256xf32>
    %602 = arith.addf %599, %601 : vector<2x256xf32>
    %c0_672 = arith.constant 0 : index
    %c11_673 = arith.constant 11 : index
    %c7_674 = arith.constant 7 : index
    %c0_675 = arith.constant 0 : index
    %603 = vector.load %arg1[%c0_672, %c11_673, %c7_674, %c0_675] : memref<2x13x13x256xf32, #tpu.memory_space<vmem>>, vector<2x1x1x256xf32>
    %604 = vector.shape_cast %603 : vector<2x1x1x256xf32> to vector<2x256xf32>
    %605 = arith.addf %602, %604 : vector<2x256xf32>
    %cst_676 = arith.constant 2.500000e-01 : f32
    %606 = vector.broadcast %cst_676 : f32 to vector<2x256xf32>
    %607 = arith.mulf %605, %606 : vector<2x256xf32>
    %608 = arith.truncf %607 : vector<2x256xf32> to vector<2x256xbf16>
    %c33 = arith.constant 33 : index
    %c0_677 = arith.constant 0 : index
    %c0_678 = arith.constant 0 : index
    %609 = vector.load %arg2[%c33, %c0_677, %c0_678] : memref<36x256x10xbf16, #tpu.memory_space<vmem>>, vector<1x256x10xbf16>
    %610 = vector.shape_cast %609 : vector<1x256x10xbf16> to vector<256x10xbf16>
    %cst_679 = arith.constant dense<0.000000e+00> : vector<2x10xf32>
    %611 = tpu.matmul %608, %610, %cst_679 {dimension_numbers = #tpu.dot_dimension_numbers<[1], [0], [0], [1], [0, 0, 1, 1], [], []>} : vector<2x256xbf16>, vector<256x10xbf16>, vector<2x10xf32> -> vector<2x10xf32>
    %612 = arith.addf %594, %611 : vector<2x10xf32>
    %c0_680 = arith.constant 0 : index
    %c10_681 = arith.constant 10 : index
    %c8_682 = arith.constant 8 : index
    %c0_683 = arith.constant 0 : index
    %613 = vector.load %arg1[%c0_680, %c10_681, %c8_682, %c0_683] : memref<2x13x13x256xf32, #tpu.memory_space<vmem>>, vector<2x1x1x256xf32>
    %614 = vector.shape_cast %613 : vector<2x1x1x256xf32> to vector<2x256xf32>
    %c0_684 = arith.constant 0 : index
    %c10_685 = arith.constant 10 : index
    %c9_686 = arith.constant 9 : index
    %c0_687 = arith.constant 0 : index
    %615 = vector.load %arg1[%c0_684, %c10_685, %c9_686, %c0_687] : memref<2x13x13x256xf32, #tpu.memory_space<vmem>>, vector<2x1x1x256xf32>
    %616 = vector.shape_cast %615 : vector<2x1x1x256xf32> to vector<2x256xf32>
    %617 = arith.addf %614, %616 : vector<2x256xf32>
    %c0_688 = arith.constant 0 : index
    %c11_689 = arith.constant 11 : index
    %c8_690 = arith.constant 8 : index
    %c0_691 = arith.constant 0 : index
    %618 = vector.load %arg1[%c0_688, %c11_689, %c8_690, %c0_691] : memref<2x13x13x256xf32, #tpu.memory_space<vmem>>, vector<2x1x1x256xf32>
    %619 = vector.shape_cast %618 : vector<2x1x1x256xf32> to vector<2x256xf32>
    %620 = arith.addf %617, %619 : vector<2x256xf32>
    %c0_692 = arith.constant 0 : index
    %c11_693 = arith.constant 11 : index
    %c9_694 = arith.constant 9 : index
    %c0_695 = arith.constant 0 : index
    %621 = vector.load %arg1[%c0_692, %c11_693, %c9_694, %c0_695] : memref<2x13x13x256xf32, #tpu.memory_space<vmem>>, vector<2x1x1x256xf32>
    %622 = vector.shape_cast %621 : vector<2x1x1x256xf32> to vector<2x256xf32>
    %623 = arith.addf %620, %622 : vector<2x256xf32>
    %cst_696 = arith.constant 2.500000e-01 : f32
    %624 = vector.broadcast %cst_696 : f32 to vector<2x256xf32>
    %625 = arith.mulf %623, %624 : vector<2x256xf32>
    %626 = arith.truncf %625 : vector<2x256xf32> to vector<2x256xbf16>
    %c34 = arith.constant 34 : index
    %c0_697 = arith.constant 0 : index
    %c0_698 = arith.constant 0 : index
    %627 = vector.load %arg2[%c34, %c0_697, %c0_698] : memref<36x256x10xbf16, #tpu.memory_space<vmem>>, vector<1x256x10xbf16>
    %628 = vector.shape_cast %627 : vector<1x256x10xbf16> to vector<256x10xbf16>
    %cst_699 = arith.constant dense<0.000000e+00> : vector<2x10xf32>
    %629 = tpu.matmul %626, %628, %cst_699 {dimension_numbers = #tpu.dot_dimension_numbers<[1], [0], [0], [1], [0, 0, 1, 1], [], []>} : vector<2x256xbf16>, vector<256x10xbf16>, vector<2x10xf32> -> vector<2x10xf32>
    %630 = arith.addf %612, %629 : vector<2x10xf32>
    %c0_700 = arith.constant 0 : index
    %c10_701 = arith.constant 10 : index
    %c10_702 = arith.constant 10 : index
    %c0_703 = arith.constant 0 : index
    %631 = vector.load %arg1[%c0_700, %c10_701, %c10_702, %c0_703] : memref<2x13x13x256xf32, #tpu.memory_space<vmem>>, vector<2x1x1x256xf32>
    %632 = vector.shape_cast %631 : vector<2x1x1x256xf32> to vector<2x256xf32>
    %c0_704 = arith.constant 0 : index
    %c10_705 = arith.constant 10 : index
    %c11_706 = arith.constant 11 : index
    %c0_707 = arith.constant 0 : index
    %633 = vector.load %arg1[%c0_704, %c10_705, %c11_706, %c0_707] : memref<2x13x13x256xf32, #tpu.memory_space<vmem>>, vector<2x1x1x256xf32>
    %634 = vector.shape_cast %633 : vector<2x1x1x256xf32> to vector<2x256xf32>
    %635 = arith.addf %632, %634 : vector<2x256xf32>
    %c0_708 = arith.constant 0 : index
    %c11_709 = arith.constant 11 : index
    %c10_710 = arith.constant 10 : index
    %c0_711 = arith.constant 0 : index
    %636 = vector.load %arg1[%c0_708, %c11_709, %c10_710, %c0_711] : memref<2x13x13x256xf32, #tpu.memory_space<vmem>>, vector<2x1x1x256xf32>
    %637 = vector.shape_cast %636 : vector<2x1x1x256xf32> to vector<2x256xf32>
    %638 = arith.addf %635, %637 : vector<2x256xf32>
    %c0_712 = arith.constant 0 : index
    %c11_713 = arith.constant 11 : index
    %c11_714 = arith.constant 11 : index
    %c0_715 = arith.constant 0 : index
    %639 = vector.load %arg1[%c0_712, %c11_713, %c11_714, %c0_715] : memref<2x13x13x256xf32, #tpu.memory_space<vmem>>, vector<2x1x1x256xf32>
    %640 = vector.shape_cast %639 : vector<2x1x1x256xf32> to vector<2x256xf32>
    %641 = arith.addf %638, %640 : vector<2x256xf32>
    %cst_716 = arith.constant 2.500000e-01 : f32
    %642 = vector.broadcast %cst_716 : f32 to vector<2x256xf32>
    %643 = arith.mulf %641, %642 : vector<2x256xf32>
    %644 = arith.truncf %643 : vector<2x256xf32> to vector<2x256xbf16>
    %c35 = arith.constant 35 : index
    %c0_717 = arith.constant 0 : index
    %c0_718 = arith.constant 0 : index
    %645 = vector.load %arg2[%c35, %c0_717, %c0_718] : memref<36x256x10xbf16, #tpu.memory_space<vmem>>, vector<1x256x10xbf16>
    %646 = vector.shape_cast %645 : vector<1x256x10xbf16> to vector<256x10xbf16>
    %cst_719 = arith.constant dense<0.000000e+00> : vector<2x10xf32>
    %647 = tpu.matmul %644, %646, %cst_719 {dimension_numbers = #tpu.dot_dimension_numbers<[1], [0], [0], [1], [0, 0, 1, 1], [], []>} : vector<2x256xbf16>, vector<256x10xbf16>, vector<2x10xf32> -> vector<2x10xf32>
    %648 = arith.addf %630, %647 : vector<2x10xf32>
    %c0_720 = arith.constant 0 : index
    %c0_721 = arith.constant 0 : index
    %649 = vector.load %arg3[%c0_720, %c0_721] : memref<1x10xf32, #tpu.memory_space<vmem>>, vector<1x10xf32>
    %650 = vector.broadcast %649 : vector<1x10xf32> to vector<2x10xf32>
    %651 = arith.addf %648, %650 : vector<2x10xf32>
    %c0_722 = arith.constant 0 : index
    %c0_723 = arith.constant 0 : index
    %652 = vector.load %arg4[%c0_722, %c0_723] : memref<2x10xf32, #tpu.memory_space<vmem>>, vector<2x10xf32>
    tpu.vector_store %arg4[%c0_722, %c0_723], %651 {strides = array<i32>} : memref<2x10xf32, #tpu.memory_space<vmem>>, vector<2x10xf32>,
    return
  }
  func.func @transform_0(%arg0: i32) -> (i32, i32, i32, i32) {
    %c0_i32 = arith.constant 0 : i32
    %c0_i32_0 = arith.constant 0 : i32
    %c0_i32_1 = arith.constant 0 : i32
    %c0_i32_2 = arith.constant 0 : i32
    return %arg0, %c0_i32, %c0_i32_0, %c0_i32_1 : i32, i32, i32, i32
  }
  func.func @transform_1(%arg0: i32) -> (i32, i32, i32) {
    %c0_i32 = arith.constant 0 : i32
    %c0_i32_0 = arith.constant 0 : i32
    %c0_i32_1 = arith.constant 0 : i32
    %c0_i32_2 = arith.constant 0 : i32
    return %c0_i32, %c0_i32_0, %c0_i32_1 : i32, i32, i32
  }
  func.func @transform_2(%arg0: i32) -> (i32, i32) {
    %c0_i32 = arith.constant 0 : i32
    %c0_i32_0 = arith.constant 0 : i32
    %c0_i32_1 = arith.constant 0 : i32
    return %c0_i32, %c0_i32_0 : i32, i32
  }
  func.func @transform_3(%arg0: i32) -> (i32, i32) {
    %c0_i32 = arith.constant 0 : i32
    %c0_i32_0 = arith.constant 0 : i32
    return %arg0, %c0_i32 : i32, i32
  }
}

</mosaic_0001>

<llo_original>
// kernel: reglog_forward.1
$region0: #{reglog_forward.1}
  #allocation0 [shape = 'u32[]', space=smem, size = 0x4, offset = 0x4, fixed_abs, tag = 'smem constant byte address 0x4 - core index']
  #allocation1 [shape = 'u32[144,128]{1,0:T(1,128)}', space=vmem, size = 0x12000, scoped, tag = 'internal scratch']
  %s0 = inlined_call_operand.vmem [shape: f32[2,13,13,256], index: 0, kind: input, shape index: {}]
  %s1 = inlined_call_operand.vmem [shape: bf16[36,256,10], index: 1, kind: input, shape index: {}]
  %s2 = inlined_call_operand.vmem [shape: f32[1,10], index: 2, kind: input, shape index: {}]
  %s3 = inlined_call_operand.hbm [shape: f32[2,10], index: 3, kind: output, shape index: {}]
  %s4 = sld [smem:[#allocation0]]
  $region22: #{reglog_forward.1} parent=0
    _
  %s6 = ssub.s32 1, %s4
  %s7 = scalar_select 0, %s6, %s4
  $region1: #{reglog_forward.1} parent=0
    #allocation2 [shape = 'u8[1024]{0}', space=vmem, size = 0x400, scoped, tag = 'output window, operand 0, single buffered']
    #allocation3 [shape = 's32[1]{0}', space=sflag, size = 0x4, scoped, tag = 'scoped memory for reglog_forward.1']
    %8 = vsyncpa [#allocation3], 0
    // Predicated region
    $region2: #{reglog_forward.1} parent=1 // pred_check
      _
    $region3: #{reglog_forward.1} parent=1 // pred_check_branch
      %10 = sbr.rel (0) target = $region5
    $region4: #{reglog_forward.1} parent=1 // pred_region
      _
    $region5: #{reglog_forward.1} parent=1 // pred_fallthru
      _
    // Predicated region
    $region6: #{reglog_forward.1} parent=1 // pred_check
      _
    $region7: #{reglog_forward.1} parent=1 // pred_check_branch
      %12 = sbr.rel (0) target = $region9
    $region8: #{reglog_forward.1} parent=1 // pred_region
      _
    $region9: #{reglog_forward.1} parent=1 // pred_fallthru
      _
    // Predicated region
    $region10: #{reglog_forward.1} parent=1 // pred_check
      _
    $region11: #{reglog_forward.1} parent=1 // pred_check_branch
      %14 = sbr.rel (0) target = $region13
    $region12: #{reglog_forward.1} parent=1 // pred_region
      _
    $region13: #{reglog_forward.1} parent=1 // pred_fallthru
      _
    %v16 = vld [vmem:[%s0] ss:$8 sm:$0x3]
    %s17 = scalar_lea.vmem %s0, 416
    %v18 = vld [vmem:[%s17] ss:$8 sm:$0x3]
    %s19 = scalar_lea.vmem %s0, 1
    %v20 = vld [vmem:[%s19] ss:$8 sm:$0x3]
    %s21 = scalar_lea.vmem %s0, 417
    %v22 = vld [vmem:[%s21] ss:$8 sm:$0x3]
    %v23 = vadd.f32 %v16, %v20
    %v24 = vadd.f32 %v18, %v22
    %s25 = scalar_lea.vmem %s0, 32
    %v26 = vld [vmem:[%s25] ss:$8 sm:$0x3]
    %s27 = scalar_lea.vmem %s25, 416
    %v28 = vld [vmem:[%s27] ss:$8 sm:$0x3]
    %v29 = vadd.f32 %v23, %v26
    %v30 = vadd.f32 %v24, %v28
    %s31 = scalar_lea.vmem %s25, 1
    %v32 = vld [vmem:[%s31] ss:$8 sm:$0x3]
    %s33 = scalar_lea.vmem %s25, 417
    %v34 = vld [vmem:[%s33] ss:$8 sm:$0x3]
    %v35 = vadd.f32 %v29, %v32
    %v36 = vadd.f32 %v30, %v34
    %v37 = vmul.f32 %v35, 0.25
    %v38 = vmul.f32 %v36, 0.25
    %v41 = vlaneseq
    %v42 = vshrl.u32 %v41, 7
    %v43 = vsub.s32 0, %v42
    %v44 = vrot.slane %v37, %v43
    %v45 = vlaneseq
    %v46 = vshrl.u32 %v45, 7
    %v47 = vsub.s32 1, %v46
    %v48 = vrot.slane %v37, %v47
    %v49 = vlaneseq
    %v50 = vshrl.u32 %v49, 7
    %v51 = vsub.s32 0, %v50
    %v52 = vrot.slane %v38, %v51
    %v53 = vlaneseq
    %v54 = vshrl.u32 %v53, 7
    %v55 = vsub.s32 1, %v54
    %v56 = vrot.slane %v38, %v55
    %v61 = vpack.c.bf16 %v44, %v44
    %v62 = vpack.c.bf16 %v48, %v48
    %v63 = vpack.c.bf16 %v52, %v52
    %v64 = vpack.c.bf16 %v56, %v56
    %v65 = vld [vmem:[%s1] sm:$0xf]
    %v66 = vld [vmem:[%s1 + $0x4] sm:$0xf]
    %v67 = vld [vmem:[%s1 + $0x8] sm:$0xf]
    %v68 = vld [vmem:[%s1 + $0xc] sm:$0xf]
    %v69 = vld [vmem:[%s1 + $0x10] sm:$0xf]
    %v70 = vld [vmem:[%s1 + $0x14] sm:$0xf]
    %v71 = vld [vmem:[%s1 + $0x18] sm:$0xf]
    %v72 = vld [vmem:[%s1 + $0x1c] sm:$0xf]
    %v73 = vld [vmem:[%s1 + $0x20] sm:$0xf]
    %v74 = vld [vmem:[%s1 + $0x24] sm:$0xf]
    %v75 = vld [vmem:[%s1 + $0x28] sm:$0xf]
    %v76 = vld [vmem:[%s1 + $0x2c] sm:$0xf]
    %v77 = vld [vmem:[%s1 + $0x30] sm:$0xf]
    %v78 = vld [vmem:[%s1 + $0x34] sm:$0xf]
    %v79 = vld [vmem:[%s1 + $0x38] sm:$0xf]
    %v80 = vld [vmem:[%s1 + $0x3c] sm:$0xf]
    %v81 = vld [vmem:[%s1 + $0x40] sm:$0xf]
    %v82 = vld [vmem:[%s1 + $0x44] sm:$0xf]
    %v83 = vld [vmem:[%s1 + $0x48] sm:$0xf]
    %v84 = vld [vmem:[%s1 + $0x4c] sm:$0xf]
    %v85 = vld [vmem:[%s1 + $0x50] sm:$0xf]
    %v86 = vld [vmem:[%s1 + $0x54] sm:$0xf]
    %v87 = vld [vmem:[%s1 + $0x58] sm:$0xf]
    %v88 = vld [vmem:[%s1 + $0x5c] sm:$0xf]
    %v89 = vld [vmem:[%s1 + $0x60] sm:$0xf]
    %v90 = vld [vmem:[%s1 + $0x64] sm:$0xf]
    %v91 = vld [vmem:[%s1 + $0x68] sm:$0xf]
    %v92 = vld [vmem:[%s1 + $0x6c] sm:$0xf]
    %v93 = vld [vmem:[%s1 + $0x70] sm:$0xf]
    %v94 = vld [vmem:[%s1 + $0x74] sm:$0xf]
    %v95 = vld [vmem:[%s1 + $0x78] sm:$0xf]
    %v96 = vld [vmem:[%s1 + $0x7c] sm:$0xf]
    %s97 = scalar_lea.vmem %s0, 2
    %v98 = vld [vmem:[%s97] ss:$8 sm:$0x3]
    %s99 = scalar_lea.vmem %s0, 418
    %v100 = vld [vmem:[%s99] ss:$8 sm:$0x3]
    %s101 = scalar_lea.vmem %s0, 3
    %v102 = vld [vmem:[%s101] ss:$8 sm:$0x3]
    %s103 = scalar_lea.vmem %s0, 419
    %v104 = vld [vmem:[%s103] ss:$8 sm:$0x3]
    %v105 = vadd.f32 %v98, %v102
    %v106 = vadd.f32 %v100, %v104
    %s107 = scalar_lea.vmem %s25, 2
    %v108 = vld [vmem:[%s107] ss:$8 sm:$0x3]
    %s109 = scalar_lea.vmem %s25, 418
    %v110 = vld [vmem:[%s109] ss:$8 sm:$0x3]
    %v111 = vadd.f32 %v105, %v108
    %v112 = vadd.f32 %v106, %v110
    %s113 = scalar_lea.vmem %s25, 3
    %v114 = vld [vmem:[%s113] ss:$8 sm:$0x3]
    %s115 = scalar_lea.vmem %s25, 419
    %v116 = vld [vmem:[%s115] ss:$8 sm:$0x3]
    %v117 = vadd.f32 %v111, %v114
    %v118 = vadd.f32 %v112, %v116
    %v119 = vmul.f32 %v117, 0.25
    %v120 = vmul.f32 %v118, 0.25
    %v123 = vlaneseq
    %v124 = vshrl.u32 %v123, 7
    %v125 = vsub.s32 0, %v124
    %v126 = vrot.slane %v119, %v125
    %v127 = vlaneseq
    %v128 = vshrl.u32 %v127, 7
    %v129 = vsub.s32 1, %v128
    %v130 = vrot.slane %v119, %v129
    %v131 = vlaneseq
    %v132 = vshrl.u32 %v131, 7
    %v133 = vsub.s32 0, %v132
    %v134 = vrot.slane %v120, %v133
    %v135 = vlaneseq
    %v136 = vshrl.u32 %v135, 7
    %v137 = vsub.s32 1, %v136
    %v138 = vrot.slane %v120, %v137
    %v143 = vpack.c.bf16 %v126, %v126
    %v144 = vpack.c.bf16 %v130, %v130
    %v145 = vpack.c.bf16 %v134, %v134
    %v146 = vpack.c.bf16 %v138, %v138
    %s147 = scalar_lea.vmem %s1, 128
    %v148 = vld [vmem:[%s147] sm:$0xf]
    %v149 = vld [vmem:[%s147 + $0x4] sm:$0xf]
    %v150 = vld [vmem:[%s147 + $0x8] sm:$0xf]
    %v151 = vld [vmem:[%s147 + $0xc] sm:$0xf]
    %v152 = vld [vmem:[%s147 + $0x10] sm:$0xf]
    %v153 = vld [vmem:[%s147 + $0x14] sm:$0xf]
    %v154 = vld [vmem:[%s147 + $0x18] sm:$0xf]
    %v155 = vld [vmem:[%s147 + $0x1c] sm:$0xf]
    %v156 = vld [vmem:[%s147 + $0x20] sm:$0xf]
    %v157 = vld [vmem:[%s147 + $0x24] sm:$0xf]
    %v158 = vld [vmem:[%s147 + $0x28] sm:$0xf]
    %v159 = vld [vmem:[%s147 + $0x2c] sm:$0xf]
    %v160 = vld [vmem:[%s147 + $0x30] sm:$0xf]
    %v161 = vld [vmem:[%s147 + $0x34] sm:$0xf]
    %v162 = vld [vmem:[%s147 + $0x38] sm:$0xf]
    %v163 = vld [vmem:[%s147 + $0x3c] sm:$0xf]
    %v164 = vld [vmem:[%s147 + $0x40] sm:$0xf]
    %v165 = vld [vmem:[%s147 + $0x44] sm:$0xf]
    %v166 = vld [vmem:[%s147 + $0x48] sm:$0xf]
    %v167 = vld [vmem:[%s147 + $0x4c] sm:$0xf]
    %v168 = vld [vmem:[%s147 + $0x50] sm:$0xf]
    %v169 = vld [vmem:[%s147 + $0x54] sm:$0xf]
    %v170 = vld [vmem:[%s147 + $0x58] sm:$0xf]
    %v171 = vld [vmem:[%s147 + $0x5c] sm:$0xf]
    %v172 = vld [vmem:[%s147 + $0x60] sm:$0xf]
    %v173 = vld [vmem:[%s147 + $0x64] sm:$0xf]
    %v174 = vld [vmem:[%s147 + $0x68] sm:$0xf]
    %v175 = vld [vmem:[%s147 + $0x6c] sm:$0xf]
    %v176 = vld [vmem:[%s147 + $0x70] sm:$0xf]
    %v177 = vld [vmem:[%s147 + $0x74] sm:$0xf]
    %v178 = vld [vmem:[%s147 + $0x78] sm:$0xf]
    %v179 = vld [vmem:[%s147 + $0x7c] sm:$0xf]
    %v184 = vunpack.c.l.b16 %v143
    %v185 = vunpack.c.l.b16 %v144
    %v186 = vunpack.c.l.b16 %v145
    %v187 = vunpack.c.l.b16 %v146
    %v188 = vrot.slane %v186, 7
    %vm189 = vcmask 1041409
    %v190 = vsel %vm189, %v188, %v184
    %v191 = vrot.slane %v187, 7
    %v192 = vsel %vm189, %v191, %v185
    %v193 = vpack.c.b16 %v190, %v190
    %v194 = vpack.c.b16 %v192, %v192
    %v229 = vunpack.c.l.b16 %v148
    %v230 = vunpack.c.l.b16 %v149
    %v231 = vunpack.c.l.b16 %v150
    %v232 = vunpack.c.l.b16 %v151
    %v233 = vunpack.c.l.b16 %v152
    %v234 = vunpack.c.l.b16 %v153
    %v235 = vunpack.c.l.b16 %v154
    %v236 = vunpack.c.l.b16 %v155
    %v237 = vunpack.c.l.b16 %v156
    %v238 = vunpack.c.l.b16 %v157
    %v239 = vunpack.c.l.b16 %v158
    %v240 = vunpack.c.l.b16 %v159
    %v241 = vunpack.c.l.b16 %v160
    %v242 = vunpack.c.l.b16 %v161
    %v243 = vunpack.c.l.b16 %v162
    %v244 = vunpack.c.l.b16 %v163
    %v245 = vunpack.c.l.b16 %v164
    %v246 = vunpack.c.l.b16 %v165
    %v247 = vunpack.c.l.b16 %v166
    %v248 = vunpack.c.l.b16 %v167
    %v249 = vunpack.c.l.b16 %v168
    %v250 = vunpack.c.l.b16 %v169
    %v251 = vunpack.c.l.b16 %v170
    %v252 = vunpack.c.l.b16 %v171
    %v253 = vunpack.c.l.b16 %v172
    %v254 = vunpack.c.l.b16 %v173
    %v255 = vunpack.c.l.b16 %v174
    %v256 = vunpack.c.l.b16 %v175
    %v257 = vunpack.c.l.b16 %v176
    %v258 = vunpack.c.l.b16 %v177
    %v259 = vunpack.c.l.b16 %v178
    %v260 = vunpack.c.l.b16 %v179
    %v261 = vpack.c.b16 %v230, %v229
    %v262 = vpack.c.b16 %v232, %v231
    %v263 = vpack.c.b16 %v234, %v233
    %v264 = vpack.c.b16 %v236, %v235
    %v265 = vpack.c.b16 %v238, %v237
    %v266 = vpack.c.b16 %v240, %v239
    %v267 = vpack.c.b16 %v242, %v241
    %v268 = vpack.c.b16 %v244, %v243
    %v269 = vpack.c.b16 %v246, %v245
    %v270 = vpack.c.b16 %v248, %v247
    %v271 = vpack.c.b16 %v250, %v249
    %v272 = vpack.c.b16 %v252, %v251
    %v273 = vpack.c.b16 %v254, %v253
    %v274 = vpack.c.b16 %v256, %v255
    %v275 = vpack.c.b16 %v258, %v257
    %v276 = vpack.c.b16 %v260, %v259
    %293 = vmatprep.subr.bf16.mxu0 0
    %294 = vmatpush1.bf16.msra.mxu0 %v268
    %295 = vmatprep.subr.bf16.mxu0 0
    %296 = vmatpush1.bf16.msra.mxu0 %v267
    %297 = vmatprep.subr.bf16.mxu0 0
    %298 = vmatpush1.bf16.msra.mxu0 %v266
    %299 = vmatprep.subr.bf16.mxu0 0
    %300 = vmatpush1.bf16.msra.mxu0 %v265
    %301 = vmatprep.subr.bf16.mxu0 0
    %302 = vmatpush1.bf16.msra.mxu0 %v264
    %303 = vmatprep.subr.bf16.mxu0 0
    %304 = vmatpush1.bf16.msra.mxu0 %v263
    %305 = vmatprep.subr.bf16.mxu0 0
    %306 = vmatpush1.bf16.msra.mxu0 %v262
    %307 = vmatprep.subr.bf16.mxu0 0
    %308 = vmatpush1.bf16.msra.mxu0 %v261
    %309 = vmatprep.subr.bf16.mxu0 0
    %310 = vmatpush2.bf16.msra.mxu0 %v276
    %311 = vmatprep.subr.bf16.mxu0 0
    %312 = vmatpush2.bf16.msra.mxu0 %v275
    %313 = vmatprep.subr.bf16.mxu0 0
    %314 = vmatpush2.bf16.msra.mxu0 %v274
    %315 = vmatprep.subr.bf16.mxu0 0
    %316 = vmatpush2.bf16.msra.mxu0 %v273
    %317 = vmatprep.subr.bf16.mxu0 0
    %318 = vmatpush2.bf16.msra.mxu0 %v272
    %319 = vmatprep.subr.bf16.mxu0 0
    %320 = vmatpush2.bf16.msra.mxu0 %v271
    %321 = vmatprep.subr.bf16.mxu0 0
    %322 = vmatpush2.bf16.msra.mxu0 %v270
    %323 = vmatprep.subr.bf16.mxu0 0
    %324 = vmatpush2.bf16.msra.mxu0 %v269
    %325 = vmatprep.mubr.bf16.mxu0 %v194
    %326 = vmatmul.mubr.bf16.gmra.mxu0 %v193
    %v327 = vpop.f32.mrf.mxu0
    %v328 = vadd.f32 0.0, %v327
    %v329 = vpop.f32.mrf.mxu0
    %v330 = vpop.f32.mrf.mxu0
    %v331 = vpop.f32.mrf.mxu0
    %332 = vdwg.mxu0
    %v337 = vunpack.c.l.b16 %v61
    %v338 = vunpack.c.l.b16 %v62
    %v339 = vunpack.c.l.b16 %v63
    %v340 = vunpack.c.l.b16 %v64
    %v341 = vrot.slane %v339, 7
    %v342 = vsel %vm189, %v341, %v337
    %v343 = vrot.slane %v340, 7
    %v344 = vsel %vm189, %v343, %v338
    %v345 = vpack.c.b16 %v342, %v342
    %v346 = vpack.c.b16 %v344, %v344
    %v381 = vunpack.c.l.b16 %v65
    %v382 = vunpack.c.l.b16 %v66
    %v383 = vunpack.c.l.b16 %v67
    %v384 = vunpack.c.l.b16 %v68
    %v385 = vunpack.c.l.b16 %v69
    %v386 = vunpack.c.l.b16 %v70
    %v387 = vunpack.c.l.b16 %v71
    %v388 = vunpack.c.l.b16 %v72
    %v389 = vunpack.c.l.b16 %v73
    %v390 = vunpack.c.l.b16 %v74
    %v391 = vunpack.c.l.b16 %v75
    %v392 = vunpack.c.l.b16 %v76
    %v393 = vunpack.c.l.b16 %v77
    %v394 = vunpack.c.l.b16 %v78
    %v395 = vunpack.c.l.b16 %v79
    %v396 = vunpack.c.l.b16 %v80
    %v397 = vunpack.c.l.b16 %v81
    %v398 = vunpack.c.l.b16 %v82
    %v399 = vunpack.c.l.b16 %v83
    %v400 = vunpack.c.l.b16 %v84
    %v401 = vunpack.c.l.b16 %v85
    %v402 = vunpack.c.l.b16 %v86
    %v403 = vunpack.c.l.b16 %v87
    %v404 = vunpack.c.l.b16 %v88
    %v405 = vunpack.c.l.b16 %v89
    %v406 = vunpack.c.l.b16 %v90
    %v407 = vunpack.c.l.b16 %v91
    %v408 = vunpack.c.l.b16 %v92
    %v409 = vunpack.c.l.b16 %v93
    %v410 = vunpack.c.l.b16 %v94
    %v411 = vunpack.c.l.b16 %v95
    %v412 = vunpack.c.l.b16 %v96
    %v413 = vpack.c.b16 %v382, %v381
    %v414 = vpack.c.b16 %v384, %v383
    %v415 = vpack.c.b16 %v386, %v385
    %v416 = vpack.c.b16 %v388, %v387
    %v417 = vpack.c.b16 %v390, %v389
    %v418 = vpack.c.b16 %v392, %v391
    %v419 = vpack.c.b16 %v394, %v393
    %v420 = vpack.c.b16 %v396, %v395
    %v421 = vpack.c.b16 %v398, %v397
    %v422 = vpack.c.b16 %v400, %v399
    %v423 = vpack.c.b16 %v402, %v401
    %v424 = vpack.c.b16 %v404, %v403
    %v425 = vpack.c.b16 %v406, %v405
    %v426 = vpack.c.b16 %v408, %v407
    %v427 = vpack.c.b16 %v410, %v409
    %v428 = vpack.c.b16 %v412, %v411
    %445 = vmatprep.subr.bf16.mxu0 0
    %446 = vmatpush1.bf16.msra.mxu0 %v420
    %447 = vmatprep.subr.bf16.mxu0 0
    %448 = vmatpush1.bf16.msra.mxu0 %v419
    %449 = vmatprep.subr.bf16.mxu0 0
    %450 = vmatpush1.bf16.msra.mxu0 %v418
    %451 = vmatprep.subr.bf16.mxu0 0
    %452 = vmatpush1.bf16.msra.mxu0 %v417
    %453 = vmatprep.subr.bf16.mxu0 0
    %454 = vmatpush1.bf16.msra.mxu0 %v416
    %455 = vmatprep.subr.bf16.mxu0 0
    %456 = vmatpush1.bf16.msra.mxu0 %v415
    %457 = vmatprep.subr.bf16.mxu0 0
    %458 = vmatpush1.bf16.msra.mxu0 %v414
    %459 = vmatprep.subr.bf16.mxu0 0
    %460 = vmatpush1.bf16.msra.mxu0 %v413
    %461 = vmatprep.subr.bf16.mxu0 0
    %462 = vmatpush2.bf16.msra.mxu0 %v428
    %463 = vmatprep.subr.bf16.mxu0 0
    %464 = vmatpush2.bf16.msra.mxu0 %v427
    %465 = vmatprep.subr.bf16.mxu0 0
    %466 = vmatpush2.bf16.msra.mxu0 %v426
    %467 = vmatprep.subr.bf16.mxu0 0
    %468 = vmatpush2.bf16.msra.mxu0 %v425
    %469 = vmatprep.subr.bf16.mxu0 0
    %470 = vmatpush2.bf16.msra.mxu0 %v424
    %471 = vmatprep.subr.bf16.mxu0 0
    %472 = vmatpush2.bf16.msra.mxu0 %v423
    %473 = vmatprep.subr.bf16.mxu0 0
    %474 = vmatpush2.bf16.msra.mxu0 %v422
    %475 = vmatprep.subr.bf16.mxu0 0
    %476 = vmatpush2.bf16.msra.mxu0 %v421
    %477 = vmatprep.mubr.bf16.mxu0 %v346
    %478 = vmatmul.mubr.bf16.gmra.mxu0 %v345
    %v479 = vpop.f32.mrf.mxu0
    %v480 = vadd.f32 %v328, %v479
    %v481 = vpop.f32.mrf.mxu0
    %v482 = vpop.f32.mrf.mxu0
    %v483 = vpop.f32.mrf.mxu0
    %484 = vdwg.mxu0
    %s485 = scalar_lea.vmem %s0, 4
    %v486 = vld [vmem:[%s485] ss:$8 sm:$0x3]
    %s487 = scalar_lea.vmem %s0, 420
    %v488 = vld [vmem:[%s487] ss:$8 sm:$0x3]
    %s489 = scalar_lea.vmem %s0, 5
    %v490 = vld [vmem:[%s489] ss:$8 sm:$0x3]
    %s491 = scalar_lea.vmem %s0, 421
    %v492 = vld [vmem:[%s491] ss:$8 sm:$0x3]
    %v493 = vadd.f32 %v486, %v490
    %v494 = vadd.f32 %v488, %v492
    %s495 = scalar_lea.vmem %s25, 4
    %v496 = vld [vmem:[%s495] ss:$8 sm:$0x3]
    %s497 = scalar_lea.vmem %s25, 420
    %v498 = vld [vmem:[%s497] ss:$8 sm:$0x3]
    %v499 = vadd.f32 %v493, %v496
    %v500 = vadd.f32 %v494, %v498
    %s501 = scalar_lea.vmem %s25, 5
    %v502 = vld [vmem:[%s501] ss:$8 sm:$0x3]
    %s503 = scalar_lea.vmem %s25, 421
    %v504 = vld [vmem:[%s503] ss:$8 sm:$0x3]
    %v505 = vadd.f32 %v499, %v502
    %v506 = vadd.f32 %v500, %v504
    %v507 = vmul.f32 %v505, 0.25
    %v508 = vmul.f32 %v506, 0.25
    %v511 = vlaneseq
    %v512 = vshrl.u32 %v511, 7
    %v513 = vsub.s32 0, %v512
    %v514 = vrot.slane %v507, %v513
    %v515 = vlaneseq
    %v516 = vshrl.u32 %v515, 7
    %v517 = vsub.s32 1, %v516
    %v518 = vrot.slane %v507, %v517
    %v519 = vlaneseq
    %v520 = vshrl.u32 %v519, 7
    %v521 = vsub.s32 0, %v520
    %v522 = vrot.slane %v508, %v521
    %v523 = vlaneseq
    %v524 = vshrl.u32 %v523, 7
    %v525 = vsub.s32 1, %v524
    %v526 = vrot.slane %v508, %v525
    %v531 = vpack.c.bf16 %v514, %v514
    %v532 = vpack.c.bf16 %v518, %v518
    %v533 = vpack.c.bf16 %v522, %v522
    %v534 = vpack.c.bf16 %v526, %v526
    %s535 = scalar_lea.vmem %s1, 256
    %v536 = vld [vmem:[%s535] sm:$0xf]
    %v537 = vld [vmem:[%s535 + $0x4] sm:$0xf]
    %v538 = vld [vmem:[%s535 + $0x8] sm:$0xf]
    %v539 = vld [vmem:[%s535 + $0xc] sm:$0xf]
    %v540 = vld [vmem:[%s535 + $0x10] sm:$0xf]
    %v541 = vld [vmem:[%s535 + $0x14] sm:$0xf]
    %v542 = vld [vmem:[%s535 + $0x18] sm:$0xf]
    %v543 = vld [vmem:[%s535 + $0x1c] sm:$0xf]
    %v544 = vld [vmem:[%s535 + $0x20] sm:$0xf]
    %v545 = vld [vmem:[%s535 + $0x24] sm:$0xf]
    %v546 = vld [vmem:[%s535 + $0x28] sm:$0xf]
    %v547 = vld [vmem:[%s535 + $0x2c] sm:$0xf]
    %v548 = vld [vmem:[%s535 + $0x30] sm:$0xf]
    %v549 = vld [vmem:[%s535 + $0x34] sm:$0xf]
    %v550 = vld [vmem:[%s535 + $0x38] sm:$0xf]
    %v551 = vld [vmem:[%s535 + $0x3c] sm:$0xf]
    %v552 = vld [vmem:[%s535 + $0x40] sm:$0xf]
    %v553 = vld [vmem:[%s535 + $0x44] sm:$0xf]
    %v554 = vld [vmem:[%s535 + $0x48] sm:$0xf]
    %v555 = vld [vmem:[%s535 + $0x4c] sm:$0xf]
    %v556 = vld [vmem:[%s535 + $0x50] sm:$0xf]
    %v557 = vld [vmem:[%s535 + $0x54] sm:$0xf]
    %v558 = vld [vmem:[%s535 + $0x58] sm:$0xf]
    %v559 = vld [vmem:[%s535 + $0x5c] sm:$0xf]
    %v560 = vld [vmem:[%s535 + $0x60] sm:$0xf]
    %v561 = vld [vmem:[%s535 + $0x64] sm:$0xf]
    %v562 = vld [vmem:[%s535 + $0x68] sm:$0xf]
    %v563 = vld [vmem:[%s535 + $0x6c] sm:$0xf]
    %v564 = vld [vmem:[%s535 + $0x70] sm:$0xf]
    %v565 = vld [vmem:[%s535 + $0x74] sm:$0xf]
    %v566 = vld [vmem:[%s535 + $0x78] sm:$0xf]
    %v567 = vld [vmem:[%s535 + $0x7c] sm:$0xf]
    %v572 = vunpack.c.l.b16 %v531
    %v573 = vunpack.c.l.b16 %v532
    %v574 = vunpack.c.l.b16 %v533
    %v575 = vunpack.c.l.b16 %v534
    %v576 = vrot.slane %v574, 7
    %v577 = vsel %vm189, %v576, %v572
    %v578 = vrot.slane %v575, 7
    %v579 = vsel %vm189, %v578, %v573
    %v580 = vpack.c.b16 %v577, %v577
    %v581 = vpack.c.b16 %v579, %v579
    %v616 = vunpack.c.l.b16 %v536
    %v617 = vunpack.c.l.b16 %v537
    %v618 = vunpack.c.l.b16 %v538
    %v619 = vunpack.c.l.b16 %v539
    %v620 = vunpack.c.l.b16 %v540
    %v621 = vunpack.c.l.b16 %v541
    %v622 = vunpack.c.l.b16 %v542
    %v623 = vunpack.c.l.b16 %v543
    %v624 = vunpack.c.l.b16 %v544
    %v625 = vunpack.c.l.b16 %v545
    %v626 = vunpack.c.l.b16 %v546
    %v627 = vunpack.c.l.b16 %v547
    %v628 = vunpack.c.l.b16 %v548
    %v629 = vunpack.c.l.b16 %v549
    %v630 = vunpack.c.l.b16 %v550
    %v631 = vunpack.c.l.b16 %v551
    %v632 = vunpack.c.l.b16 %v552
    %v633 = vunpack.c.l.b16 %v553
    %v634 = vunpack.c.l.b16 %v554
    %v635 = vunpack.c.l.b16 %v555
    %v636 = vunpack.c.l.b16 %v556
    %v637 = vunpack.c.l.b16 %v557
    %v638 = vunpack.c.l.b16 %v558
    %v639 = vunpack.c.l.b16 %v559
    %v640 = vunpack.c.l.b16 %v560
    %v641 = vunpack.c.l.b16 %v561
    %v642 = vunpack.c.l.b16 %v562
    %v643 = vunpack.c.l.b16 %v563
    %v644 = vunpack.c.l.b16 %v564
    %v645 = vunpack.c.l.b16 %v565
    %v646 = vunpack.c.l.b16 %v566
    %v647 = vunpack.c.l.b16 %v567
    %v648 = vpack.c.b16 %v617, %v616
    %v649 = vpack.c.b16 %v619, %v618
    %v650 = vpack.c.b16 %v621, %v620
    %v651 = vpack.c.b16 %v623, %v622
    %v652 = vpack.c.b16 %v625, %v624
    %v653 = vpack.c.b16 %v627, %v626
    %v654 = vpack.c.b16 %v629, %v628
    %v655 = vpack.c.b16 %v631, %v630
    %v656 = vpack.c.b16 %v633, %v632
    %v657 = vpack.c.b16 %v635, %v634
    %v658 = vpack.c.b16 %v637, %v636
    %v659 = vpack.c.b16 %v639, %v638
    %v660 = vpack.c.b16 %v641, %v640
    %v661 = vpack.c.b16 %v643, %v642
    %v662 = vpack.c.b16 %v645, %v644
    %v663 = vpack.c.b16 %v647, %v646
    %680 = vmatprep.subr.bf16.mxu0 0
    %681 = vmatpush1.bf16.msra.mxu0 %v655
    %682 = vmatprep.subr.bf16.mxu0 0
    %683 = vmatpush1.bf16.msra.mxu0 %v654
    %684 = vmatprep.subr.bf16.mxu0 0
    %685 = vmatpush1.bf16.msra.mxu0 %v653
    %686 = vmatprep.subr.bf16.mxu0 0
    %687 = vmatpush1.bf16.msra.mxu0 %v652
    %688 = vmatprep.subr.bf16.mxu0 0
    %689 = vmatpush1.bf16.msra.mxu0 %v651
    %690 = vmatprep.subr.bf16.mxu0 0
    %691 = vmatpush1.bf16.msra.mxu0 %v650
    %692 = vmatprep.subr.bf16.mxu0 0
    %693 = vmatpush1.bf16.msra.mxu0 %v649
    %694 = vmatprep.subr.bf16.mxu0 0
    %695 = vmatpush1.bf16.msra.mxu0 %v648
    %696 = vmatprep.subr.bf16.mxu0 0
    %697 = vmatpush2.bf16.msra.mxu0 %v663
    %698 = vmatprep.subr.bf16.mxu0 0
    %699 = vmatpush2.bf16.msra.mxu0 %v662
    %700 = vmatprep.subr.bf16.mxu0 0
    %701 = vmatpush2.bf16.msra.mxu0 %v661
    %702 = vmatprep.subr.bf16.mxu0 0
    %703 = vmatpush2.bf16.msra.mxu0 %v660
    %704 = vmatprep.subr.bf16.mxu0 0
    %705 = vmatpush2.bf16.msra.mxu0 %v659
    %706 = vmatprep.subr.bf16.mxu0 0
    %707 = vmatpush2.bf16.msra.mxu0 %v658
    %708 = vmatprep.subr.bf16.mxu0 0
    %709 = vmatpush2.bf16.msra.mxu0 %v657
    %710 = vmatprep.subr.bf16.mxu0 0
    %711 = vmatpush2.bf16.msra.mxu0 %v656
    %712 = vmatprep.mubr.bf16.mxu0 %v581
    %713 = vmatmul.mubr.bf16.gmra.mxu0 %v580
    %v714 = vpop.f32.mrf.mxu0
    %v715 = vadd.f32 0.0, %v714
    %v716 = vpop.f32.mrf.mxu0
    %v717 = vpop.f32.mrf.mxu0
    %v718 = vpop.f32.mrf.mxu0
    %719 = vdwg.mxu0
    %v720 = vadd.f32 %v480, %v715
    %s721 = scalar_lea.vmem %s0, 6
    %v722 = vld [vmem:[%s721] ss:$8 sm:$0x3]
    %s723 = scalar_lea.vmem %s0, 422
    %v724 = vld [vmem:[%s723] ss:$8 sm:$0x3]
    %s725 = scalar_lea.vmem %s0, 7
    %v726 = vld [vmem:[%s725] ss:$8 sm:$0x3]
    %s727 = scalar_lea.vmem %s0, 423
    %v728 = vld [vmem:[%s727] ss:$8 sm:$0x3]
    %v729 = vadd.f32 %v722, %v726
    %v730 = vadd.f32 %v724, %v728
    %s731 = scalar_lea.vmem %s25, 6
    %v732 = vld [vmem:[%s731] ss:$8 sm:$0x3]
    %s733 = scalar_lea.vmem %s25, 422
    %v734 = vld [vmem:[%s733] ss:$8 sm:$0x3]
    %v735 = vadd.f32 %v729, %v732
    %v736 = vadd.f32 %v730, %v734
    %s737 = scalar_lea.vmem %s25, 7
    %v738 = vld [vmem:[%s737] ss:$8 sm:$0x3]
    %s739 = scalar_lea.vmem %s25, 423
    %v740 = vld [vmem:[%s739] ss:$8 sm:$0x3]
    %v741 = vadd.f32 %v735, %v738
    %v742 = vadd.f32 %v736, %v740
    %v743 = vmul.f32 %v741, 0.25
    %v744 = vmul.f32 %v742, 0.25
    %v747 = vlaneseq
    %v748 = vshrl.u32 %v747, 7
    %v749 = vsub.s32 0, %v748
    %v750 = vrot.slane %v743, %v749
    %v751 = vlaneseq
    %v752 = vshrl.u32 %v751, 7
    %v753 = vsub.s32 1, %v752
    %v754 = vrot.slane %v743, %v753
    %v755 = vlaneseq
    %v756 = vshrl.u32 %v755, 7
    %v757 = vsub.s32 0, %v756
    %v758 = vrot.slane %v744, %v757
    %v759 = vlaneseq
    %v760 = vshrl.u32 %v759, 7
    %v761 = vsub.s32 1, %v760
    %v762 = vrot.slane %v744, %v761
    %v767 = vpack.c.bf16 %v750, %v750
    %v768 = vpack.c.bf16 %v754, %v754
    %v769 = vpack.c.bf16 %v758, %v758
    %v770 = vpack.c.bf16 %v762, %v762
    %s771 = scalar_lea.vmem %s1, 384
    %v772 = vld [vmem:[%s771] sm:$0xf]
    %v773 = vld [vmem:[%s771 + $0x4] sm:$0xf]
    %v774 = vld [vmem:[%s771 + $0x8] sm:$0xf]
    %v775 = vld [vmem:[%s771 + $0xc] sm:$0xf]
    %v776 = vld [vmem:[%s771 + $0x10] sm:$0xf]
    %v777 = vld [vmem:[%s771 + $0x14] sm:$0xf]
    %v778 = vld [vmem:[%s771 + $0x18] sm:$0xf]
    %v779 = vld [vmem:[%s771 + $0x1c] sm:$0xf]
    %v780 = vld [vmem:[%s771 + $0x20] sm:$0xf]
    %v781 = vld [vmem:[%s771 + $0x24] sm:$0xf]
    %v782 = vld [vmem:[%s771 + $0x28] sm:$0xf]
    %v783 = vld [vmem:[%s771 + $0x2c] sm:$0xf]
    %v784 = vld [vmem:[%s771 + $0x30] sm:$0xf]
    %v785 = vld [vmem:[%s771 + $0x34] sm:$0xf]
    %v786 = vld [vmem:[%s771 + $0x38] sm:$0xf]
    %v787 = vld [vmem:[%s771 + $0x3c] sm:$0xf]
    %v788 = vld [vmem:[%s771 + $0x40] sm:$0xf]
    %v789 = vld [vmem:[%s771 + $0x44] sm:$0xf]
    %v790 = vld [vmem:[%s771 + $0x48] sm:$0xf]
    %v791 = vld [vmem:[%s771 + $0x4c] sm:$0xf]
    %v792 = vld [vmem:[%s771 + $0x50] sm:$0xf]
    %v793 = vld [vmem:[%s771 + $0x54] sm:$0xf]
    %v794 = vld [vmem:[%s771 + $0x58] sm:$0xf]
    %v795 = vld [vmem:[%s771 + $0x5c] sm:$0xf]
    %v796 = vld [vmem:[%s771 + $0x60] sm:$0xf]
    %v797 = vld [vmem:[%s771 + $0x64] sm:$0xf]
    %v798 = vld [vmem:[%s771 + $0x68] sm:$0xf]
    %v799 = vld [vmem:[%s771 + $0x6c] sm:$0xf]
    %v800 = vld [vmem:[%s771 + $0x70] sm:$0xf]
    %v801 = vld [vmem:[%s771 + $0x74] sm:$0xf]
    %v802 = vld [vmem:[%s771 + $0x78] sm:$0xf]
    %v803 = vld [vmem:[%s771 + $0x7c] sm:$0xf]
    %v808 = vunpack.c.l.b16 %v767
    %v809 = vunpack.c.l.b16 %v768
    %v810 = vunpack.c.l.b16 %v769
    %v811 = vunpack.c.l.b16 %v770
    %v812 = vrot.slane %v810, 7
    %v813 = vsel %vm189, %v812, %v808
    %v814 = vrot.slane %v811, 7
    %v815 = vsel %vm189, %v814, %v809
    %v816 = vpack.c.b16 %v813, %v813
    %v817 = vpack.c.b16 %v815, %v815
    %v852 = vunpack.c.l.b16 %v772
    %v853 = vunpack.c.l.b16 %v773
    %v854 = vunpack.c.l.b16 %v774
    %v855 = vunpack.c.l.b16 %v775
    %v856 = vunpack.c.l.b16 %v776
    %v857 = vunpack.c.l.b16 %v777
    %v858 = vunpack.c.l.b16 %v778
    %v859 = vunpack.c.l.b16 %v779
    %v860 = vunpack.c.l.b16 %v780
    %v861 = vunpack.c.l.b16 %v781
    %v862 = vunpack.c.l.b16 %v782
    %v863 = vunpack.c.l.b16 %v783
    %v864 = vunpack.c.l.b16 %v784
    %v865 = vunpack.c.l.b16 %v785
    %v866 = vunpack.c.l.b16 %v786
    %v867 = vunpack.c.l.b16 %v787
    %v868 = vunpack.c.l.b16 %v788
    %v869 = vunpack.c.l.b16 %v789
    %v870 = vunpack.c.l.b16 %v790
    %v871 = vunpack.c.l.b16 %v791
    %v872 = vunpack.c.l.b16 %v792
    %v873 = vunpack.c.l.b16 %v793
    %v874 = vunpack.c.l.b16 %v794
    %v875 = vunpack.c.l.b16 %v795
    %v876 = vunpack.c.l.b16 %v796
    %v877 = vunpack.c.l.b16 %v797
    %v878 = vunpack.c.l.b16 %v798
    %v879 = vunpack.c.l.b16 %v799
    %v880 = vunpack.c.l.b16 %v800
    %v881 = vunpack.c.l.b16 %v801
    %v882 = vunpack.c.l.b16 %v802
    %v883 = vunpack.c.l.b16 %v803
    %v884 = vpack.c.b16 %v853, %v852
    %v885 = vpack.c.b16 %v855, %v854
    %v886 = vpack.c.b16 %v857, %v856
    %v887 = vpack.c.b16 %v859, %v858
    %v888 = vpack.c.b16 %v861, %v860
    %v889 = vpack.c.b16 %v863, %v862
    %v890 = vpack.c.b16 %v865, %v864
    %v891 = vpack.c.b16 %v867, %v866
    %v892 = vpack.c.b16 %v869, %v868
    %v893 = vpack.c.b16 %v871, %v870
    %v894 = vpack.c.b16 %v873, %v872
    %v895 = vpack.c.b16 %v875, %v874
    %v896 = vpack.c.b16 %v877, %v876
    %v897 = vpack.c.b16 %v879, %v878
    %v898 = vpack.c.b16 %v881, %v880
    %v899 = vpack.c.b16 %v883, %v882
    %916 = vmatprep.subr.bf16.mxu0 0
    %917 = vmatpush1.bf16.msra.mxu0 %v891
    %918 = vmatprep.subr.bf16.mxu0 0
    %919 = vmatpush1.bf16.msra.mxu0 %v890
    %920 = vmatprep.subr.bf16.mxu0 0
    %921 = vmatpush1.bf16.msra.mxu0 %v889
    %922 = vmatprep.subr.bf16.mxu0 0
    %923 = vmatpush1.bf16.msra.mxu0 %v888
    %924 = vmatprep.subr.bf16.mxu0 0
    %925 = vmatpush1.bf16.msra.mxu0 %v887
    %926 = vmatprep.subr.bf16.mxu0 0
    %927 = vmatpush1.bf16.msra.mxu0 %v886
    %928 = vmatprep.subr.bf16.mxu0 0
    %929 = vmatpush1.bf16.msra.mxu0 %v885
    %930 = vmatprep.subr.bf16.mxu0 0
    %931 = vmatpush1.bf16.msra.mxu0 %v884
    %932 = vmatprep.subr.bf16.mxu0 0
    %933 = vmatpush2.bf16.msra.mxu0 %v899
    %934 = vmatprep.subr.bf16.mxu0 0
    %935 = vmatpush2.bf16.msra.mxu0 %v898
    %936 = vmatprep.subr.bf16.mxu0 0
    %937 = vmatpush2.bf16.msra.mxu0 %v897
    %938 = vmatprep.subr.bf16.mxu0 0
    %939 = vmatpush2.bf16.msra.mxu0 %v896
    %940 = vmatprep.subr.bf16.mxu0 0
    %941 = vmatpush2.bf16.msra.mxu0 %v895
    %942 = vmatprep.subr.bf16.mxu0 0
    %943 = vmatpush2.bf16.msra.mxu0 %v894
    %944 = vmatprep.subr.bf16.mxu0 0
    %945 = vmatpush2.bf16.msra.mxu0 %v893
    %946 = vmatprep.subr.bf16.mxu0 0
    %947 = vmatpush2.bf16.msra.mxu0 %v892
    %948 = vmatprep.mubr.bf16.mxu0 %v817
    %949 = vmatmul.mubr.bf16.gmra.mxu0 %v816
    %v950 = vpop.f32.mrf.mxu0
    %v951 = vadd.f32 0.0, %v950
    %v952 = vpop.f32.mrf.mxu0
    %v953 = vpop.f32.mrf.mxu0
    %v954 = vpop.f32.mrf.mxu0
    %955 = vdwg.mxu0
    %v956 = vadd.f32 %v720, %v951
    %s957 = scalar_lea.vmem %s0, 16
    %v958 = vld [vmem:[%s957] ss:$8 sm:$0x3]
    %s959 = scalar_lea.vmem %s0, 432
    %v960 = vld [vmem:[%s959] ss:$8 sm:$0x3]
    %s961 = scalar_lea.vmem %s0, 17
    %v962 = vld [vmem:[%s961] ss:$8 sm:$0x3]
    %s963 = scalar_lea.vmem %s0, 433
    %v964 = vld [vmem:[%s963] ss:$8 sm:$0x3]
    %v965 = vadd.f32 %v958, %v962
    %v966 = vadd.f32 %v960, %v964
    %s967 = scalar_lea.vmem %s25, 16
    %v968 = vld [vmem:[%s967] ss:$8 sm:$0x3]
    %s969 = scalar_lea.vmem %s25, 432
    %v970 = vld [vmem:[%s969] ss:$8 sm:$0x3]
    %v971 = vadd.f32 %v965, %v968
    %v972 = vadd.f32 %v966, %v970
    %s973 = scalar_lea.vmem %s25, 17
    %v974 = vld [vmem:[%s973] ss:$8 sm:$0x3]
    %s975 = scalar_lea.vmem %s25, 433
    %v976 = vld [vmem:[%s975] ss:$8 sm:$0x3]
    %v977 = vadd.f32 %v971, %v974
    %v978 = vadd.f32 %v972, %v976
    %v979 = vmul.f32 %v977, 0.25
    %v980 = vmul.f32 %v978, 0.25
    %v983 = vlaneseq
    %v984 = vshrl.u32 %v983, 7
    %v985 = vsub.s32 0, %v984
    %v986 = vrot.slane %v979, %v985
    %v987 = vlaneseq
    %v988 = vshrl.u32 %v987, 7
    %v989 = vsub.s32 1, %v988
    %v990 = vrot.slane %v979, %v989
    %v991 = vlaneseq
    %v992 = vshrl.u32 %v991, 7
    %v993 = vsub.s32 0, %v992
    %v994 = vrot.slane %v980, %v993
    %v995 = vlaneseq
    %v996 = vshrl.u32 %v995, 7
    %v997 = vsub.s32 1, %v996
    %v998 = vrot.slane %v980, %v997
    %v1003 = vpack.c.bf16 %v986, %v986
    %v1004 = vpack.c.bf16 %v990, %v990
    %v1005 = vpack.c.bf16 %v994, %v994
    %v1006 = vpack.c.bf16 %v998, %v998
    %s1007 = scalar_lea.vmem %s1, 512
    %v1008 = vld [vmem:[%s1007] sm:$0xf]
    %v1009 = vld [vmem:[%s1007 + $0x4] sm:$0xf]
    %v1010 = vld [vmem:[%s1007 + $0x8] sm:$0xf]
    %v1011 = vld [vmem:[%s1007 + $0xc] sm:$0xf]
    %v1012 = vld [vmem:[%s1007 + $0x10] sm:$0xf]
    %v1013 = vld [vmem:[%s1007 + $0x14] sm:$0xf]
    %v1014 = vld [vmem:[%s1007 + $0x18] sm:$0xf]
    %v1015 = vld [vmem:[%s1007 + $0x1c] sm:$0xf]
    %v1016 = vld [vmem:[%s1007 + $0x20] sm:$0xf]
    %v1017 = vld [vmem:[%s1007 + $0x24] sm:$0xf]
    %v1018 = vld [vmem:[%s1007 + $0x28] sm:$0xf]
    %v1019 = vld [vmem:[%s1007 + $0x2c] sm:$0xf]
    %v1020 = vld [vmem:[%s1007 + $0x30] sm:$0xf]
    %v1021 = vld [vmem:[%s1007 + $0x34] sm:$0xf]
    %v1022 = vld [vmem:[%s1007 + $0x38] sm:$0xf]
    %v1023 = vld [vmem:[%s1007 + $0x3c] sm:$0xf]
    %v1024 = vld [vmem:[%s1007 + $0x40] sm:$0xf]
    %v1025 = vld [vmem:[%s1007 + $0x44] sm:$0xf]
    %v1026 = vld [vmem:[%s1007 + $0x48] sm:$0xf]
    %v1027 = vld [vmem:[%s1007 + $0x4c] sm:$0xf]
    %v1028 = vld [vmem:[%s1007 + $0x50] sm:$0xf]
    %v1029 = vld [vmem:[%s1007 + $0x54] sm:$0xf]
    %v1030 = vld [vmem:[%s1007 + $0x58] sm:$0xf]
    %v1031 = vld [vmem:[%s1007 + $0x5c] sm:$0xf]
    %v1032 = vld [vmem:[%s1007 + $0x60] sm:$0xf]
    %v1033 = vld [vmem:[%s1007 + $0x64] sm:$0xf]
    %v1034 = vld [vmem:[%s1007 + $0x68] sm:$0xf]
    %v1035 = vld [vmem:[%s1007 + $0x6c] sm:$0xf]
    %v1036 = vld [vmem:[%s1007 + $0x70] sm:$0xf]
    %v1037 = vld [vmem:[%s1007 + $0x74] sm:$0xf]
    %v1038 = vld [vmem:[%s1007 + $0x78] sm:$0xf]
    %v1039 = vld [vmem:[%s1007 + $0x7c] sm:$0xf]
    %v1044 = vunpack.c.l.b16 %v1003
    %v1045 = vunpack.c.l.b16 %v1004
    %v1046 = vunpack.c.l.b16 %v1005
    %v1047 = vunpack.c.l.b16 %v1006
    %v1048 = vrot.slane %v1046, 7
    %v1049 = vsel %vm189, %v1048, %v1044
    %v1050 = vrot.slane %v1047, 7
    %v1051 = vsel %vm189, %v1050, %v1045
    %v1052 = vpack.c.b16 %v1049, %v1049
    %v1053 = vpack.c.b16 %v1051, %v1051
    %v1088 = vunpack.c.l.b16 %v1008
    %v1089 = vunpack.c.l.b16 %v1009
    %v1090 = vunpack.c.l.b16 %v1010
    %v1091 = vunpack.c.l.b16 %v1011
    %v1092 = vunpack.c.l.b16 %v1012
    %v1093 = vunpack.c.l.b16 %v1013
    %v1094 = vunpack.c.l.b16 %v1014
    %v1095 = vunpack.c.l.b16 %v1015
    %v1096 = vunpack.c.l.b16 %v1016
    %v1097 = vunpack.c.l.b16 %v1017
    %v1098 = vunpack.c.l.b16 %v1018
    %v1099 = vunpack.c.l.b16 %v1019
    %v1100 = vunpack.c.l.b16 %v1020
    %v1101 = vunpack.c.l.b16 %v1021
    %v1102 = vunpack.c.l.b16 %v1022
    %v1103 = vunpack.c.l.b16 %v1023
    %v1104 = vunpack.c.l.b16 %v1024
    %v1105 = vunpack.c.l.b16 %v1025
    %v1106 = vunpack.c.l.b16 %v1026
    %v1107 = vunpack.c.l.b16 %v1027
    %v1108 = vunpack.c.l.b16 %v1028
    %v1109 = vunpack.c.l.b16 %v1029
    %v1110 = vunpack.c.l.b16 %v1030
    %v1111 = vunpack.c.l.b16 %v1031
    %v1112 = vunpack.c.l.b16 %v1032
    %v1113 = vunpack.c.l.b16 %v1033
    %v1114 = vunpack.c.l.b16 %v1034
    %v1115 = vunpack.c.l.b16 %v1035
    %v1116 = vunpack.c.l.b16 %v1036
    %v1117 = vunpack.c.l.b16 %v1037
    %v1118 = vunpack.c.l.b16 %v1038
    %v1119 = vunpack.c.l.b16 %v1039
    %v1120 = vpack.c.b16 %v1089, %v1088
    %v1121 = vpack.c.b16 %v1091, %v1090
    %v1122 = vpack.c.b16 %v1093, %v1092
    %v1123 = vpack.c.b16 %v1095, %v1094
    %v1124 = vpack.c.b16 %v1097, %v1096
    %v1125 = vpack.c.b16 %v1099, %v1098
    %v1126 = vpack.c.b16 %v1101, %v1100
    %v1127 = vpack.c.b16 %v1103, %v1102
    %v1128 = vpack.c.b16 %v1105, %v1104
    %v1129 = vpack.c.b16 %v1107, %v1106
    %v1130 = vpack.c.b16 %v1109, %v1108
    %v1131 = vpack.c.b16 %v1111, %v1110
    %v1132 = vpack.c.b16 %v1113, %v1112
    %v1133 = vpack.c.b16 %v1115, %v1114
    %v1134 = vpack.c.b16 %v1117, %v1116
    %v1135 = vpack.c.b16 %v1119, %v1118
    %1152 = vmatprep.subr.bf16.mxu0 0
    %1153 = vmatpush1.bf16.msra.mxu0 %v1127
    %1154 = vmatprep.subr.bf16.mxu0 0
    %1155 = vmatpush1.bf16.msra.mxu0 %v1126
    %1156 = vmatprep.subr.bf16.mxu0 0
    %1157 = vmatpush1.bf16.msra.mxu0 %v1125
    %1158 = vmatprep.subr.bf16.mxu0 0
    %1159 = vmatpush1.bf16.msra.mxu0 %v1124
    %1160 = vmatprep.subr.bf16.mxu0 0
    %1161 = vmatpush1.bf16.msra.mxu0 %v1123
    %1162 = vmatprep.subr.bf16.mxu0 0
    %1163 = vmatpush1.bf16.msra.mxu0 %v1122
    %1164 = vmatprep.subr.bf16.mxu0 0
    %1165 = vmatpush1.bf16.msra.mxu0 %v1121
    %1166 = vmatprep.subr.bf16.mxu0 0
    %1167 = vmatpush1.bf16.msra.mxu0 %v1120
    %1168 = vmatprep.subr.bf16.mxu0 0
    %1169 = vmatpush2.bf16.msra.mxu0 %v1135
    %1170 = vmatprep.subr.bf16.mxu0 0
    %1171 = vmatpush2.bf16.msra.mxu0 %v1134
    %1172 = vmatprep.subr.bf16.mxu0 0
    %1173 = vmatpush2.bf16.msra.mxu0 %v1133
    %1174 = vmatprep.subr.bf16.mxu0 0
    %1175 = vmatpush2.bf16.msra.mxu0 %v1132
    %1176 = vmatprep.subr.bf16.mxu0 0
    %1177 = vmatpush2.bf16.msra.mxu0 %v1131
    %1178 = vmatprep.subr.bf16.mxu0 0
    %1179 = vmatpush2.bf16.msra.mxu0 %v1130
    %1180 = vmatprep.subr.bf16.mxu0 0
    %1181 = vmatpush2.bf16.msra.mxu0 %v1129
    %1182 = vmatprep.subr.bf16.mxu0 0
    %1183 = vmatpush2.bf16.msra.mxu0 %v1128
    %1184 = vmatprep.mubr.bf16.mxu0 %v1053
    %1185 = vmatmul.mubr.bf16.gmra.mxu0 %v1052
    %v1186 = vpop.f32.mrf.mxu0
    %v1187 = vadd.f32 0.0, %v1186
    %v1188 = vpop.f32.mrf.mxu0
    %v1189 = vpop.f32.mrf.mxu0
    %v1190 = vpop.f32.mrf.mxu0
    %1191 = vdwg.mxu0
    %v1192 = vadd.f32 %v956, %v1187
    %s1193 = scalar_lea.vmem %s0, 18
    %v1194 = vld [vmem:[%s1193] ss:$8 sm:$0x3]
    %s1195 = scalar_lea.vmem %s0, 434
    %v1196 = vld [vmem:[%s1195] ss:$8 sm:$0x3]
    %s1197 = scalar_lea.vmem %s0, 19
    %v1198 = vld [vmem:[%s1197] ss:$8 sm:$0x3]
    %s1199 = scalar_lea.vmem %s0, 435
    %v1200 = vld [vmem:[%s1199] ss:$8 sm:$0x3]
    %v1201 = vadd.f32 %v1194, %v1198
    %v1202 = vadd.f32 %v1196, %v1200
    %s1203 = scalar_lea.vmem %s25, 18
    %v1204 = vld [vmem:[%s1203] ss:$8 sm:$0x3]
    %s1205 = scalar_lea.vmem %s25, 434
    %v1206 = vld [vmem:[%s1205] ss:$8 sm:$0x3]
    %v1207 = vadd.f32 %v1201, %v1204
    %v1208 = vadd.f32 %v1202, %v1206
    %s1209 = scalar_lea.vmem %s25, 19
    %v1210 = vld [vmem:[%s1209] ss:$8 sm:$0x3]
    %s1211 = scalar_lea.vmem %s25, 435
    %v1212 = vld [vmem:[%s1211] ss:$8 sm:$0x3]
    %v1213 = vadd.f32 %v1207, %v1210
    %v1214 = vadd.f32 %v1208, %v1212
    %v1215 = vmul.f32 %v1213, 0.25
    %v1216 = vmul.f32 %v1214, 0.25
    %v1219 = vlaneseq
    %v1220 = vshrl.u32 %v1219, 7
    %v1221 = vsub.s32 0, %v1220
    %v1222 = vrot.slane %v1215, %v1221
    %v1223 = vlaneseq
    %v1224 = vshrl.u32 %v1223, 7
    %v1225 = vsub.s32 1, %v1224
    %v1226 = vrot.slane %v1215, %v1225
    %v1227 = vlaneseq
    %v1228 = vshrl.u32 %v1227, 7
    %v1229 = vsub.s32 0, %v1228
    %v1230 = vrot.slane %v1216, %v1229
    %v1231 = vlaneseq
    %v1232 = vshrl.u32 %v1231, 7
    %v1233 = vsub.s32 1, %v1232
    %v1234 = vrot.slane %v1216, %v1233
    %v1239 = vpack.c.bf16 %v1222, %v1222
    %v1240 = vpack.c.bf16 %v1226, %v1226
    %v1241 = vpack.c.bf16 %v1230, %v1230
    %v1242 = vpack.c.bf16 %v1234, %v1234
    %s1243 = scalar_lea.vmem %s1, 640
    %v1244 = vld [vmem:[%s1243] sm:$0xf]
    %v1245 = vld [vmem:[%s1243 + $0x4] sm:$0xf]
    %v1246 = vld [vmem:[%s1243 + $0x8] sm:$0xf]
    %v1247 = vld [vmem:[%s1243 + $0xc] sm:$0xf]
    %v1248 = vld [vmem:[%s1243 + $0x10] sm:$0xf]
    %v1249 = vld [vmem:[%s1243 + $0x14] sm:$0xf]
    %v1250 = vld [vmem:[%s1243 + $0x18] sm:$0xf]
    %v1251 = vld [vmem:[%s1243 + $0x1c] sm:$0xf]
    %v1252 = vld [vmem:[%s1243 + $0x20] sm:$0xf]
    %v1253 = vld [vmem:[%s1243 + $0x24] sm:$0xf]
    %v1254 = vld [vmem:[%s1243 + $0x28] sm:$0xf]
    %v1255 = vld [vmem:[%s1243 + $0x2c] sm:$0xf]
    %v1256 = vld [vmem:[%s1243 + $0x30] sm:$0xf]
    %v1257 = vld [vmem:[%s1243 + $0x34] sm:$0xf]
    %v1258 = vld [vmem:[%s1243 + $0x38] sm:$0xf]
    %v1259 = vld [vmem:[%s1243 + $0x3c] sm:$0xf]
    %v1260 = vld [vmem:[%s1243 + $0x40] sm:$0xf]
    %v1261 = vld [vmem:[%s1243 + $0x44] sm:$0xf]
    %v1262 = vld [vmem:[%s1243 + $0x48] sm:$0xf]
    %v1263 = vld [vmem:[%s1243 + $0x4c] sm:$0xf]
    %v1264 = vld [vmem:[%s1243 + $0x50] sm:$0xf]
    %v1265 = vld [vmem:[%s1243 + $0x54] sm:$0xf]
    %v1266 = vld [vmem:[%s1243 + $0x58] sm:$0xf]
    %v1267 = vld [vmem:[%s1243 + $0x5c] sm:$0xf]
    %v1268 = vld [vmem:[%s1243 + $0x60] sm:$0xf]
    %v1269 = vld [vmem:[%s1243 + $0x64] sm:$0xf]
    %v1270 = vld [vmem:[%s1243 + $0x68] sm:$0xf]
    %v1271 = vld [vmem:[%s1243 + $0x6c] sm:$0xf]
    %v1272 = vld [vmem:[%s1243 + $0x70] sm:$0xf]
    %v1273 = vld [vmem:[%s1243 + $0x74] sm:$0xf]
    %v1274 = vld [vmem:[%s1243 + $0x78] sm:$0xf]
    %v1275 = vld [vmem:[%s1243 + $0x7c] sm:$0xf]
    %v1280 = vunpack.c.l.b16 %v1239
    %v1281 = vunpack.c.l.b16 %v1240
    %v1282 = vunpack.c.l.b16 %v1241
    %v1283 = vunpack.c.l.b16 %v1242
    %v1284 = vrot.slane %v1282, 7
    %v1285 = vsel %vm189, %v1284, %v1280
    %v1286 = vrot.slane %v1283, 7
    %v1287 = vsel %vm189, %v1286, %v1281
    %v1288 = vpack.c.b16 %v1285, %v1285
    %v1289 = vpack.c.b16 %v1287, %v1287
    %v1324 = vunpack.c.l.b16 %v1244
    %v1325 = vunpack.c.l.b16 %v1245
    %v1326 = vunpack.c.l.b16 %v1246
    %v1327 = vunpack.c.l.b16 %v1247
    %v1328 = vunpack.c.l.b16 %v1248
    %v1329 = vunpack.c.l.b16 %v1249
    %v1330 = vunpack.c.l.b16 %v1250
    %v1331 = vunpack.c.l.b16 %v1251
    %v1332 = vunpack.c.l.b16 %v1252
    %v1333 = vunpack.c.l.b16 %v1253
    %v1334 = vunpack.c.l.b16 %v1254
    %v1335 = vunpack.c.l.b16 %v1255
    %v1336 = vunpack.c.l.b16 %v1256
    %v1337 = vunpack.c.l.b16 %v1257
    %v1338 = vunpack.c.l.b16 %v1258
    %v1339 = vunpack.c.l.b16 %v1259
    %v1340 = vunpack.c.l.b16 %v1260
    %v1341 = vunpack.c.l.b16 %v1261
    %v1342 = vunpack.c.l.b16 %v1262
    %v1343 = vunpack.c.l.b16 %v1263
    %v1344 = vunpack.c.l.b16 %v1264
    %v1345 = vunpack.c.l.b16 %v1265
    %v1346 = vunpack.c.l.b16 %v1266
    %v1347 = vunpack.c.l.b16 %v1267
    %v1348 = vunpack.c.l.b16 %v1268
    %v1349 = vunpack.c.l.b16 %v1269
    %v1350 = vunpack.c.l.b16 %v1270
    %v1351 = vunpack.c.l.b16 %v1271
    %v1352 = vunpack.c.l.b16 %v1272
    %v1353 = vunpack.c.l.b16 %v1273
    %v1354 = vunpack.c.l.b16 %v1274
    %v1355 = vunpack.c.l.b16 %v1275
    %v1356 = vpack.c.b16 %v1325, %v1324
    %v1357 = vpack.c.b16 %v1327, %v1326
    %v1358 = vpack.c.b16 %v1329, %v1328
    %v1359 = vpack.c.b16 %v1331, %v1330
    %v1360 = vpack.c.b16 %v1333, %v1332
    %v1361 = vpack.c.b16 %v1335, %v1334
    %v1362 = vpack.c.b16 %v1337, %v1336
    %v1363 = vpack.c.b16 %v1339, %v1338
    %v1364 = vpack.c.b16 %v1341, %v1340
    %v1365 = vpack.c.b16 %v1343, %v1342
    %v1366 = vpack.c.b16 %v1345, %v1344
    %v1367 = vpack.c.b16 %v1347, %v1346
    %v1368 = vpack.c.b16 %v1349, %v1348
    %v1369 = vpack.c.b16 %v1351, %v1350
    %v1370 = vpack.c.b16 %v1353, %v1352
    %v1371 = vpack.c.b16 %v1355, %v1354
    %1388 = vmatprep.subr.bf16.mxu0 0
    %1389 = vmatpush1.bf16.msra.mxu0 %v1363
    %1390 = vmatprep.subr.bf16.mxu0 0
    %1391 = vmatpush1.bf16.msra.mxu0 %v1362
    %1392 = vmatprep.subr.bf16.mxu0 0
    %1393 = vmatpush1.bf16.msra.mxu0 %v1361
    %1394 = vmatprep.subr.bf16.mxu0 0
    %1395 = vmatpush1.bf16.msra.mxu0 %v1360
    %1396 = vmatprep.subr.bf16.mxu0 0
    %1397 = vmatpush1.bf16.msra.mxu0 %v1359
    %1398 = vmatprep.subr.bf16.mxu0 0
    %1399 = vmatpush1.bf16.msra.mxu0 %v1358
    %1400 = vmatprep.subr.bf16.mxu0 0
    %1401 = vmatpush1.bf16.msra.mxu0 %v1357
    %1402 = vmatprep.subr.bf16.mxu0 0
    %1403 = vmatpush1.bf16.msra.mxu0 %v1356
    %1404 = vmatprep.subr.bf16.mxu0 0
    %1405 = vmatpush2.bf16.msra.mxu0 %v1371
    %1406 = vmatprep.subr.bf16.mxu0 0
    %1407 = vmatpush2.bf16.msra.mxu0 %v1370
    %1408 = vmatprep.subr.bf16.mxu0 0
    %1409 = vmatpush2.bf16.msra.mxu0 %v1369
    %1410 = vmatprep.subr.bf16.mxu0 0
    %1411 = vmatpush2.bf16.msra.mxu0 %v1368
    %1412 = vmatprep.subr.bf16.mxu0 0
    %1413 = vmatpush2.bf16.msra.mxu0 %v1367
    %1414 = vmatprep.subr.bf16.mxu0 0
    %1415 = vmatpush2.bf16.msra.mxu0 %v1366
    %1416 = vmatprep.subr.bf16.mxu0 0
    %1417 = vmatpush2.bf16.msra.mxu0 %v1365
    %1418 = vmatprep.subr.bf16.mxu0 0
    %1419 = vmatpush2.bf16.msra.mxu0 %v1364
    %1420 = vmatprep.mubr.bf16.mxu0 %v1289
    %1421 = vmatmul.mubr.bf16.gmra.mxu0 %v1288
    %v1422 = vpop.f32.mrf.mxu0
    %v1423 = vadd.f32 0.0, %v1422
    %v1424 = vpop.f32.mrf.mxu0
    %v1425 = vpop.f32.mrf.mxu0
    %v1426 = vpop.f32.mrf.mxu0
    %1427 = vdwg.mxu0
    %v1428 = vadd.f32 %v1192, %v1423
    %s1429 = scalar_lea.vmem %s0, 64
    %v1430 = vld [vmem:[%s1429] ss:$8 sm:$0x3]
    %s1431 = scalar_lea.vmem %s1429, 416
    %v1432 = vld [vmem:[%s1431] ss:$8 sm:$0x3]
    %s1433 = scalar_lea.vmem %s1429, 1
    %v1434 = vld [vmem:[%s1433] ss:$8 sm:$0x3]
    %s1435 = scalar_lea.vmem %s1429, 417
    %v1436 = vld [vmem:[%s1435] ss:$8 sm:$0x3]
    %v1437 = vadd.f32 %v1430, %v1434
    %v1438 = vadd.f32 %v1432, %v1436
    %s1439 = scalar_lea.vmem %s0, 96
    %v1440 = vld [vmem:[%s1439] ss:$8 sm:$0x3]
    %s1441 = scalar_lea.vmem %s1439, 416
    %v1442 = vld [vmem:[%s1441] ss:$8 sm:$0x3]
    %v1443 = vadd.f32 %v1437, %v1440
    %v1444 = vadd.f32 %v1438, %v1442
    %s1445 = scalar_lea.vmem %s1439, 1
    %v1446 = vld [vmem:[%s1445] ss:$8 sm:$0x3]
    %s1447 = scalar_lea.vmem %s1439, 417
    %v1448 = vld [vmem:[%s1447] ss:$8 sm:$0x3]
    %v1449 = vadd.f32 %v1443, %v1446
    %v1450 = vadd.f32 %v1444, %v1448
    %v1451 = vmul.f32 %v1449, 0.25
    %v1452 = vmul.f32 %v1450, 0.25
    %v1455 = vlaneseq
    %v1456 = vshrl.u32 %v1455, 7
    %v1457 = vsub.s32 0, %v1456
    %v1458 = vrot.slane %v1451, %v1457
    %v1459 = vlaneseq
    %v1460 = vshrl.u32 %v1459, 7
    %v1461 = vsub.s32 1, %v1460
    %v1462 = vrot.slane %v1451, %v1461
    %v1463 = vlaneseq
    %v1464 = vshrl.u32 %v1463, 7
    %v1465 = vsub.s32 0, %v1464
    %v1466 = vrot.slane %v1452, %v1465
    %v1467 = vlaneseq
    %v1468 = vshrl.u32 %v1467, 7
    %v1469 = vsub.s32 1, %v1468
    %v1470 = vrot.slane %v1452, %v1469
    %v1475 = vpack.c.bf16 %v1458, %v1458
    %v1476 = vpack.c.bf16 %v1462, %v1462
    %v1477 = vpack.c.bf16 %v1466, %v1466
    %v1478 = vpack.c.bf16 %v1470, %v1470
    %s1479 = scalar_lea.vmem %s1, 768
    %v1480 = vld [vmem:[%s1479] sm:$0xf]
    %v1481 = vld [vmem:[%s1479 + $0x4] sm:$0xf]
    %v1482 = vld [vmem:[%s1479 + $0x8] sm:$0xf]
    %v1483 = vld [vmem:[%s1479 + $0xc] sm:$0xf]
    %v1484 = vld [vmem:[%s1479 + $0x10] sm:$0xf]
    %v1485 = vld [vmem:[%s1479 + $0x14] sm:$0xf]
    %v1486 = vld [vmem:[%s1479 + $0x18] sm:$0xf]
    %v1487 = vld [vmem:[%s1479 + $0x1c] sm:$0xf]
    %v1488 = vld [vmem:[%s1479 + $0x20] sm:$0xf]
    %v1489 = vld [vmem:[%s1479 + $0x24] sm:$0xf]
    %v1490 = vld [vmem:[%s1479 + $0x28] sm:$0xf]
    %v1491 = vld [vmem:[%s1479 + $0x2c] sm:$0xf]
    %v1492 = vld [vmem:[%s1479 + $0x30] sm:$0xf]
    %v1493 = vld [vmem:[%s1479 + $0x34] sm:$0xf]
    %v1494 = vld [vmem:[%s1479 + $0x38] sm:$0xf]
    %v1495 = vld [vmem:[%s1479 + $0x3c] sm:$0xf]
    %v1496 = vld [vmem:[%s1479 + $0x40] sm:$0xf]
    %v1497 = vld [vmem:[%s1479 + $0x44] sm:$0xf]
    %v1498 = vld [vmem:[%s1479 + $0x48] sm:$0xf]
    %v1499 = vld [vmem:[%s1479 + $0x4c] sm:$0xf]
    %v1500 = vld [vmem:[%s1479 + $0x50] sm:$0xf]
    %v1501 = vld [vmem:[%s1479 + $0x54] sm:$0xf]
    %v1502 = vld [vmem:[%s1479 + $0x58] sm:$0xf]
    %v1503 = vld [vmem:[%s1479 + $0x5c] sm:$0xf]
    %v1504 = vld [vmem:[%s1479 + $0x60] sm:$0xf]
    %v1505 = vld [vmem:[%s1479 + $0x64] sm:$0xf]
    %v1506 = vld [vmem:[%s1479 + $0x68] sm:$0xf]
    %v1507 = vld [vmem:[%s1479 + $0x6c] sm:$0xf]
    %v1508 = vld [vmem:[%s1479 + $0x70] sm:$0xf]
    %v1509 = vld [vmem:[%s1479 + $0x74] sm:$0xf]
    %v1510 = vld [vmem:[%s1479 + $0x78] sm:$0xf]
    %v1511 = vld [vmem:[%s1479 + $0x7c] sm:$0xf]
    %v1516 = vunpack.c.l.b16 %v1475
    %v1517 = vunpack.c.l.b16 %v1476
    %v1518 = vunpack.c.l.b16 %v1477
    %v1519 = vunpack.c.l.b16 %v1478
    %v1520 = vrot.slane %v1518, 7
    %v1521 = vsel %vm189, %v1520, %v1516
    %v1522 = vrot.slane %v1519, 7
    %v1523 = vsel %vm189, %v1522, %v1517
    %v1524 = vpack.c.b16 %v1521, %v1521
    %v1525 = vpack.c.b16 %v1523, %v1523
    %v1560 = vunpack.c.l.b16 %v1480
    %v1561 = vunpack.c.l.b16 %v1481
    %v1562 = vunpack.c.l.b16 %v1482
    %v1563 = vunpack.c.l.b16 %v1483
    %v1564 = vunpack.c.l.b16 %v1484
    %v1565 = vunpack.c.l.b16 %v1485
    %v1566 = vunpack.c.l.b16 %v1486
    %v1567 = vunpack.c.l.b16 %v1487
    %v1568 = vunpack.c.l.b16 %v1488
    %v1569 = vunpack.c.l.b16 %v1489
    %v1570 = vunpack.c.l.b16 %v1490
    %v1571 = vunpack.c.l.b16 %v1491
    %v1572 = vunpack.c.l.b16 %v1492
    %v1573 = vunpack.c.l.b16 %v1493
    %v1574 = vunpack.c.l.b16 %v1494
    %v1575 = vunpack.c.l.b16 %v1495
    %v1576 = vunpack.c.l.b16 %v1496
    %v1577 = vunpack.c.l.b16 %v1497
    %v1578 = vunpack.c.l.b16 %v1498
    %v1579 = vunpack.c.l.b16 %v1499
    %v1580 = vunpack.c.l.b16 %v1500
    %v1581 = vunpack.c.l.b16 %v1501
    %v1582 = vunpack.c.l.b16 %v1502
    %v1583 = vunpack.c.l.b16 %v1503
    %v1584 = vunpack.c.l.b16 %v1504
    %v1585 = vunpack.c.l.b16 %v1505
    %v1586 = vunpack.c.l.b16 %v1506
    %v1587 = vunpack.c.l.b16 %v1507
    %v1588 = vunpack.c.l.b16 %v1508
    %v1589 = vunpack.c.l.b16 %v1509
    %v1590 = vunpack.c.l.b16 %v1510
    %v1591 = vunpack.c.l.b16 %v1511
    %v1592 = vpack.c.b16 %v1561, %v1560
    %v1593 = vpack.c.b16 %v1563, %v1562
    %v1594 = vpack.c.b16 %v1565, %v1564
    %v1595 = vpack.c.b16 %v1567, %v1566
    %v1596 = vpack.c.b16 %v1569, %v1568
    %v1597 = vpack.c.b16 %v1571, %v1570
    %v1598 = vpack.c.b16 %v1573, %v1572
    %v1599 = vpack.c.b16 %v1575, %v1574
    %v1600 = vpack.c.b16 %v1577, %v1576
    %v1601 = vpack.c.b16 %v1579, %v1578
    %v1602 = vpack.c.b16 %v1581, %v1580
    %v1603 = vpack.c.b16 %v1583, %v1582
    %v1604 = vpack.c.b16 %v1585, %v1584
    %v1605 = vpack.c.b16 %v1587, %v1586
    %v1606 = vpack.c.b16 %v1589, %v1588
    %v1607 = vpack.c.b16 %v1591, %v1590
    %1624 = vmatprep.subr.bf16.mxu0 0
    %1625 = vmatpush1.bf16.msra.mxu0 %v1599
    %1626 = vmatprep.subr.bf16.mxu0 0
    %1627 = vmatpush1.bf16.msra.mxu0 %v1598
    %1628 = vmatprep.subr.bf16.mxu0 0
    %1629 = vmatpush1.bf16.msra.mxu0 %v1597
    %1630 = vmatprep.subr.bf16.mxu0 0
    %1631 = vmatpush1.bf16.msra.mxu0 %v1596
    %1632 = vmatprep.subr.bf16.mxu0 0
    %1633 = vmatpush1.bf16.msra.mxu0 %v1595
    %1634 = vmatprep.subr.bf16.mxu0 0
    %1635 = vmatpush1.bf16.msra.mxu0 %v1594
    %1636 = vmatprep.subr.bf16.mxu0 0
    %1637 = vmatpush1.bf16.msra.mxu0 %v1593
    %1638 = vmatprep.subr.bf16.mxu0 0
    %1639 = vmatpush1.bf16.msra.mxu0 %v1592
    %1640 = vmatprep.subr.bf16.mxu0 0
    %1641 = vmatpush2.bf16.msra.mxu0 %v1607
    %1642 = vmatprep.subr.bf16.mxu0 0
    %1643 = vmatpush2.bf16.msra.mxu0 %v1606
    %1644 = vmatprep.subr.bf16.mxu0 0
    %1645 = vmatpush2.bf16.msra.mxu0 %v1605
    %1646 = vmatprep.subr.bf16.mxu0 0
    %1647 = vmatpush2.bf16.msra.mxu0 %v1604
    %1648 = vmatprep.subr.bf16.mxu0 0
    %1649 = vmatpush2.bf16.msra.mxu0 %v1603
    %1650 = vmatprep.subr.bf16.mxu0 0
    %1651 = vmatpush2.bf16.msra.mxu0 %v1602
    %1652 = vmatprep.subr.bf16.mxu0 0
    %1653 = vmatpush2.bf16.msra.mxu0 %v1601
    %1654 = vmatprep.subr.bf16.mxu0 0
    %1655 = vmatpush2.bf16.msra.mxu0 %v1600
    %1656 = vmatprep.mubr.bf16.mxu0 %v1525
    %1657 = vmatmul.mubr.bf16.gmra.mxu0 %v1524
    %v1658 = vpop.f32.mrf.mxu0
    %v1659 = vadd.f32 0.0, %v1658
    %v1660 = vpop.f32.mrf.mxu0
    %v1661 = vpop.f32.mrf.mxu0
    %v1662 = vpop.f32.mrf.mxu0
    %1663 = vdwg.mxu0
    %v1664 = vadd.f32 %v1428, %v1659
    %s1665 = scalar_lea.vmem %s1429, 2
    %v1666 = vld [vmem:[%s1665] ss:$8 sm:$0x3]
    %s1667 = scalar_lea.vmem %s1429, 418
    %v1668 = vld [vmem:[%s1667] ss:$8 sm:$0x3]
    %s1669 = scalar_lea.vmem %s1429, 3
    %v1670 = vld [vmem:[%s1669] ss:$8 sm:$0x3]
    %s1671 = scalar_lea.vmem %s1429, 419
    %v1672 = vld [vmem:[%s1671] ss:$8 sm:$0x3]
    %v1673 = vadd.f32 %v1666, %v1670
    %v1674 = vadd.f32 %v1668, %v1672
    %s1675 = scalar_lea.vmem %s1439, 2
    %v1676 = vld [vmem:[%s1675] ss:$8 sm:$0x3]
    %s1677 = scalar_lea.vmem %s1439, 418
    %v1678 = vld [vmem:[%s1677] ss:$8 sm:$0x3]
    %v1679 = vadd.f32 %v1673, %v1676
    %v1680 = vadd.f32 %v1674, %v1678
    %s1681 = scalar_lea.vmem %s1439, 3
    %v1682 = vld [vmem:[%s1681] ss:$8 sm:$0x3]
    %s1683 = scalar_lea.vmem %s1439, 419
    %v1684 = vld [vmem:[%s1683] ss:$8 sm:$0x3]
    %v1685 = vadd.f32 %v1679, %v1682
    %v1686 = vadd.f32 %v1680, %v1684
    %v1687 = vmul.f32 %v1685, 0.25
    %v1688 = vmul.f32 %v1686, 0.25
    %v1691 = vlaneseq
    %v1692 = vshrl.u32 %v1691, 7
    %v1693 = vsub.s32 0, %v1692
    %v1694 = vrot.slane %v1687, %v1693
    %v1695 = vlaneseq
    %v1696 = vshrl.u32 %v1695, 7
    %v1697 = vsub.s32 1, %v1696
    %v1698 = vrot.slane %v1687, %v1697
    %v1699 = vlaneseq
    %v1700 = vshrl.u32 %v1699, 7
    %v1701 = vsub.s32 0, %v1700
    %v1702 = vrot.slane %v1688, %v1701
    %v1703 = vlaneseq
    %v1704 = vshrl.u32 %v1703, 7
    %v1705 = vsub.s32 1, %v1704
    %v1706 = vrot.slane %v1688, %v1705
    %v1711 = vpack.c.bf16 %v1694, %v1694
    %v1712 = vpack.c.bf16 %v1698, %v1698
    %v1713 = vpack.c.bf16 %v1702, %v1702
    %v1714 = vpack.c.bf16 %v1706, %v1706
    %s1715 = scalar_lea.vmem %s1, 896
    %v1716 = vld [vmem:[%s1715] sm:$0xf]
    %v1717 = vld [vmem:[%s1715 + $0x4] sm:$0xf]
    %v1718 = vld [vmem:[%s1715 + $0x8] sm:$0xf]
    %v1719 = vld [vmem:[%s1715 + $0xc] sm:$0xf]
    %v1720 = vld [vmem:[%s1715 + $0x10] sm:$0xf]
    %v1721 = vld [vmem:[%s1715 + $0x14] sm:$0xf]
    %v1722 = vld [vmem:[%s1715 + $0x18] sm:$0xf]
    %v1723 = vld [vmem:[%s1715 + $0x1c] sm:$0xf]
    %v1724 = vld [vmem:[%s1715 + $0x20] sm:$0xf]
    %v1725 = vld [vmem:[%s1715 + $0x24] sm:$0xf]
    %v1726 = vld [vmem:[%s1715 + $0x28] sm:$0xf]
    %v1727 = vld [vmem:[%s1715 + $0x2c] sm:$0xf]
    %v1728 = vld [vmem:[%s1715 + $0x30] sm:$0xf]
    %v1729 = vld [vmem:[%s1715 + $0x34] sm:$0xf]
    %v1730 = vld [vmem:[%s1715 + $0x38] sm:$0xf]
    %v1731 = vld [vmem:[%s1715 + $0x3c] sm:$0xf]
    %v1732 = vld [vmem:[%s1715 + $0x40] sm:$0xf]
    %v1733 = vld [vmem:[%s1715 + $0x44] sm:$0xf]
    %v1734 = vld [vmem:[%s1715 + $0x48] sm:$0xf]
    %v1735 = vld [vmem:[%s1715 + $0x4c] sm:$0xf]
    %v1736 = vld [vmem:[%s1715 + $0x50] sm:$0xf]
    %v1737 = vld [vmem:[%s1715 + $0x54] sm:$0xf]
    %v1738 = vld [vmem:[%s1715 + $0x58] sm:$0xf]
    %v1739 = vld [vmem:[%s1715 + $0x5c] sm:$0xf]
    %v1740 = vld [vmem:[%s1715 + $0x60] sm:$0xf]
    %v1741 = vld [vmem:[%s1715 + $0x64] sm:$0xf]
    %v1742 = vld [vmem:[%s1715 + $0x68] sm:$0xf]
    %v1743 = vld [vmem:[%s1715 + $0x6c] sm:$0xf]
    %v1744 = vld [vmem:[%s1715 + $0x70] sm:$0xf]
    %v1745 = vld [vmem:[%s1715 + $0x74] sm:$0xf]
    %v1746 = vld [vmem:[%s1715 + $0x78] sm:$0xf]
    %v1747 = vld [vmem:[%s1715 + $0x7c] sm:$0xf]
    %v1752 = vunpack.c.l.b16 %v1711
    %v1753 = vunpack.c.l.b16 %v1712
    %v1754 = vunpack.c.l.b16 %v1713
    %v1755 = vunpack.c.l.b16 %v1714
    %v1756 = vrot.slane %v1754, 7
    %v1757 = vsel %vm189, %v1756, %v1752
    %v1758 = vrot.slane %v1755, 7
    %v1759 = vsel %vm189, %v1758, %v1753
    %v1760 = vpack.c.b16 %v1757, %v1757
    %v1761 = vpack.c.b16 %v1759, %v1759
    %v1796 = vunpack.c.l.b16 %v1716
    %v1797 = vunpack.c.l.b16 %v1717
    %v1798 = vunpack.c.l.b16 %v1718
    %v1799 = vunpack.c.l.b16 %v1719
    %v1800 = vunpack.c.l.b16 %v1720
    %v1801 = vunpack.c.l.b16 %v1721
    %v1802 = vunpack.c.l.b16 %v1722
    %v1803 = vunpack.c.l.b16 %v1723
    %v1804 = vunpack.c.l.b16 %v1724
    %v1805 = vunpack.c.l.b16 %v1725
    %v1806 = vunpack.c.l.b16 %v1726
    %v1807 = vunpack.c.l.b16 %v1727
    %v1808 = vunpack.c.l.b16 %v1728
    %v1809 = vunpack.c.l.b16 %v1729
    %v1810 = vunpack.c.l.b16 %v1730
    %v1811 = vunpack.c.l.b16 %v1731
    %v1812 = vunpack.c.l.b16 %v1732
    %v1813 = vunpack.c.l.b16 %v1733
    %v1814 = vunpack.c.l.b16 %v1734
    %v1815 = vunpack.c.l.b16 %v1735
    %v1816 = vunpack.c.l.b16 %v1736
    %v1817 = vunpack.c.l.b16 %v1737
    %v1818 = vunpack.c.l.b16 %v1738
    %v1819 = vunpack.c.l.b16 %v1739
    %v1820 = vunpack.c.l.b16 %v1740
    %v1821 = vunpack.c.l.b16 %v1741
    %v1822 = vunpack.c.l.b16 %v1742
    %v1823 = vunpack.c.l.b16 %v1743
    %v1824 = vunpack.c.l.b16 %v1744
    %v1825 = vunpack.c.l.b16 %v1745
    %v1826 = vunpack.c.l.b16 %v1746
    %v1827 = vunpack.c.l.b16 %v1747
    %v1828 = vpack.c.b16 %v1797, %v1796
    %v1829 = vpack.c.b16 %v1799, %v1798
    %v1830 = vpack.c.b16 %v1801, %v1800
    %v1831 = vpack.c.b16 %v1803, %v1802
    %v1832 = vpack.c.b16 %v1805, %v1804
    %v1833 = vpack.c.b16 %v1807, %v1806
    %v1834 = vpack.c.b16 %v1809, %v1808
    %v1835 = vpack.c.b16 %v1811, %v1810
    %v1836 = vpack.c.b16 %v1813, %v1812
    %v1837 = vpack.c.b16 %v1815, %v1814
    %v1838 = vpack.c.b16 %v1817, %v1816
    %v1839 = vpack.c.b16 %v1819, %v1818
    %v1840 = vpack.c.b16 %v1821, %v1820
    %v1841 = vpack.c.b16 %v1823, %v1822
    %v1842 = vpack.c.b16 %v1825, %v1824
    %v1843 = vpack.c.b16 %v1827, %v1826
    %1860 = vmatprep.subr.bf16.mxu0 0
    %1861 = vmatpush1.bf16.msra.mxu0 %v1835
    %1862 = vmatprep.subr.bf16.mxu0 0
    %1863 = vmatpush1.bf16.msra.mxu0 %v1834
    %1864 = vmatprep.subr.bf16.mxu0 0
    %1865 = vmatpush1.bf16.msra.mxu0 %v1833
    %1866 = vmatprep.subr.bf16.mxu0 0
    %1867 = vmatpush1.bf16.msra.mxu0 %v1832
    %1868 = vmatprep.subr.bf16.mxu0 0
    %1869 = vmatpush1.bf16.msra.mxu0 %v1831
    %1870 = vmatprep.subr.bf16.mxu0 0
    %1871 = vmatpush1.bf16.msra.mxu0 %v1830
    %1872 = vmatprep.subr.bf16.mxu0 0
    %1873 = vmatpush1.bf16.msra.mxu0 %v1829
    %1874 = vmatprep.subr.bf16.mxu0 0
    %1875 = vmatpush1.bf16.msra.mxu0 %v1828
    %1876 = vmatprep.subr.bf16.mxu0 0
    %1877 = vmatpush2.bf16.msra.mxu0 %v1843
    %1878 = vmatprep.subr.bf16.mxu0 0
    %1879 = vmatpush2.bf16.msra.mxu0 %v1842
    %1880 = vmatprep.subr.bf16.mxu0 0
    %1881 = vmatpush2.bf16.msra.mxu0 %v1841
    %1882 = vmatprep.subr.bf16.mxu0 0
    %1883 = vmatpush2.bf16.msra.mxu0 %v1840
    %1884 = vmatprep.subr.bf16.mxu0 0
    %1885 = vmatpush2.bf16.msra.mxu0 %v1839
    %1886 = vmatprep.subr.bf16.mxu0 0
    %1887 = vmatpush2.bf16.msra.mxu0 %v1838
    %1888 = vmatprep.subr.bf16.mxu0 0
    %1889 = vmatpush2.bf16.msra.mxu0 %v1837
    %1890 = vmatprep.subr.bf16.mxu0 0
    %1891 = vmatpush2.bf16.msra.mxu0 %v1836
    %1892 = vmatprep.mubr.bf16.mxu0 %v1761
    %1893 = vmatmul.mubr.bf16.gmra.mxu0 %v1760
    %v1894 = vpop.f32.mrf.mxu0
    %v1895 = vadd.f32 0.0, %v1894
    %v1896 = vpop.f32.mrf.mxu0
    %v1897 = vpop.f32.mrf.mxu0
    %v1898 = vpop.f32.mrf.mxu0
    %1899 = vdwg.mxu0
    %v1900 = vadd.f32 %v1664, %v1895
    %s1901 = scalar_lea.vmem %s1429, 4
    %v1902 = vld [vmem:[%s1901] ss:$8 sm:$0x3]
    %s1903 = scalar_lea.vmem %s1429, 420
    %v1904 = vld [vmem:[%s1903] ss:$8 sm:$0x3]
    %s1905 = scalar_lea.vmem %s1429, 5
    %v1906 = vld [vmem:[%s1905] ss:$8 sm:$0x3]
    %s1907 = scalar_lea.vmem %s1429, 421
    %v1908 = vld [vmem:[%s1907] ss:$8 sm:$0x3]
    %v1909 = vadd.f32 %v1902, %v1906
    %v1910 = vadd.f32 %v1904, %v1908
    %s1911 = scalar_lea.vmem %s1439, 4
    %v1912 = vld [vmem:[%s1911] ss:$8 sm:$0x3]
    %s1913 = scalar_lea.vmem %s1439, 420
    %v1914 = vld [vmem:[%s1913] ss:$8 sm:$0x3]
    %v1915 = vadd.f32 %v1909, %v1912
    %v1916 = vadd.f32 %v1910, %v1914
    %s1917 = scalar_lea.vmem %s1439, 5
    %v1918 = vld [vmem:[%s1917] ss:$8 sm:$0x3]
    %s1919 = scalar_lea.vmem %s1439, 421
    %v1920 = vld [vmem:[%s1919] ss:$8 sm:$0x3]
    %v1921 = vadd.f32 %v1915, %v1918
    %v1922 = vadd.f32 %v1916, %v1920
    %v1923 = vmul.f32 %v1921, 0.25
    %v1924 = vmul.f32 %v1922, 0.25
    %v1927 = vlaneseq
    %v1928 = vshrl.u32 %v1927, 7
    %v1929 = vsub.s32 0, %v1928
    %v1930 = vrot.slane %v1923, %v1929
    %v1931 = vlaneseq
    %v1932 = vshrl.u32 %v1931, 7
    %v1933 = vsub.s32 1, %v1932
    %v1934 = vrot.slane %v1923, %v1933
    %v1935 = vlaneseq
    %v1936 = vshrl.u32 %v1935, 7
    %v1937 = vsub.s32 0, %v1936
    %v1938 = vrot.slane %v1924, %v1937
    %v1939 = vlaneseq
    %v1940 = vshrl.u32 %v1939, 7
    %v1941 = vsub.s32 1, %v1940
    %v1942 = vrot.slane %v1924, %v1941
    %v1947 = vpack.c.bf16 %v1930, %v1930
    %v1948 = vpack.c.bf16 %v1934, %v1934
    %v1949 = vpack.c.bf16 %v1938, %v1938
    %v1950 = vpack.c.bf16 %v1942, %v1942
    %s1951 = scalar_lea.vmem %s1, 1024
    %v1952 = vld [vmem:[%s1951] sm:$0xf]
    %v1953 = vld [vmem:[%s1951 + $0x4] sm:$0xf]
    %v1954 = vld [vmem:[%s1951 + $0x8] sm:$0xf]
    %v1955 = vld [vmem:[%s1951 + $0xc] sm:$0xf]
    %v1956 = vld [vmem:[%s1951 + $0x10] sm:$0xf]
    %v1957 = vld [vmem:[%s1951 + $0x14] sm:$0xf]
    %v1958 = vld [vmem:[%s1951 + $0x18] sm:$0xf]
    %v1959 = vld [vmem:[%s1951 + $0x1c] sm:$0xf]
    %v1960 = vld [vmem:[%s1951 + $0x20] sm:$0xf]
    %v1961 = vld [vmem:[%s1951 + $0x24] sm:$0xf]
    %v1962 = vld [vmem:[%s1951 + $0x28] sm:$0xf]
    %v1963 = vld [vmem:[%s1951 + $0x2c] sm:$0xf]
    %v1964 = vld [vmem:[%s1951 + $0x30] sm:$0xf]
    %v1965 = vld [vmem:[%s1951 + $0x34] sm:$0xf]
    %v1966 = vld [vmem:[%s1951 + $0x38] sm:$0xf]
    %v1967 = vld [vmem:[%s1951 + $0x3c] sm:$0xf]
    %v1968 = vld [vmem:[%s1951 + $0x40] sm:$0xf]
    %v1969 = vld [vmem:[%s1951 + $0x44] sm:$0xf]
    %v1970 = vld [vmem:[%s1951 + $0x48] sm:$0xf]
    %v1971 = vld [vmem:[%s1951 + $0x4c] sm:$0xf]
    %v1972 = vld [vmem:[%s1951 + $0x50] sm:$0xf]
    %v1973 = vld [vmem:[%s1951 + $0x54] sm:$0xf]
    %v1974 = vld [vmem:[%s1951 + $0x58] sm:$0xf]
    %v1975 = vld [vmem:[%s1951 + $0x5c] sm:$0xf]
    %v1976 = vld [vmem:[%s1951 + $0x60] sm:$0xf]
    %v1977 = vld [vmem:[%s1951 + $0x64] sm:$0xf]
    %v1978 = vld [vmem:[%s1951 + $0x68] sm:$0xf]
    %v1979 = vld [vmem:[%s1951 + $0x6c] sm:$0xf]
    %v1980 = vld [vmem:[%s1951 + $0x70] sm:$0xf]
    %v1981 = vld [vmem:[%s1951 + $0x74] sm:$0xf]
    %v1982 = vld [vmem:[%s1951 + $0x78] sm:$0xf]
    %v1983 = vld [vmem:[%s1951 + $0x7c] sm:$0xf]
    %v1988 = vunpack.c.l.b16 %v1947
    %v1989 = vunpack.c.l.b16 %v1948
    %v1990 = vunpack.c.l.b16 %v1949
    %v1991 = vunpack.c.l.b16 %v1950
    %v1992 = vrot.slane %v1990, 7
    %v1993 = vsel %vm189, %v1992, %v1988
    %v1994 = vrot.slane %v1991, 7
    %v1995 = vsel %vm189, %v1994, %v1989
    %v1996 = vpack.c.b16 %v1993, %v1993
    %v1997 = vpack.c.b16 %v1995, %v1995
    %v2032 = vunpack.c.l.b16 %v1952
    %v2033 = vunpack.c.l.b16 %v1953
    %v2034 = vunpack.c.l.b16 %v1954
    %v2035 = vunpack.c.l.b16 %v1955
    %v2036 = vunpack.c.l.b16 %v1956
    %v2037 = vunpack.c.l.b16 %v1957
    %v2038 = vunpack.c.l.b16 %v1958
    %v2039 = vunpack.c.l.b16 %v1959
    %v2040 = vunpack.c.l.b16 %v1960
    %v2041 = vunpack.c.l.b16 %v1961
    %v2042 = vunpack.c.l.b16 %v1962
    %v2043 = vunpack.c.l.b16 %v1963
    %v2044 = vunpack.c.l.b16 %v1964
    %v2045 = vunpack.c.l.b16 %v1965
    %v2046 = vunpack.c.l.b16 %v1966
    %v2047 = vunpack.c.l.b16 %v1967
    %v2048 = vunpack.c.l.b16 %v1968
    %v2049 = vunpack.c.l.b16 %v1969
    %v2050 = vunpack.c.l.b16 %v1970
    %v2051 = vunpack.c.l.b16 %v1971
    %v2052 = vunpack.c.l.b16 %v1972
    %v2053 = vunpack.c.l.b16 %v1973
    %v2054 = vunpack.c.l.b16 %v1974
    %v2055 = vunpack.c.l.b16 %v1975
    %v2056 = vunpack.c.l.b16 %v1976
    %v2057 = vunpack.c.l.b16 %v1977
    %v2058 = vunpack.c.l.b16 %v1978
    %v2059 = vunpack.c.l.b16 %v1979
    %v2060 = vunpack.c.l.b16 %v1980
    %v2061 = vunpack.c.l.b16 %v1981
    %v2062 = vunpack.c.l.b16 %v1982
    %v2063 = vunpack.c.l.b16 %v1983
    %v2064 = vpack.c.b16 %v2033, %v2032
    %v2065 = vpack.c.b16 %v2035, %v2034
    %v2066 = vpack.c.b16 %v2037, %v2036
    %v2067 = vpack.c.b16 %v2039, %v2038
    %v2068 = vpack.c.b16 %v2041, %v2040
    %v2069 = vpack.c.b16 %v2043, %v2042
    %v2070 = vpack.c.b16 %v2045, %v2044
    %v2071 = vpack.c.b16 %v2047, %v2046
    %v2072 = vpack.c.b16 %v2049, %v2048
    %v2073 = vpack.c.b16 %v2051, %v2050
    %v2074 = vpack.c.b16 %v2053, %v2052
    %v2075 = vpack.c.b16 %v2055, %v2054
    %v2076 = vpack.c.b16 %v2057, %v2056
    %v2077 = vpack.c.b16 %v2059, %v2058
    %v2078 = vpack.c.b16 %v2061, %v2060
    %v2079 = vpack.c.b16 %v2063, %v2062
    %2096 = vmatprep.subr.bf16.mxu0 0
    %2097 = vmatpush1.bf16.msra.mxu0 %v2071
    %2098 = vmatprep.subr.bf16.mxu0 0
    %2099 = vmatpush1.bf16.msra.mxu0 %v2070
    %2100 = vmatprep.subr.bf16.mxu0 0
    %2101 = vmatpush1.bf16.msra.mxu0 %v2069
    %2102 = vmatprep.subr.bf16.mxu0 0
    %2103 = vmatpush1.bf16.msra.mxu0 %v2068
    %2104 = vmatprep.subr.bf16.mxu0 0
    %2105 = vmatpush1.bf16.msra.mxu0 %v2067
    %2106 = vmatprep.subr.bf16.mxu0 0
    %2107 = vmatpush1.bf16.msra.mxu0 %v2066
    %2108 = vmatprep.subr.bf16.mxu0 0
    %2109 = vmatpush1.bf16.msra.mxu0 %v2065
    %2110 = vmatprep.subr.bf16.mxu0 0
    %2111 = vmatpush1.bf16.msra.mxu0 %v2064
    %2112 = vmatprep.subr.bf16.mxu0 0
    %2113 = vmatpush2.bf16.msra.mxu0 %v2079
    %2114 = vmatprep.subr.bf16.mxu0 0
    %2115 = vmatpush2.bf16.msra.mxu0 %v2078
    %2116 = vmatprep.subr.bf16.mxu0 0
    %2117 = vmatpush2.bf16.msra.mxu0 %v2077
    %2118 = vmatprep.subr.bf16.mxu0 0
    %2119 = vmatpush2.bf16.msra.mxu0 %v2076
    %2120 = vmatprep.subr.bf16.mxu0 0
    %2121 = vmatpush2.bf16.msra.mxu0 %v2075
    %2122 = vmatprep.subr.bf16.mxu0 0
    %2123 = vmatpush2.bf16.msra.mxu0 %v2074
    %2124 = vmatprep.subr.bf16.mxu0 0
    %2125 = vmatpush2.bf16.msra.mxu0 %v2073
    %2126 = vmatprep.subr.bf16.mxu0 0
    %2127 = vmatpush2.bf16.msra.mxu0 %v2072
    %2128 = vmatprep.mubr.bf16.mxu0 %v1997
    %2129 = vmatmul.mubr.bf16.gmra.mxu0 %v1996
    %v2130 = vpop.f32.mrf.mxu0
    %v2131 = vadd.f32 0.0, %v2130
    %v2132 = vpop.f32.mrf.mxu0
    %v2133 = vpop.f32.mrf.mxu0
    %v2134 = vpop.f32.mrf.mxu0
    %2135 = vdwg.mxu0
    %v2136 = vadd.f32 %v1900, %v2131
    %s2137 = scalar_lea.vmem %s1429, 6
    %v2138 = vld [vmem:[%s2137] ss:$8 sm:$0x3]
    %s2139 = scalar_lea.vmem %s1429, 422
    %v2140 = vld [vmem:[%s2139] ss:$8 sm:$0x3]
    %s2141 = scalar_lea.vmem %s1429, 7
    %v2142 = vld [vmem:[%s2141] ss:$8 sm:$0x3]
    %s2143 = scalar_lea.vmem %s1429, 423
    %v2144 = vld [vmem:[%s2143] ss:$8 sm:$0x3]
    %v2145 = vadd.f32 %v2138, %v2142
    %v2146 = vadd.f32 %v2140, %v2144
    %s2147 = scalar_lea.vmem %s1439, 6
    %v2148 = vld [vmem:[%s2147] ss:$8 sm:$0x3]
    %s2149 = scalar_lea.vmem %s1439, 422
    %v2150 = vld [vmem:[%s2149] ss:$8 sm:$0x3]
    %v2151 = vadd.f32 %v2145, %v2148
    %v2152 = vadd.f32 %v2146, %v2150
    %s2153 = scalar_lea.vmem %s1439, 7
    %v2154 = vld [vmem:[%s2153] ss:$8 sm:$0x3]
    %s2155 = scalar_lea.vmem %s1439, 423
    %v2156 = vld [vmem:[%s2155] ss:$8 sm:$0x3]
    %v2157 = vadd.f32 %v2151, %v2154
    %v2158 = vadd.f32 %v2152, %v2156
    %v2159 = vmul.f32 %v2157, 0.25
    %v2160 = vmul.f32 %v2158, 0.25
    %v2163 = vlaneseq
    %v2164 = vshrl.u32 %v2163, 7
    %v2165 = vsub.s32 0, %v2164
    %v2166 = vrot.slane %v2159, %v2165
    %v2167 = vlaneseq
    %v2168 = vshrl.u32 %v2167, 7
    %v2169 = vsub.s32 1, %v2168
    %v2170 = vrot.slane %v2159, %v2169
    %v2171 = vlaneseq
    %v2172 = vshrl.u32 %v2171, 7
    %v2173 = vsub.s32 0, %v2172
    %v2174 = vrot.slane %v2160, %v2173
    %v2175 = vlaneseq
    %v2176 = vshrl.u32 %v2175, 7
    %v2177 = vsub.s32 1, %v2176
    %v2178 = vrot.slane %v2160, %v2177
    %v2183 = vpack.c.bf16 %v2166, %v2166
    %v2184 = vpack.c.bf16 %v2170, %v2170
    %v2185 = vpack.c.bf16 %v2174, %v2174
    %v2186 = vpack.c.bf16 %v2178, %v2178
    %s2187 = scalar_lea.vmem %s1, 1152
    %v2188 = vld [vmem:[%s2187] sm:$0xf]
    %v2189 = vld [vmem:[%s2187 + $0x4] sm:$0xf]
    %v2190 = vld [vmem:[%s2187 + $0x8] sm:$0xf]
    %v2191 = vld [vmem:[%s2187 + $0xc] sm:$0xf]
    %v2192 = vld [vmem:[%s2187 + $0x10] sm:$0xf]
    %v2193 = vld [vmem:[%s2187 + $0x14] sm:$0xf]
    %v2194 = vld [vmem:[%s2187 + $0x18] sm:$0xf]
    %v2195 = vld [vmem:[%s2187 + $0x1c] sm:$0xf]
    %v2196 = vld [vmem:[%s2187 + $0x20] sm:$0xf]
    %v2197 = vld [vmem:[%s2187 + $0x24] sm:$0xf]
    %v2198 = vld [vmem:[%s2187 + $0x28] sm:$0xf]
    %v2199 = vld [vmem:[%s2187 + $0x2c] sm:$0xf]
    %v2200 = vld [vmem:[%s2187 + $0x30] sm:$0xf]
    %v2201 = vld [vmem:[%s2187 + $0x34] sm:$0xf]
    %v2202 = vld [vmem:[%s2187 + $0x38] sm:$0xf]
    %v2203 = vld [vmem:[%s2187 + $0x3c] sm:$0xf]
    %v2204 = vld [vmem:[%s2187 + $0x40] sm:$0xf]
    %v2205 = vld [vmem:[%s2187 + $0x44] sm:$0xf]
    %v2206 = vld [vmem:[%s2187 + $0x48] sm:$0xf]
    %v2207 = vld [vmem:[%s2187 + $0x4c] sm:$0xf]
    %v2208 = vld [vmem:[%s2187 + $0x50] sm:$0xf]
    %v2209 = vld [vmem:[%s2187 + $0x54] sm:$0xf]
    %v2210 = vld [vmem:[%s2187 + $0x58] sm:$0xf]
    %v2211 = vld [vmem:[%s2187 + $0x5c] sm:$0xf]
    %v2212 = vld [vmem:[%s2187 + $0x60] sm:$0xf]
    %v2213 = vld [vmem:[%s2187 + $0x64] sm:$0xf]
    %v2214 = vld [vmem:[%s2187 + $0x68] sm:$0xf]
    %v2215 = vld [vmem:[%s2187 + $0x6c] sm:$0xf]
    %v2216 = vld [vmem:[%s2187 + $0x70] sm:$0xf]
    %v2217 = vld [vmem:[%s2187 + $0x74] sm:$0xf]
    %v2218 = vld [vmem:[%s2187 + $0x78] sm:$0xf]
    %v2219 = vld [vmem:[%s2187 + $0x7c] sm:$0xf]
    %v2224 = vunpack.c.l.b16 %v2183
    %v2225 = vunpack.c.l.b16 %v2184
    %v2226 = vunpack.c.l.b16 %v2185
    %v2227 = vunpack.c.l.b16 %v2186
    %v2228 = vrot.slane %v2226, 7
    %v2229 = vsel %vm189, %v2228, %v2224
    %v2230 = vrot.slane %v2227, 7
    %v2231 = vsel %vm189, %v2230, %v2225
    %v2232 = vpack.c.b16 %v2229, %v2229
    %v2233 = vpack.c.b16 %v2231, %v2231
    %v2268 = vunpack.c.l.b16 %v2188
    %v2269 = vunpack.c.l.b16 %v2189
    %v2270 = vunpack.c.l.b16 %v2190
    %v2271 = vunpack.c.l.b16 %v2191
    %v2272 = vunpack.c.l.b16 %v2192
    %v2273 = vunpack.c.l.b16 %v2193
    %v2274 = vunpack.c.l.b16 %v2194
    %v2275 = vunpack.c.l.b16 %v2195
    %v2276 = vunpack.c.l.b16 %v2196
    %v2277 = vunpack.c.l.b16 %v2197
    %v2278 = vunpack.c.l.b16 %v2198
    %v2279 = vunpack.c.l.b16 %v2199
    %v2280 = vunpack.c.l.b16 %v2200
    %v2281 = vunpack.c.l.b16 %v2201
    %v2282 = vunpack.c.l.b16 %v2202
    %v2283 = vunpack.c.l.b16 %v2203
    %v2284 = vunpack.c.l.b16 %v2204
    %v2285 = vunpack.c.l.b16 %v2205
    %v2286 = vunpack.c.l.b16 %v2206
    %v2287 = vunpack.c.l.b16 %v2207
    %v2288 = vunpack.c.l.b16 %v2208
    %v2289 = vunpack.c.l.b16 %v2209
    %v2290 = vunpack.c.l.b16 %v2210
    %v2291 = vunpack.c.l.b16 %v2211
    %v2292 = vunpack.c.l.b16 %v2212
    %v2293 = vunpack.c.l.b16 %v2213
    %v2294 = vunpack.c.l.b16 %v2214
    %v2295 = vunpack.c.l.b16 %v2215
    %v2296 = vunpack.c.l.b16 %v2216
    %v2297 = vunpack.c.l.b16 %v2217
    %v2298 = vunpack.c.l.b16 %v2218
    %v2299 = vunpack.c.l.b16 %v2219
    %v2300 = vpack.c.b16 %v2269, %v2268
    %v2301 = vpack.c.b16 %v2271, %v2270
    %v2302 = vpack.c.b16 %v2273, %v2272
    %v2303 = vpack.c.b16 %v2275, %v2274
    %v2304 = vpack.c.b16 %v2277, %v2276
    %v2305 = vpack.c.b16 %v2279, %v2278
    %v2306 = vpack.c.b16 %v2281, %v2280
    %v2307 = vpack.c.b16 %v2283, %v2282
    %v2308 = vpack.c.b16 %v2285, %v2284
    %v2309 = vpack.c.b16 %v2287, %v2286
    %v2310 = vpack.c.b16 %v2289, %v2288
    %v2311 = vpack.c.b16 %v2291, %v2290
    %v2312 = vpack.c.b16 %v2293, %v2292
    %v2313 = vpack.c.b16 %v2295, %v2294
    %v2314 = vpack.c.b16 %v2297, %v2296
    %v2315 = vpack.c.b16 %v2299, %v2298
    %2332 = vmatprep.subr.bf16.mxu0 0
    %2333 = vmatpush1.bf16.msra.mxu0 %v2307
    %2334 = vmatprep.subr.bf16.mxu0 0
    %2335 = vmatpush1.bf16.msra.mxu0 %v2306
    %2336 = vmatprep.subr.bf16.mxu0 0
    %2337 = vmatpush1.bf16.msra.mxu0 %v2305
    %2338 = vmatprep.subr.bf16.mxu0 0
    %2339 = vmatpush1.bf16.msra.mxu0 %v2304
    %2340 = vmatprep.subr.bf16.mxu0 0
    %2341 = vmatpush1.bf16.msra.mxu0 %v2303
    %2342 = vmatprep.subr.bf16.mxu0 0
    %2343 = vmatpush1.bf16.msra.mxu0 %v2302
    %2344 = vmatprep.subr.bf16.mxu0 0
    %2345 = vmatpush1.bf16.msra.mxu0 %v2301
    %2346 = vmatprep.subr.bf16.mxu0 0
    %2347 = vmatpush1.bf16.msra.mxu0 %v2300
    %2348 = vmatprep.subr.bf16.mxu0 0
    %2349 = vmatpush2.bf16.msra.mxu0 %v2315
    %2350 = vmatprep.subr.bf16.mxu0 0
    %2351 = vmatpush2.bf16.msra.mxu0 %v2314
    %2352 = vmatprep.subr.bf16.mxu0 0
    %2353 = vmatpush2.bf16.msra.mxu0 %v2313
    %2354 = vmatprep.subr.bf16.mxu0 0
    %2355 = vmatpush2.bf16.msra.mxu0 %v2312
    %2356 = vmatprep.subr.bf16.mxu0 0
    %2357 = vmatpush2.bf16.msra.mxu0 %v2311
    %2358 = vmatprep.subr.bf16.mxu0 0
    %2359 = vmatpush2.bf16.msra.mxu0 %v2310
    %2360 = vmatprep.subr.bf16.mxu0 0
    %2361 = vmatpush2.bf16.msra.mxu0 %v2309
    %2362 = vmatprep.subr.bf16.mxu0 0
    %2363 = vmatpush2.bf16.msra.mxu0 %v2308
    %2364 = vmatprep.mubr.bf16.mxu0 %v2233
    %2365 = vmatmul.mubr.bf16.gmra.mxu0 %v2232
    %v2366 = vpop.f32.mrf.mxu0
    %v2367 = vadd.f32 0.0, %v2366
    %v2368 = vpop.f32.mrf.mxu0
    %v2369 = vpop.f32.mrf.mxu0
    %v2370 = vpop.f32.mrf.mxu0
    %2371 = vdwg.mxu0
    %v2372 = vadd.f32 %v2136, %v2367
    %s2373 = scalar_lea.vmem %s1429, 16
    %v2374 = vld [vmem:[%s2373] ss:$8 sm:$0x3]
    %s2375 = scalar_lea.vmem %s1429, 432
    %v2376 = vld [vmem:[%s2375] ss:$8 sm:$0x3]
    %s2377 = scalar_lea.vmem %s1429, 17
    %v2378 = vld [vmem:[%s2377] ss:$8 sm:$0x3]
    %s2379 = scalar_lea.vmem %s1429, 433
    %v2380 = vld [vmem:[%s2379] ss:$8 sm:$0x3]
    %v2381 = vadd.f32 %v2374, %v2378
    %v2382 = vadd.f32 %v2376, %v2380
    %s2383 = scalar_lea.vmem %s1439, 16
    %v2384 = vld [vmem:[%s2383] ss:$8 sm:$0x3]
    %s2385 = scalar_lea.vmem %s1439, 432
    %v2386 = vld [vmem:[%s2385] ss:$8 sm:$0x3]
    %v2387 = vadd.f32 %v2381, %v2384
    %v2388 = vadd.f32 %v2382, %v2386
    %s2389 = scalar_lea.vmem %s1439, 17
    %v2390 = vld [vmem:[%s2389] ss:$8 sm:$0x3]
    %s2391 = scalar_lea.vmem %s1439, 433
    %v2392 = vld [vmem:[%s2391] ss:$8 sm:$0x3]
    %v2393 = vadd.f32 %v2387, %v2390
    %v2394 = vadd.f32 %v2388, %v2392
    %v2395 = vmul.f32 %v2393, 0.25
    %v2396 = vmul.f32 %v2394, 0.25
    %v2399 = vlaneseq
    %v2400 = vshrl.u32 %v2399, 7
    %v2401 = vsub.s32 0, %v2400
    %v2402 = vrot.slane %v2395, %v2401
    %v2403 = vlaneseq
    %v2404 = vshrl.u32 %v2403, 7
    %v2405 = vsub.s32 1, %v2404
    %v2406 = vrot.slane %v2395, %v2405
    %v2407 = vlaneseq
    %v2408 = vshrl.u32 %v2407, 7
    %v2409 = vsub.s32 0, %v2408
    %v2410 = vrot.slane %v2396, %v2409
    %v2411 = vlaneseq
    %v2412 = vshrl.u32 %v2411, 7
    %v2413 = vsub.s32 1, %v2412
    %v2414 = vrot.slane %v2396, %v2413
    %v2419 = vpack.c.bf16 %v2402, %v2402
    %v2420 = vpack.c.bf16 %v2406, %v2406
    %v2421 = vpack.c.bf16 %v2410, %v2410
    %v2422 = vpack.c.bf16 %v2414, %v2414
    %s2423 = scalar_lea.vmem %s1, 1280
    %v2424 = vld [vmem:[%s2423] sm:$0xf]
    %v2425 = vld [vmem:[%s2423 + $0x4] sm:$0xf]
    %v2426 = vld [vmem:[%s2423 + $0x8] sm:$0xf]
    %v2427 = vld [vmem:[%s2423 + $0xc] sm:$0xf]
    %v2428 = vld [vmem:[%s2423 + $0x10] sm:$0xf]
    %v2429 = vld [vmem:[%s2423 + $0x14] sm:$0xf]
    %v2430 = vld [vmem:[%s2423 + $0x18] sm:$0xf]
    %v2431 = vld [vmem:[%s2423 + $0x1c] sm:$0xf]
    %v2432 = vld [vmem:[%s2423 + $0x20] sm:$0xf]
    %v2433 = vld [vmem:[%s2423 + $0x24] sm:$0xf]
    %v2434 = vld [vmem:[%s2423 + $0x28] sm:$0xf]
    %v2435 = vld [vmem:[%s2423 + $0x2c] sm:$0xf]
    %v2436 = vld [vmem:[%s2423 + $0x30] sm:$0xf]
    %v2437 = vld [vmem:[%s2423 + $0x34] sm:$0xf]
    %v2438 = vld [vmem:[%s2423 + $0x38] sm:$0xf]
    %v2439 = vld [vmem:[%s2423 + $0x3c] sm:$0xf]
    %v2440 = vld [vmem:[%s2423 + $0x40] sm:$0xf]
    %v2441 = vld [vmem:[%s2423 + $0x44] sm:$0xf]
    %v2442 = vld [vmem:[%s2423 + $0x48] sm:$0xf]
    %v2443 = vld [vmem:[%s2423 + $0x4c] sm:$0xf]
    %v2444 = vld [vmem:[%s2423 + $0x50] sm:$0xf]
    %v2445 = vld [vmem:[%s2423 + $0x54] sm:$0xf]
    %v2446 = vld [vmem:[%s2423 + $0x58] sm:$0xf]
    %v2447 = vld [vmem:[%s2423 + $0x5c] sm:$0xf]
    %v2448 = vld [vmem:[%s2423 + $0x60] sm:$0xf]
    %v2449 = vld [vmem:[%s2423 + $0x64] sm:$0xf]
    %v2450 = vld [vmem:[%s2423 + $0x68] sm:$0xf]
    %v2451 = vld [vmem:[%s2423 + $0x6c] sm:$0xf]
    %v2452 = vld [vmem:[%s2423 + $0x70] sm:$0xf]
    %v2453 = vld [vmem:[%s2423 + $0x74] sm:$0xf]
    %v2454 = vld [vmem:[%s2423 + $0x78] sm:$0xf]
    %v2455 = vld [vmem:[%s2423 + $0x7c] sm:$0xf]
    %v2460 = vunpack.c.l.b16 %v2419
    %v2461 = vunpack.c.l.b16 %v2420
    %v2462 = vunpack.c.l.b16 %v2421
    %v2463 = vunpack.c.l.b16 %v2422
    %v2464 = vrot.slane %v2462, 7
    %v2465 = vsel %vm189, %v2464, %v2460
    %v2466 = vrot.slane %v2463, 7
    %v2467 = vsel %vm189, %v2466, %v2461
    %v2468 = vpack.c.b16 %v2465, %v2465
    %v2469 = vpack.c.b16 %v2467, %v2467
    %v2504 = vunpack.c.l.b16 %v2424
    %v2505 = vunpack.c.l.b16 %v2425
    %v2506 = vunpack.c.l.b16 %v2426
    %v2507 = vunpack.c.l.b16 %v2427
    %v2508 = vunpack.c.l.b16 %v2428
    %v2509 = vunpack.c.l.b16 %v2429
    %v2510 = vunpack.c.l.b16 %v2430
    %v2511 = vunpack.c.l.b16 %v2431
    %v2512 = vunpack.c.l.b16 %v2432
    %v2513 = vunpack.c.l.b16 %v2433
    %v2514 = vunpack.c.l.b16 %v2434
    %v2515 = vunpack.c.l.b16 %v2435
    %v2516 = vunpack.c.l.b16 %v2436
    %v2517 = vunpack.c.l.b16 %v2437
    %v2518 = vunpack.c.l.b16 %v2438
    %v2519 = vunpack.c.l.b16 %v2439
    %v2520 = vunpack.c.l.b16 %v2440
    %v2521 = vunpack.c.l.b16 %v2441
    %v2522 = vunpack.c.l.b16 %v2442
    %v2523 = vunpack.c.l.b16 %v2443
    %v2524 = vunpack.c.l.b16 %v2444
    %v2525 = vunpack.c.l.b16 %v2445
    %v2526 = vunpack.c.l.b16 %v2446
    %v2527 = vunpack.c.l.b16 %v2447
    %v2528 = vunpack.c.l.b16 %v2448
    %v2529 = vunpack.c.l.b16 %v2449
    %v2530 = vunpack.c.l.b16 %v2450
    %v2531 = vunpack.c.l.b16 %v2451
    %v2532 = vunpack.c.l.b16 %v2452
    %v2533 = vunpack.c.l.b16 %v2453
    %v2534 = vunpack.c.l.b16 %v2454
    %v2535 = vunpack.c.l.b16 %v2455
    %v2536 = vpack.c.b16 %v2505, %v2504
    %v2537 = vpack.c.b16 %v2507, %v2506
    %v2538 = vpack.c.b16 %v2509, %v2508
    %v2539 = vpack.c.b16 %v2511, %v2510
    %v2540 = vpack.c.b16 %v2513, %v2512
    %v2541 = vpack.c.b16 %v2515, %v2514
    %v2542 = vpack.c.b16 %v2517, %v2516
    %v2543 = vpack.c.b16 %v2519, %v2518
    %v2544 = vpack.c.b16 %v2521, %v2520
    %v2545 = vpack.c.b16 %v2523, %v2522
    %v2546 = vpack.c.b16 %v2525, %v2524
    %v2547 = vpack.c.b16 %v2527, %v2526
    %v2548 = vpack.c.b16 %v2529, %v2528
    %v2549 = vpack.c.b16 %v2531, %v2530
    %v2550 = vpack.c.b16 %v2533, %v2532
    %v2551 = vpack.c.b16 %v2535, %v2534
    %2568 = vmatprep.subr.bf16.mxu0 0
    %2569 = vmatpush1.bf16.msra.mxu0 %v2543
    %2570 = vmatprep.subr.bf16.mxu0 0
    %2571 = vmatpush1.bf16.msra.mxu0 %v2542
    %2572 = vmatprep.subr.bf16.mxu0 0
    %2573 = vmatpush1.bf16.msra.mxu0 %v2541
    %2574 = vmatprep.subr.bf16.mxu0 0
    %2575 = vmatpush1.bf16.msra.mxu0 %v2540
    %2576 = vmatprep.subr.bf16.mxu0 0
    %2577 = vmatpush1.bf16.msra.mxu0 %v2539
    %2578 = vmatprep.subr.bf16.mxu0 0
    %2579 = vmatpush1.bf16.msra.mxu0 %v2538
    %2580 = vmatprep.subr.bf16.mxu0 0
    %2581 = vmatpush1.bf16.msra.mxu0 %v2537
    %2582 = vmatprep.subr.bf16.mxu0 0
    %2583 = vmatpush1.bf16.msra.mxu0 %v2536
    %2584 = vmatprep.subr.bf16.mxu0 0
    %2585 = vmatpush2.bf16.msra.mxu0 %v2551
    %2586 = vmatprep.subr.bf16.mxu0 0
    %2587 = vmatpush2.bf16.msra.mxu0 %v2550
    %2588 = vmatprep.subr.bf16.mxu0 0
    %2589 = vmatpush2.bf16.msra.mxu0 %v2549
    %2590 = vmatprep.subr.bf16.mxu0 0
    %2591 = vmatpush2.bf16.msra.mxu0 %v2548
    %2592 = vmatprep.subr.bf16.mxu0 0
    %2593 = vmatpush2.bf16.msra.mxu0 %v2547
    %2594 = vmatprep.subr.bf16.mxu0 0
    %2595 = vmatpush2.bf16.msra.mxu0 %v2546
    %2596 = vmatprep.subr.bf16.mxu0 0
    %2597 = vmatpush2.bf16.msra.mxu0 %v2545
    %2598 = vmatprep.subr.bf16.mxu0 0
    %2599 = vmatpush2.bf16.msra.mxu0 %v2544
    %2600 = vmatprep.mubr.bf16.mxu0 %v2469
    %2601 = vmatmul.mubr.bf16.gmra.mxu0 %v2468
    %v2602 = vpop.f32.mrf.mxu0
    %v2603 = vadd.f32 0.0, %v2602
    %v2604 = vpop.f32.mrf.mxu0
    %v2605 = vpop.f32.mrf.mxu0
    %v2606 = vpop.f32.mrf.mxu0
    %2607 = vdwg.mxu0
    %v2608 = vadd.f32 %v2372, %v2603
    %s2609 = scalar_lea.vmem %s1429, 18
    %v2610 = vld [vmem:[%s2609] ss:$8 sm:$0x3]
    %s2611 = scalar_lea.vmem %s1429, 434
    %v2612 = vld [vmem:[%s2611] ss:$8 sm:$0x3]
    %s2613 = scalar_lea.vmem %s1429, 19
    %v2614 = vld [vmem:[%s2613] ss:$8 sm:$0x3]
    %s2615 = scalar_lea.vmem %s1429, 435
    %v2616 = vld [vmem:[%s2615] ss:$8 sm:$0x3]
    %v2617 = vadd.f32 %v2610, %v2614
    %v2618 = vadd.f32 %v2612, %v2616
    %s2619 = scalar_lea.vmem %s1439, 18
    %v2620 = vld [vmem:[%s2619] ss:$8 sm:$0x3]
    %s2621 = scalar_lea.vmem %s1439, 434
    %v2622 = vld [vmem:[%s2621] ss:$8 sm:$0x3]
    %v2623 = vadd.f32 %v2617, %v2620
    %v2624 = vadd.f32 %v2618, %v2622
    %s2625 = scalar_lea.vmem %s1439, 19
    %v2626 = vld [vmem:[%s2625] ss:$8 sm:$0x3]
    %s2627 = scalar_lea.vmem %s1439, 435
    %v2628 = vld [vmem:[%s2627] ss:$8 sm:$0x3]
    %v2629 = vadd.f32 %v2623, %v2626
    %v2630 = vadd.f32 %v2624, %v2628
    %v2631 = vmul.f32 %v2629, 0.25
    %v2632 = vmul.f32 %v2630, 0.25
    %v2635 = vlaneseq
    %v2636 = vshrl.u32 %v2635, 7
    %v2637 = vsub.s32 0, %v2636
    %v2638 = vrot.slane %v2631, %v2637
    %v2639 = vlaneseq
    %v2640 = vshrl.u32 %v2639, 7
    %v2641 = vsub.s32 1, %v2640
    %v2642 = vrot.slane %v2631, %v2641
    %v2643 = vlaneseq
    %v2644 = vshrl.u32 %v2643, 7
    %v2645 = vsub.s32 0, %v2644
    %v2646 = vrot.slane %v2632, %v2645
    %v2647 = vlaneseq
    %v2648 = vshrl.u32 %v2647, 7
    %v2649 = vsub.s32 1, %v2648
    %v2650 = vrot.slane %v2632, %v2649
    %v2655 = vpack.c.bf16 %v2638, %v2638
    %v2656 = vpack.c.bf16 %v2642, %v2642
    %v2657 = vpack.c.bf16 %v2646, %v2646
    %v2658 = vpack.c.bf16 %v2650, %v2650
    %s2659 = scalar_lea.vmem %s1, 1408
    %v2660 = vld [vmem:[%s2659] sm:$0xf]
    %v2661 = vld [vmem:[%s2659 + $0x4] sm:$0xf]
    %v2662 = vld [vmem:[%s2659 + $0x8] sm:$0xf]
    %v2663 = vld [vmem:[%s2659 + $0xc] sm:$0xf]
    %v2664 = vld [vmem:[%s2659 + $0x10] sm:$0xf]
    %v2665 = vld [vmem:[%s2659 + $0x14] sm:$0xf]
    %v2666 = vld [vmem:[%s2659 + $0x18] sm:$0xf]
    %v2667 = vld [vmem:[%s2659 + $0x1c] sm:$0xf]
    %v2668 = vld [vmem:[%s2659 + $0x20] sm:$0xf]
    %v2669 = vld [vmem:[%s2659 + $0x24] sm:$0xf]
    %v2670 = vld [vmem:[%s2659 + $0x28] sm:$0xf]
    %v2671 = vld [vmem:[%s2659 + $0x2c] sm:$0xf]
    %v2672 = vld [vmem:[%s2659 + $0x30] sm:$0xf]
    %v2673 = vld [vmem:[%s2659 + $0x34] sm:$0xf]
    %v2674 = vld [vmem:[%s2659 + $0x38] sm:$0xf]
    %v2675 = vld [vmem:[%s2659 + $0x3c] sm:$0xf]
    %v2676 = vld [vmem:[%s2659 + $0x40] sm:$0xf]
    %v2677 = vld [vmem:[%s2659 + $0x44] sm:$0xf]
    %v2678 = vld [vmem:[%s2659 + $0x48] sm:$0xf]
    %v2679 = vld [vmem:[%s2659 + $0x4c] sm:$0xf]
    %v2680 = vld [vmem:[%s2659 + $0x50] sm:$0xf]
    %v2681 = vld [vmem:[%s2659 + $0x54] sm:$0xf]
    %v2682 = vld [vmem:[%s2659 + $0x58] sm:$0xf]
    %v2683 = vld [vmem:[%s2659 + $0x5c] sm:$0xf]
    %v2684 = vld [vmem:[%s2659 + $0x60] sm:$0xf]
    %v2685 = vld [vmem:[%s2659 + $0x64] sm:$0xf]
    %v2686 = vld [vmem:[%s2659 + $0x68] sm:$0xf]
    %v2687 = vld [vmem:[%s2659 + $0x6c] sm:$0xf]
    %v2688 = vld [vmem:[%s2659 + $0x70] sm:$0xf]
    %v2689 = vld [vmem:[%s2659 + $0x74] sm:$0xf]
    %v2690 = vld [vmem:[%s2659 + $0x78] sm:$0xf]
    %v2691 = vld [vmem:[%s2659 + $0x7c] sm:$0xf]
    %v2696 = vunpack.c.l.b16 %v2655
    %v2697 = vunpack.c.l.b16 %v2656
    %v2698 = vunpack.c.l.b16 %v2657
    %v2699 = vunpack.c.l.b16 %v2658
    %v2700 = vrot.slane %v2698, 7
    %v2701 = vsel %vm189, %v2700, %v2696
    %v2702 = vrot.slane %v2699, 7
    %v2703 = vsel %vm189, %v2702, %v2697
    %v2704 = vpack.c.b16 %v2701, %v2701
    %v2705 = vpack.c.b16 %v2703, %v2703
    %v2740 = vunpack.c.l.b16 %v2660
    %v2741 = vunpack.c.l.b16 %v2661
    %v2742 = vunpack.c.l.b16 %v2662
    %v2743 = vunpack.c.l.b16 %v2663
    %v2744 = vunpack.c.l.b16 %v2664
    %v2745 = vunpack.c.l.b16 %v2665
    %v2746 = vunpack.c.l.b16 %v2666
    %v2747 = vunpack.c.l.b16 %v2667
    %v2748 = vunpack.c.l.b16 %v2668
    %v2749 = vunpack.c.l.b16 %v2669
    %v2750 = vunpack.c.l.b16 %v2670
    %v2751 = vunpack.c.l.b16 %v2671
    %v2752 = vunpack.c.l.b16 %v2672
    %v2753 = vunpack.c.l.b16 %v2673
    %v2754 = vunpack.c.l.b16 %v2674
    %v2755 = vunpack.c.l.b16 %v2675
    %v2756 = vunpack.c.l.b16 %v2676
    %v2757 = vunpack.c.l.b16 %v2677
    %v2758 = vunpack.c.l.b16 %v2678
    %v2759 = vunpack.c.l.b16 %v2679
    %v2760 = vunpack.c.l.b16 %v2680
    %v2761 = vunpack.c.l.b16 %v2681
    %v2762 = vunpack.c.l.b16 %v2682
    %v2763 = vunpack.c.l.b16 %v2683
    %v2764 = vunpack.c.l.b16 %v2684
    %v2765 = vunpack.c.l.b16 %v2685
    %v2766 = vunpack.c.l.b16 %v2686
    %v2767 = vunpack.c.l.b16 %v2687
    %v2768 = vunpack.c.l.b16 %v2688
    %v2769 = vunpack.c.l.b16 %v2689
    %v2770 = vunpack.c.l.b16 %v2690
    %v2771 = vunpack.c.l.b16 %v2691
    %v2772 = vpack.c.b16 %v2741, %v2740
    %v2773 = vpack.c.b16 %v2743, %v2742
    %v2774 = vpack.c.b16 %v2745, %v2744
    %v2775 = vpack.c.b16 %v2747, %v2746
    %v2776 = vpack.c.b16 %v2749, %v2748
    %v2777 = vpack.c.b16 %v2751, %v2750
    %v2778 = vpack.c.b16 %v2753, %v2752
    %v2779 = vpack.c.b16 %v2755, %v2754
    %v2780 = vpack.c.b16 %v2757, %v2756
    %v2781 = vpack.c.b16 %v2759, %v2758
    %v2782 = vpack.c.b16 %v2761, %v2760
    %v2783 = vpack.c.b16 %v2763, %v2762
    %v2784 = vpack.c.b16 %v2765, %v2764
    %v2785 = vpack.c.b16 %v2767, %v2766
    %v2786 = vpack.c.b16 %v2769, %v2768
    %v2787 = vpack.c.b16 %v2771, %v2770
    %2804 = vmatprep.subr.bf16.mxu0 0
    %2805 = vmatpush1.bf16.msra.mxu0 %v2779
    %2806 = vmatprep.subr.bf16.mxu0 0
    %2807 = vmatpush1.bf16.msra.mxu0 %v2778
    %2808 = vmatprep.subr.bf16.mxu0 0
    %2809 = vmatpush1.bf16.msra.mxu0 %v2777
    %2810 = vmatprep.subr.bf16.mxu0 0
    %2811 = vmatpush1.bf16.msra.mxu0 %v2776
    %2812 = vmatprep.subr.bf16.mxu0 0
    %2813 = vmatpush1.bf16.msra.mxu0 %v2775
    %2814 = vmatprep.subr.bf16.mxu0 0
    %2815 = vmatpush1.bf16.msra.mxu0 %v2774
    %2816 = vmatprep.subr.bf16.mxu0 0
    %2817 = vmatpush1.bf16.msra.mxu0 %v2773
    %2818 = vmatprep.subr.bf16.mxu0 0
    %2819 = vmatpush1.bf16.msra.mxu0 %v2772
    %2820 = vmatprep.subr.bf16.mxu0 0
    %2821 = vmatpush2.bf16.msra.mxu0 %v2787
    %2822 = vmatprep.subr.bf16.mxu0 0
    %2823 = vmatpush2.bf16.msra.mxu0 %v2786
    %2824 = vmatprep.subr.bf16.mxu0 0
    %2825 = vmatpush2.bf16.msra.mxu0 %v2785
    %2826 = vmatprep.subr.bf16.mxu0 0
    %2827 = vmatpush2.bf16.msra.mxu0 %v2784
    %2828 = vmatprep.subr.bf16.mxu0 0
    %2829 = vmatpush2.bf16.msra.mxu0 %v2783
    %2830 = vmatprep.subr.bf16.mxu0 0
    %2831 = vmatpush2.bf16.msra.mxu0 %v2782
    %2832 = vmatprep.subr.bf16.mxu0 0
    %2833 = vmatpush2.bf16.msra.mxu0 %v2781
    %2834 = vmatprep.subr.bf16.mxu0 0
    %2835 = vmatpush2.bf16.msra.mxu0 %v2780
    %2836 = vmatprep.mubr.bf16.mxu0 %v2705
    %2837 = vmatmul.mubr.bf16.gmra.mxu0 %v2704
    %v2838 = vpop.f32.mrf.mxu0
    %v2839 = vadd.f32 0.0, %v2838
    %v2840 = vpop.f32.mrf.mxu0
    %v2841 = vpop.f32.mrf.mxu0
    %v2842 = vpop.f32.mrf.mxu0
    %2843 = vdwg.mxu0
    %v2844 = vadd.f32 %v2608, %v2839
    %s2845 = scalar_lea.vmem %s0, 128
    %v2846 = vld [vmem:[%s2845] ss:$8 sm:$0x3]
    %s2847 = scalar_lea.vmem %s2845, 416
    %v2848 = vld [vmem:[%s2847] ss:$8 sm:$0x3]
    %s2849 = scalar_lea.vmem %s2845, 1
    %v2850 = vld [vmem:[%s2849] ss:$8 sm:$0x3]
    %s2851 = scalar_lea.vmem %s2845, 417
    %v2852 = vld [vmem:[%s2851] ss:$8 sm:$0x3]
    %v2853 = vadd.f32 %v2846, %v2850
    %v2854 = vadd.f32 %v2848, %v2852
    %s2855 = scalar_lea.vmem %s0, 160
    %v2856 = vld [vmem:[%s2855] ss:$8 sm:$0x3]
    %s2857 = scalar_lea.vmem %s2855, 416
    %v2858 = vld [vmem:[%s2857] ss:$8 sm:$0x3]
    %v2859 = vadd.f32 %v2853, %v2856
    %v2860 = vadd.f32 %v2854, %v2858
    %s2861 = scalar_lea.vmem %s2855, 1
    %v2862 = vld [vmem:[%s2861] ss:$8 sm:$0x3]
    %s2863 = scalar_lea.vmem %s2855, 417
    %v2864 = vld [vmem:[%s2863] ss:$8 sm:$0x3]
    %v2865 = vadd.f32 %v2859, %v2862
    %v2866 = vadd.f32 %v2860, %v2864
    %v2867 = vmul.f32 %v2865, 0.25
    %v2868 = vmul.f32 %v2866, 0.25
    %v2871 = vlaneseq
    %v2872 = vshrl.u32 %v2871, 7
    %v2873 = vsub.s32 0, %v2872
    %v2874 = vrot.slane %v2867, %v2873
    %v2875 = vlaneseq
    %v2876 = vshrl.u32 %v2875, 7
    %v2877 = vsub.s32 1, %v2876
    %v2878 = vrot.slane %v2867, %v2877
    %v2879 = vlaneseq
    %v2880 = vshrl.u32 %v2879, 7
    %v2881 = vsub.s32 0, %v2880
    %v2882 = vrot.slane %v2868, %v2881
    %v2883 = vlaneseq
    %v2884 = vshrl.u32 %v2883, 7
    %v2885 = vsub.s32 1, %v2884
    %v2886 = vrot.slane %v2868, %v2885
    %v2891 = vpack.c.bf16 %v2874, %v2874
    %v2892 = vpack.c.bf16 %v2878, %v2878
    %v2893 = vpack.c.bf16 %v2882, %v2882
    %v2894 = vpack.c.bf16 %v2886, %v2886
    %s2895 = scalar_lea.vmem %s1, 1536
    %v2896 = vld [vmem:[%s2895] sm:$0xf]
    %v2897 = vld [vmem:[%s2895 + $0x4] sm:$0xf]
    %v2898 = vld [vmem:[%s2895 + $0x8] sm:$0xf]
    %v2899 = vld [vmem:[%s2895 + $0xc] sm:$0xf]
    %v2900 = vld [vmem:[%s2895 + $0x10] sm:$0xf]
    %v2901 = vld [vmem:[%s2895 + $0x14] sm:$0xf]
    %v2902 = vld [vmem:[%s2895 + $0x18] sm:$0xf]
    %v2903 = vld [vmem:[%s2895 + $0x1c] sm:$0xf]
    %v2904 = vld [vmem:[%s2895 + $0x20] sm:$0xf]
    %v2905 = vld [vmem:[%s2895 + $0x24] sm:$0xf]
    %v2906 = vld [vmem:[%s2895 + $0x28] sm:$0xf]
    %v2907 = vld [vmem:[%s2895 + $0x2c] sm:$0xf]
    %v2908 = vld [vmem:[%s2895 + $0x30] sm:$0xf]
    %v2909 = vld [vmem:[%s2895 + $0x34] sm:$0xf]
    %v2910 = vld [vmem:[%s2895 + $0x38] sm:$0xf]
    %v2911 = vld [vmem:[%s2895 + $0x3c] sm:$0xf]
    %v2912 = vld [vmem:[%s2895 + $0x40] sm:$0xf]
    %v2913 = vld [vmem:[%s2895 + $0x44] sm:$0xf]
    %v2914 = vld [vmem:[%s2895 + $0x48] sm:$0xf]
    %v2915 = vld [vmem:[%s2895 + $0x4c] sm:$0xf]
    %v2916 = vld [vmem:[%s2895 + $0x50] sm:$0xf]
    %v2917 = vld [vmem:[%s2895 + $0x54] sm:$0xf]
    %v2918 = vld [vmem:[%s2895 + $0x58] sm:$0xf]
    %v2919 = vld [vmem:[%s2895 + $0x5c] sm:$0xf]
    %v2920 = vld [vmem:[%s2895 + $0x60] sm:$0xf]
    %v2921 = vld [vmem:[%s2895 + $0x64] sm:$0xf]
    %v2922 = vld [vmem:[%s2895 + $0x68] sm:$0xf]
    %v2923 = vld [vmem:[%s2895 + $0x6c] sm:$0xf]
    %v2924 = vld [vmem:[%s2895 + $0x70] sm:$0xf]
    %v2925 = vld [vmem:[%s2895 + $0x74] sm:$0xf]
    %v2926 = vld [vmem:[%s2895 + $0x78] sm:$0xf]
    %v2927 = vld [vmem:[%s2895 + $0x7c] sm:$0xf]
    %v2932 = vunpack.c.l.b16 %v2891
    %v2933 = vunpack.c.l.b16 %v2892
    %v2934 = vunpack.c.l.b16 %v2893
    %v2935 = vunpack.c.l.b16 %v2894
    %v2936 = vrot.slane %v2934, 7
    %v2937 = vsel %vm189, %v2936, %v2932
    %v2938 = vrot.slane %v2935, 7
    %v2939 = vsel %vm189, %v2938, %v2933
    %v2940 = vpack.c.b16 %v2937, %v2937
    %v2941 = vpack.c.b16 %v2939, %v2939
    %v2976 = vunpack.c.l.b16 %v2896
    %v2977 = vunpack.c.l.b16 %v2897
    %v2978 = vunpack.c.l.b16 %v2898
    %v2979 = vunpack.c.l.b16 %v2899
    %v2980 = vunpack.c.l.b16 %v2900
    %v2981 = vunpack.c.l.b16 %v2901
    %v2982 = vunpack.c.l.b16 %v2902
    %v2983 = vunpack.c.l.b16 %v2903
    %v2984 = vunpack.c.l.b16 %v2904
    %v2985 = vunpack.c.l.b16 %v2905
    %v2986 = vunpack.c.l.b16 %v2906
    %v2987 = vunpack.c.l.b16 %v2907
    %v2988 = vunpack.c.l.b16 %v2908
    %v2989 = vunpack.c.l.b16 %v2909
    %v2990 = vunpack.c.l.b16 %v2910
    %v2991 = vunpack.c.l.b16 %v2911
    %v2992 = vunpack.c.l.b16 %v2912
    %v2993 = vunpack.c.l.b16 %v2913
    %v2994 = vunpack.c.l.b16 %v2914
    %v2995 = vunpack.c.l.b16 %v2915
    %v2996 = vunpack.c.l.b16 %v2916
    %v2997 = vunpack.c.l.b16 %v2917
    %v2998 = vunpack.c.l.b16 %v2918
    %v2999 = vunpack.c.l.b16 %v2919
    %v3000 = vunpack.c.l.b16 %v2920
    %v3001 = vunpack.c.l.b16 %v2921
    %v3002 = vunpack.c.l.b16 %v2922
    %v3003 = vunpack.c.l.b16 %v2923
    %v3004 = vunpack.c.l.b16 %v2924
    %v3005 = vunpack.c.l.b16 %v2925
    %v3006 = vunpack.c.l.b16 %v2926
    %v3007 = vunpack.c.l.b16 %v2927
    %v3008 = vpack.c.b16 %v2977, %v2976
    %v3009 = vpack.c.b16 %v2979, %v2978
    %v3010 = vpack.c.b16 %v2981, %v2980
    %v3011 = vpack.c.b16 %v2983, %v2982
    %v3012 = vpack.c.b16 %v2985, %v2984
    %v3013 = vpack.c.b16 %v2987, %v2986
    %v3014 = vpack.c.b16 %v2989, %v2988
    %v3015 = vpack.c.b16 %v2991, %v2990
    %v3016 = vpack.c.b16 %v2993, %v2992
    %v3017 = vpack.c.b16 %v2995, %v2994
    %v3018 = vpack.c.b16 %v2997, %v2996
    %v3019 = vpack.c.b16 %v2999, %v2998
    %v3020 = vpack.c.b16 %v3001, %v3000
    %v3021 = vpack.c.b16 %v3003, %v3002
    %v3022 = vpack.c.b16 %v3005, %v3004
    %v3023 = vpack.c.b16 %v3007, %v3006
    %3040 = vmatprep.subr.bf16.mxu0 0
    %3041 = vmatpush1.bf16.msra.mxu0 %v3015
    %3042 = vmatprep.subr.bf16.mxu0 0
    %3043 = vmatpush1.bf16.msra.mxu0 %v3014
    %3044 = vmatprep.subr.bf16.mxu0 0
    %3045 = vmatpush1.bf16.msra.mxu0 %v3013
    %3046 = vmatprep.subr.bf16.mxu0 0
    %3047 = vmatpush1.bf16.msra.mxu0 %v3012
    %3048 = vmatprep.subr.bf16.mxu0 0
    %3049 = vmatpush1.bf16.msra.mxu0 %v3011
    %3050 = vmatprep.subr.bf16.mxu0 0
    %3051 = vmatpush1.bf16.msra.mxu0 %v3010
    %3052 = vmatprep.subr.bf16.mxu0 0
    %3053 = vmatpush1.bf16.msra.mxu0 %v3009
    %3054 = vmatprep.subr.bf16.mxu0 0
    %3055 = vmatpush1.bf16.msra.mxu0 %v3008
    %3056 = vmatprep.subr.bf16.mxu0 0
    %3057 = vmatpush2.bf16.msra.mxu0 %v3023
    %3058 = vmatprep.subr.bf16.mxu0 0
    %3059 = vmatpush2.bf16.msra.mxu0 %v3022
    %3060 = vmatprep.subr.bf16.mxu0 0
    %3061 = vmatpush2.bf16.msra.mxu0 %v3021
    %3062 = vmatprep.subr.bf16.mxu0 0
    %3063 = vmatpush2.bf16.msra.mxu0 %v3020
    %3064 = vmatprep.subr.bf16.mxu0 0
    %3065 = vmatpush2.bf16.msra.mxu0 %v3019
    %3066 = vmatprep.subr.bf16.mxu0 0
    %3067 = vmatpush2.bf16.msra.mxu0 %v3018
    %3068 = vmatprep.subr.bf16.mxu0 0
    %3069 = vmatpush2.bf16.msra.mxu0 %v3017
    %3070 = vmatprep.subr.bf16.mxu0 0
    %3071 = vmatpush2.bf16.msra.mxu0 %v3016
    %3072 = vmatprep.mubr.bf16.mxu0 %v2941
    %3073 = vmatmul.mubr.bf16.gmra.mxu0 %v2940
    %v3074 = vpop.f32.mrf.mxu0
    %v3075 = vadd.f32 0.0, %v3074
    %v3076 = vpop.f32.mrf.mxu0
    %v3077 = vpop.f32.mrf.mxu0
    %v3078 = vpop.f32.mrf.mxu0
    %3079 = vdwg.mxu0
    %v3080 = vadd.f32 %v2844, %v3075
    %s3081 = scalar_lea.vmem %s2845, 2
    %v3082 = vld [vmem:[%s3081] ss:$8 sm:$0x3]
    %s3083 = scalar_lea.vmem %s2845, 418
    %v3084 = vld [vmem:[%s3083] ss:$8 sm:$0x3]
    %s3085 = scalar_lea.vmem %s2845, 3
    %v3086 = vld [vmem:[%s3085] ss:$8 sm:$0x3]
    %s3087 = scalar_lea.vmem %s2845, 419
    %v3088 = vld [vmem:[%s3087] ss:$8 sm:$0x3]
    %v3089 = vadd.f32 %v3082, %v3086
    %v3090 = vadd.f32 %v3084, %v3088
    %s3091 = scalar_lea.vmem %s2855, 2
    %v3092 = vld [vmem:[%s3091] ss:$8 sm:$0x3]
    %s3093 = scalar_lea.vmem %s2855, 418
    %v3094 = vld [vmem:[%s3093] ss:$8 sm:$0x3]
    %v3095 = vadd.f32 %v3089, %v3092
    %v3096 = vadd.f32 %v3090, %v3094
    %s3097 = scalar_lea.vmem %s2855, 3
    %v3098 = vld [vmem:[%s3097] ss:$8 sm:$0x3]
    %s3099 = scalar_lea.vmem %s2855, 419
    %v3100 = vld [vmem:[%s3099] ss:$8 sm:$0x3]
    %v3101 = vadd.f32 %v3095, %v3098
    %v3102 = vadd.f32 %v3096, %v3100
    %v3103 = vmul.f32 %v3101, 0.25
    %v3104 = vmul.f32 %v3102, 0.25
    %v3107 = vlaneseq
    %v3108 = vshrl.u32 %v3107, 7
    %v3109 = vsub.s32 0, %v3108
    %v3110 = vrot.slane %v3103, %v3109
    %v3111 = vlaneseq
    %v3112 = vshrl.u32 %v3111, 7
    %v3113 = vsub.s32 1, %v3112
    %v3114 = vrot.slane %v3103, %v3113
    %v3115 = vlaneseq
    %v3116 = vshrl.u32 %v3115, 7
    %v3117 = vsub.s32 0, %v3116
    %v3118 = vrot.slane %v3104, %v3117
    %v3119 = vlaneseq
    %v3120 = vshrl.u32 %v3119, 7
    %v3121 = vsub.s32 1, %v3120
    %v3122 = vrot.slane %v3104, %v3121
    %v3127 = vpack.c.bf16 %v3110, %v3110
    %v3128 = vpack.c.bf16 %v3114, %v3114
    %v3129 = vpack.c.bf16 %v3118, %v3118
    %v3130 = vpack.c.bf16 %v3122, %v3122
    %s3131 = scalar_lea.vmem %s1, 1664
    %v3132 = vld [vmem:[%s3131] sm:$0xf]
    %v3133 = vld [vmem:[%s3131 + $0x4] sm:$0xf]
    %v3134 = vld [vmem:[%s3131 + $0x8] sm:$0xf]
    %v3135 = vld [vmem:[%s3131 + $0xc] sm:$0xf]
    %v3136 = vld [vmem:[%s3131 + $0x10] sm:$0xf]
    %v3137 = vld [vmem:[%s3131 + $0x14] sm:$0xf]
    %v3138 = vld [vmem:[%s3131 + $0x18] sm:$0xf]
    %v3139 = vld [vmem:[%s3131 + $0x1c] sm:$0xf]
    %v3140 = vld [vmem:[%s3131 + $0x20] sm:$0xf]
    %v3141 = vld [vmem:[%s3131 + $0x24] sm:$0xf]
    %v3142 = vld [vmem:[%s3131 + $0x28] sm:$0xf]
    %v3143 = vld [vmem:[%s3131 + $0x2c] sm:$0xf]
    %v3144 = vld [vmem:[%s3131 + $0x30] sm:$0xf]
    %v3145 = vld [vmem:[%s3131 + $0x34] sm:$0xf]
    %v3146 = vld [vmem:[%s3131 + $0x38] sm:$0xf]
    %v3147 = vld [vmem:[%s3131 + $0x3c] sm:$0xf]
    %v3148 = vld [vmem:[%s3131 + $0x40] sm:$0xf]
    %v3149 = vld [vmem:[%s3131 + $0x44] sm:$0xf]
    %v3150 = vld [vmem:[%s3131 + $0x48] sm:$0xf]
    %v3151 = vld [vmem:[%s3131 + $0x4c] sm:$0xf]
    %v3152 = vld [vmem:[%s3131 + $0x50] sm:$0xf]
    %v3153 = vld [vmem:[%s3131 + $0x54] sm:$0xf]
    %v3154 = vld [vmem:[%s3131 + $0x58] sm:$0xf]
    %v3155 = vld [vmem:[%s3131 + $0x5c] sm:$0xf]
    %v3156 = vld [vmem:[%s3131 + $0x60] sm:$0xf]
    %v3157 = vld [vmem:[%s3131 + $0x64] sm:$0xf]
    %v3158 = vld [vmem:[%s3131 + $0x68] sm:$0xf]
    %v3159 = vld [vmem:[%s3131 + $0x6c] sm:$0xf]
    %v3160 = vld [vmem:[%s3131 + $0x70] sm:$0xf]
    %v3161 = vld [vmem:[%s3131 + $0x74] sm:$0xf]
    %v3162 = vld [vmem:[%s3131 + $0x78] sm:$0xf]
    %v3163 = vld [vmem:[%s3131 + $0x7c] sm:$0xf]
    %v3168 = vunpack.c.l.b16 %v3127
    %v3169 = vunpack.c.l.b16 %v3128
    %v3170 = vunpack.c.l.b16 %v3129
    %v3171 = vunpack.c.l.b16 %v3130
    %v3172 = vrot.slane %v3170, 7
    %v3173 = vsel %vm189, %v3172, %v3168
    %v3174 = vrot.slane %v3171, 7
    %v3175 = vsel %vm189, %v3174, %v3169
    %v3176 = vpack.c.b16 %v3173, %v3173
    %v3177 = vpack.c.b16 %v3175, %v3175
    %v3212 = vunpack.c.l.b16 %v3132
    %v3213 = vunpack.c.l.b16 %v3133
    %v3214 = vunpack.c.l.b16 %v3134
    %v3215 = vunpack.c.l.b16 %v3135
    %v3216 = vunpack.c.l.b16 %v3136
    %v3217 = vunpack.c.l.b16 %v3137
    %v3218 = vunpack.c.l.b16 %v3138
    %v3219 = vunpack.c.l.b16 %v3139
    %v3220 = vunpack.c.l.b16 %v3140
    %v3221 = vunpack.c.l.b16 %v3141
    %v3222 = vunpack.c.l.b16 %v3142
    %v3223 = vunpack.c.l.b16 %v3143
    %v3224 = vunpack.c.l.b16 %v3144
    %v3225 = vunpack.c.l.b16 %v3145
    %v3226 = vunpack.c.l.b16 %v3146
    %v3227 = vunpack.c.l.b16 %v3147
    %v3228 = vunpack.c.l.b16 %v3148
    %v3229 = vunpack.c.l.b16 %v3149
    %v3230 = vunpack.c.l.b16 %v3150
    %v3231 = vunpack.c.l.b16 %v3151
    %v3232 = vunpack.c.l.b16 %v3152
    %v3233 = vunpack.c.l.b16 %v3153
    %v3234 = vunpack.c.l.b16 %v3154
    %v3235 = vunpack.c.l.b16 %v3155
    %v3236 = vunpack.c.l.b16 %v3156
    %v3237 = vunpack.c.l.b16 %v3157
    %v3238 = vunpack.c.l.b16 %v3158
    %v3239 = vunpack.c.l.b16 %v3159
    %v3240 = vunpack.c.l.b16 %v3160
    %v3241 = vunpack.c.l.b16 %v3161
    %v3242 = vunpack.c.l.b16 %v3162
    %v3243 = vunpack.c.l.b16 %v3163
    %v3244 = vpack.c.b16 %v3213, %v3212
    %v3245 = vpack.c.b16 %v3215, %v3214
    %v3246 = vpack.c.b16 %v3217, %v3216
    %v3247 = vpack.c.b16 %v3219, %v3218
    %v3248 = vpack.c.b16 %v3221, %v3220
    %v3249 = vpack.c.b16 %v3223, %v3222
    %v3250 = vpack.c.b16 %v3225, %v3224
    %v3251 = vpack.c.b16 %v3227, %v3226
    %v3252 = vpack.c.b16 %v3229, %v3228
    %v3253 = vpack.c.b16 %v3231, %v3230
    %v3254 = vpack.c.b16 %v3233, %v3232
    %v3255 = vpack.c.b16 %v3235, %v3234
    %v3256 = vpack.c.b16 %v3237, %v3236
    %v3257 = vpack.c.b16 %v3239, %v3238
    %v3258 = vpack.c.b16 %v3241, %v3240
    %v3259 = vpack.c.b16 %v3243, %v3242
    %3276 = vmatprep.subr.bf16.mxu0 0
    %3277 = vmatpush1.bf16.msra.mxu0 %v3251
    %3278 = vmatprep.subr.bf16.mxu0 0
    %3279 = vmatpush1.bf16.msra.mxu0 %v3250
    %3280 = vmatprep.subr.bf16.mxu0 0
    %3281 = vmatpush1.bf16.msra.mxu0 %v3249
    %3282 = vmatprep.subr.bf16.mxu0 0
    %3283 = vmatpush1.bf16.msra.mxu0 %v3248
    %3284 = vmatprep.subr.bf16.mxu0 0
    %3285 = vmatpush1.bf16.msra.mxu0 %v3247
    %3286 = vmatprep.subr.bf16.mxu0 0
    %3287 = vmatpush1.bf16.msra.mxu0 %v3246
    %3288 = vmatprep.subr.bf16.mxu0 0
    %3289 = vmatpush1.bf16.msra.mxu0 %v3245
    %3290 = vmatprep.subr.bf16.mxu0 0
    %3291 = vmatpush1.bf16.msra.mxu0 %v3244
    %3292 = vmatprep.subr.bf16.mxu0 0
    %3293 = vmatpush2.bf16.msra.mxu0 %v3259
    %3294 = vmatprep.subr.bf16.mxu0 0
    %3295 = vmatpush2.bf16.msra.mxu0 %v3258
    %3296 = vmatprep.subr.bf16.mxu0 0
    %3297 = vmatpush2.bf16.msra.mxu0 %v3257
    %3298 = vmatprep.subr.bf16.mxu0 0
    %3299 = vmatpush2.bf16.msra.mxu0 %v3256
    %3300 = vmatprep.subr.bf16.mxu0 0
    %3301 = vmatpush2.bf16.msra.mxu0 %v3255
    %3302 = vmatprep.subr.bf16.mxu0 0
    %3303 = vmatpush2.bf16.msra.mxu0 %v3254
    %3304 = vmatprep.subr.bf16.mxu0 0
    %3305 = vmatpush2.bf16.msra.mxu0 %v3253
    %3306 = vmatprep.subr.bf16.mxu0 0
    %3307 = vmatpush2.bf16.msra.mxu0 %v3252
    %3308 = vmatprep.mubr.bf16.mxu0 %v3177
    %3309 = vmatmul.mubr.bf16.gmra.mxu0 %v3176
    %v3310 = vpop.f32.mrf.mxu0
    %v3311 = vadd.f32 0.0, %v3310
    %v3312 = vpop.f32.mrf.mxu0
    %v3313 = vpop.f32.mrf.mxu0
    %v3314 = vpop.f32.mrf.mxu0
    %3315 = vdwg.mxu0
    %v3316 = vadd.f32 %v3080, %v3311
    %s3317 = scalar_lea.vmem %s2845, 4
    %v3318 = vld [vmem:[%s3317] ss:$8 sm:$0x3]
    %s3319 = scalar_lea.vmem %s2845, 420
    %v3320 = vld [vmem:[%s3319] ss:$8 sm:$0x3]
    %s3321 = scalar_lea.vmem %s2845, 5
    %v3322 = vld [vmem:[%s3321] ss:$8 sm:$0x3]
    %s3323 = scalar_lea.vmem %s2845, 421
    %v3324 = vld [vmem:[%s3323] ss:$8 sm:$0x3]
    %v3325 = vadd.f32 %v3318, %v3322
    %v3326 = vadd.f32 %v3320, %v3324
    %s3327 = scalar_lea.vmem %s2855, 4
    %v3328 = vld [vmem:[%s3327] ss:$8 sm:$0x3]
    %s3329 = scalar_lea.vmem %s2855, 420
    %v3330 = vld [vmem:[%s3329] ss:$8 sm:$0x3]
    %v3331 = vadd.f32 %v3325, %v3328
    %v3332 = vadd.f32 %v3326, %v3330
    %s3333 = scalar_lea.vmem %s2855, 5
    %v3334 = vld [vmem:[%s3333] ss:$8 sm:$0x3]
    %s3335 = scalar_lea.vmem %s2855, 421
    %v3336 = vld [vmem:[%s3335] ss:$8 sm:$0x3]
    %v3337 = vadd.f32 %v3331, %v3334
    %v3338 = vadd.f32 %v3332, %v3336
    %v3339 = vmul.f32 %v3337, 0.25
    %v3340 = vmul.f32 %v3338, 0.25
    %v3343 = vlaneseq
    %v3344 = vshrl.u32 %v3343, 7
    %v3345 = vsub.s32 0, %v3344
    %v3346 = vrot.slane %v3339, %v3345
    %v3347 = vlaneseq
    %v3348 = vshrl.u32 %v3347, 7
    %v3349 = vsub.s32 1, %v3348
    %v3350 = vrot.slane %v3339, %v3349
    %v3351 = vlaneseq
    %v3352 = vshrl.u32 %v3351, 7
    %v3353 = vsub.s32 0, %v3352
    %v3354 = vrot.slane %v3340, %v3353
    %v3355 = vlaneseq
    %v3356 = vshrl.u32 %v3355, 7
    %v3357 = vsub.s32 1, %v3356
    %v3358 = vrot.slane %v3340, %v3357
    %v3363 = vpack.c.bf16 %v3346, %v3346
    %v3364 = vpack.c.bf16 %v3350, %v3350
    %v3365 = vpack.c.bf16 %v3354, %v3354
    %v3366 = vpack.c.bf16 %v3358, %v3358
    %s3367 = scalar_lea.vmem %s1, 1792
    %v3368 = vld [vmem:[%s3367] sm:$0xf]
    %v3369 = vld [vmem:[%s3367 + $0x4] sm:$0xf]
    %v3370 = vld [vmem:[%s3367 + $0x8] sm:$0xf]
    %v3371 = vld [vmem:[%s3367 + $0xc] sm:$0xf]
    %v3372 = vld [vmem:[%s3367 + $0x10] sm:$0xf]
    %v3373 = vld [vmem:[%s3367 + $0x14] sm:$0xf]
    %v3374 = vld [vmem:[%s3367 + $0x18] sm:$0xf]
    %v3375 = vld [vmem:[%s3367 + $0x1c] sm:$0xf]
    %v3376 = vld [vmem:[%s3367 + $0x20] sm:$0xf]
    %v3377 = vld [vmem:[%s3367 + $0x24] sm:$0xf]
    %v3378 = vld [vmem:[%s3367 + $0x28] sm:$0xf]
    %v3379 = vld [vmem:[%s3367 + $0x2c] sm:$0xf]
    %v3380 = vld [vmem:[%s3367 + $0x30] sm:$0xf]
    %v3381 = vld [vmem:[%s3367 + $0x34] sm:$0xf]
    %v3382 = vld [vmem:[%s3367 + $0x38] sm:$0xf]
    %v3383 = vld [vmem:[%s3367 + $0x3c] sm:$0xf]
    %v3384 = vld [vmem:[%s3367 + $0x40] sm:$0xf]
    %v3385 = vld [vmem:[%s3367 + $0x44] sm:$0xf]
    %v3386 = vld [vmem:[%s3367 + $0x48] sm:$0xf]
    %v3387 = vld [vmem:[%s3367 + $0x4c] sm:$0xf]
    %v3388 = vld [vmem:[%s3367 + $0x50] sm:$0xf]
    %v3389 = vld [vmem:[%s3367 + $0x54] sm:$0xf]
    %v3390 = vld [vmem:[%s3367 + $0x58] sm:$0xf]
    %v3391 = vld [vmem:[%s3367 + $0x5c] sm:$0xf]
    %v3392 = vld [vmem:[%s3367 + $0x60] sm:$0xf]
    %v3393 = vld [vmem:[%s3367 + $0x64] sm:$0xf]
    %v3394 = vld [vmem:[%s3367 + $0x68] sm:$0xf]
    %v3395 = vld [vmem:[%s3367 + $0x6c] sm:$0xf]
    %v3396 = vld [vmem:[%s3367 + $0x70] sm:$0xf]
    %v3397 = vld [vmem:[%s3367 + $0x74] sm:$0xf]
    %v3398 = vld [vmem:[%s3367 + $0x78] sm:$0xf]
    %v3399 = vld [vmem:[%s3367 + $0x7c] sm:$0xf]
    %v3404 = vunpack.c.l.b16 %v3363
    %v3405 = vunpack.c.l.b16 %v3364
    %v3406 = vunpack.c.l.b16 %v3365
    %v3407 = vunpack.c.l.b16 %v3366
    %v3408 = vrot.slane %v3406, 7
    %v3409 = vsel %vm189, %v3408, %v3404
    %v3410 = vrot.slane %v3407, 7
    %v3411 = vsel %vm189, %v3410, %v3405
    %v3412 = vpack.c.b16 %v3409, %v3409
    %v3413 = vpack.c.b16 %v3411, %v3411
    %v3448 = vunpack.c.l.b16 %v3368
    %v3449 = vunpack.c.l.b16 %v3369
    %v3450 = vunpack.c.l.b16 %v3370
    %v3451 = vunpack.c.l.b16 %v3371
    %v3452 = vunpack.c.l.b16 %v3372
    %v3453 = vunpack.c.l.b16 %v3373
    %v3454 = vunpack.c.l.b16 %v3374
    %v3455 = vunpack.c.l.b16 %v3375
    %v3456 = vunpack.c.l.b16 %v3376
    %v3457 = vunpack.c.l.b16 %v3377
    %v3458 = vunpack.c.l.b16 %v3378
    %v3459 = vunpack.c.l.b16 %v3379
    %v3460 = vunpack.c.l.b16 %v3380
    %v3461 = vunpack.c.l.b16 %v3381
    %v3462 = vunpack.c.l.b16 %v3382
    %v3463 = vunpack.c.l.b16 %v3383
    %v3464 = vunpack.c.l.b16 %v3384
    %v3465 = vunpack.c.l.b16 %v3385
    %v3466 = vunpack.c.l.b16 %v3386
    %v3467 = vunpack.c.l.b16 %v3387
    %v3468 = vunpack.c.l.b16 %v3388
    %v3469 = vunpack.c.l.b16 %v3389
    %v3470 = vunpack.c.l.b16 %v3390
    %v3471 = vunpack.c.l.b16 %v3391
    %v3472 = vunpack.c.l.b16 %v3392
    %v3473 = vunpack.c.l.b16 %v3393
    %v3474 = vunpack.c.l.b16 %v3394
    %v3475 = vunpack.c.l.b16 %v3395
    %v3476 = vunpack.c.l.b16 %v3396
    %v3477 = vunpack.c.l.b16 %v3397
    %v3478 = vunpack.c.l.b16 %v3398
    %v3479 = vunpack.c.l.b16 %v3399
    %v3480 = vpack.c.b16 %v3449, %v3448
    %v3481 = vpack.c.b16 %v3451, %v3450
    %v3482 = vpack.c.b16 %v3453, %v3452
    %v3483 = vpack.c.b16 %v3455, %v3454
    %v3484 = vpack.c.b16 %v3457, %v3456
    %v3485 = vpack.c.b16 %v3459, %v3458
    %v3486 = vpack.c.b16 %v3461, %v3460
    %v3487 = vpack.c.b16 %v3463, %v3462
    %v3488 = vpack.c.b16 %v3465, %v3464
    %v3489 = vpack.c.b16 %v3467, %v3466
    %v3490 = vpack.c.b16 %v3469, %v3468
    %v3491 = vpack.c.b16 %v3471, %v3470
    %v3492 = vpack.c.b16 %v3473, %v3472
    %v3493 = vpack.c.b16 %v3475, %v3474
    %v3494 = vpack.c.b16 %v3477, %v3476
    %v3495 = vpack.c.b16 %v3479, %v3478
    %3512 = vmatprep.subr.bf16.mxu0 0
    %3513 = vmatpush1.bf16.msra.mxu0 %v3487
    %3514 = vmatprep.subr.bf16.mxu0 0
    %3515 = vmatpush1.bf16.msra.mxu0 %v3486
    %3516 = vmatprep.subr.bf16.mxu0 0
    %3517 = vmatpush1.bf16.msra.mxu0 %v3485
    %3518 = vmatprep.subr.bf16.mxu0 0
    %3519 = vmatpush1.bf16.msra.mxu0 %v3484
    %3520 = vmatprep.subr.bf16.mxu0 0
    %3521 = vmatpush1.bf16.msra.mxu0 %v3483
    %3522 = vmatprep.subr.bf16.mxu0 0
    %3523 = vmatpush1.bf16.msra.mxu0 %v3482
    %3524 = vmatprep.subr.bf16.mxu0 0
    %3525 = vmatpush1.bf16.msra.mxu0 %v3481
    %3526 = vmatprep.subr.bf16.mxu0 0
    %3527 = vmatpush1.bf16.msra.mxu0 %v3480
    %3528 = vmatprep.subr.bf16.mxu0 0
    %3529 = vmatpush2.bf16.msra.mxu0 %v3495
    %3530 = vmatprep.subr.bf16.mxu0 0
    %3531 = vmatpush2.bf16.msra.mxu0 %v3494
    %3532 = vmatprep.subr.bf16.mxu0 0
    %3533 = vmatpush2.bf16.msra.mxu0 %v3493
    %3534 = vmatprep.subr.bf16.mxu0 0
    %3535 = vmatpush2.bf16.msra.mxu0 %v3492
    %3536 = vmatprep.subr.bf16.mxu0 0
    %3537 = vmatpush2.bf16.msra.mxu0 %v3491
    %3538 = vmatprep.subr.bf16.mxu0 0
    %3539 = vmatpush2.bf16.msra.mxu0 %v3490
    %3540 = vmatprep.subr.bf16.mxu0 0
    %3541 = vmatpush2.bf16.msra.mxu0 %v3489
    %3542 = vmatprep.subr.bf16.mxu0 0
    %3543 = vmatpush2.bf16.msra.mxu0 %v3488
    %3544 = vmatprep.mubr.bf16.mxu0 %v3413
    %3545 = vmatmul.mubr.bf16.gmra.mxu0 %v3412
    %v3546 = vpop.f32.mrf.mxu0
    %v3547 = vadd.f32 0.0, %v3546
    %v3548 = vpop.f32.mrf.mxu0
    %v3549 = vpop.f32.mrf.mxu0
    %v3550 = vpop.f32.mrf.mxu0
    %3551 = vdwg.mxu0
    %v3552 = vadd.f32 %v3316, %v3547
    %s3553 = scalar_lea.vmem %s2845, 6
    %v3554 = vld [vmem:[%s3553] ss:$8 sm:$0x3]
    %s3555 = scalar_lea.vmem %s2845, 422
    %v3556 = vld [vmem:[%s3555] ss:$8 sm:$0x3]
    %s3557 = scalar_lea.vmem %s2845, 7
    %v3558 = vld [vmem:[%s3557] ss:$8 sm:$0x3]
    %s3559 = scalar_lea.vmem %s2845, 423
    %v3560 = vld [vmem:[%s3559] ss:$8 sm:$0x3]
    %v3561 = vadd.f32 %v3554, %v3558
    %v3562 = vadd.f32 %v3556, %v3560
    %s3563 = scalar_lea.vmem %s2855, 6
    %v3564 = vld [vmem:[%s3563] ss:$8 sm:$0x3]
    %s3565 = scalar_lea.vmem %s2855, 422
    %v3566 = vld [vmem:[%s3565] ss:$8 sm:$0x3]
    %v3567 = vadd.f32 %v3561, %v3564
    %v3568 = vadd.f32 %v3562, %v3566
    %s3569 = scalar_lea.vmem %s2855, 7
    %v3570 = vld [vmem:[%s3569] ss:$8 sm:$0x3]
    %s3571 = scalar_lea.vmem %s2855, 423
    %v3572 = vld [vmem:[%s3571] ss:$8 sm:$0x3]
    %v3573 = vadd.f32 %v3567, %v3570
    %v3574 = vadd.f32 %v3568, %v3572
    %v3575 = vmul.f32 %v3573, 0.25
    %v3576 = vmul.f32 %v3574, 0.25
    %v3579 = vlaneseq
    %v3580 = vshrl.u32 %v3579, 7
    %v3581 = vsub.s32 0, %v3580
    %v3582 = vrot.slane %v3575, %v3581
    %v3583 = vlaneseq
    %v3584 = vshrl.u32 %v3583, 7
    %v3585 = vsub.s32 1, %v3584
    %v3586 = vrot.slane %v3575, %v3585
    %v3587 = vlaneseq
    %v3588 = vshrl.u32 %v3587, 7
    %v3589 = vsub.s32 0, %v3588
    %v3590 = vrot.slane %v3576, %v3589
    %v3591 = vlaneseq
    %v3592 = vshrl.u32 %v3591, 7
    %v3593 = vsub.s32 1, %v3592
    %v3594 = vrot.slane %v3576, %v3593
    %v3599 = vpack.c.bf16 %v3582, %v3582
    %v3600 = vpack.c.bf16 %v3586, %v3586
    %v3601 = vpack.c.bf16 %v3590, %v3590
    %v3602 = vpack.c.bf16 %v3594, %v3594
    %s3603 = scalar_lea.vmem %s1, 1920
    %v3604 = vld [vmem:[%s3603] sm:$0xf]
    %v3605 = vld [vmem:[%s3603 + $0x4] sm:$0xf]
    %v3606 = vld [vmem:[%s3603 + $0x8] sm:$0xf]
    %v3607 = vld [vmem:[%s3603 + $0xc] sm:$0xf]
    %v3608 = vld [vmem:[%s3603 + $0x10] sm:$0xf]
    %v3609 = vld [vmem:[%s3603 + $0x14] sm:$0xf]
    %v3610 = vld [vmem:[%s3603 + $0x18] sm:$0xf]
    %v3611 = vld [vmem:[%s3603 + $0x1c] sm:$0xf]
    %v3612 = vld [vmem:[%s3603 + $0x20] sm:$0xf]
    %v3613 = vld [vmem:[%s3603 + $0x24] sm:$0xf]
    %v3614 = vld [vmem:[%s3603 + $0x28] sm:$0xf]
    %v3615 = vld [vmem:[%s3603 + $0x2c] sm:$0xf]
    %v3616 = vld [vmem:[%s3603 + $0x30] sm:$0xf]
    %v3617 = vld [vmem:[%s3603 + $0x34] sm:$0xf]
    %v3618 = vld [vmem:[%s3603 + $0x38] sm:$0xf]
    %v3619 = vld [vmem:[%s3603 + $0x3c] sm:$0xf]
    %v3620 = vld [vmem:[%s3603 + $0x40] sm:$0xf]
    %v3621 = vld [vmem:[%s3603 + $0x44] sm:$0xf]
    %v3622 = vld [vmem:[%s3603 + $0x48] sm:$0xf]
    %v3623 = vld [vmem:[%s3603 + $0x4c] sm:$0xf]
    %v3624 = vld [vmem:[%s3603 + $0x50] sm:$0xf]
    %v3625 = vld [vmem:[%s3603 + $0x54] sm:$0xf]
    %v3626 = vld [vmem:[%s3603 + $0x58] sm:$0xf]
    %v3627 = vld [vmem:[%s3603 + $0x5c] sm:$0xf]
    %v3628 = vld [vmem:[%s3603 + $0x60] sm:$0xf]
    %v3629 = vld [vmem:[%s3603 + $0x64] sm:$0xf]
    %v3630 = vld [vmem:[%s3603 + $0x68] sm:$0xf]
    %v3631 = vld [vmem:[%s3603 + $0x6c] sm:$0xf]
    %v3632 = vld [vmem:[%s3603 + $0x70] sm:$0xf]
    %v3633 = vld [vmem:[%s3603 + $0x74] sm:$0xf]
    %v3634 = vld [vmem:[%s3603 + $0x78] sm:$0xf]
    %v3635 = vld [vmem:[%s3603 + $0x7c] sm:$0xf]
    %v3640 = vunpack.c.l.b16 %v3599
    %v3641 = vunpack.c.l.b16 %v3600
    %v3642 = vunpack.c.l.b16 %v3601
    %v3643 = vunpack.c.l.b16 %v3602
    %v3644 = vrot.slane %v3642, 7
    %v3645 = vsel %vm189, %v3644, %v3640
    %v3646 = vrot.slane %v3643, 7
    %v3647 = vsel %vm189, %v3646, %v3641
    %v3648 = vpack.c.b16 %v3645, %v3645
    %v3649 = vpack.c.b16 %v3647, %v3647
    %v3684 = vunpack.c.l.b16 %v3604
    %v3685 = vunpack.c.l.b16 %v3605
    %v3686 = vunpack.c.l.b16 %v3606
    %v3687 = vunpack.c.l.b16 %v3607
    %v3688 = vunpack.c.l.b16 %v3608
    %v3689 = vunpack.c.l.b16 %v3609
    %v3690 = vunpack.c.l.b16 %v3610
    %v3691 = vunpack.c.l.b16 %v3611
    %v3692 = vunpack.c.l.b16 %v3612
    %v3693 = vunpack.c.l.b16 %v3613
    %v3694 = vunpack.c.l.b16 %v3614
    %v3695 = vunpack.c.l.b16 %v3615
    %v3696 = vunpack.c.l.b16 %v3616
    %v3697 = vunpack.c.l.b16 %v3617
    %v3698 = vunpack.c.l.b16 %v3618
    %v3699 = vunpack.c.l.b16 %v3619
    %v3700 = vunpack.c.l.b16 %v3620
    %v3701 = vunpack.c.l.b16 %v3621
    %v3702 = vunpack.c.l.b16 %v3622
    %v3703 = vunpack.c.l.b16 %v3623
    %v3704 = vunpack.c.l.b16 %v3624
    %v3705 = vunpack.c.l.b16 %v3625
    %v3706 = vunpack.c.l.b16 %v3626
    %v3707 = vunpack.c.l.b16 %v3627
    %v3708 = vunpack.c.l.b16 %v3628
    %v3709 = vunpack.c.l.b16 %v3629
    %v3710 = vunpack.c.l.b16 %v3630
    %v3711 = vunpack.c.l.b16 %v3631
    %v3712 = vunpack.c.l.b16 %v3632
    %v3713 = vunpack.c.l.b16 %v3633
    %v3714 = vunpack.c.l.b16 %v3634
    %v3715 = vunpack.c.l.b16 %v3635
    %v3716 = vpack.c.b16 %v3685, %v3684
    %v3717 = vpack.c.b16 %v3687, %v3686
    %v3718 = vpack.c.b16 %v3689, %v3688
    %v3719 = vpack.c.b16 %v3691, %v3690
    %v3720 = vpack.c.b16 %v3693, %v3692
    %v3721 = vpack.c.b16 %v3695, %v3694
    %v3722 = vpack.c.b16 %v3697, %v3696
    %v3723 = vpack.c.b16 %v3699, %v3698
    %v3724 = vpack.c.b16 %v3701, %v3700
    %v3725 = vpack.c.b16 %v3703, %v3702
    %v3726 = vpack.c.b16 %v3705, %v3704
    %v3727 = vpack.c.b16 %v3707, %v3706
    %v3728 = vpack.c.b16 %v3709, %v3708
    %v3729 = vpack.c.b16 %v3711, %v3710
    %v3730 = vpack.c.b16 %v3713, %v3712
    %v3731 = vpack.c.b16 %v3715, %v3714
    %3748 = vmatprep.subr.bf16.mxu0 0
    %3749 = vmatpush1.bf16.msra.mxu0 %v3723
    %3750 = vmatprep.subr.bf16.mxu0 0
    %3751 = vmatpush1.bf16.msra.mxu0 %v3722
    %3752 = vmatprep.subr.bf16.mxu0 0
    %3753 = vmatpush1.bf16.msra.mxu0 %v3721
    %3754 = vmatprep.subr.bf16.mxu0 0
    %3755 = vmatpush1.bf16.msra.mxu0 %v3720
    %3756 = vmatprep.subr.bf16.mxu0 0
    %3757 = vmatpush1.bf16.msra.mxu0 %v3719
    %3758 = vmatprep.subr.bf16.mxu0 0
    %3759 = vmatpush1.bf16.msra.mxu0 %v3718
    %3760 = vmatprep.subr.bf16.mxu0 0
    %3761 = vmatpush1.bf16.msra.mxu0 %v3717
    %3762 = vmatprep.subr.bf16.mxu0 0
    %3763 = vmatpush1.bf16.msra.mxu0 %v3716
    %3764 = vmatprep.subr.bf16.mxu0 0
    %3765 = vmatpush2.bf16.msra.mxu0 %v3731
    %3766 = vmatprep.subr.bf16.mxu0 0
    %3767 = vmatpush2.bf16.msra.mxu0 %v3730
    %3768 = vmatprep.subr.bf16.mxu0 0
    %3769 = vmatpush2.bf16.msra.mxu0 %v3729
    %3770 = vmatprep.subr.bf16.mxu0 0
    %3771 = vmatpush2.bf16.msra.mxu0 %v3728
    %3772 = vmatprep.subr.bf16.mxu0 0
    %3773 = vmatpush2.bf16.msra.mxu0 %v3727
    %3774 = vmatprep.subr.bf16.mxu0 0
    %3775 = vmatpush2.bf16.msra.mxu0 %v3726
    %3776 = vmatprep.subr.bf16.mxu0 0
    %3777 = vmatpush2.bf16.msra.mxu0 %v3725
    %3778 = vmatprep.subr.bf16.mxu0 0
    %3779 = vmatpush2.bf16.msra.mxu0 %v3724
    %3780 = vmatprep.mubr.bf16.mxu0 %v3649
    %3781 = vmatmul.mubr.bf16.gmra.mxu0 %v3648
    %v3782 = vpop.f32.mrf.mxu0
    %v3783 = vadd.f32 0.0, %v3782
    %v3784 = vpop.f32.mrf.mxu0
    %v3785 = vpop.f32.mrf.mxu0
    %v3786 = vpop.f32.mrf.mxu0
    %3787 = vdwg.mxu0
    %v3788 = vadd.f32 %v3552, %v3783
    %s3789 = scalar_lea.vmem %s2845, 16
    %v3790 = vld [vmem:[%s3789] ss:$8 sm:$0x3]
    %s3791 = scalar_lea.vmem %s2845, 432
    %v3792 = vld [vmem:[%s3791] ss:$8 sm:$0x3]
    %s3793 = scalar_lea.vmem %s2845, 17
    %v3794 = vld [vmem:[%s3793] ss:$8 sm:$0x3]
    %s3795 = scalar_lea.vmem %s2845, 433
    %v3796 = vld [vmem:[%s3795] ss:$8 sm:$0x3]
    %v3797 = vadd.f32 %v3790, %v3794
    %v3798 = vadd.f32 %v3792, %v3796
    %s3799 = scalar_lea.vmem %s2855, 16
    %v3800 = vld [vmem:[%s3799] ss:$8 sm:$0x3]
    %s3801 = scalar_lea.vmem %s2855, 432
    %v3802 = vld [vmem:[%s3801] ss:$8 sm:$0x3]
    %v3803 = vadd.f32 %v3797, %v3800
    %v3804 = vadd.f32 %v3798, %v3802
    %s3805 = scalar_lea.vmem %s2855, 17
    %v3806 = vld [vmem:[%s3805] ss:$8 sm:$0x3]
    %s3807 = scalar_lea.vmem %s2855, 433
    %v3808 = vld [vmem:[%s3807] ss:$8 sm:$0x3]
    %v3809 = vadd.f32 %v3803, %v3806
    %v3810 = vadd.f32 %v3804, %v3808
    %v3811 = vmul.f32 %v3809, 0.25
    %v3812 = vmul.f32 %v3810, 0.25
    %v3815 = vlaneseq
    %v3816 = vshrl.u32 %v3815, 7
    %v3817 = vsub.s32 0, %v3816
    %v3818 = vrot.slane %v3811, %v3817
    %v3819 = vlaneseq
    %v3820 = vshrl.u32 %v3819, 7
    %v3821 = vsub.s32 1, %v3820
    %v3822 = vrot.slane %v3811, %v3821
    %v3823 = vlaneseq
    %v3824 = vshrl.u32 %v3823, 7
    %v3825 = vsub.s32 0, %v3824
    %v3826 = vrot.slane %v3812, %v3825
    %v3827 = vlaneseq
    %v3828 = vshrl.u32 %v3827, 7
    %v3829 = vsub.s32 1, %v3828
    %v3830 = vrot.slane %v3812, %v3829
    %v3835 = vpack.c.bf16 %v3818, %v3818
    %v3836 = vpack.c.bf16 %v3822, %v3822
    %v3837 = vpack.c.bf16 %v3826, %v3826
    %v3838 = vpack.c.bf16 %v3830, %v3830
    %s3839 = scalar_lea.vmem %s1, 2048
    %v3840 = vld [vmem:[%s3839] sm:$0xf]
    %v3841 = vld [vmem:[%s3839 + $0x4] sm:$0xf]
    %v3842 = vld [vmem:[%s3839 + $0x8] sm:$0xf]
    %v3843 = vld [vmem:[%s3839 + $0xc] sm:$0xf]
    %v3844 = vld [vmem:[%s3839 + $0x10] sm:$0xf]
    %v3845 = vld [vmem:[%s3839 + $0x14] sm:$0xf]
    %v3846 = vld [vmem:[%s3839 + $0x18] sm:$0xf]
    %v3847 = vld [vmem:[%s3839 + $0x1c] sm:$0xf]
    %v3848 = vld [vmem:[%s3839 + $0x20] sm:$0xf]
    %v3849 = vld [vmem:[%s3839 + $0x24] sm:$0xf]
    %v3850 = vld [vmem:[%s3839 + $0x28] sm:$0xf]
    %v3851 = vld [vmem:[%s3839 + $0x2c] sm:$0xf]
    %v3852 = vld [vmem:[%s3839 + $0x30] sm:$0xf]
    %v3853 = vld [vmem:[%s3839 + $0x34] sm:$0xf]
    %v3854 = vld [vmem:[%s3839 + $0x38] sm:$0xf]
    %v3855 = vld [vmem:[%s3839 + $0x3c] sm:$0xf]
    %v3856 = vld [vmem:[%s3839 + $0x40] sm:$0xf]
    %v3857 = vld [vmem:[%s3839 + $0x44] sm:$0xf]
    %v3858 = vld [vmem:[%s3839 + $0x48] sm:$0xf]
    %v3859 = vld [vmem:[%s3839 + $0x4c] sm:$0xf]
    %v3860 = vld [vmem:[%s3839 + $0x50] sm:$0xf]
    %v3861 = vld [vmem:[%s3839 + $0x54] sm:$0xf]
    %v3862 = vld [vmem:[%s3839 + $0x58] sm:$0xf]
    %v3863 = vld [vmem:[%s3839 + $0x5c] sm:$0xf]
    %v3864 = vld [vmem:[%s3839 + $0x60] sm:$0xf]
    %v3865 = vld [vmem:[%s3839 + $0x64] sm:$0xf]
    %v3866 = vld [vmem:[%s3839 + $0x68] sm:$0xf]
    %v3867 = vld [vmem:[%s3839 + $0x6c] sm:$0xf]
    %v3868 = vld [vmem:[%s3839 + $0x70] sm:$0xf]
    %v3869 = vld [vmem:[%s3839 + $0x74] sm:$0xf]
    %v3870 = vld [vmem:[%s3839 + $0x78] sm:$0xf]
    %v3871 = vld [vmem:[%s3839 + $0x7c] sm:$0xf]
    %v3876 = vunpack.c.l.b16 %v3835
    %v3877 = vunpack.c.l.b16 %v3836
    %v3878 = vunpack.c.l.b16 %v3837
    %v3879 = vunpack.c.l.b16 %v3838
    %v3880 = vrot.slane %v3878, 7
    %v3881 = vsel %vm189, %v3880, %v3876
    %v3882 = vrot.slane %v3879, 7
    %v3883 = vsel %vm189, %v3882, %v3877
    %v3884 = vpack.c.b16 %v3881, %v3881
    %v3885 = vpack.c.b16 %v3883, %v3883
    %v3920 = vunpack.c.l.b16 %v3840
    %v3921 = vunpack.c.l.b16 %v3841
    %v3922 = vunpack.c.l.b16 %v3842
    %v3923 = vunpack.c.l.b16 %v3843
    %v3924 = vunpack.c.l.b16 %v3844
    %v3925 = vunpack.c.l.b16 %v3845
    %v3926 = vunpack.c.l.b16 %v3846
    %v3927 = vunpack.c.l.b16 %v3847
    %v3928 = vunpack.c.l.b16 %v3848
    %v3929 = vunpack.c.l.b16 %v3849
    %v3930 = vunpack.c.l.b16 %v3850
    %v3931 = vunpack.c.l.b16 %v3851
    %v3932 = vunpack.c.l.b16 %v3852
    %v3933 = vunpack.c.l.b16 %v3853
    %v3934 = vunpack.c.l.b16 %v3854
    %v3935 = vunpack.c.l.b16 %v3855
    %v3936 = vunpack.c.l.b16 %v3856
    %v3937 = vunpack.c.l.b16 %v3857
    %v3938 = vunpack.c.l.b16 %v3858
    %v3939 = vunpack.c.l.b16 %v3859
    %v3940 = vunpack.c.l.b16 %v3860
    %v3941 = vunpack.c.l.b16 %v3861
    %v3942 = vunpack.c.l.b16 %v3862
    %v3943 = vunpack.c.l.b16 %v3863
    %v3944 = vunpack.c.l.b16 %v3864
    %v3945 = vunpack.c.l.b16 %v3865
    %v3946 = vunpack.c.l.b16 %v3866
    %v3947 = vunpack.c.l.b16 %v3867
    %v3948 = vunpack.c.l.b16 %v3868
    %v3949 = vunpack.c.l.b16 %v3869
    %v3950 = vunpack.c.l.b16 %v3870
    %v3951 = vunpack.c.l.b16 %v3871
    %v3952 = vpack.c.b16 %v3921, %v3920
    %v3953 = vpack.c.b16 %v3923, %v3922
    %v3954 = vpack.c.b16 %v3925, %v3924
    %v3955 = vpack.c.b16 %v3927, %v3926
    %v3956 = vpack.c.b16 %v3929, %v3928
    %v3957 = vpack.c.b16 %v3931, %v3930
    %v3958 = vpack.c.b16 %v3933, %v3932
    %v3959 = vpack.c.b16 %v3935, %v3934
    %v3960 = vpack.c.b16 %v3937, %v3936
    %v3961 = vpack.c.b16 %v3939, %v3938
    %v3962 = vpack.c.b16 %v3941, %v3940
    %v3963 = vpack.c.b16 %v3943, %v3942
    %v3964 = vpack.c.b16 %v3945, %v3944
    %v3965 = vpack.c.b16 %v3947, %v3946
    %v3966 = vpack.c.b16 %v3949, %v3948
    %v3967 = vpack.c.b16 %v3951, %v3950
    %3984 = vmatprep.subr.bf16.mxu0 0
    %3985 = vmatpush1.bf16.msra.mxu0 %v3959
    %3986 = vmatprep.subr.bf16.mxu0 0
    %3987 = vmatpush1.bf16.msra.mxu0 %v3958
    %3988 = vmatprep.subr.bf16.mxu0 0
    %3989 = vmatpush1.bf16.msra.mxu0 %v3957
    %3990 = vmatprep.subr.bf16.mxu0 0
    %3991 = vmatpush1.bf16.msra.mxu0 %v3956
    %3992 = vmatprep.subr.bf16.mxu0 0
    %3993 = vmatpush1.bf16.msra.mxu0 %v3955
    %3994 = vmatprep.subr.bf16.mxu0 0
    %3995 = vmatpush1.bf16.msra.mxu0 %v3954
    %3996 = vmatprep.subr.bf16.mxu0 0
    %3997 = vmatpush1.bf16.msra.mxu0 %v3953
    %3998 = vmatprep.subr.bf16.mxu0 0
    %3999 = vmatpush1.bf16.msra.mxu0 %v3952
    %4000 = vmatprep.subr.bf16.mxu0 0
    %4001 = vmatpush2.bf16.msra.mxu0 %v3967
    %4002 = vmatprep.subr.bf16.mxu0 0
    %4003 = vmatpush2.bf16.msra.mxu0 %v3966
    %4004 = vmatprep.subr.bf16.mxu0 0
    %4005 = vmatpush2.bf16.msra.mxu0 %v3965
    %4006 = vmatprep.subr.bf16.mxu0 0
    %4007 = vmatpush2.bf16.msra.mxu0 %v3964
    %4008 = vmatprep.subr.bf16.mxu0 0
    %4009 = vmatpush2.bf16.msra.mxu0 %v3963
    %4010 = vmatprep.subr.bf16.mxu0 0
    %4011 = vmatpush2.bf16.msra.mxu0 %v3962
    %4012 = vmatprep.subr.bf16.mxu0 0
    %4013 = vmatpush2.bf16.msra.mxu0 %v3961
    %4014 = vmatprep.subr.bf16.mxu0 0
    %4015 = vmatpush2.bf16.msra.mxu0 %v3960
    %4016 = vmatprep.mubr.bf16.mxu0 %v3885
    %4017 = vmatmul.mubr.bf16.gmra.mxu0 %v3884
    %v4018 = vpop.f32.mrf.mxu0
    %v4019 = vadd.f32 0.0, %v4018
    %v4020 = vpop.f32.mrf.mxu0
    %v4021 = vpop.f32.mrf.mxu0
    %v4022 = vpop.f32.mrf.mxu0
    %4023 = vdwg.mxu0
    %v4024 = vadd.f32 %v3788, %v4019
    %s4025 = scalar_lea.vmem %s2845, 18
    %v4026 = vld [vmem:[%s4025] ss:$8 sm:$0x3]
    %s4027 = scalar_lea.vmem %s2845, 434
    %v4028 = vld [vmem:[%s4027] ss:$8 sm:$0x3]
    %s4029 = scalar_lea.vmem %s2845, 19
    %v4030 = vld [vmem:[%s4029] ss:$8 sm:$0x3]
    %s4031 = scalar_lea.vmem %s2845, 435
    %v4032 = vld [vmem:[%s4031] ss:$8 sm:$0x3]
    %v4033 = vadd.f32 %v4026, %v4030
    %v4034 = vadd.f32 %v4028, %v4032
    %s4035 = scalar_lea.vmem %s2855, 18
    %v4036 = vld [vmem:[%s4035] ss:$8 sm:$0x3]
    %s4037 = scalar_lea.vmem %s2855, 434
    %v4038 = vld [vmem:[%s4037] ss:$8 sm:$0x3]
    %v4039 = vadd.f32 %v4033, %v4036
    %v4040 = vadd.f32 %v4034, %v4038
    %s4041 = scalar_lea.vmem %s2855, 19
    %v4042 = vld [vmem:[%s4041] ss:$8 sm:$0x3]
    %s4043 = scalar_lea.vmem %s2855, 435
    %v4044 = vld [vmem:[%s4043] ss:$8 sm:$0x3]
    %v4045 = vadd.f32 %v4039, %v4042
    %v4046 = vadd.f32 %v4040, %v4044
    %v4047 = vmul.f32 %v4045, 0.25
    %v4048 = vmul.f32 %v4046, 0.25
    %v4051 = vlaneseq
    %v4052 = vshrl.u32 %v4051, 7
    %v4053 = vsub.s32 0, %v4052
    %v4054 = vrot.slane %v4047, %v4053
    %v4055 = vlaneseq
    %v4056 = vshrl.u32 %v4055, 7
    %v4057 = vsub.s32 1, %v4056
    %v4058 = vrot.slane %v4047, %v4057
    %v4059 = vlaneseq
    %v4060 = vshrl.u32 %v4059, 7
    %v4061 = vsub.s32 0, %v4060
    %v4062 = vrot.slane %v4048, %v4061
    %v4063 = vlaneseq
    %v4064 = vshrl.u32 %v4063, 7
    %v4065 = vsub.s32 1, %v4064
    %v4066 = vrot.slane %v4048, %v4065
    %v4071 = vpack.c.bf16 %v4054, %v4054
    %v4072 = vpack.c.bf16 %v4058, %v4058
    %v4073 = vpack.c.bf16 %v4062, %v4062
    %v4074 = vpack.c.bf16 %v4066, %v4066
    %s4075 = scalar_lea.vmem %s1, 2176
    %v4076 = vld [vmem:[%s4075] sm:$0xf]
    %v4077 = vld [vmem:[%s4075 + $0x4] sm:$0xf]
    %v4078 = vld [vmem:[%s4075 + $0x8] sm:$0xf]
    %v4079 = vld [vmem:[%s4075 + $0xc] sm:$0xf]
    %v4080 = vld [vmem:[%s4075 + $0x10] sm:$0xf]
    %v4081 = vld [vmem:[%s4075 + $0x14] sm:$0xf]
    %v4082 = vld [vmem:[%s4075 + $0x18] sm:$0xf]
    %v4083 = vld [vmem:[%s4075 + $0x1c] sm:$0xf]
    %v4084 = vld [vmem:[%s4075 + $0x20] sm:$0xf]
    %v4085 = vld [vmem:[%s4075 + $0x24] sm:$0xf]
    %v4086 = vld [vmem:[%s4075 + $0x28] sm:$0xf]
    %v4087 = vld [vmem:[%s4075 + $0x2c] sm:$0xf]
    %v4088 = vld [vmem:[%s4075 + $0x30] sm:$0xf]
    %v4089 = vld [vmem:[%s4075 + $0x34] sm:$0xf]
    %v4090 = vld [vmem:[%s4075 + $0x38] sm:$0xf]
    %v4091 = vld [vmem:[%s4075 + $0x3c] sm:$0xf]
    %v4092 = vld [vmem:[%s4075 + $0x40] sm:$0xf]
    %v4093 = vld [vmem:[%s4075 + $0x44] sm:$0xf]
    %v4094 = vld [vmem:[%s4075 + $0x48] sm:$0xf]
    %v4095 = vld [vmem:[%s4075 + $0x4c] sm:$0xf]
    %v4096 = vld [vmem:[%s4075 + $0x50] sm:$0xf]
    %v4097 = vld [vmem:[%s4075 + $0x54] sm:$0xf]
    %v4098 = vld [vmem:[%s4075 + $0x58] sm:$0xf]
    %v4099 = vld [vmem:[%s4075 + $0x5c] sm:$0xf]
    %v4100 = vld [vmem:[%s4075 + $0x60] sm:$0xf]
    %v4101 = vld [vmem:[%s4075 + $0x64] sm:$0xf]
    %v4102 = vld [vmem:[%s4075 + $0x68] sm:$0xf]
    %v4103 = vld [vmem:[%s4075 + $0x6c] sm:$0xf]
    %v4104 = vld [vmem:[%s4075 + $0x70] sm:$0xf]
    %v4105 = vld [vmem:[%s4075 + $0x74] sm:$0xf]
    %v4106 = vld [vmem:[%s4075 + $0x78] sm:$0xf]
    %v4107 = vld [vmem:[%s4075 + $0x7c] sm:$0xf]
    %v4112 = vunpack.c.l.b16 %v4071
    %v4113 = vunpack.c.l.b16 %v4072
    %v4114 = vunpack.c.l.b16 %v4073
    %v4115 = vunpack.c.l.b16 %v4074
    %v4116 = vrot.slane %v4114, 7
    %v4117 = vsel %vm189, %v4116, %v4112
    %v4118 = vrot.slane %v4115, 7
    %v4119 = vsel %vm189, %v4118, %v4113
    %v4120 = vpack.c.b16 %v4117, %v4117
    %v4121 = vpack.c.b16 %v4119, %v4119
    %v4156 = vunpack.c.l.b16 %v4076
    %v4157 = vunpack.c.l.b16 %v4077
    %v4158 = vunpack.c.l.b16 %v4078
    %v4159 = vunpack.c.l.b16 %v4079
    %v4160 = vunpack.c.l.b16 %v4080
    %v4161 = vunpack.c.l.b16 %v4081
    %v4162 = vunpack.c.l.b16 %v4082
    %v4163 = vunpack.c.l.b16 %v4083
    %v4164 = vunpack.c.l.b16 %v4084
    %v4165 = vunpack.c.l.b16 %v4085
    %v4166 = vunpack.c.l.b16 %v4086
    %v4167 = vunpack.c.l.b16 %v4087
    %v4168 = vunpack.c.l.b16 %v4088
    %v4169 = vunpack.c.l.b16 %v4089
    %v4170 = vunpack.c.l.b16 %v4090
    %v4171 = vunpack.c.l.b16 %v4091
    %v4172 = vunpack.c.l.b16 %v4092
    %v4173 = vunpack.c.l.b16 %v4093
    %v4174 = vunpack.c.l.b16 %v4094
    %v4175 = vunpack.c.l.b16 %v4095
    %v4176 = vunpack.c.l.b16 %v4096
    %v4177 = vunpack.c.l.b16 %v4097
    %v4178 = vunpack.c.l.b16 %v4098
    %v4179 = vunpack.c.l.b16 %v4099
    %v4180 = vunpack.c.l.b16 %v4100
    %v4181 = vunpack.c.l.b16 %v4101
    %v4182 = vunpack.c.l.b16 %v4102
    %v4183 = vunpack.c.l.b16 %v4103
    %v4184 = vunpack.c.l.b16 %v4104
    %v4185 = vunpack.c.l.b16 %v4105
    %v4186 = vunpack.c.l.b16 %v4106
    %v4187 = vunpack.c.l.b16 %v4107
    %v4188 = vpack.c.b16 %v4157, %v4156
    %v4189 = vpack.c.b16 %v4159, %v4158
    %v4190 = vpack.c.b16 %v4161, %v4160
    %v4191 = vpack.c.b16 %v4163, %v4162
    %v4192 = vpack.c.b16 %v4165, %v4164
    %v4193 = vpack.c.b16 %v4167, %v4166
    %v4194 = vpack.c.b16 %v4169, %v4168
    %v4195 = vpack.c.b16 %v4171, %v4170
    %v4196 = vpack.c.b16 %v4173, %v4172
    %v4197 = vpack.c.b16 %v4175, %v4174
    %v4198 = vpack.c.b16 %v4177, %v4176
    %v4199 = vpack.c.b16 %v4179, %v4178
    %v4200 = vpack.c.b16 %v4181, %v4180
    %v4201 = vpack.c.b16 %v4183, %v4182
    %v4202 = vpack.c.b16 %v4185, %v4184
    %v4203 = vpack.c.b16 %v4187, %v4186
    %4220 = vmatprep.subr.bf16.mxu0 0
    %4221 = vmatpush1.bf16.msra.mxu0 %v4195
    %4222 = vmatprep.subr.bf16.mxu0 0
    %4223 = vmatpush1.bf16.msra.mxu0 %v4194
    %4224 = vmatprep.subr.bf16.mxu0 0
    %4225 = vmatpush1.bf16.msra.mxu0 %v4193
    %4226 = vmatprep.subr.bf16.mxu0 0
    %4227 = vmatpush1.bf16.msra.mxu0 %v4192
    %4228 = vmatprep.subr.bf16.mxu0 0
    %4229 = vmatpush1.bf16.msra.mxu0 %v4191
    %4230 = vmatprep.subr.bf16.mxu0 0
    %4231 = vmatpush1.bf16.msra.mxu0 %v4190
    %4232 = vmatprep.subr.bf16.mxu0 0
    %4233 = vmatpush1.bf16.msra.mxu0 %v4189
    %4234 = vmatprep.subr.bf16.mxu0 0
    %4235 = vmatpush1.bf16.msra.mxu0 %v4188
    %4236 = vmatprep.subr.bf16.mxu0 0
    %4237 = vmatpush2.bf16.msra.mxu0 %v4203
    %4238 = vmatprep.subr.bf16.mxu0 0
    %4239 = vmatpush2.bf16.msra.mxu0 %v4202
    %4240 = vmatprep.subr.bf16.mxu0 0
    %4241 = vmatpush2.bf16.msra.mxu0 %v4201
    %4242 = vmatprep.subr.bf16.mxu0 0
    %4243 = vmatpush2.bf16.msra.mxu0 %v4200
    %4244 = vmatprep.subr.bf16.mxu0 0
    %4245 = vmatpush2.bf16.msra.mxu0 %v4199
    %4246 = vmatprep.subr.bf16.mxu0 0
    %4247 = vmatpush2.bf16.msra.mxu0 %v4198
    %4248 = vmatprep.subr.bf16.mxu0 0
    %4249 = vmatpush2.bf16.msra.mxu0 %v4197
    %4250 = vmatprep.subr.bf16.mxu0 0
    %4251 = vmatpush2.bf16.msra.mxu0 %v4196
    %4252 = vmatprep.mubr.bf16.mxu0 %v4121
    %4253 = vmatmul.mubr.bf16.gmra.mxu0 %v4120
    %v4254 = vpop.f32.mrf.mxu0
    %v4255 = vadd.f32 0.0, %v4254
    %v4256 = vpop.f32.mrf.mxu0
    %v4257 = vpop.f32.mrf.mxu0
    %v4258 = vpop.f32.mrf.mxu0
    %4259 = vdwg.mxu0
    %v4260 = vadd.f32 %v4024, %v4255
    %s4261 = scalar_lea.vmem %s0, 192
    %v4262 = vld [vmem:[%s4261] ss:$8 sm:$0x3]
    %s4263 = scalar_lea.vmem %s4261, 416
    %v4264 = vld [vmem:[%s4263] ss:$8 sm:$0x3]
    %s4265 = scalar_lea.vmem %s4261, 1
    %v4266 = vld [vmem:[%s4265] ss:$8 sm:$0x3]
    %s4267 = scalar_lea.vmem %s4261, 417
    %v4268 = vld [vmem:[%s4267] ss:$8 sm:$0x3]
    %v4269 = vadd.f32 %v4262, %v4266
    %v4270 = vadd.f32 %v4264, %v4268
    %s4271 = scalar_lea.vmem %s0, 224
    %v4272 = vld [vmem:[%s4271] ss:$8 sm:$0x3]
    %s4273 = scalar_lea.vmem %s4271, 416
    %v4274 = vld [vmem:[%s4273] ss:$8 sm:$0x3]
    %v4275 = vadd.f32 %v4269, %v4272
    %v4276 = vadd.f32 %v4270, %v4274
    %s4277 = scalar_lea.vmem %s4271, 1
    %v4278 = vld [vmem:[%s4277] ss:$8 sm:$0x3]
    %s4279 = scalar_lea.vmem %s4271, 417
    %v4280 = vld [vmem:[%s4279] ss:$8 sm:$0x3]
    %v4281 = vadd.f32 %v4275, %v4278
    %v4282 = vadd.f32 %v4276, %v4280
    %v4283 = vmul.f32 %v4281, 0.25
    %v4284 = vmul.f32 %v4282, 0.25
    %v4287 = vlaneseq
    %v4288 = vshrl.u32 %v4287, 7
    %v4289 = vsub.s32 0, %v4288
    %v4290 = vrot.slane %v4283, %v4289
    %v4291 = vlaneseq
    %v4292 = vshrl.u32 %v4291, 7
    %v4293 = vsub.s32 1, %v4292
    %v4294 = vrot.slane %v4283, %v4293
    %v4295 = vlaneseq
    %v4296 = vshrl.u32 %v4295, 7
    %v4297 = vsub.s32 0, %v4296
    %v4298 = vrot.slane %v4284, %v4297
    %v4299 = vlaneseq
    %v4300 = vshrl.u32 %v4299, 7
    %v4301 = vsub.s32 1, %v4300
    %v4302 = vrot.slane %v4284, %v4301
    %v4307 = vpack.c.bf16 %v4290, %v4290
    %v4308 = vpack.c.bf16 %v4294, %v4294
    %v4309 = vpack.c.bf16 %v4298, %v4298
    %v4310 = vpack.c.bf16 %v4302, %v4302
    %s4311 = scalar_lea.vmem %s1, 2304
    %v4312 = vld [vmem:[%s4311] sm:$0xf]
    %v4313 = vld [vmem:[%s4311 + $0x4] sm:$0xf]
    %v4314 = vld [vmem:[%s4311 + $0x8] sm:$0xf]
    %v4315 = vld [vmem:[%s4311 + $0xc] sm:$0xf]
    %v4316 = vld [vmem:[%s4311 + $0x10] sm:$0xf]
    %v4317 = vld [vmem:[%s4311 + $0x14] sm:$0xf]
    %v4318 = vld [vmem:[%s4311 + $0x18] sm:$0xf]
    %v4319 = vld [vmem:[%s4311 + $0x1c] sm:$0xf]
    %v4320 = vld [vmem:[%s4311 + $0x20] sm:$0xf]
    %v4321 = vld [vmem:[%s4311 + $0x24] sm:$0xf]
    %v4322 = vld [vmem:[%s4311 + $0x28] sm:$0xf]
    %v4323 = vld [vmem:[%s4311 + $0x2c] sm:$0xf]
    %v4324 = vld [vmem:[%s4311 + $0x30] sm:$0xf]
    %v4325 = vld [vmem:[%s4311 + $0x34] sm:$0xf]
    %v4326 = vld [vmem:[%s4311 + $0x38] sm:$0xf]
    %v4327 = vld [vmem:[%s4311 + $0x3c] sm:$0xf]
    %v4328 = vld [vmem:[%s4311 + $0x40] sm:$0xf]
    %v4329 = vld [vmem:[%s4311 + $0x44] sm:$0xf]
    %v4330 = vld [vmem:[%s4311 + $0x48] sm:$0xf]
    %v4331 = vld [vmem:[%s4311 + $0x4c] sm:$0xf]
    %v4332 = vld [vmem:[%s4311 + $0x50] sm:$0xf]
    %v4333 = vld [vmem:[%s4311 + $0x54] sm:$0xf]
    %v4334 = vld [vmem:[%s4311 + $0x58] sm:$0xf]
    %v4335 = vld [vmem:[%s4311 + $0x5c] sm:$0xf]
    %v4336 = vld [vmem:[%s4311 + $0x60] sm:$0xf]
    %v4337 = vld [vmem:[%s4311 + $0x64] sm:$0xf]
    %v4338 = vld [vmem:[%s4311 + $0x68] sm:$0xf]
    %v4339 = vld [vmem:[%s4311 + $0x6c] sm:$0xf]
    %v4340 = vld [vmem:[%s4311 + $0x70] sm:$0xf]
    %v4341 = vld [vmem:[%s4311 + $0x74] sm:$0xf]
    %v4342 = vld [vmem:[%s4311 + $0x78] sm:$0xf]
    %v4343 = vld [vmem:[%s4311 + $0x7c] sm:$0xf]
    %v4348 = vunpack.c.l.b16 %v4307
    %v4349 = vunpack.c.l.b16 %v4308
    %v4350 = vunpack.c.l.b16 %v4309
    %v4351 = vunpack.c.l.b16 %v4310
    %v4352 = vrot.slane %v4350, 7
    %v4353 = vsel %vm189, %v4352, %v4348
    %v4354 = vrot.slane %v4351, 7
    %v4355 = vsel %vm189, %v4354, %v4349
    %v4356 = vpack.c.b16 %v4353, %v4353
    %v4357 = vpack.c.b16 %v4355, %v4355
    %v4392 = vunpack.c.l.b16 %v4312
    %v4393 = vunpack.c.l.b16 %v4313
    %v4394 = vunpack.c.l.b16 %v4314
    %v4395 = vunpack.c.l.b16 %v4315
    %v4396 = vunpack.c.l.b16 %v4316
    %v4397 = vunpack.c.l.b16 %v4317
    %v4398 = vunpack.c.l.b16 %v4318
    %v4399 = vunpack.c.l.b16 %v4319
    %v4400 = vunpack.c.l.b16 %v4320
    %v4401 = vunpack.c.l.b16 %v4321
    %v4402 = vunpack.c.l.b16 %v4322
    %v4403 = vunpack.c.l.b16 %v4323
    %v4404 = vunpack.c.l.b16 %v4324
    %v4405 = vunpack.c.l.b16 %v4325
    %v4406 = vunpack.c.l.b16 %v4326
    %v4407 = vunpack.c.l.b16 %v4327
    %v4408 = vunpack.c.l.b16 %v4328
    %v4409 = vunpack.c.l.b16 %v4329
    %v4410 = vunpack.c.l.b16 %v4330
    %v4411 = vunpack.c.l.b16 %v4331
    %v4412 = vunpack.c.l.b16 %v4332
    %v4413 = vunpack.c.l.b16 %v4333
    %v4414 = vunpack.c.l.b16 %v4334
    %v4415 = vunpack.c.l.b16 %v4335
    %v4416 = vunpack.c.l.b16 %v4336
    %v4417 = vunpack.c.l.b16 %v4337
    %v4418 = vunpack.c.l.b16 %v4338
    %v4419 = vunpack.c.l.b16 %v4339
    %v4420 = vunpack.c.l.b16 %v4340
    %v4421 = vunpack.c.l.b16 %v4341
    %v4422 = vunpack.c.l.b16 %v4342
    %v4423 = vunpack.c.l.b16 %v4343
    %v4424 = vpack.c.b16 %v4393, %v4392
    %v4425 = vpack.c.b16 %v4395, %v4394
    %v4426 = vpack.c.b16 %v4397, %v4396
    %v4427 = vpack.c.b16 %v4399, %v4398
    %v4428 = vpack.c.b16 %v4401, %v4400
    %v4429 = vpack.c.b16 %v4403, %v4402
    %v4430 = vpack.c.b16 %v4405, %v4404
    %v4431 = vpack.c.b16 %v4407, %v4406
    %v4432 = vpack.c.b16 %v4409, %v4408
    %v4433 = vpack.c.b16 %v4411, %v4410
    %v4434 = vpack.c.b16 %v4413, %v4412
    %v4435 = vpack.c.b16 %v4415, %v4414
    %v4436 = vpack.c.b16 %v4417, %v4416
    %v4437 = vpack.c.b16 %v4419, %v4418
    %v4438 = vpack.c.b16 %v4421, %v4420
    %v4439 = vpack.c.b16 %v4423, %v4422
    %4456 = vmatprep.subr.bf16.mxu0 0
    %4457 = vmatpush1.bf16.msra.mxu0 %v4431
    %4458 = vmatprep.subr.bf16.mxu0 0
    %4459 = vmatpush1.bf16.msra.mxu0 %v4430
    %4460 = vmatprep.subr.bf16.mxu0 0
    %4461 = vmatpush1.bf16.msra.mxu0 %v4429
    %4462 = vmatprep.subr.bf16.mxu0 0
    %4463 = vmatpush1.bf16.msra.mxu0 %v4428
    %4464 = vmatprep.subr.bf16.mxu0 0
    %4465 = vmatpush1.bf16.msra.mxu0 %v4427
    %4466 = vmatprep.subr.bf16.mxu0 0
    %4467 = vmatpush1.bf16.msra.mxu0 %v4426
    %4468 = vmatprep.subr.bf16.mxu0 0
    %4469 = vmatpush1.bf16.msra.mxu0 %v4425
    %4470 = vmatprep.subr.bf16.mxu0 0
    %4471 = vmatpush1.bf16.msra.mxu0 %v4424
    %4472 = vmatprep.subr.bf16.mxu0 0
    %4473 = vmatpush2.bf16.msra.mxu0 %v4439
    %4474 = vmatprep.subr.bf16.mxu0 0
    %4475 = vmatpush2.bf16.msra.mxu0 %v4438
    %4476 = vmatprep.subr.bf16.mxu0 0
    %4477 = vmatpush2.bf16.msra.mxu0 %v4437
    %4478 = vmatprep.subr.bf16.mxu0 0
    %4479 = vmatpush2.bf16.msra.mxu0 %v4436
    %4480 = vmatprep.subr.bf16.mxu0 0
    %4481 = vmatpush2.bf16.msra.mxu0 %v4435
    %4482 = vmatprep.subr.bf16.mxu0 0
    %4483 = vmatpush2.bf16.msra.mxu0 %v4434
    %4484 = vmatprep.subr.bf16.mxu0 0
    %4485 = vmatpush2.bf16.msra.mxu0 %v4433
    %4486 = vmatprep.subr.bf16.mxu0 0
    %4487 = vmatpush2.bf16.msra.mxu0 %v4432
    %4488 = vmatprep.mubr.bf16.mxu0 %v4357
    %4489 = vmatmul.mubr.bf16.gmra.mxu0 %v4356
    %v4490 = vpop.f32.mrf.mxu0
    %v4491 = vadd.f32 0.0, %v4490
    %v4492 = vpop.f32.mrf.mxu0
    %v4493 = vpop.f32.mrf.mxu0
    %v4494 = vpop.f32.mrf.mxu0
    %4495 = vdwg.mxu0
    %v4496 = vadd.f32 %v4260, %v4491
    %s4497 = scalar_lea.vmem %s4261, 2
    %v4498 = vld [vmem:[%s4497] ss:$8 sm:$0x3]
    %s4499 = scalar_lea.vmem %s4261, 418
    %v4500 = vld [vmem:[%s4499] ss:$8 sm:$0x3]
    %s4501 = scalar_lea.vmem %s4261, 3
    %v4502 = vld [vmem:[%s4501] ss:$8 sm:$0x3]
    %s4503 = scalar_lea.vmem %s4261, 419
    %v4504 = vld [vmem:[%s4503] ss:$8 sm:$0x3]
    %v4505 = vadd.f32 %v4498, %v4502
    %v4506 = vadd.f32 %v4500, %v4504
    %s4507 = scalar_lea.vmem %s4271, 2
    %v4508 = vld [vmem:[%s4507] ss:$8 sm:$0x3]
    %s4509 = scalar_lea.vmem %s4271, 418
    %v4510 = vld [vmem:[%s4509] ss:$8 sm:$0x3]
    %v4511 = vadd.f32 %v4505, %v4508
    %v4512 = vadd.f32 %v4506, %v4510
    %s4513 = scalar_lea.vmem %s4271, 3
    %v4514 = vld [vmem:[%s4513] ss:$8 sm:$0x3]
    %s4515 = scalar_lea.vmem %s4271, 419
    %v4516 = vld [vmem:[%s4515] ss:$8 sm:$0x3]
    %v4517 = vadd.f32 %v4511, %v4514
    %v4518 = vadd.f32 %v4512, %v4516
    %v4519 = vmul.f32 %v4517, 0.25
    %v4520 = vmul.f32 %v4518, 0.25
    %v4523 = vlaneseq
    %v4524 = vshrl.u32 %v4523, 7
    %v4525 = vsub.s32 0, %v4524
    %v4526 = vrot.slane %v4519, %v4525
    %v4527 = vlaneseq
    %v4528 = vshrl.u32 %v4527, 7
    %v4529 = vsub.s32 1, %v4528
    %v4530 = vrot.slane %v4519, %v4529
    %v4531 = vlaneseq
    %v4532 = vshrl.u32 %v4531, 7
    %v4533 = vsub.s32 0, %v4532
    %v4534 = vrot.slane %v4520, %v4533
    %v4535 = vlaneseq
    %v4536 = vshrl.u32 %v4535, 7
    %v4537 = vsub.s32 1, %v4536
    %v4538 = vrot.slane %v4520, %v4537
    %v4543 = vpack.c.bf16 %v4526, %v4526
    %v4544 = vpack.c.bf16 %v4530, %v4530
    %v4545 = vpack.c.bf16 %v4534, %v4534
    %v4546 = vpack.c.bf16 %v4538, %v4538
    %s4547 = scalar_lea.vmem %s1, 2432
    %v4548 = vld [vmem:[%s4547] sm:$0xf]
    %v4549 = vld [vmem:[%s4547 + $0x4] sm:$0xf]
    %v4550 = vld [vmem:[%s4547 + $0x8] sm:$0xf]
    %v4551 = vld [vmem:[%s4547 + $0xc] sm:$0xf]
    %v4552 = vld [vmem:[%s4547 + $0x10] sm:$0xf]
    %v4553 = vld [vmem:[%s4547 + $0x14] sm:$0xf]
    %v4554 = vld [vmem:[%s4547 + $0x18] sm:$0xf]
    %v4555 = vld [vmem:[%s4547 + $0x1c] sm:$0xf]
    %v4556 = vld [vmem:[%s4547 + $0x20] sm:$0xf]
    %v4557 = vld [vmem:[%s4547 + $0x24] sm:$0xf]
    %v4558 = vld [vmem:[%s4547 + $0x28] sm:$0xf]
    %v4559 = vld [vmem:[%s4547 + $0x2c] sm:$0xf]
    %v4560 = vld [vmem:[%s4547 + $0x30] sm:$0xf]
    %v4561 = vld [vmem:[%s4547 + $0x34] sm:$0xf]
    %v4562 = vld [vmem:[%s4547 + $0x38] sm:$0xf]
    %v4563 = vld [vmem:[%s4547 + $0x3c] sm:$0xf]
    %v4564 = vld [vmem:[%s4547 + $0x40] sm:$0xf]
    %v4565 = vld [vmem:[%s4547 + $0x44] sm:$0xf]
    %v4566 = vld [vmem:[%s4547 + $0x48] sm:$0xf]
    %v4567 = vld [vmem:[%s4547 + $0x4c] sm:$0xf]
    %v4568 = vld [vmem:[%s4547 + $0x50] sm:$0xf]
    %v4569 = vld [vmem:[%s4547 + $0x54] sm:$0xf]
    %v4570 = vld [vmem:[%s4547 + $0x58] sm:$0xf]
    %v4571 = vld [vmem:[%s4547 + $0x5c] sm:$0xf]
    %v4572 = vld [vmem:[%s4547 + $0x60] sm:$0xf]
    %v4573 = vld [vmem:[%s4547 + $0x64] sm:$0xf]
    %v4574 = vld [vmem:[%s4547 + $0x68] sm:$0xf]
    %v4575 = vld [vmem:[%s4547 + $0x6c] sm:$0xf]
    %v4576 = vld [vmem:[%s4547 + $0x70] sm:$0xf]
    %v4577 = vld [vmem:[%s4547 + $0x74] sm:$0xf]
    %v4578 = vld [vmem:[%s4547 + $0x78] sm:$0xf]
    %v4579 = vld [vmem:[%s4547 + $0x7c] sm:$0xf]
    %v4584 = vunpack.c.l.b16 %v4543
    %v4585 = vunpack.c.l.b16 %v4544
    %v4586 = vunpack.c.l.b16 %v4545
    %v4587 = vunpack.c.l.b16 %v4546
    %v4588 = vrot.slane %v4586, 7
    %v4589 = vsel %vm189, %v4588, %v4584
    %v4590 = vrot.slane %v4587, 7
    %v4591 = vsel %vm189, %v4590, %v4585
    %v4592 = vpack.c.b16 %v4589, %v4589
    %v4593 = vpack.c.b16 %v4591, %v4591
    %v4628 = vunpack.c.l.b16 %v4548
    %v4629 = vunpack.c.l.b16 %v4549
    %v4630 = vunpack.c.l.b16 %v4550
    %v4631 = vunpack.c.l.b16 %v4551
    %v4632 = vunpack.c.l.b16 %v4552
    %v4633 = vunpack.c.l.b16 %v4553
    %v4634 = vunpack.c.l.b16 %v4554
    %v4635 = vunpack.c.l.b16 %v4555
    %v4636 = vunpack.c.l.b16 %v4556
    %v4637 = vunpack.c.l.b16 %v4557
    %v4638 = vunpack.c.l.b16 %v4558
    %v4639 = vunpack.c.l.b16 %v4559
    %v4640 = vunpack.c.l.b16 %v4560
    %v4641 = vunpack.c.l.b16 %v4561
    %v4642 = vunpack.c.l.b16 %v4562
    %v4643 = vunpack.c.l.b16 %v4563
    %v4644 = vunpack.c.l.b16 %v4564
    %v4645 = vunpack.c.l.b16 %v4565
    %v4646 = vunpack.c.l.b16 %v4566
    %v4647 = vunpack.c.l.b16 %v4567
    %v4648 = vunpack.c.l.b16 %v4568
    %v4649 = vunpack.c.l.b16 %v4569
    %v4650 = vunpack.c.l.b16 %v4570
    %v4651 = vunpack.c.l.b16 %v4571
    %v4652 = vunpack.c.l.b16 %v4572
    %v4653 = vunpack.c.l.b16 %v4573
    %v4654 = vunpack.c.l.b16 %v4574
    %v4655 = vunpack.c.l.b16 %v4575
    %v4656 = vunpack.c.l.b16 %v4576
    %v4657 = vunpack.c.l.b16 %v4577
    %v4658 = vunpack.c.l.b16 %v4578
    %v4659 = vunpack.c.l.b16 %v4579
    %v4660 = vpack.c.b16 %v4629, %v4628
    %v4661 = vpack.c.b16 %v4631, %v4630
    %v4662 = vpack.c.b16 %v4633, %v4632
    %v4663 = vpack.c.b16 %v4635, %v4634
    %v4664 = vpack.c.b16 %v4637, %v4636
    %v4665 = vpack.c.b16 %v4639, %v4638
    %v4666 = vpack.c.b16 %v4641, %v4640
    %v4667 = vpack.c.b16 %v4643, %v4642
    %v4668 = vpack.c.b16 %v4645, %v4644
    %v4669 = vpack.c.b16 %v4647, %v4646
    %v4670 = vpack.c.b16 %v4649, %v4648
    %v4671 = vpack.c.b16 %v4651, %v4650
    %v4672 = vpack.c.b16 %v4653, %v4652
    %v4673 = vpack.c.b16 %v4655, %v4654
    %v4674 = vpack.c.b16 %v4657, %v4656
    %v4675 = vpack.c.b16 %v4659, %v4658
    %4692 = vmatprep.subr.bf16.mxu0 0
    %4693 = vmatpush1.bf16.msra.mxu0 %v4667
    %4694 = vmatprep.subr.bf16.mxu0 0
    %4695 = vmatpush1.bf16.msra.mxu0 %v4666
    %4696 = vmatprep.subr.bf16.mxu0 0
    %4697 = vmatpush1.bf16.msra.mxu0 %v4665
    %4698 = vmatprep.subr.bf16.mxu0 0
    %4699 = vmatpush1.bf16.msra.mxu0 %v4664
    %4700 = vmatprep.subr.bf16.mxu0 0
    %4701 = vmatpush1.bf16.msra.mxu0 %v4663
    %4702 = vmatprep.subr.bf16.mxu0 0
    %4703 = vmatpush1.bf16.msra.mxu0 %v4662
    %4704 = vmatprep.subr.bf16.mxu0 0
    %4705 = vmatpush1.bf16.msra.mxu0 %v4661
    %4706 = vmatprep.subr.bf16.mxu0 0
    %4707 = vmatpush1.bf16.msra.mxu0 %v4660
    %4708 = vmatprep.subr.bf16.mxu0 0
    %4709 = vmatpush2.bf16.msra.mxu0 %v4675
    %4710 = vmatprep.subr.bf16.mxu0 0
    %4711 = vmatpush2.bf16.msra.mxu0 %v4674
    %4712 = vmatprep.subr.bf16.mxu0 0
    %4713 = vmatpush2.bf16.msra.mxu0 %v4673
    %4714 = vmatprep.subr.bf16.mxu0 0
    %4715 = vmatpush2.bf16.msra.mxu0 %v4672
    %4716 = vmatprep.subr.bf16.mxu0 0
    %4717 = vmatpush2.bf16.msra.mxu0 %v4671
    %4718 = vmatprep.subr.bf16.mxu0 0
    %4719 = vmatpush2.bf16.msra.mxu0 %v4670
    %4720 = vmatprep.subr.bf16.mxu0 0
    %4721 = vmatpush2.bf16.msra.mxu0 %v4669
    %4722 = vmatprep.subr.bf16.mxu0 0
    %4723 = vmatpush2.bf16.msra.mxu0 %v4668
    %4724 = vmatprep.mubr.bf16.mxu0 %v4593
    %4725 = vmatmul.mubr.bf16.gmra.mxu0 %v4592
    %v4726 = vpop.f32.mrf.mxu0
    %v4727 = vadd.f32 0.0, %v4726
    %v4728 = vpop.f32.mrf.mxu0
    %v4729 = vpop.f32.mrf.mxu0
    %v4730 = vpop.f32.mrf.mxu0
    %4731 = vdwg.mxu0
    %v4732 = vadd.f32 %v4496, %v4727
    %s4733 = scalar_lea.vmem %s4261, 4
    %v4734 = vld [vmem:[%s4733] ss:$8 sm:$0x3]
    %s4735 = scalar_lea.vmem %s4261, 420
    %v4736 = vld [vmem:[%s4735] ss:$8 sm:$0x3]
    %s4737 = scalar_lea.vmem %s4261, 5
    %v4738 = vld [vmem:[%s4737] ss:$8 sm:$0x3]
    %s4739 = scalar_lea.vmem %s4261, 421
    %v4740 = vld [vmem:[%s4739] ss:$8 sm:$0x3]
    %v4741 = vadd.f32 %v4734, %v4738
    %v4742 = vadd.f32 %v4736, %v4740
    %s4743 = scalar_lea.vmem %s4271, 4
    %v4744 = vld [vmem:[%s4743] ss:$8 sm:$0x3]
    %s4745 = scalar_lea.vmem %s4271, 420
    %v4746 = vld [vmem:[%s4745] ss:$8 sm:$0x3]
    %v4747 = vadd.f32 %v4741, %v4744
    %v4748 = vadd.f32 %v4742, %v4746
    %s4749 = scalar_lea.vmem %s4271, 5
    %v4750 = vld [vmem:[%s4749] ss:$8 sm:$0x3]
    %s4751 = scalar_lea.vmem %s4271, 421
    %v4752 = vld [vmem:[%s4751] ss:$8 sm:$0x3]
    %v4753 = vadd.f32 %v4747, %v4750
    %v4754 = vadd.f32 %v4748, %v4752
    %v4755 = vmul.f32 %v4753, 0.25
    %v4756 = vmul.f32 %v4754, 0.25
    %v4759 = vlaneseq
    %v4760 = vshrl.u32 %v4759, 7
    %v4761 = vsub.s32 0, %v4760
    %v4762 = vrot.slane %v4755, %v4761
    %v4763 = vlaneseq
    %v4764 = vshrl.u32 %v4763, 7
    %v4765 = vsub.s32 1, %v4764
    %v4766 = vrot.slane %v4755, %v4765
    %v4767 = vlaneseq
    %v4768 = vshrl.u32 %v4767, 7
    %v4769 = vsub.s32 0, %v4768
    %v4770 = vrot.slane %v4756, %v4769
    %v4771 = vlaneseq
    %v4772 = vshrl.u32 %v4771, 7
    %v4773 = vsub.s32 1, %v4772
    %v4774 = vrot.slane %v4756, %v4773
    %v4779 = vpack.c.bf16 %v4762, %v4762
    %v4780 = vpack.c.bf16 %v4766, %v4766
    %v4781 = vpack.c.bf16 %v4770, %v4770
    %v4782 = vpack.c.bf16 %v4774, %v4774
    %s4783 = scalar_lea.vmem %s1, 2560
    %v4784 = vld [vmem:[%s4783] sm:$0xf]
    %v4785 = vld [vmem:[%s4783 + $0x4] sm:$0xf]
    %v4786 = vld [vmem:[%s4783 + $0x8] sm:$0xf]
    %v4787 = vld [vmem:[%s4783 + $0xc] sm:$0xf]
    %v4788 = vld [vmem:[%s4783 + $0x10] sm:$0xf]
    %v4789 = vld [vmem:[%s4783 + $0x14] sm:$0xf]
    %v4790 = vld [vmem:[%s4783 + $0x18] sm:$0xf]
    %v4791 = vld [vmem:[%s4783 + $0x1c] sm:$0xf]
    %v4792 = vld [vmem:[%s4783 + $0x20] sm:$0xf]
    %v4793 = vld [vmem:[%s4783 + $0x24] sm:$0xf]
    %v4794 = vld [vmem:[%s4783 + $0x28] sm:$0xf]
    %v4795 = vld [vmem:[%s4783 + $0x2c] sm:$0xf]
    %v4796 = vld [vmem:[%s4783 + $0x30] sm:$0xf]
    %v4797 = vld [vmem:[%s4783 + $0x34] sm:$0xf]
    %v4798 = vld [vmem:[%s4783 + $0x38] sm:$0xf]
    %v4799 = vld [vmem:[%s4783 + $0x3c] sm:$0xf]
    %v4800 = vld [vmem:[%s4783 + $0x40] sm:$0xf]
    %v4801 = vld [vmem:[%s4783 + $0x44] sm:$0xf]
    %v4802 = vld [vmem:[%s4783 + $0x48] sm:$0xf]
    %v4803 = vld [vmem:[%s4783 + $0x4c] sm:$0xf]
    %v4804 = vld [vmem:[%s4783 + $0x50] sm:$0xf]
    %v4805 = vld [vmem:[%s4783 + $0x54] sm:$0xf]
    %v4806 = vld [vmem:[%s4783 + $0x58] sm:$0xf]
    %v4807 = vld [vmem:[%s4783 + $0x5c] sm:$0xf]
    %v4808 = vld [vmem:[%s4783 + $0x60] sm:$0xf]
    %v4809 = vld [vmem:[%s4783 + $0x64] sm:$0xf]
    %v4810 = vld [vmem:[%s4783 + $0x68] sm:$0xf]
    %v4811 = vld [vmem:[%s4783 + $0x6c] sm:$0xf]
    %v4812 = vld [vmem:[%s4783 + $0x70] sm:$0xf]
    %v4813 = vld [vmem:[%s4783 + $0x74] sm:$0xf]
    %v4814 = vld [vmem:[%s4783 + $0x78] sm:$0xf]
    %v4815 = vld [vmem:[%s4783 + $0x7c] sm:$0xf]
    %v4820 = vunpack.c.l.b16 %v4779
    %v4821 = vunpack.c.l.b16 %v4780
    %v4822 = vunpack.c.l.b16 %v4781
    %v4823 = vunpack.c.l.b16 %v4782
    %v4824 = vrot.slane %v4822, 7
    %v4825 = vsel %vm189, %v4824, %v4820
    %v4826 = vrot.slane %v4823, 7
    %v4827 = vsel %vm189, %v4826, %v4821
    %v4828 = vpack.c.b16 %v4825, %v4825
    %v4829 = vpack.c.b16 %v4827, %v4827
    %v4864 = vunpack.c.l.b16 %v4784
    %v4865 = vunpack.c.l.b16 %v4785
    %v4866 = vunpack.c.l.b16 %v4786
    %v4867 = vunpack.c.l.b16 %v4787
    %v4868 = vunpack.c.l.b16 %v4788
    %v4869 = vunpack.c.l.b16 %v4789
    %v4870 = vunpack.c.l.b16 %v4790
    %v4871 = vunpack.c.l.b16 %v4791
    %v4872 = vunpack.c.l.b16 %v4792
    %v4873 = vunpack.c.l.b16 %v4793
    %v4874 = vunpack.c.l.b16 %v4794
    %v4875 = vunpack.c.l.b16 %v4795
    %v4876 = vunpack.c.l.b16 %v4796
    %v4877 = vunpack.c.l.b16 %v4797
    %v4878 = vunpack.c.l.b16 %v4798
    %v4879 = vunpack.c.l.b16 %v4799
    %v4880 = vunpack.c.l.b16 %v4800
    %v4881 = vunpack.c.l.b16 %v4801
    %v4882 = vunpack.c.l.b16 %v4802
    %v4883 = vunpack.c.l.b16 %v4803
    %v4884 = vunpack.c.l.b16 %v4804
    %v4885 = vunpack.c.l.b16 %v4805
    %v4886 = vunpack.c.l.b16 %v4806
    %v4887 = vunpack.c.l.b16 %v4807
    %v4888 = vunpack.c.l.b16 %v4808
    %v4889 = vunpack.c.l.b16 %v4809
    %v4890 = vunpack.c.l.b16 %v4810
    %v4891 = vunpack.c.l.b16 %v4811
    %v4892 = vunpack.c.l.b16 %v4812
    %v4893 = vunpack.c.l.b16 %v4813
    %v4894 = vunpack.c.l.b16 %v4814
    %v4895 = vunpack.c.l.b16 %v4815
    %v4896 = vpack.c.b16 %v4865, %v4864
    %v4897 = vpack.c.b16 %v4867, %v4866
    %v4898 = vpack.c.b16 %v4869, %v4868
    %v4899 = vpack.c.b16 %v4871, %v4870
    %v4900 = vpack.c.b16 %v4873, %v4872
    %v4901 = vpack.c.b16 %v4875, %v4874
    %v4902 = vpack.c.b16 %v4877, %v4876
    %v4903 = vpack.c.b16 %v4879, %v4878
    %v4904 = vpack.c.b16 %v4881, %v4880
    %v4905 = vpack.c.b16 %v4883, %v4882
    %v4906 = vpack.c.b16 %v4885, %v4884
    %v4907 = vpack.c.b16 %v4887, %v4886
    %v4908 = vpack.c.b16 %v4889, %v4888
    %v4909 = vpack.c.b16 %v4891, %v4890
    %v4910 = vpack.c.b16 %v4893, %v4892
    %v4911 = vpack.c.b16 %v4895, %v4894
    %4928 = vmatprep.subr.bf16.mxu0 0
    %4929 = vmatpush1.bf16.msra.mxu0 %v4903
    %4930 = vmatprep.subr.bf16.mxu0 0
    %4931 = vmatpush1.bf16.msra.mxu0 %v4902
    %4932 = vmatprep.subr.bf16.mxu0 0
    %4933 = vmatpush1.bf16.msra.mxu0 %v4901
    %4934 = vmatprep.subr.bf16.mxu0 0
    %4935 = vmatpush1.bf16.msra.mxu0 %v4900
    %4936 = vmatprep.subr.bf16.mxu0 0
    %4937 = vmatpush1.bf16.msra.mxu0 %v4899
    %4938 = vmatprep.subr.bf16.mxu0 0
    %4939 = vmatpush1.bf16.msra.mxu0 %v4898
    %4940 = vmatprep.subr.bf16.mxu0 0
    %4941 = vmatpush1.bf16.msra.mxu0 %v4897
    %4942 = vmatprep.subr.bf16.mxu0 0
    %4943 = vmatpush1.bf16.msra.mxu0 %v4896
    %4944 = vmatprep.subr.bf16.mxu0 0
    %4945 = vmatpush2.bf16.msra.mxu0 %v4911
    %4946 = vmatprep.subr.bf16.mxu0 0
    %4947 = vmatpush2.bf16.msra.mxu0 %v4910
    %4948 = vmatprep.subr.bf16.mxu0 0
    %4949 = vmatpush2.bf16.msra.mxu0 %v4909
    %4950 = vmatprep.subr.bf16.mxu0 0
    %4951 = vmatpush2.bf16.msra.mxu0 %v4908
    %4952 = vmatprep.subr.bf16.mxu0 0
    %4953 = vmatpush2.bf16.msra.mxu0 %v4907
    %4954 = vmatprep.subr.bf16.mxu0 0
    %4955 = vmatpush2.bf16.msra.mxu0 %v4906
    %4956 = vmatprep.subr.bf16.mxu0 0
    %4957 = vmatpush2.bf16.msra.mxu0 %v4905
    %4958 = vmatprep.subr.bf16.mxu0 0
    %4959 = vmatpush2.bf16.msra.mxu0 %v4904
    %4960 = vmatprep.mubr.bf16.mxu0 %v4829
    %4961 = vmatmul.mubr.bf16.gmra.mxu0 %v4828
    %v4962 = vpop.f32.mrf.mxu0
    %v4963 = vadd.f32 0.0, %v4962
    %v4964 = vpop.f32.mrf.mxu0
    %v4965 = vpop.f32.mrf.mxu0
    %v4966 = vpop.f32.mrf.mxu0
    %4967 = vdwg.mxu0
    %v4968 = vadd.f32 %v4732, %v4963
    %s4969 = scalar_lea.vmem %s4261, 6
    %v4970 = vld [vmem:[%s4969] ss:$8 sm:$0x3]
    %s4971 = scalar_lea.vmem %s4261, 422
    %v4972 = vld [vmem:[%s4971] ss:$8 sm:$0x3]
    %s4973 = scalar_lea.vmem %s4261, 7
    %v4974 = vld [vmem:[%s4973] ss:$8 sm:$0x3]
    %s4975 = scalar_lea.vmem %s4261, 423
    %v4976 = vld [vmem:[%s4975] ss:$8 sm:$0x3]
    %v4977 = vadd.f32 %v4970, %v4974
    %v4978 = vadd.f32 %v4972, %v4976
    %s4979 = scalar_lea.vmem %s4271, 6
    %v4980 = vld [vmem:[%s4979] ss:$8 sm:$0x3]
    %s4981 = scalar_lea.vmem %s4271, 422
    %v4982 = vld [vmem:[%s4981] ss:$8 sm:$0x3]
    %v4983 = vadd.f32 %v4977, %v4980
    %v4984 = vadd.f32 %v4978, %v4982
    %s4985 = scalar_lea.vmem %s4271, 7
    %v4986 = vld [vmem:[%s4985] ss:$8 sm:$0x3]
    %s4987 = scalar_lea.vmem %s4271, 423
    %v4988 = vld [vmem:[%s4987] ss:$8 sm:$0x3]
    %v4989 = vadd.f32 %v4983, %v4986
    %v4990 = vadd.f32 %v4984, %v4988
    %v4991 = vmul.f32 %v4989, 0.25
    %v4992 = vmul.f32 %v4990, 0.25
    %v4995 = vlaneseq
    %v4996 = vshrl.u32 %v4995, 7
    %v4997 = vsub.s32 0, %v4996
    %v4998 = vrot.slane %v4991, %v4997
    %v4999 = vlaneseq
    %v5000 = vshrl.u32 %v4999, 7
    %v5001 = vsub.s32 1, %v5000
    %v5002 = vrot.slane %v4991, %v5001
    %v5003 = vlaneseq
    %v5004 = vshrl.u32 %v5003, 7
    %v5005 = vsub.s32 0, %v5004
    %v5006 = vrot.slane %v4992, %v5005
    %v5007 = vlaneseq
    %v5008 = vshrl.u32 %v5007, 7
    %v5009 = vsub.s32 1, %v5008
    %v5010 = vrot.slane %v4992, %v5009
    %v5015 = vpack.c.bf16 %v4998, %v4998
    %v5016 = vpack.c.bf16 %v5002, %v5002
    %v5017 = vpack.c.bf16 %v5006, %v5006
    %v5018 = vpack.c.bf16 %v5010, %v5010
    %s5019 = scalar_lea.vmem %s1, 2688
    %v5020 = vld [vmem:[%s5019] sm:$0xf]
    %v5021 = vld [vmem:[%s5019 + $0x4] sm:$0xf]
    %v5022 = vld [vmem:[%s5019 + $0x8] sm:$0xf]
    %v5023 = vld [vmem:[%s5019 + $0xc] sm:$0xf]
    %v5024 = vld [vmem:[%s5019 + $0x10] sm:$0xf]
    %v5025 = vld [vmem:[%s5019 + $0x14] sm:$0xf]
    %v5026 = vld [vmem:[%s5019 + $0x18] sm:$0xf]
    %v5027 = vld [vmem:[%s5019 + $0x1c] sm:$0xf]
    %v5028 = vld [vmem:[%s5019 + $0x20] sm:$0xf]
    %v5029 = vld [vmem:[%s5019 + $0x24] sm:$0xf]
    %v5030 = vld [vmem:[%s5019 + $0x28] sm:$0xf]
    %v5031 = vld [vmem:[%s5019 + $0x2c] sm:$0xf]
    %v5032 = vld [vmem:[%s5019 + $0x30] sm:$0xf]
    %v5033 = vld [vmem:[%s5019 + $0x34] sm:$0xf]
    %v5034 = vld [vmem:[%s5019 + $0x38] sm:$0xf]
    %v5035 = vld [vmem:[%s5019 + $0x3c] sm:$0xf]
    %v5036 = vld [vmem:[%s5019 + $0x40] sm:$0xf]
    %v5037 = vld [vmem:[%s5019 + $0x44] sm:$0xf]
    %v5038 = vld [vmem:[%s5019 + $0x48] sm:$0xf]
    %v5039 = vld [vmem:[%s5019 + $0x4c] sm:$0xf]
    %v5040 = vld [vmem:[%s5019 + $0x50] sm:$0xf]
    %v5041 = vld [vmem:[%s5019 + $0x54] sm:$0xf]
    %v5042 = vld [vmem:[%s5019 + $0x58] sm:$0xf]
    %v5043 = vld [vmem:[%s5019 + $0x5c] sm:$0xf]
    %v5044 = vld [vmem:[%s5019 + $0x60] sm:$0xf]
    %v5045 = vld [vmem:[%s5019 + $0x64] sm:$0xf]
    %v5046 = vld [vmem:[%s5019 + $0x68] sm:$0xf]
    %v5047 = vld [vmem:[%s5019 + $0x6c] sm:$0xf]
    %v5048 = vld [vmem:[%s5019 + $0x70] sm:$0xf]
    %v5049 = vld [vmem:[%s5019 + $0x74] sm:$0xf]
    %v5050 = vld [vmem:[%s5019 + $0x78] sm:$0xf]
    %v5051 = vld [vmem:[%s5019 + $0x7c] sm:$0xf]
    %v5056 = vunpack.c.l.b16 %v5015
    %v5057 = vunpack.c.l.b16 %v5016
    %v5058 = vunpack.c.l.b16 %v5017
    %v5059 = vunpack.c.l.b16 %v5018
    %v5060 = vrot.slane %v5058, 7
    %v5061 = vsel %vm189, %v5060, %v5056
    %v5062 = vrot.slane %v5059, 7
    %v5063 = vsel %vm189, %v5062, %v5057
    %v5064 = vpack.c.b16 %v5061, %v5061
    %v5065 = vpack.c.b16 %v5063, %v5063
    %v5100 = vunpack.c.l.b16 %v5020
    %v5101 = vunpack.c.l.b16 %v5021
    %v5102 = vunpack.c.l.b16 %v5022
    %v5103 = vunpack.c.l.b16 %v5023
    %v5104 = vunpack.c.l.b16 %v5024
    %v5105 = vunpack.c.l.b16 %v5025
    %v5106 = vunpack.c.l.b16 %v5026
    %v5107 = vunpack.c.l.b16 %v5027
    %v5108 = vunpack.c.l.b16 %v5028
    %v5109 = vunpack.c.l.b16 %v5029
    %v5110 = vunpack.c.l.b16 %v5030
    %v5111 = vunpack.c.l.b16 %v5031
    %v5112 = vunpack.c.l.b16 %v5032
    %v5113 = vunpack.c.l.b16 %v5033
    %v5114 = vunpack.c.l.b16 %v5034
    %v5115 = vunpack.c.l.b16 %v5035
    %v5116 = vunpack.c.l.b16 %v5036
    %v5117 = vunpack.c.l.b16 %v5037
    %v5118 = vunpack.c.l.b16 %v5038
    %v5119 = vunpack.c.l.b16 %v5039
    %v5120 = vunpack.c.l.b16 %v5040
    %v5121 = vunpack.c.l.b16 %v5041
    %v5122 = vunpack.c.l.b16 %v5042
    %v5123 = vunpack.c.l.b16 %v5043
    %v5124 = vunpack.c.l.b16 %v5044
    %v5125 = vunpack.c.l.b16 %v5045
    %v5126 = vunpack.c.l.b16 %v5046
    %v5127 = vunpack.c.l.b16 %v5047
    %v5128 = vunpack.c.l.b16 %v5048
    %v5129 = vunpack.c.l.b16 %v5049
    %v5130 = vunpack.c.l.b16 %v5050
    %v5131 = vunpack.c.l.b16 %v5051
    %v5132 = vpack.c.b16 %v5101, %v5100
    %v5133 = vpack.c.b16 %v5103, %v5102
    %v5134 = vpack.c.b16 %v5105, %v5104
    %v5135 = vpack.c.b16 %v5107, %v5106
    %v5136 = vpack.c.b16 %v5109, %v5108
    %v5137 = vpack.c.b16 %v5111, %v5110
    %v5138 = vpack.c.b16 %v5113, %v5112
    %v5139 = vpack.c.b16 %v5115, %v5114
    %v5140 = vpack.c.b16 %v5117, %v5116
    %v5141 = vpack.c.b16 %v5119, %v5118
    %v5142 = vpack.c.b16 %v5121, %v5120
    %v5143 = vpack.c.b16 %v5123, %v5122
    %v5144 = vpack.c.b16 %v5125, %v5124
    %v5145 = vpack.c.b16 %v5127, %v5126
    %v5146 = vpack.c.b16 %v5129, %v5128
    %v5147 = vpack.c.b16 %v5131, %v5130
    %5164 = vmatprep.subr.bf16.mxu0 0
    %5165 = vmatpush1.bf16.msra.mxu0 %v5139
    %5166 = vmatprep.subr.bf16.mxu0 0
    %5167 = vmatpush1.bf16.msra.mxu0 %v5138
    %5168 = vmatprep.subr.bf16.mxu0 0
    %5169 = vmatpush1.bf16.msra.mxu0 %v5137
    %5170 = vmatprep.subr.bf16.mxu0 0
    %5171 = vmatpush1.bf16.msra.mxu0 %v5136
    %5172 = vmatprep.subr.bf16.mxu0 0
    %5173 = vmatpush1.bf16.msra.mxu0 %v5135
    %5174 = vmatprep.subr.bf16.mxu0 0
    %5175 = vmatpush1.bf16.msra.mxu0 %v5134
    %5176 = vmatprep.subr.bf16.mxu0 0
    %5177 = vmatpush1.bf16.msra.mxu0 %v5133
    %5178 = vmatprep.subr.bf16.mxu0 0
    %5179 = vmatpush1.bf16.msra.mxu0 %v5132
    %5180 = vmatprep.subr.bf16.mxu0 0
    %5181 = vmatpush2.bf16.msra.mxu0 %v5147
    %5182 = vmatprep.subr.bf16.mxu0 0
    %5183 = vmatpush2.bf16.msra.mxu0 %v5146
    %5184 = vmatprep.subr.bf16.mxu0 0
    %5185 = vmatpush2.bf16.msra.mxu0 %v5145
    %5186 = vmatprep.subr.bf16.mxu0 0
    %5187 = vmatpush2.bf16.msra.mxu0 %v5144
    %5188 = vmatprep.subr.bf16.mxu0 0
    %5189 = vmatpush2.bf16.msra.mxu0 %v5143
    %5190 = vmatprep.subr.bf16.mxu0 0
    %5191 = vmatpush2.bf16.msra.mxu0 %v5142
    %5192 = vmatprep.subr.bf16.mxu0 0
    %5193 = vmatpush2.bf16.msra.mxu0 %v5141
    %5194 = vmatprep.subr.bf16.mxu0 0
    %5195 = vmatpush2.bf16.msra.mxu0 %v5140
    %5196 = vmatprep.mubr.bf16.mxu0 %v5065
    %5197 = vmatmul.mubr.bf16.gmra.mxu0 %v5064
    %v5198 = vpop.f32.mrf.mxu0
    %v5199 = vadd.f32 0.0, %v5198
    %v5200 = vpop.f32.mrf.mxu0
    %v5201 = vpop.f32.mrf.mxu0
    %v5202 = vpop.f32.mrf.mxu0
    %5203 = vdwg.mxu0
    %v5204 = vadd.f32 %v4968, %v5199
    %s5205 = scalar_lea.vmem %s4261, 16
    %v5206 = vld [vmem:[%s5205] ss:$8 sm:$0x3]
    %s5207 = scalar_lea.vmem %s4261, 432
    %v5208 = vld [vmem:[%s5207] ss:$8 sm:$0x3]
    %s5209 = scalar_lea.vmem %s4261, 17
    %v5210 = vld [vmem:[%s5209] ss:$8 sm:$0x3]
    %s5211 = scalar_lea.vmem %s4261, 433
    %v5212 = vld [vmem:[%s5211] ss:$8 sm:$0x3]
    %v5213 = vadd.f32 %v5206, %v5210
    %v5214 = vadd.f32 %v5208, %v5212
    %s5215 = scalar_lea.vmem %s4271, 16
    %v5216 = vld [vmem:[%s5215] ss:$8 sm:$0x3]
    %s5217 = scalar_lea.vmem %s4271, 432
    %v5218 = vld [vmem:[%s5217] ss:$8 sm:$0x3]
    %v5219 = vadd.f32 %v5213, %v5216
    %v5220 = vadd.f32 %v5214, %v5218
    %s5221 = scalar_lea.vmem %s4271, 17
    %v5222 = vld [vmem:[%s5221] ss:$8 sm:$0x3]
    %s5223 = scalar_lea.vmem %s4271, 433
    %v5224 = vld [vmem:[%s5223] ss:$8 sm:$0x3]
    %v5225 = vadd.f32 %v5219, %v5222
    %v5226 = vadd.f32 %v5220, %v5224
    %v5227 = vmul.f32 %v5225, 0.25
    %v5228 = vmul.f32 %v5226, 0.25
    %v5231 = vlaneseq
    %v5232 = vshrl.u32 %v5231, 7
    %v5233 = vsub.s32 0, %v5232
    %v5234 = vrot.slane %v5227, %v5233
    %v5235 = vlaneseq
    %v5236 = vshrl.u32 %v5235, 7
    %v5237 = vsub.s32 1, %v5236
    %v5238 = vrot.slane %v5227, %v5237
    %v5239 = vlaneseq
    %v5240 = vshrl.u32 %v5239, 7
    %v5241 = vsub.s32 0, %v5240
    %v5242 = vrot.slane %v5228, %v5241
    %v5243 = vlaneseq
    %v5244 = vshrl.u32 %v5243, 7
    %v5245 = vsub.s32 1, %v5244
    %v5246 = vrot.slane %v5228, %v5245
    %v5251 = vpack.c.bf16 %v5234, %v5234
    %v5252 = vpack.c.bf16 %v5238, %v5238
    %v5253 = vpack.c.bf16 %v5242, %v5242
    %v5254 = vpack.c.bf16 %v5246, %v5246
    %s5255 = scalar_lea.vmem %s1, 2816
    %v5256 = vld [vmem:[%s5255] sm:$0xf]
    %v5257 = vld [vmem:[%s5255 + $0x4] sm:$0xf]
    %v5258 = vld [vmem:[%s5255 + $0x8] sm:$0xf]
    %v5259 = vld [vmem:[%s5255 + $0xc] sm:$0xf]
    %v5260 = vld [vmem:[%s5255 + $0x10] sm:$0xf]
    %v5261 = vld [vmem:[%s5255 + $0x14] sm:$0xf]
    %v5262 = vld [vmem:[%s5255 + $0x18] sm:$0xf]
    %v5263 = vld [vmem:[%s5255 + $0x1c] sm:$0xf]
    %v5264 = vld [vmem:[%s5255 + $0x20] sm:$0xf]
    %v5265 = vld [vmem:[%s5255 + $0x24] sm:$0xf]
    %v5266 = vld [vmem:[%s5255 + $0x28] sm:$0xf]
    %v5267 = vld [vmem:[%s5255 + $0x2c] sm:$0xf]
    %v5268 = vld [vmem:[%s5255 + $0x30] sm:$0xf]
    %v5269 = vld [vmem:[%s5255 + $0x34] sm:$0xf]
    %v5270 = vld [vmem:[%s5255 + $0x38] sm:$0xf]
    %v5271 = vld [vmem:[%s5255 + $0x3c] sm:$0xf]
    %v5272 = vld [vmem:[%s5255 + $0x40] sm:$0xf]
    %v5273 = vld [vmem:[%s5255 + $0x44] sm:$0xf]
    %v5274 = vld [vmem:[%s5255 + $0x48] sm:$0xf]
    %v5275 = vld [vmem:[%s5255 + $0x4c] sm:$0xf]
    %v5276 = vld [vmem:[%s5255 + $0x50] sm:$0xf]
    %v5277 = vld [vmem:[%s5255 + $0x54] sm:$0xf]
    %v5278 = vld [vmem:[%s5255 + $0x58] sm:$0xf]
    %v5279 = vld [vmem:[%s5255 + $0x5c] sm:$0xf]
    %v5280 = vld [vmem:[%s5255 + $0x60] sm:$0xf]
    %v5281 = vld [vmem:[%s5255 + $0x64] sm:$0xf]
    %v5282 = vld [vmem:[%s5255 + $0x68] sm:$0xf]
    %v5283 = vld [vmem:[%s5255 + $0x6c] sm:$0xf]
    %v5284 = vld [vmem:[%s5255 + $0x70] sm:$0xf]
    %v5285 = vld [vmem:[%s5255 + $0x74] sm:$0xf]
    %v5286 = vld [vmem:[%s5255 + $0x78] sm:$0xf]
    %v5287 = vld [vmem:[%s5255 + $0x7c] sm:$0xf]
    %v5292 = vunpack.c.l.b16 %v5251
    %v5293 = vunpack.c.l.b16 %v5252
    %v5294 = vunpack.c.l.b16 %v5253
    %v5295 = vunpack.c.l.b16 %v5254
    %v5296 = vrot.slane %v5294, 7
    %v5297 = vsel %vm189, %v5296, %v5292
    %v5298 = vrot.slane %v5295, 7
    %v5299 = vsel %vm189, %v5298, %v5293
    %v5300 = vpack.c.b16 %v5297, %v5297
    %v5301 = vpack.c.b16 %v5299, %v5299
    %v5336 = vunpack.c.l.b16 %v5256
    %v5337 = vunpack.c.l.b16 %v5257
    %v5338 = vunpack.c.l.b16 %v5258
    %v5339 = vunpack.c.l.b16 %v5259
    %v5340 = vunpack.c.l.b16 %v5260
    %v5341 = vunpack.c.l.b16 %v5261
    %v5342 = vunpack.c.l.b16 %v5262
    %v5343 = vunpack.c.l.b16 %v5263
    %v5344 = vunpack.c.l.b16 %v5264
    %v5345 = vunpack.c.l.b16 %v5265
    %v5346 = vunpack.c.l.b16 %v5266
    %v5347 = vunpack.c.l.b16 %v5267
    %v5348 = vunpack.c.l.b16 %v5268
    %v5349 = vunpack.c.l.b16 %v5269
    %v5350 = vunpack.c.l.b16 %v5270
    %v5351 = vunpack.c.l.b16 %v5271
    %v5352 = vunpack.c.l.b16 %v5272
    %v5353 = vunpack.c.l.b16 %v5273
    %v5354 = vunpack.c.l.b16 %v5274
    %v5355 = vunpack.c.l.b16 %v5275
    %v5356 = vunpack.c.l.b16 %v5276
    %v5357 = vunpack.c.l.b16 %v5277
    %v5358 = vunpack.c.l.b16 %v5278
    %v5359 = vunpack.c.l.b16 %v5279
    %v5360 = vunpack.c.l.b16 %v5280
    %v5361 = vunpack.c.l.b16 %v5281
    %v5362 = vunpack.c.l.b16 %v5282
    %v5363 = vunpack.c.l.b16 %v5283
    %v5364 = vunpack.c.l.b16 %v5284
    %v5365 = vunpack.c.l.b16 %v5285
    %v5366 = vunpack.c.l.b16 %v5286
    %v5367 = vunpack.c.l.b16 %v5287
    %v5368 = vpack.c.b16 %v5337, %v5336
    %v5369 = vpack.c.b16 %v5339, %v5338
    %v5370 = vpack.c.b16 %v5341, %v5340
    %v5371 = vpack.c.b16 %v5343, %v5342
    %v5372 = vpack.c.b16 %v5345, %v5344
    %v5373 = vpack.c.b16 %v5347, %v5346
    %v5374 = vpack.c.b16 %v5349, %v5348
    %v5375 = vpack.c.b16 %v5351, %v5350
    %v5376 = vpack.c.b16 %v5353, %v5352
    %v5377 = vpack.c.b16 %v5355, %v5354
    %v5378 = vpack.c.b16 %v5357, %v5356
    %v5379 = vpack.c.b16 %v5359, %v5358
    %v5380 = vpack.c.b16 %v5361, %v5360
    %v5381 = vpack.c.b16 %v5363, %v5362
    %v5382 = vpack.c.b16 %v5365, %v5364
    %v5383 = vpack.c.b16 %v5367, %v5366
    %5400 = vmatprep.subr.bf16.mxu0 0
    %5401 = vmatpush1.bf16.msra.mxu0 %v5375
    %5402 = vmatprep.subr.bf16.mxu0 0
    %5403 = vmatpush1.bf16.msra.mxu0 %v5374
    %5404 = vmatprep.subr.bf16.mxu0 0
    %5405 = vmatpush1.bf16.msra.mxu0 %v5373
    %5406 = vmatprep.subr.bf16.mxu0 0
    %5407 = vmatpush1.bf16.msra.mxu0 %v5372
    %5408 = vmatprep.subr.bf16.mxu0 0
    %5409 = vmatpush1.bf16.msra.mxu0 %v5371
    %5410 = vmatprep.subr.bf16.mxu0 0
    %5411 = vmatpush1.bf16.msra.mxu0 %v5370
    %5412 = vmatprep.subr.bf16.mxu0 0
    %5413 = vmatpush1.bf16.msra.mxu0 %v5369
    %5414 = vmatprep.subr.bf16.mxu0 0
    %5415 = vmatpush1.bf16.msra.mxu0 %v5368
    %5416 = vmatprep.subr.bf16.mxu0 0
    %5417 = vmatpush2.bf16.msra.mxu0 %v5383
    %5418 = vmatprep.subr.bf16.mxu0 0
    %5419 = vmatpush2.bf16.msra.mxu0 %v5382
    %5420 = vmatprep.subr.bf16.mxu0 0
    %5421 = vmatpush2.bf16.msra.mxu0 %v5381
    %5422 = vmatprep.subr.bf16.mxu0 0
    %5423 = vmatpush2.bf16.msra.mxu0 %v5380
    %5424 = vmatprep.subr.bf16.mxu0 0
    %5425 = vmatpush2.bf16.msra.mxu0 %v5379
    %5426 = vmatprep.subr.bf16.mxu0 0
    %5427 = vmatpush2.bf16.msra.mxu0 %v5378
    %5428 = vmatprep.subr.bf16.mxu0 0
    %5429 = vmatpush2.bf16.msra.mxu0 %v5377
    %5430 = vmatprep.subr.bf16.mxu0 0
    %5431 = vmatpush2.bf16.msra.mxu0 %v5376
    %5432 = vmatprep.mubr.bf16.mxu0 %v5301
    %5433 = vmatmul.mubr.bf16.gmra.mxu0 %v5300
    %v5434 = vpop.f32.mrf.mxu0
    %v5435 = vadd.f32 0.0, %v5434
    %v5436 = vpop.f32.mrf.mxu0
    %v5437 = vpop.f32.mrf.mxu0
    %v5438 = vpop.f32.mrf.mxu0
    %5439 = vdwg.mxu0
    %v5440 = vadd.f32 %v5204, %v5435
    %s5441 = scalar_lea.vmem %s4261, 18
    %v5442 = vld [vmem:[%s5441] ss:$8 sm:$0x3]
    %s5443 = scalar_lea.vmem %s4261, 434
    %v5444 = vld [vmem:[%s5443] ss:$8 sm:$0x3]
    %s5445 = scalar_lea.vmem %s4261, 19
    %v5446 = vld [vmem:[%s5445] ss:$8 sm:$0x3]
    %s5447 = scalar_lea.vmem %s4261, 435
    %v5448 = vld [vmem:[%s5447] ss:$8 sm:$0x3]
    %v5449 = vadd.f32 %v5442, %v5446
    %v5450 = vadd.f32 %v5444, %v5448
    %s5451 = scalar_lea.vmem %s4271, 18
    %v5452 = vld [vmem:[%s5451] ss:$8 sm:$0x3]
    %s5453 = scalar_lea.vmem %s4271, 434
    %v5454 = vld [vmem:[%s5453] ss:$8 sm:$0x3]
    %v5455 = vadd.f32 %v5449, %v5452
    %v5456 = vadd.f32 %v5450, %v5454
    %s5457 = scalar_lea.vmem %s4271, 19
    %v5458 = vld [vmem:[%s5457] ss:$8 sm:$0x3]
    %s5459 = scalar_lea.vmem %s4271, 435
    %v5460 = vld [vmem:[%s5459] ss:$8 sm:$0x3]
    %v5461 = vadd.f32 %v5455, %v5458
    %v5462 = vadd.f32 %v5456, %v5460
    %v5463 = vmul.f32 %v5461, 0.25
    %v5464 = vmul.f32 %v5462, 0.25
    %v5467 = vlaneseq
    %v5468 = vshrl.u32 %v5467, 7
    %v5469 = vsub.s32 0, %v5468
    %v5470 = vrot.slane %v5463, %v5469
    %v5471 = vlaneseq
    %v5472 = vshrl.u32 %v5471, 7
    %v5473 = vsub.s32 1, %v5472
    %v5474 = vrot.slane %v5463, %v5473
    %v5475 = vlaneseq
    %v5476 = vshrl.u32 %v5475, 7
    %v5477 = vsub.s32 0, %v5476
    %v5478 = vrot.slane %v5464, %v5477
    %v5479 = vlaneseq
    %v5480 = vshrl.u32 %v5479, 7
    %v5481 = vsub.s32 1, %v5480
    %v5482 = vrot.slane %v5464, %v5481
    %v5487 = vpack.c.bf16 %v5470, %v5470
    %v5488 = vpack.c.bf16 %v5474, %v5474
    %v5489 = vpack.c.bf16 %v5478, %v5478
    %v5490 = vpack.c.bf16 %v5482, %v5482
    %s5491 = scalar_lea.vmem %s1, 2944
    %v5492 = vld [vmem:[%s5491] sm:$0xf]
    %v5493 = vld [vmem:[%s5491 + $0x4] sm:$0xf]
    %v5494 = vld [vmem:[%s5491 + $0x8] sm:$0xf]
    %v5495 = vld [vmem:[%s5491 + $0xc] sm:$0xf]
    %v5496 = vld [vmem:[%s5491 + $0x10] sm:$0xf]
    %v5497 = vld [vmem:[%s5491 + $0x14] sm:$0xf]
    %v5498 = vld [vmem:[%s5491 + $0x18] sm:$0xf]
    %v5499 = vld [vmem:[%s5491 + $0x1c] sm:$0xf]
    %v5500 = vld [vmem:[%s5491 + $0x20] sm:$0xf]
    %v5501 = vld [vmem:[%s5491 + $0x24] sm:$0xf]
    %v5502 = vld [vmem:[%s5491 + $0x28] sm:$0xf]
    %v5503 = vld [vmem:[%s5491 + $0x2c] sm:$0xf]
    %v5504 = vld [vmem:[%s5491 + $0x30] sm:$0xf]
    %v5505 = vld [vmem:[%s5491 + $0x34] sm:$0xf]
    %v5506 = vld [vmem:[%s5491 + $0x38] sm:$0xf]
    %v5507 = vld [vmem:[%s5491 + $0x3c] sm:$0xf]
    %v5508 = vld [vmem:[%s5491 + $0x40] sm:$0xf]
    %v5509 = vld [vmem:[%s5491 + $0x44] sm:$0xf]
    %v5510 = vld [vmem:[%s5491 + $0x48] sm:$0xf]
    %v5511 = vld [vmem:[%s5491 + $0x4c] sm:$0xf]
    %v5512 = vld [vmem:[%s5491 + $0x50] sm:$0xf]
    %v5513 = vld [vmem:[%s5491 + $0x54] sm:$0xf]
    %v5514 = vld [vmem:[%s5491 + $0x58] sm:$0xf]
    %v5515 = vld [vmem:[%s5491 + $0x5c] sm:$0xf]
    %v5516 = vld [vmem:[%s5491 + $0x60] sm:$0xf]
    %v5517 = vld [vmem:[%s5491 + $0x64] sm:$0xf]
    %v5518 = vld [vmem:[%s5491 + $0x68] sm:$0xf]
    %v5519 = vld [vmem:[%s5491 + $0x6c] sm:$0xf]
    %v5520 = vld [vmem:[%s5491 + $0x70] sm:$0xf]
    %v5521 = vld [vmem:[%s5491 + $0x74] sm:$0xf]
    %v5522 = vld [vmem:[%s5491 + $0x78] sm:$0xf]
    %v5523 = vld [vmem:[%s5491 + $0x7c] sm:$0xf]
    %v5528 = vunpack.c.l.b16 %v5487
    %v5529 = vunpack.c.l.b16 %v5488
    %v5530 = vunpack.c.l.b16 %v5489
    %v5531 = vunpack.c.l.b16 %v5490
    %v5532 = vrot.slane %v5530, 7
    %v5533 = vsel %vm189, %v5532, %v5528
    %v5534 = vrot.slane %v5531, 7
    %v5535 = vsel %vm189, %v5534, %v5529
    %v5536 = vpack.c.b16 %v5533, %v5533
    %v5537 = vpack.c.b16 %v5535, %v5535
    %v5572 = vunpack.c.l.b16 %v5492
    %v5573 = vunpack.c.l.b16 %v5493
    %v5574 = vunpack.c.l.b16 %v5494
    %v5575 = vunpack.c.l.b16 %v5495
    %v5576 = vunpack.c.l.b16 %v5496
    %v5577 = vunpack.c.l.b16 %v5497
    %v5578 = vunpack.c.l.b16 %v5498
    %v5579 = vunpack.c.l.b16 %v5499
    %v5580 = vunpack.c.l.b16 %v5500
    %v5581 = vunpack.c.l.b16 %v5501
    %v5582 = vunpack.c.l.b16 %v5502
    %v5583 = vunpack.c.l.b16 %v5503
    %v5584 = vunpack.c.l.b16 %v5504
    %v5585 = vunpack.c.l.b16 %v5505
    %v5586 = vunpack.c.l.b16 %v5506
    %v5587 = vunpack.c.l.b16 %v5507
    %v5588 = vunpack.c.l.b16 %v5508
    %v5589 = vunpack.c.l.b16 %v5509
    %v5590 = vunpack.c.l.b16 %v5510
    %v5591 = vunpack.c.l.b16 %v5511
    %v5592 = vunpack.c.l.b16 %v5512
    %v5593 = vunpack.c.l.b16 %v5513
    %v5594 = vunpack.c.l.b16 %v5514
    %v5595 = vunpack.c.l.b16 %v5515
    %v5596 = vunpack.c.l.b16 %v5516
    %v5597 = vunpack.c.l.b16 %v5517
    %v5598 = vunpack.c.l.b16 %v5518
    %v5599 = vunpack.c.l.b16 %v5519
    %v5600 = vunpack.c.l.b16 %v5520
    %v5601 = vunpack.c.l.b16 %v5521
    %v5602 = vunpack.c.l.b16 %v5522
    %v5603 = vunpack.c.l.b16 %v5523
    %v5604 = vpack.c.b16 %v5573, %v5572
    %v5605 = vpack.c.b16 %v5575, %v5574
    %v5606 = vpack.c.b16 %v5577, %v5576
    %v5607 = vpack.c.b16 %v5579, %v5578
    %v5608 = vpack.c.b16 %v5581, %v5580
    %v5609 = vpack.c.b16 %v5583, %v5582
    %v5610 = vpack.c.b16 %v5585, %v5584
    %v5611 = vpack.c.b16 %v5587, %v5586
    %v5612 = vpack.c.b16 %v5589, %v5588
    %v5613 = vpack.c.b16 %v5591, %v5590
    %v5614 = vpack.c.b16 %v5593, %v5592
    %v5615 = vpack.c.b16 %v5595, %v5594
    %v5616 = vpack.c.b16 %v5597, %v5596
    %v5617 = vpack.c.b16 %v5599, %v5598
    %v5618 = vpack.c.b16 %v5601, %v5600
    %v5619 = vpack.c.b16 %v5603, %v5602
    %5636 = vmatprep.subr.bf16.mxu0 0
    %5637 = vmatpush1.bf16.msra.mxu0 %v5611
    %5638 = vmatprep.subr.bf16.mxu0 0
    %5639 = vmatpush1.bf16.msra.mxu0 %v5610
    %5640 = vmatprep.subr.bf16.mxu0 0
    %5641 = vmatpush1.bf16.msra.mxu0 %v5609
    %5642 = vmatprep.subr.bf16.mxu0 0
    %5643 = vmatpush1.bf16.msra.mxu0 %v5608
    %5644 = vmatprep.subr.bf16.mxu0 0
    %5645 = vmatpush1.bf16.msra.mxu0 %v5607
    %5646 = vmatprep.subr.bf16.mxu0 0
    %5647 = vmatpush1.bf16.msra.mxu0 %v5606
    %5648 = vmatprep.subr.bf16.mxu0 0
    %5649 = vmatpush1.bf16.msra.mxu0 %v5605
    %5650 = vmatprep.subr.bf16.mxu0 0
    %5651 = vmatpush1.bf16.msra.mxu0 %v5604
    %5652 = vmatprep.subr.bf16.mxu0 0
    %5653 = vmatpush2.bf16.msra.mxu0 %v5619
    %5654 = vmatprep.subr.bf16.mxu0 0
    %5655 = vmatpush2.bf16.msra.mxu0 %v5618
    %5656 = vmatprep.subr.bf16.mxu0 0
    %5657 = vmatpush2.bf16.msra.mxu0 %v5617
    %5658 = vmatprep.subr.bf16.mxu0 0
    %5659 = vmatpush2.bf16.msra.mxu0 %v5616
    %5660 = vmatprep.subr.bf16.mxu0 0
    %5661 = vmatpush2.bf16.msra.mxu0 %v5615
    %5662 = vmatprep.subr.bf16.mxu0 0
    %5663 = vmatpush2.bf16.msra.mxu0 %v5614
    %5664 = vmatprep.subr.bf16.mxu0 0
    %5665 = vmatpush2.bf16.msra.mxu0 %v5613
    %5666 = vmatprep.subr.bf16.mxu0 0
    %5667 = vmatpush2.bf16.msra.mxu0 %v5612
    %5668 = vmatprep.mubr.bf16.mxu0 %v5537
    %5669 = vmatmul.mubr.bf16.gmra.mxu0 %v5536
    %v5670 = vpop.f32.mrf.mxu0
    %v5671 = vadd.f32 0.0, %v5670
    %v5672 = vpop.f32.mrf.mxu0
    %v5673 = vpop.f32.mrf.mxu0
    %v5674 = vpop.f32.mrf.mxu0
    %5675 = vdwg.mxu0
    %v5676 = vadd.f32 %v5440, %v5671
    %s5677 = scalar_lea.vmem %s0, 256
    %v5678 = vld [vmem:[%s5677] ss:$8 sm:$0x3]
    %s5679 = scalar_lea.vmem %s5677, 416
    %v5680 = vld [vmem:[%s5679] ss:$8 sm:$0x3]
    %s5681 = scalar_lea.vmem %s5677, 1
    %v5682 = vld [vmem:[%s5681] ss:$8 sm:$0x3]
    %s5683 = scalar_lea.vmem %s5677, 417
    %v5684 = vld [vmem:[%s5683] ss:$8 sm:$0x3]
    %v5685 = vadd.f32 %v5678, %v5682
    %v5686 = vadd.f32 %v5680, %v5684
    %s5687 = scalar_lea.vmem %s0, 288
    %v5688 = vld [vmem:[%s5687] ss:$8 sm:$0x3]
    %s5689 = scalar_lea.vmem %s5687, 416
    %v5690 = vld [vmem:[%s5689] ss:$8 sm:$0x3]
    %v5691 = vadd.f32 %v5685, %v5688
    %v5692 = vadd.f32 %v5686, %v5690
    %s5693 = scalar_lea.vmem %s5687, 1
    %v5694 = vld [vmem:[%s5693] ss:$8 sm:$0x3]
    %s5695 = scalar_lea.vmem %s5687, 417
    %v5696 = vld [vmem:[%s5695] ss:$8 sm:$0x3]
    %v5697 = vadd.f32 %v5691, %v5694
    %v5698 = vadd.f32 %v5692, %v5696
    %v5699 = vmul.f32 %v5697, 0.25
    %v5700 = vmul.f32 %v5698, 0.25
    %v5703 = vlaneseq
    %v5704 = vshrl.u32 %v5703, 7
    %v5705 = vsub.s32 0, %v5704
    %v5706 = vrot.slane %v5699, %v5705
    %v5707 = vlaneseq
    %v5708 = vshrl.u32 %v5707, 7
    %v5709 = vsub.s32 1, %v5708
    %v5710 = vrot.slane %v5699, %v5709
    %v5711 = vlaneseq
    %v5712 = vshrl.u32 %v5711, 7
    %v5713 = vsub.s32 0, %v5712
    %v5714 = vrot.slane %v5700, %v5713
    %v5715 = vlaneseq
    %v5716 = vshrl.u32 %v5715, 7
    %v5717 = vsub.s32 1, %v5716
    %v5718 = vrot.slane %v5700, %v5717
    %v5723 = vpack.c.bf16 %v5706, %v5706
    %v5724 = vpack.c.bf16 %v5710, %v5710
    %v5725 = vpack.c.bf16 %v5714, %v5714
    %v5726 = vpack.c.bf16 %v5718, %v5718
    %s5727 = scalar_lea.vmem %s1, 3072
    %v5728 = vld [vmem:[%s5727] sm:$0xf]
    %v5729 = vld [vmem:[%s5727 + $0x4] sm:$0xf]
    %v5730 = vld [vmem:[%s5727 + $0x8] sm:$0xf]
    %v5731 = vld [vmem:[%s5727 + $0xc] sm:$0xf]
    %v5732 = vld [vmem:[%s5727 + $0x10] sm:$0xf]
    %v5733 = vld [vmem:[%s5727 + $0x14] sm:$0xf]
    %v5734 = vld [vmem:[%s5727 + $0x18] sm:$0xf]
    %v5735 = vld [vmem:[%s5727 + $0x1c] sm:$0xf]
    %v5736 = vld [vmem:[%s5727 + $0x20] sm:$0xf]
    %v5737 = vld [vmem:[%s5727 + $0x24] sm:$0xf]
    %v5738 = vld [vmem:[%s5727 + $0x28] sm:$0xf]
    %v5739 = vld [vmem:[%s5727 + $0x2c] sm:$0xf]
    %v5740 = vld [vmem:[%s5727 + $0x30] sm:$0xf]
    %v5741 = vld [vmem:[%s5727 + $0x34] sm:$0xf]
    %v5742 = vld [vmem:[%s5727 + $0x38] sm:$0xf]
    %v5743 = vld [vmem:[%s5727 + $0x3c] sm:$0xf]
    %v5744 = vld [vmem:[%s5727 + $0x40] sm:$0xf]
    %v5745 = vld [vmem:[%s5727 + $0x44] sm:$0xf]
    %v5746 = vld [vmem:[%s5727 + $0x48] sm:$0xf]
    %v5747 = vld [vmem:[%s5727 + $0x4c] sm:$0xf]
    %v5748 = vld [vmem:[%s5727 + $0x50] sm:$0xf]
    %v5749 = vld [vmem:[%s5727 + $0x54] sm:$0xf]
    %v5750 = vld [vmem:[%s5727 + $0x58] sm:$0xf]
    %v5751 = vld [vmem:[%s5727 + $0x5c] sm:$0xf]
    %v5752 = vld [vmem:[%s5727 + $0x60] sm:$0xf]
    %v5753 = vld [vmem:[%s5727 + $0x64] sm:$0xf]
    %v5754 = vld [vmem:[%s5727 + $0x68] sm:$0xf]
    %v5755 = vld [vmem:[%s5727 + $0x6c] sm:$0xf]
    %v5756 = vld [vmem:[%s5727 + $0x70] sm:$0xf]
    %v5757 = vld [vmem:[%s5727 + $0x74] sm:$0xf]
    %v5758 = vld [vmem:[%s5727 + $0x78] sm:$0xf]
    %v5759 = vld [vmem:[%s5727 + $0x7c] sm:$0xf]
    %v5764 = vunpack.c.l.b16 %v5723
    %v5765 = vunpack.c.l.b16 %v5724
    %v5766 = vunpack.c.l.b16 %v5725
    %v5767 = vunpack.c.l.b16 %v5726
    %v5768 = vrot.slane %v5766, 7
    %v5769 = vsel %vm189, %v5768, %v5764
    %v5770 = vrot.slane %v5767, 7
    %v5771 = vsel %vm189, %v5770, %v5765
    %v5772 = vpack.c.b16 %v5769, %v5769
    %v5773 = vpack.c.b16 %v5771, %v5771
    %v5808 = vunpack.c.l.b16 %v5728
    %v5809 = vunpack.c.l.b16 %v5729
    %v5810 = vunpack.c.l.b16 %v5730
    %v5811 = vunpack.c.l.b16 %v5731
    %v5812 = vunpack.c.l.b16 %v5732
    %v5813 = vunpack.c.l.b16 %v5733
    %v5814 = vunpack.c.l.b16 %v5734
    %v5815 = vunpack.c.l.b16 %v5735
    %v5816 = vunpack.c.l.b16 %v5736
    %v5817 = vunpack.c.l.b16 %v5737
    %v5818 = vunpack.c.l.b16 %v5738
    %v5819 = vunpack.c.l.b16 %v5739
    %v5820 = vunpack.c.l.b16 %v5740
    %v5821 = vunpack.c.l.b16 %v5741
    %v5822 = vunpack.c.l.b16 %v5742
    %v5823 = vunpack.c.l.b16 %v5743
    %v5824 = vunpack.c.l.b16 %v5744
    %v5825 = vunpack.c.l.b16 %v5745
    %v5826 = vunpack.c.l.b16 %v5746
    %v5827 = vunpack.c.l.b16 %v5747
    %v5828 = vunpack.c.l.b16 %v5748
    %v5829 = vunpack.c.l.b16 %v5749
    %v5830 = vunpack.c.l.b16 %v5750
    %v5831 = vunpack.c.l.b16 %v5751
    %v5832 = vunpack.c.l.b16 %v5752
    %v5833 = vunpack.c.l.b16 %v5753
    %v5834 = vunpack.c.l.b16 %v5754
    %v5835 = vunpack.c.l.b16 %v5755
    %v5836 = vunpack.c.l.b16 %v5756
    %v5837 = vunpack.c.l.b16 %v5757
    %v5838 = vunpack.c.l.b16 %v5758
    %v5839 = vunpack.c.l.b16 %v5759
    %v5840 = vpack.c.b16 %v5809, %v5808
    %v5841 = vpack.c.b16 %v5811, %v5810
    %v5842 = vpack.c.b16 %v5813, %v5812
    %v5843 = vpack.c.b16 %v5815, %v5814
    %v5844 = vpack.c.b16 %v5817, %v5816
    %v5845 = vpack.c.b16 %v5819, %v5818
    %v5846 = vpack.c.b16 %v5821, %v5820
    %v5847 = vpack.c.b16 %v5823, %v5822
    %v5848 = vpack.c.b16 %v5825, %v5824
    %v5849 = vpack.c.b16 %v5827, %v5826
    %v5850 = vpack.c.b16 %v5829, %v5828
    %v5851 = vpack.c.b16 %v5831, %v5830
    %v5852 = vpack.c.b16 %v5833, %v5832
    %v5853 = vpack.c.b16 %v5835, %v5834
    %v5854 = vpack.c.b16 %v5837, %v5836
    %v5855 = vpack.c.b16 %v5839, %v5838
    %5872 = vmatprep.subr.bf16.mxu0 0
    %5873 = vmatpush1.bf16.msra.mxu0 %v5847
    %5874 = vmatprep.subr.bf16.mxu0 0
    %5875 = vmatpush1.bf16.msra.mxu0 %v5846
    %5876 = vmatprep.subr.bf16.mxu0 0
    %5877 = vmatpush1.bf16.msra.mxu0 %v5845
    %5878 = vmatprep.subr.bf16.mxu0 0
    %5879 = vmatpush1.bf16.msra.mxu0 %v5844
    %5880 = vmatprep.subr.bf16.mxu0 0
    %5881 = vmatpush1.bf16.msra.mxu0 %v5843
    %5882 = vmatprep.subr.bf16.mxu0 0
    %5883 = vmatpush1.bf16.msra.mxu0 %v5842
    %5884 = vmatprep.subr.bf16.mxu0 0
    %5885 = vmatpush1.bf16.msra.mxu0 %v5841
    %5886 = vmatprep.subr.bf16.mxu0 0
    %5887 = vmatpush1.bf16.msra.mxu0 %v5840
    %5888 = vmatprep.subr.bf16.mxu0 0
    %5889 = vmatpush2.bf16.msra.mxu0 %v5855
    %5890 = vmatprep.subr.bf16.mxu0 0
    %5891 = vmatpush2.bf16.msra.mxu0 %v5854
    %5892 = vmatprep.subr.bf16.mxu0 0
    %5893 = vmatpush2.bf16.msra.mxu0 %v5853
    %5894 = vmatprep.subr.bf16.mxu0 0
    %5895 = vmatpush2.bf16.msra.mxu0 %v5852
    %5896 = vmatprep.subr.bf16.mxu0 0
    %5897 = vmatpush2.bf16.msra.mxu0 %v5851
    %5898 = vmatprep.subr.bf16.mxu0 0
    %5899 = vmatpush2.bf16.msra.mxu0 %v5850
    %5900 = vmatprep.subr.bf16.mxu0 0
    %5901 = vmatpush2.bf16.msra.mxu0 %v5849
    %5902 = vmatprep.subr.bf16.mxu0 0
    %5903 = vmatpush2.bf16.msra.mxu0 %v5848
    %5904 = vmatprep.mubr.bf16.mxu0 %v5773
    %5905 = vmatmul.mubr.bf16.gmra.mxu0 %v5772
    %v5906 = vpop.f32.mrf.mxu0
    %v5907 = vadd.f32 0.0, %v5906
    %v5908 = vpop.f32.mrf.mxu0
    %v5909 = vpop.f32.mrf.mxu0
    %v5910 = vpop.f32.mrf.mxu0
    %5911 = vdwg.mxu0
    %v5912 = vadd.f32 %v5676, %v5907
    %s5913 = scalar_lea.vmem %s5677, 2
    %v5914 = vld [vmem:[%s5913] ss:$8 sm:$0x3]
    %s5915 = scalar_lea.vmem %s5677, 418
    %v5916 = vld [vmem:[%s5915] ss:$8 sm:$0x3]
    %s5917 = scalar_lea.vmem %s5677, 3
    %v5918 = vld [vmem:[%s5917] ss:$8 sm:$0x3]
    %s5919 = scalar_lea.vmem %s5677, 419
    %v5920 = vld [vmem:[%s5919] ss:$8 sm:$0x3]
    %v5921 = vadd.f32 %v5914, %v5918
    %v5922 = vadd.f32 %v5916, %v5920
    %s5923 = scalar_lea.vmem %s5687, 2
    %v5924 = vld [vmem:[%s5923] ss:$8 sm:$0x3]
    %s5925 = scalar_lea.vmem %s5687, 418
    %v5926 = vld [vmem:[%s5925] ss:$8 sm:$0x3]
    %v5927 = vadd.f32 %v5921, %v5924
    %v5928 = vadd.f32 %v5922, %v5926
    %s5929 = scalar_lea.vmem %s5687, 3
    %v5930 = vld [vmem:[%s5929] ss:$8 sm:$0x3]
    %s5931 = scalar_lea.vmem %s5687, 419
    %v5932 = vld [vmem:[%s5931] ss:$8 sm:$0x3]
    %v5933 = vadd.f32 %v5927, %v5930
    %v5934 = vadd.f32 %v5928, %v5932
    %v5935 = vmul.f32 %v5933, 0.25
    %v5936 = vmul.f32 %v5934, 0.25
    %v5939 = vlaneseq
    %v5940 = vshrl.u32 %v5939, 7
    %v5941 = vsub.s32 0, %v5940
    %v5942 = vrot.slane %v5935, %v5941
    %v5943 = vlaneseq
    %v5944 = vshrl.u32 %v5943, 7
    %v5945 = vsub.s32 1, %v5944
    %v5946 = vrot.slane %v5935, %v5945
    %v5947 = vlaneseq
    %v5948 = vshrl.u32 %v5947, 7
    %v5949 = vsub.s32 0, %v5948
    %v5950 = vrot.slane %v5936, %v5949
    %v5951 = vlaneseq
    %v5952 = vshrl.u32 %v5951, 7
    %v5953 = vsub.s32 1, %v5952
    %v5954 = vrot.slane %v5936, %v5953
    %v5959 = vpack.c.bf16 %v5942, %v5942
    %v5960 = vpack.c.bf16 %v5946, %v5946
    %v5961 = vpack.c.bf16 %v5950, %v5950
    %v5962 = vpack.c.bf16 %v5954, %v5954
    %s5963 = scalar_lea.vmem %s1, 3200
    %v5964 = vld [vmem:[%s5963] sm:$0xf]
    %v5965 = vld [vmem:[%s5963 + $0x4] sm:$0xf]
    %v5966 = vld [vmem:[%s5963 + $0x8] sm:$0xf]
    %v5967 = vld [vmem:[%s5963 + $0xc] sm:$0xf]
    %v5968 = vld [vmem:[%s5963 + $0x10] sm:$0xf]
    %v5969 = vld [vmem:[%s5963 + $0x14] sm:$0xf]
    %v5970 = vld [vmem:[%s5963 + $0x18] sm:$0xf]
    %v5971 = vld [vmem:[%s5963 + $0x1c] sm:$0xf]
    %v5972 = vld [vmem:[%s5963 + $0x20] sm:$0xf]
    %v5973 = vld [vmem:[%s5963 + $0x24] sm:$0xf]
    %v5974 = vld [vmem:[%s5963 + $0x28] sm:$0xf]
    %v5975 = vld [vmem:[%s5963 + $0x2c] sm:$0xf]
    %v5976 = vld [vmem:[%s5963 + $0x30] sm:$0xf]
    %v5977 = vld [vmem:[%s5963 + $0x34] sm:$0xf]
    %v5978 = vld [vmem:[%s5963 + $0x38] sm:$0xf]
    %v5979 = vld [vmem:[%s5963 + $0x3c] sm:$0xf]
    %v5980 = vld [vmem:[%s5963 + $0x40] sm:$0xf]
    %v5981 = vld [vmem:[%s5963 + $0x44] sm:$0xf]
    %v5982 = vld [vmem:[%s5963 + $0x48] sm:$0xf]
    %v5983 = vld [vmem:[%s5963 + $0x4c] sm:$0xf]
    %v5984 = vld [vmem:[%s5963 + $0x50] sm:$0xf]
    %v5985 = vld [vmem:[%s5963 + $0x54] sm:$0xf]
    %v5986 = vld [vmem:[%s5963 + $0x58] sm:$0xf]
    %v5987 = vld [vmem:[%s5963 + $0x5c] sm:$0xf]
    %v5988 = vld [vmem:[%s5963 + $0x60] sm:$0xf]
    %v5989 = vld [vmem:[%s5963 + $0x64] sm:$0xf]
    %v5990 = vld [vmem:[%s5963 + $0x68] sm:$0xf]
    %v5991 = vld [vmem:[%s5963 + $0x6c] sm:$0xf]
    %v5992 = vld [vmem:[%s5963 + $0x70] sm:$0xf]
    %v5993 = vld [vmem:[%s5963 + $0x74] sm:$0xf]
    %v5994 = vld [vmem:[%s5963 + $0x78] sm:$0xf]
    %v5995 = vld [vmem:[%s5963 + $0x7c] sm:$0xf]
    %v6000 = vunpack.c.l.b16 %v5959
    %v6001 = vunpack.c.l.b16 %v5960
    %v6002 = vunpack.c.l.b16 %v5961
    %v6003 = vunpack.c.l.b16 %v5962
    %v6004 = vrot.slane %v6002, 7
    %v6005 = vsel %vm189, %v6004, %v6000
    %v6006 = vrot.slane %v6003, 7
    %v6007 = vsel %vm189, %v6006, %v6001
    %v6008 = vpack.c.b16 %v6005, %v6005
    %v6009 = vpack.c.b16 %v6007, %v6007
    %v6044 = vunpack.c.l.b16 %v5964
    %v6045 = vunpack.c.l.b16 %v5965
    %v6046 = vunpack.c.l.b16 %v5966
    %v6047 = vunpack.c.l.b16 %v5967
    %v6048 = vunpack.c.l.b16 %v5968
    %v6049 = vunpack.c.l.b16 %v5969
    %v6050 = vunpack.c.l.b16 %v5970
    %v6051 = vunpack.c.l.b16 %v5971
    %v6052 = vunpack.c.l.b16 %v5972
    %v6053 = vunpack.c.l.b16 %v5973
    %v6054 = vunpack.c.l.b16 %v5974
    %v6055 = vunpack.c.l.b16 %v5975
    %v6056 = vunpack.c.l.b16 %v5976
    %v6057 = vunpack.c.l.b16 %v5977
    %v6058 = vunpack.c.l.b16 %v5978
    %v6059 = vunpack.c.l.b16 %v5979
    %v6060 = vunpack.c.l.b16 %v5980
    %v6061 = vunpack.c.l.b16 %v5981
    %v6062 = vunpack.c.l.b16 %v5982
    %v6063 = vunpack.c.l.b16 %v5983
    %v6064 = vunpack.c.l.b16 %v5984
    %v6065 = vunpack.c.l.b16 %v5985
    %v6066 = vunpack.c.l.b16 %v5986
    %v6067 = vunpack.c.l.b16 %v5987
    %v6068 = vunpack.c.l.b16 %v5988
    %v6069 = vunpack.c.l.b16 %v5989
    %v6070 = vunpack.c.l.b16 %v5990
    %v6071 = vunpack.c.l.b16 %v5991
    %v6072 = vunpack.c.l.b16 %v5992
    %v6073 = vunpack.c.l.b16 %v5993
    %v6074 = vunpack.c.l.b16 %v5994
    %v6075 = vunpack.c.l.b16 %v5995
    %v6076 = vpack.c.b16 %v6045, %v6044
    %v6077 = vpack.c.b16 %v6047, %v6046
    %v6078 = vpack.c.b16 %v6049, %v6048
    %v6079 = vpack.c.b16 %v6051, %v6050
    %v6080 = vpack.c.b16 %v6053, %v6052
    %v6081 = vpack.c.b16 %v6055, %v6054
    %v6082 = vpack.c.b16 %v6057, %v6056
    %v6083 = vpack.c.b16 %v6059, %v6058
    %v6084 = vpack.c.b16 %v6061, %v6060
    %v6085 = vpack.c.b16 %v6063, %v6062
    %v6086 = vpack.c.b16 %v6065, %v6064
    %v6087 = vpack.c.b16 %v6067, %v6066
    %v6088 = vpack.c.b16 %v6069, %v6068
    %v6089 = vpack.c.b16 %v6071, %v6070
    %v6090 = vpack.c.b16 %v6073, %v6072
    %v6091 = vpack.c.b16 %v6075, %v6074
    %6108 = vmatprep.subr.bf16.mxu0 0
    %6109 = vmatpush1.bf16.msra.mxu0 %v6083
    %6110 = vmatprep.subr.bf16.mxu0 0
    %6111 = vmatpush1.bf16.msra.mxu0 %v6082
    %6112 = vmatprep.subr.bf16.mxu0 0
    %6113 = vmatpush1.bf16.msra.mxu0 %v6081
    %6114 = vmatprep.subr.bf16.mxu0 0
    %6115 = vmatpush1.bf16.msra.mxu0 %v6080
    %6116 = vmatprep.subr.bf16.mxu0 0
    %6117 = vmatpush1.bf16.msra.mxu0 %v6079
    %6118 = vmatprep.subr.bf16.mxu0 0
    %6119 = vmatpush1.bf16.msra.mxu0 %v6078
    %6120 = vmatprep.subr.bf16.mxu0 0
    %6121 = vmatpush1.bf16.msra.mxu0 %v6077
    %6122 = vmatprep.subr.bf16.mxu0 0
    %6123 = vmatpush1.bf16.msra.mxu0 %v6076
    %6124 = vmatprep.subr.bf16.mxu0 0
    %6125 = vmatpush2.bf16.msra.mxu0 %v6091
    %6126 = vmatprep.subr.bf16.mxu0 0
    %6127 = vmatpush2.bf16.msra.mxu0 %v6090
    %6128 = vmatprep.subr.bf16.mxu0 0
    %6129 = vmatpush2.bf16.msra.mxu0 %v6089
    %6130 = vmatprep.subr.bf16.mxu0 0
    %6131 = vmatpush2.bf16.msra.mxu0 %v6088
    %6132 = vmatprep.subr.bf16.mxu0 0
    %6133 = vmatpush2.bf16.msra.mxu0 %v6087
    %6134 = vmatprep.subr.bf16.mxu0 0
    %6135 = vmatpush2.bf16.msra.mxu0 %v6086
    %6136 = vmatprep.subr.bf16.mxu0 0
    %6137 = vmatpush2.bf16.msra.mxu0 %v6085
    %6138 = vmatprep.subr.bf16.mxu0 0
    %6139 = vmatpush2.bf16.msra.mxu0 %v6084
    %6140 = vmatprep.mubr.bf16.mxu0 %v6009
    %6141 = vmatmul.mubr.bf16.gmra.mxu0 %v6008
    %v6142 = vpop.f32.mrf.mxu0
    %v6143 = vadd.f32 0.0, %v6142
    %v6144 = vpop.f32.mrf.mxu0
    %v6145 = vpop.f32.mrf.mxu0
    %v6146 = vpop.f32.mrf.mxu0
    %6147 = vdwg.mxu0
    %v6148 = vadd.f32 %v5912, %v6143
    %s6149 = scalar_lea.vmem %s5677, 4
    %v6150 = vld [vmem:[%s6149] ss:$8 sm:$0x3]
    %s6151 = scalar_lea.vmem %s5677, 420
    %v6152 = vld [vmem:[%s6151] ss:$8 sm:$0x3]
    %s6153 = scalar_lea.vmem %s5677, 5
    %v6154 = vld [vmem:[%s6153] ss:$8 sm:$0x3]
    %s6155 = scalar_lea.vmem %s5677, 421
    %v6156 = vld [vmem:[%s6155] ss:$8 sm:$0x3]
    %v6157 = vadd.f32 %v6150, %v6154
    %v6158 = vadd.f32 %v6152, %v6156
    %s6159 = scalar_lea.vmem %s5687, 4
    %v6160 = vld [vmem:[%s6159] ss:$8 sm:$0x3]
    %s6161 = scalar_lea.vmem %s5687, 420
    %v6162 = vld [vmem:[%s6161] ss:$8 sm:$0x3]
    %v6163 = vadd.f32 %v6157, %v6160
    %v6164 = vadd.f32 %v6158, %v6162
    %s6165 = scalar_lea.vmem %s5687, 5
    %v6166 = vld [vmem:[%s6165] ss:$8 sm:$0x3]
    %s6167 = scalar_lea.vmem %s5687, 421
    %v6168 = vld [vmem:[%s6167] ss:$8 sm:$0x3]
    %v6169 = vadd.f32 %v6163, %v6166
    %v6170 = vadd.f32 %v6164, %v6168
    %v6171 = vmul.f32 %v6169, 0.25
    %v6172 = vmul.f32 %v6170, 0.25
    %v6175 = vlaneseq
    %v6176 = vshrl.u32 %v6175, 7
    %v6177 = vsub.s32 0, %v6176
    %v6178 = vrot.slane %v6171, %v6177
    %v6179 = vlaneseq
    %v6180 = vshrl.u32 %v6179, 7
    %v6181 = vsub.s32 1, %v6180
    %v6182 = vrot.slane %v6171, %v6181
    %v6183 = vlaneseq
    %v6184 = vshrl.u32 %v6183, 7
    %v6185 = vsub.s32 0, %v6184
    %v6186 = vrot.slane %v6172, %v6185
    %v6187 = vlaneseq
    %v6188 = vshrl.u32 %v6187, 7
    %v6189 = vsub.s32 1, %v6188
    %v6190 = vrot.slane %v6172, %v6189
    %v6195 = vpack.c.bf16 %v6178, %v6178
    %v6196 = vpack.c.bf16 %v6182, %v6182
    %v6197 = vpack.c.bf16 %v6186, %v6186
    %v6198 = vpack.c.bf16 %v6190, %v6190
    %s6199 = scalar_lea.vmem %s1, 3328
    %v6200 = vld [vmem:[%s6199] sm:$0xf]
    %v6201 = vld [vmem:[%s6199 + $0x4] sm:$0xf]
    %v6202 = vld [vmem:[%s6199 + $0x8] sm:$0xf]
    %v6203 = vld [vmem:[%s6199 + $0xc] sm:$0xf]
    %v6204 = vld [vmem:[%s6199 + $0x10] sm:$0xf]
    %v6205 = vld [vmem:[%s6199 + $0x14] sm:$0xf]
    %v6206 = vld [vmem:[%s6199 + $0x18] sm:$0xf]
    %v6207 = vld [vmem:[%s6199 + $0x1c] sm:$0xf]
    %v6208 = vld [vmem:[%s6199 + $0x20] sm:$0xf]
    %v6209 = vld [vmem:[%s6199 + $0x24] sm:$0xf]
    %v6210 = vld [vmem:[%s6199 + $0x28] sm:$0xf]
    %v6211 = vld [vmem:[%s6199 + $0x2c] sm:$0xf]
    %v6212 = vld [vmem:[%s6199 + $0x30] sm:$0xf]
    %v6213 = vld [vmem:[%s6199 + $0x34] sm:$0xf]
    %v6214 = vld [vmem:[%s6199 + $0x38] sm:$0xf]
    %v6215 = vld [vmem:[%s6199 + $0x3c] sm:$0xf]
    %v6216 = vld [vmem:[%s6199 + $0x40] sm:$0xf]
    %v6217 = vld [vmem:[%s6199 + $0x44] sm:$0xf]
    %v6218 = vld [vmem:[%s6199 + $0x48] sm:$0xf]
    %v6219 = vld [vmem:[%s6199 + $0x4c] sm:$0xf]
    %v6220 = vld [vmem:[%s6199 + $0x50] sm:$0xf]
    %v6221 = vld [vmem:[%s6199 + $0x54] sm:$0xf]
    %v6222 = vld [vmem:[%s6199 + $0x58] sm:$0xf]
    %v6223 = vld [vmem:[%s6199 + $0x5c] sm:$0xf]
    %v6224 = vld [vmem:[%s6199 + $0x60] sm:$0xf]
    %v6225 = vld [vmem:[%s6199 + $0x64] sm:$0xf]
    %v6226 = vld [vmem:[%s6199 + $0x68] sm:$0xf]
    %v6227 = vld [vmem:[%s6199 + $0x6c] sm:$0xf]
    %v6228 = vld [vmem:[%s6199 + $0x70] sm:$0xf]
    %v6229 = vld [vmem:[%s6199 + $0x74] sm:$0xf]
    %v6230 = vld [vmem:[%s6199 + $0x78] sm:$0xf]
    %v6231 = vld [vmem:[%s6199 + $0x7c] sm:$0xf]
    %v6236 = vunpack.c.l.b16 %v6195
    %v6237 = vunpack.c.l.b16 %v6196
    %v6238 = vunpack.c.l.b16 %v6197
    %v6239 = vunpack.c.l.b16 %v6198
    %v6240 = vrot.slane %v6238, 7
    %v6241 = vsel %vm189, %v6240, %v6236
    %v6242 = vrot.slane %v6239, 7
    %v6243 = vsel %vm189, %v6242, %v6237
    %v6244 = vpack.c.b16 %v6241, %v6241
    %v6245 = vpack.c.b16 %v6243, %v6243
    %v6280 = vunpack.c.l.b16 %v6200
    %v6281 = vunpack.c.l.b16 %v6201
    %v6282 = vunpack.c.l.b16 %v6202
    %v6283 = vunpack.c.l.b16 %v6203
    %v6284 = vunpack.c.l.b16 %v6204
    %v6285 = vunpack.c.l.b16 %v6205
    %v6286 = vunpack.c.l.b16 %v6206
    %v6287 = vunpack.c.l.b16 %v6207
    %v6288 = vunpack.c.l.b16 %v6208
    %v6289 = vunpack.c.l.b16 %v6209
    %v6290 = vunpack.c.l.b16 %v6210
    %v6291 = vunpack.c.l.b16 %v6211
    %v6292 = vunpack.c.l.b16 %v6212
    %v6293 = vunpack.c.l.b16 %v6213
    %v6294 = vunpack.c.l.b16 %v6214
    %v6295 = vunpack.c.l.b16 %v6215
    %v6296 = vunpack.c.l.b16 %v6216
    %v6297 = vunpack.c.l.b16 %v6217
    %v6298 = vunpack.c.l.b16 %v6218
    %v6299 = vunpack.c.l.b16 %v6219
    %v6300 = vunpack.c.l.b16 %v6220
    %v6301 = vunpack.c.l.b16 %v6221
    %v6302 = vunpack.c.l.b16 %v6222
    %v6303 = vunpack.c.l.b16 %v6223
    %v6304 = vunpack.c.l.b16 %v6224
    %v6305 = vunpack.c.l.b16 %v6225
    %v6306 = vunpack.c.l.b16 %v6226
    %v6307 = vunpack.c.l.b16 %v6227
    %v6308 = vunpack.c.l.b16 %v6228
    %v6309 = vunpack.c.l.b16 %v6229
    %v6310 = vunpack.c.l.b16 %v6230
    %v6311 = vunpack.c.l.b16 %v6231
    %v6312 = vpack.c.b16 %v6281, %v6280
    %v6313 = vpack.c.b16 %v6283, %v6282
    %v6314 = vpack.c.b16 %v6285, %v6284
    %v6315 = vpack.c.b16 %v6287, %v6286
    %v6316 = vpack.c.b16 %v6289, %v6288
    %v6317 = vpack.c.b16 %v6291, %v6290
    %v6318 = vpack.c.b16 %v6293, %v6292
    %v6319 = vpack.c.b16 %v6295, %v6294
    %v6320 = vpack.c.b16 %v6297, %v6296
    %v6321 = vpack.c.b16 %v6299, %v6298
    %v6322 = vpack.c.b16 %v6301, %v6300
    %v6323 = vpack.c.b16 %v6303, %v6302
    %v6324 = vpack.c.b16 %v6305, %v6304
    %v6325 = vpack.c.b16 %v6307, %v6306
    %v6326 = vpack.c.b16 %v6309, %v6308
    %v6327 = vpack.c.b16 %v6311, %v6310
    %6344 = vmatprep.subr.bf16.mxu0 0
    %6345 = vmatpush1.bf16.msra.mxu0 %v6319
    %6346 = vmatprep.subr.bf16.mxu0 0
    %6347 = vmatpush1.bf16.msra.mxu0 %v6318
    %6348 = vmatprep.subr.bf16.mxu0 0
    %6349 = vmatpush1.bf16.msra.mxu0 %v6317
    %6350 = vmatprep.subr.bf16.mxu0 0
    %6351 = vmatpush1.bf16.msra.mxu0 %v6316
    %6352 = vmatprep.subr.bf16.mxu0 0
    %6353 = vmatpush1.bf16.msra.mxu0 %v6315
    %6354 = vmatprep.subr.bf16.mxu0 0
    %6355 = vmatpush1.bf16.msra.mxu0 %v6314
    %6356 = vmatprep.subr.bf16.mxu0 0
    %6357 = vmatpush1.bf16.msra.mxu0 %v6313
    %6358 = vmatprep.subr.bf16.mxu0 0
    %6359 = vmatpush1.bf16.msra.mxu0 %v6312
    %6360 = vmatprep.subr.bf16.mxu0 0
    %6361 = vmatpush2.bf16.msra.mxu0 %v6327
    %6362 = vmatprep.subr.bf16.mxu0 0
    %6363 = vmatpush2.bf16.msra.mxu0 %v6326
    %6364 = vmatprep.subr.bf16.mxu0 0
    %6365 = vmatpush2.bf16.msra.mxu0 %v6325
    %6366 = vmatprep.subr.bf16.mxu0 0
    %6367 = vmatpush2.bf16.msra.mxu0 %v6324
    %6368 = vmatprep.subr.bf16.mxu0 0
    %6369 = vmatpush2.bf16.msra.mxu0 %v6323
    %6370 = vmatprep.subr.bf16.mxu0 0
    %6371 = vmatpush2.bf16.msra.mxu0 %v6322
    %6372 = vmatprep.subr.bf16.mxu0 0
    %6373 = vmatpush2.bf16.msra.mxu0 %v6321
    %6374 = vmatprep.subr.bf16.mxu0 0
    %6375 = vmatpush2.bf16.msra.mxu0 %v6320
    %6376 = vmatprep.mubr.bf16.mxu0 %v6245
    %6377 = vmatmul.mubr.bf16.gmra.mxu0 %v6244
    %v6378 = vpop.f32.mrf.mxu0
    %v6379 = vadd.f32 0.0, %v6378
    %v6380 = vpop.f32.mrf.mxu0
    %v6381 = vpop.f32.mrf.mxu0
    %v6382 = vpop.f32.mrf.mxu0
    %6383 = vdwg.mxu0
    %v6384 = vadd.f32 %v6148, %v6379
    %s6385 = scalar_lea.vmem %s5677, 6
    %v6386 = vld [vmem:[%s6385] ss:$8 sm:$0x3]
    %s6387 = scalar_lea.vmem %s5677, 422
    %v6388 = vld [vmem:[%s6387] ss:$8 sm:$0x3]
    %s6389 = scalar_lea.vmem %s5677, 7
    %v6390 = vld [vmem:[%s6389] ss:$8 sm:$0x3]
    %s6391 = scalar_lea.vmem %s5677, 423
    %v6392 = vld [vmem:[%s6391] ss:$8 sm:$0x3]
    %v6393 = vadd.f32 %v6386, %v6390
    %v6394 = vadd.f32 %v6388, %v6392
    %s6395 = scalar_lea.vmem %s5687, 6
    %v6396 = vld [vmem:[%s6395] ss:$8 sm:$0x3]
    %s6397 = scalar_lea.vmem %s5687, 422
    %v6398 = vld [vmem:[%s6397] ss:$8 sm:$0x3]
    %v6399 = vadd.f32 %v6393, %v6396
    %v6400 = vadd.f32 %v6394, %v6398
    %s6401 = scalar_lea.vmem %s5687, 7
    %v6402 = vld [vmem:[%s6401] ss:$8 sm:$0x3]
    %s6403 = scalar_lea.vmem %s5687, 423
    %v6404 = vld [vmem:[%s6403] ss:$8 sm:$0x3]
    %v6405 = vadd.f32 %v6399, %v6402
    %v6406 = vadd.f32 %v6400, %v6404
    %v6407 = vmul.f32 %v6405, 0.25
    %v6408 = vmul.f32 %v6406, 0.25
    %v6411 = vlaneseq
    %v6412 = vshrl.u32 %v6411, 7
    %v6413 = vsub.s32 0, %v6412
    %v6414 = vrot.slane %v6407, %v6413
    %v6415 = vlaneseq
    %v6416 = vshrl.u32 %v6415, 7
    %v6417 = vsub.s32 1, %v6416
    %v6418 = vrot.slane %v6407, %v6417
    %v6419 = vlaneseq
    %v6420 = vshrl.u32 %v6419, 7
    %v6421 = vsub.s32 0, %v6420
    %v6422 = vrot.slane %v6408, %v6421
    %v6423 = vlaneseq
    %v6424 = vshrl.u32 %v6423, 7
    %v6425 = vsub.s32 1, %v6424
    %v6426 = vrot.slane %v6408, %v6425
    %v6431 = vpack.c.bf16 %v6414, %v6414
    %v6432 = vpack.c.bf16 %v6418, %v6418
    %v6433 = vpack.c.bf16 %v6422, %v6422
    %v6434 = vpack.c.bf16 %v6426, %v6426
    %s6435 = scalar_lea.vmem %s1, 3456
    %v6436 = vld [vmem:[%s6435] sm:$0xf]
    %v6437 = vld [vmem:[%s6435 + $0x4] sm:$0xf]
    %v6438 = vld [vmem:[%s6435 + $0x8] sm:$0xf]
    %v6439 = vld [vmem:[%s6435 + $0xc] sm:$0xf]
    %v6440 = vld [vmem:[%s6435 + $0x10] sm:$0xf]
    %v6441 = vld [vmem:[%s6435 + $0x14] sm:$0xf]
    %v6442 = vld [vmem:[%s6435 + $0x18] sm:$0xf]
    %v6443 = vld [vmem:[%s6435 + $0x1c] sm:$0xf]
    %v6444 = vld [vmem:[%s6435 + $0x20] sm:$0xf]
    %v6445 = vld [vmem:[%s6435 + $0x24] sm:$0xf]
    %v6446 = vld [vmem:[%s6435 + $0x28] sm:$0xf]
    %v6447 = vld [vmem:[%s6435 + $0x2c] sm:$0xf]
    %v6448 = vld [vmem:[%s6435 + $0x30] sm:$0xf]
    %v6449 = vld [vmem:[%s6435 + $0x34] sm:$0xf]
    %v6450 = vld [vmem:[%s6435 + $0x38] sm:$0xf]
    %v6451 = vld [vmem:[%s6435 + $0x3c] sm:$0xf]
    %v6452 = vld [vmem:[%s6435 + $0x40] sm:$0xf]
    %v6453 = vld [vmem:[%s6435 + $0x44] sm:$0xf]
    %v6454 = vld [vmem:[%s6435 + $0x48] sm:$0xf]
    %v6455 = vld [vmem:[%s6435 + $0x4c] sm:$0xf]
    %v6456 = vld [vmem:[%s6435 + $0x50] sm:$0xf]
    %v6457 = vld [vmem:[%s6435 + $0x54] sm:$0xf]
    %v6458 = vld [vmem:[%s6435 + $0x58] sm:$0xf]
    %v6459 = vld [vmem:[%s6435 + $0x5c] sm:$0xf]
    %v6460 = vld [vmem:[%s6435 + $0x60] sm:$0xf]
    %v6461 = vld [vmem:[%s6435 + $0x64] sm:$0xf]
    %v6462 = vld [vmem:[%s6435 + $0x68] sm:$0xf]
    %v6463 = vld [vmem:[%s6435 + $0x6c] sm:$0xf]
    %v6464 = vld [vmem:[%s6435 + $0x70] sm:$0xf]
    %v6465 = vld [vmem:[%s6435 + $0x74] sm:$0xf]
    %v6466 = vld [vmem:[%s6435 + $0x78] sm:$0xf]
    %v6467 = vld [vmem:[%s6435 + $0x7c] sm:$0xf]
    %v6472 = vunpack.c.l.b16 %v6431
    %v6473 = vunpack.c.l.b16 %v6432
    %v6474 = vunpack.c.l.b16 %v6433
    %v6475 = vunpack.c.l.b16 %v6434
    %v6476 = vrot.slane %v6474, 7
    %v6477 = vsel %vm189, %v6476, %v6472
    %v6478 = vrot.slane %v6475, 7
    %v6479 = vsel %vm189, %v6478, %v6473
    %v6480 = vpack.c.b16 %v6477, %v6477
    %v6481 = vpack.c.b16 %v6479, %v6479
    %v6516 = vunpack.c.l.b16 %v6436
    %v6517 = vunpack.c.l.b16 %v6437
    %v6518 = vunpack.c.l.b16 %v6438
    %v6519 = vunpack.c.l.b16 %v6439
    %v6520 = vunpack.c.l.b16 %v6440
    %v6521 = vunpack.c.l.b16 %v6441
    %v6522 = vunpack.c.l.b16 %v6442
    %v6523 = vunpack.c.l.b16 %v6443
    %v6524 = vunpack.c.l.b16 %v6444
    %v6525 = vunpack.c.l.b16 %v6445
    %v6526 = vunpack.c.l.b16 %v6446
    %v6527 = vunpack.c.l.b16 %v6447
    %v6528 = vunpack.c.l.b16 %v6448
    %v6529 = vunpack.c.l.b16 %v6449
    %v6530 = vunpack.c.l.b16 %v6450
    %v6531 = vunpack.c.l.b16 %v6451
    %v6532 = vunpack.c.l.b16 %v6452
    %v6533 = vunpack.c.l.b16 %v6453
    %v6534 = vunpack.c.l.b16 %v6454
    %v6535 = vunpack.c.l.b16 %v6455
    %v6536 = vunpack.c.l.b16 %v6456
    %v6537 = vunpack.c.l.b16 %v6457
    %v6538 = vunpack.c.l.b16 %v6458
    %v6539 = vunpack.c.l.b16 %v6459
    %v6540 = vunpack.c.l.b16 %v6460
    %v6541 = vunpack.c.l.b16 %v6461
    %v6542 = vunpack.c.l.b16 %v6462
    %v6543 = vunpack.c.l.b16 %v6463
    %v6544 = vunpack.c.l.b16 %v6464
    %v6545 = vunpack.c.l.b16 %v6465
    %v6546 = vunpack.c.l.b16 %v6466
    %v6547 = vunpack.c.l.b16 %v6467
    %v6548 = vpack.c.b16 %v6517, %v6516
    %v6549 = vpack.c.b16 %v6519, %v6518
    %v6550 = vpack.c.b16 %v6521, %v6520
    %v6551 = vpack.c.b16 %v6523, %v6522
    %v6552 = vpack.c.b16 %v6525, %v6524
    %v6553 = vpack.c.b16 %v6527, %v6526
    %v6554 = vpack.c.b16 %v6529, %v6528
    %v6555 = vpack.c.b16 %v6531, %v6530
    %v6556 = vpack.c.b16 %v6533, %v6532
    %v6557 = vpack.c.b16 %v6535, %v6534
    %v6558 = vpack.c.b16 %v6537, %v6536
    %v6559 = vpack.c.b16 %v6539, %v6538
    %v6560 = vpack.c.b16 %v6541, %v6540
    %v6561 = vpack.c.b16 %v6543, %v6542
    %v6562 = vpack.c.b16 %v6545, %v6544
    %v6563 = vpack.c.b16 %v6547, %v6546
    %6580 = vmatprep.subr.bf16.mxu0 0
    %6581 = vmatpush1.bf16.msra.mxu0 %v6555
    %6582 = vmatprep.subr.bf16.mxu0 0
    %6583 = vmatpush1.bf16.msra.mxu0 %v6554
    %6584 = vmatprep.subr.bf16.mxu0 0
    %6585 = vmatpush1.bf16.msra.mxu0 %v6553
    %6586 = vmatprep.subr.bf16.mxu0 0
    %6587 = vmatpush1.bf16.msra.mxu0 %v6552
    %6588 = vmatprep.subr.bf16.mxu0 0
    %6589 = vmatpush1.bf16.msra.mxu0 %v6551
    %6590 = vmatprep.subr.bf16.mxu0 0
    %6591 = vmatpush1.bf16.msra.mxu0 %v6550
    %6592 = vmatprep.subr.bf16.mxu0 0
    %6593 = vmatpush1.bf16.msra.mxu0 %v6549
    %6594 = vmatprep.subr.bf16.mxu0 0
    %6595 = vmatpush1.bf16.msra.mxu0 %v6548
    %6596 = vmatprep.subr.bf16.mxu0 0
    %6597 = vmatpush2.bf16.msra.mxu0 %v6563
    %6598 = vmatprep.subr.bf16.mxu0 0
    %6599 = vmatpush2.bf16.msra.mxu0 %v6562
    %6600 = vmatprep.subr.bf16.mxu0 0
    %6601 = vmatpush2.bf16.msra.mxu0 %v6561
    %6602 = vmatprep.subr.bf16.mxu0 0
    %6603 = vmatpush2.bf16.msra.mxu0 %v6560
    %6604 = vmatprep.subr.bf16.mxu0 0
    %6605 = vmatpush2.bf16.msra.mxu0 %v6559
    %6606 = vmatprep.subr.bf16.mxu0 0
    %6607 = vmatpush2.bf16.msra.mxu0 %v6558
    %6608 = vmatprep.subr.bf16.mxu0 0
    %6609 = vmatpush2.bf16.msra.mxu0 %v6557
    %6610 = vmatprep.subr.bf16.mxu0 0
    %6611 = vmatpush2.bf16.msra.mxu0 %v6556
    %6612 = vmatprep.mubr.bf16.mxu0 %v6481
    %6613 = vmatmul.mubr.bf16.gmra.mxu0 %v6480
    %v6614 = vpop.f32.mrf.mxu0
    %v6615 = vadd.f32 0.0, %v6614
    %v6616 = vpop.f32.mrf.mxu0
    %v6617 = vpop.f32.mrf.mxu0
    %v6618 = vpop.f32.mrf.mxu0
    %6619 = vdwg.mxu0
    %v6620 = vadd.f32 %v6384, %v6615
    %s6621 = scalar_lea.vmem %s5677, 16
    %v6622 = vld [vmem:[%s6621] ss:$8 sm:$0x3]
    %s6623 = scalar_lea.vmem %s5677, 432
    %v6624 = vld [vmem:[%s6623] ss:$8 sm:$0x3]
    %s6625 = scalar_lea.vmem %s5677, 17
    %v6626 = vld [vmem:[%s6625] ss:$8 sm:$0x3]
    %s6627 = scalar_lea.vmem %s5677, 433
    %v6628 = vld [vmem:[%s6627] ss:$8 sm:$0x3]
    %v6629 = vadd.f32 %v6622, %v6626
    %v6630 = vadd.f32 %v6624, %v6628
    %s6631 = scalar_lea.vmem %s5687, 16
    %v6632 = vld [vmem:[%s6631] ss:$8 sm:$0x3]
    %s6633 = scalar_lea.vmem %s5687, 432
    %v6634 = vld [vmem:[%s6633] ss:$8 sm:$0x3]
    %v6635 = vadd.f32 %v6629, %v6632
    %v6636 = vadd.f32 %v6630, %v6634
    %s6637 = scalar_lea.vmem %s5687, 17
    %v6638 = vld [vmem:[%s6637] ss:$8 sm:$0x3]
    %s6639 = scalar_lea.vmem %s5687, 433
    %v6640 = vld [vmem:[%s6639] ss:$8 sm:$0x3]
    %v6641 = vadd.f32 %v6635, %v6638
    %v6642 = vadd.f32 %v6636, %v6640
    %v6643 = vmul.f32 %v6641, 0.25
    %v6644 = vmul.f32 %v6642, 0.25
    %v6647 = vlaneseq
    %v6648 = vshrl.u32 %v6647, 7
    %v6649 = vsub.s32 0, %v6648
    %v6650 = vrot.slane %v6643, %v6649
    %v6651 = vlaneseq
    %v6652 = vshrl.u32 %v6651, 7
    %v6653 = vsub.s32 1, %v6652
    %v6654 = vrot.slane %v6643, %v6653
    %v6655 = vlaneseq
    %v6656 = vshrl.u32 %v6655, 7
    %v6657 = vsub.s32 0, %v6656
    %v6658 = vrot.slane %v6644, %v6657
    %v6659 = vlaneseq
    %v6660 = vshrl.u32 %v6659, 7
    %v6661 = vsub.s32 1, %v6660
    %v6662 = vrot.slane %v6644, %v6661
    %v6667 = vpack.c.bf16 %v6650, %v6650
    %v6668 = vpack.c.bf16 %v6654, %v6654
    %v6669 = vpack.c.bf16 %v6658, %v6658
    %v6670 = vpack.c.bf16 %v6662, %v6662
    %s6671 = scalar_lea.vmem %s1, 3584
    %v6672 = vld [vmem:[%s6671] sm:$0xf]
    %v6673 = vld [vmem:[%s6671 + $0x4] sm:$0xf]
    %v6674 = vld [vmem:[%s6671 + $0x8] sm:$0xf]
    %v6675 = vld [vmem:[%s6671 + $0xc] sm:$0xf]
    %v6676 = vld [vmem:[%s6671 + $0x10] sm:$0xf]
    %v6677 = vld [vmem:[%s6671 + $0x14] sm:$0xf]
    %v6678 = vld [vmem:[%s6671 + $0x18] sm:$0xf]
    %v6679 = vld [vmem:[%s6671 + $0x1c] sm:$0xf]
    %v6680 = vld [vmem:[%s6671 + $0x20] sm:$0xf]
    %v6681 = vld [vmem:[%s6671 + $0x24] sm:$0xf]
    %v6682 = vld [vmem:[%s6671 + $0x28] sm:$0xf]
    %v6683 = vld [vmem:[%s6671 + $0x2c] sm:$0xf]
    %v6684 = vld [vmem:[%s6671 + $0x30] sm:$0xf]
    %v6685 = vld [vmem:[%s6671 + $0x34] sm:$0xf]
    %v6686 = vld [vmem:[%s6671 + $0x38] sm:$0xf]
    %v6687 = vld [vmem:[%s6671 + $0x3c] sm:$0xf]
    %v6688 = vld [vmem:[%s6671 + $0x40] sm:$0xf]
    %v6689 = vld [vmem:[%s6671 + $0x44] sm:$0xf]
    %v6690 = vld [vmem:[%s6671 + $0x48] sm:$0xf]
    %v6691 = vld [vmem:[%s6671 + $0x4c] sm:$0xf]
    %v6692 = vld [vmem:[%s6671 + $0x50] sm:$0xf]
    %v6693 = vld [vmem:[%s6671 + $0x54] sm:$0xf]
    %v6694 = vld [vmem:[%s6671 + $0x58] sm:$0xf]
    %v6695 = vld [vmem:[%s6671 + $0x5c] sm:$0xf]
    %v6696 = vld [vmem:[%s6671 + $0x60] sm:$0xf]
    %v6697 = vld [vmem:[%s6671 + $0x64] sm:$0xf]
    %v6698 = vld [vmem:[%s6671 + $0x68] sm:$0xf]
    %v6699 = vld [vmem:[%s6671 + $0x6c] sm:$0xf]
    %v6700 = vld [vmem:[%s6671 + $0x70] sm:$0xf]
    %v6701 = vld [vmem:[%s6671 + $0x74] sm:$0xf]
    %v6702 = vld [vmem:[%s6671 + $0x78] sm:$0xf]
    %v6703 = vld [vmem:[%s6671 + $0x7c] sm:$0xf]
    %v6708 = vunpack.c.l.b16 %v6667
    %v6709 = vunpack.c.l.b16 %v6668
    %v6710 = vunpack.c.l.b16 %v6669
    %v6711 = vunpack.c.l.b16 %v6670
    %v6712 = vrot.slane %v6710, 7
    %v6713 = vsel %vm189, %v6712, %v6708
    %v6714 = vrot.slane %v6711, 7
    %v6715 = vsel %vm189, %v6714, %v6709
    %v6716 = vpack.c.b16 %v6713, %v6713
    %v6717 = vpack.c.b16 %v6715, %v6715
    %v6752 = vunpack.c.l.b16 %v6672
    %v6753 = vunpack.c.l.b16 %v6673
    %v6754 = vunpack.c.l.b16 %v6674
    %v6755 = vunpack.c.l.b16 %v6675
    %v6756 = vunpack.c.l.b16 %v6676
    %v6757 = vunpack.c.l.b16 %v6677
    %v6758 = vunpack.c.l.b16 %v6678
    %v6759 = vunpack.c.l.b16 %v6679
    %v6760 = vunpack.c.l.b16 %v6680
    %v6761 = vunpack.c.l.b16 %v6681
    %v6762 = vunpack.c.l.b16 %v6682
    %v6763 = vunpack.c.l.b16 %v6683
    %v6764 = vunpack.c.l.b16 %v6684
    %v6765 = vunpack.c.l.b16 %v6685
    %v6766 = vunpack.c.l.b16 %v6686
    %v6767 = vunpack.c.l.b16 %v6687
    %v6768 = vunpack.c.l.b16 %v6688
    %v6769 = vunpack.c.l.b16 %v6689
    %v6770 = vunpack.c.l.b16 %v6690
    %v6771 = vunpack.c.l.b16 %v6691
    %v6772 = vunpack.c.l.b16 %v6692
    %v6773 = vunpack.c.l.b16 %v6693
    %v6774 = vunpack.c.l.b16 %v6694
    %v6775 = vunpack.c.l.b16 %v6695
    %v6776 = vunpack.c.l.b16 %v6696
    %v6777 = vunpack.c.l.b16 %v6697
    %v6778 = vunpack.c.l.b16 %v6698
    %v6779 = vunpack.c.l.b16 %v6699
    %v6780 = vunpack.c.l.b16 %v6700
    %v6781 = vunpack.c.l.b16 %v6701
    %v6782 = vunpack.c.l.b16 %v6702
    %v6783 = vunpack.c.l.b16 %v6703
    %v6784 = vpack.c.b16 %v6753, %v6752
    %v6785 = vpack.c.b16 %v6755, %v6754
    %v6786 = vpack.c.b16 %v6757, %v6756
    %v6787 = vpack.c.b16 %v6759, %v6758
    %v6788 = vpack.c.b16 %v6761, %v6760
    %v6789 = vpack.c.b16 %v6763, %v6762
    %v6790 = vpack.c.b16 %v6765, %v6764
    %v6791 = vpack.c.b16 %v6767, %v6766
    %v6792 = vpack.c.b16 %v6769, %v6768
    %v6793 = vpack.c.b16 %v6771, %v6770
    %v6794 = vpack.c.b16 %v6773, %v6772
    %v6795 = vpack.c.b16 %v6775, %v6774
    %v6796 = vpack.c.b16 %v6777, %v6776
    %v6797 = vpack.c.b16 %v6779, %v6778
    %v6798 = vpack.c.b16 %v6781, %v6780
    %v6799 = vpack.c.b16 %v6783, %v6782
    %6816 = vmatprep.subr.bf16.mxu0 0
    %6817 = vmatpush1.bf16.msra.mxu0 %v6791
    %6818 = vmatprep.subr.bf16.mxu0 0
    %6819 = vmatpush1.bf16.msra.mxu0 %v6790
    %6820 = vmatprep.subr.bf16.mxu0 0
    %6821 = vmatpush1.bf16.msra.mxu0 %v6789
    %6822 = vmatprep.subr.bf16.mxu0 0
    %6823 = vmatpush1.bf16.msra.mxu0 %v6788
    %6824 = vmatprep.subr.bf16.mxu0 0
    %6825 = vmatpush1.bf16.msra.mxu0 %v6787
    %6826 = vmatprep.subr.bf16.mxu0 0
    %6827 = vmatpush1.bf16.msra.mxu0 %v6786
    %6828 = vmatprep.subr.bf16.mxu0 0
    %6829 = vmatpush1.bf16.msra.mxu0 %v6785
    %6830 = vmatprep.subr.bf16.mxu0 0
    %6831 = vmatpush1.bf16.msra.mxu0 %v6784
    %6832 = vmatprep.subr.bf16.mxu0 0
    %6833 = vmatpush2.bf16.msra.mxu0 %v6799
    %6834 = vmatprep.subr.bf16.mxu0 0
    %6835 = vmatpush2.bf16.msra.mxu0 %v6798
    %6836 = vmatprep.subr.bf16.mxu0 0
    %6837 = vmatpush2.bf16.msra.mxu0 %v6797
    %6838 = vmatprep.subr.bf16.mxu0 0
    %6839 = vmatpush2.bf16.msra.mxu0 %v6796
    %6840 = vmatprep.subr.bf16.mxu0 0
    %6841 = vmatpush2.bf16.msra.mxu0 %v6795
    %6842 = vmatprep.subr.bf16.mxu0 0
    %6843 = vmatpush2.bf16.msra.mxu0 %v6794
    %6844 = vmatprep.subr.bf16.mxu0 0
    %6845 = vmatpush2.bf16.msra.mxu0 %v6793
    %6846 = vmatprep.subr.bf16.mxu0 0
    %6847 = vmatpush2.bf16.msra.mxu0 %v6792
    %6848 = vmatprep.mubr.bf16.mxu0 %v6717
    %6849 = vmatmul.mubr.bf16.gmra.mxu0 %v6716
    %v6850 = vpop.f32.mrf.mxu0
    %v6851 = vadd.f32 0.0, %v6850
    %v6852 = vpop.f32.mrf.mxu0
    %v6853 = vpop.f32.mrf.mxu0
    %v6854 = vpop.f32.mrf.mxu0
    %6855 = vdwg.mxu0
    %v6856 = vadd.f32 %v6620, %v6851
    %s6857 = scalar_lea.vmem %s5677, 18
    %v6858 = vld [vmem:[%s6857] ss:$8 sm:$0x3]
    %s6859 = scalar_lea.vmem %s5677, 434
    %v6860 = vld [vmem:[%s6859] ss:$8 sm:$0x3]
    %s6861 = scalar_lea.vmem %s5677, 19
    %v6862 = vld [vmem:[%s6861] ss:$8 sm:$0x3]
    %s6863 = scalar_lea.vmem %s5677, 435
    %v6864 = vld [vmem:[%s6863] ss:$8 sm:$0x3]
    %v6865 = vadd.f32 %v6858, %v6862
    %v6866 = vadd.f32 %v6860, %v6864
    %s6867 = scalar_lea.vmem %s5687, 18
    %v6868 = vld [vmem:[%s6867] ss:$8 sm:$0x3]
    %s6869 = scalar_lea.vmem %s5687, 434
    %v6870 = vld [vmem:[%s6869] ss:$8 sm:$0x3]
    %v6871 = vadd.f32 %v6865, %v6868
    %v6872 = vadd.f32 %v6866, %v6870
    %s6873 = scalar_lea.vmem %s5687, 19
    %v6874 = vld [vmem:[%s6873] ss:$8 sm:$0x3]
    %s6875 = scalar_lea.vmem %s5687, 435
    %v6876 = vld [vmem:[%s6875] ss:$8 sm:$0x3]
    %v6877 = vadd.f32 %v6871, %v6874
    %v6878 = vadd.f32 %v6872, %v6876
    %v6879 = vmul.f32 %v6877, 0.25
    %v6880 = vmul.f32 %v6878, 0.25
    %v6883 = vlaneseq
    %v6884 = vshrl.u32 %v6883, 7
    %v6885 = vsub.s32 0, %v6884
    %v6886 = vrot.slane %v6879, %v6885
    %v6887 = vlaneseq
    %v6888 = vshrl.u32 %v6887, 7
    %v6889 = vsub.s32 1, %v6888
    %v6890 = vrot.slane %v6879, %v6889
    %v6891 = vlaneseq
    %v6892 = vshrl.u32 %v6891, 7
    %v6893 = vsub.s32 0, %v6892
    %v6894 = vrot.slane %v6880, %v6893
    %v6895 = vlaneseq
    %v6896 = vshrl.u32 %v6895, 7
    %v6897 = vsub.s32 1, %v6896
    %v6898 = vrot.slane %v6880, %v6897
    %v6903 = vpack.c.bf16 %v6886, %v6886
    %v6904 = vpack.c.bf16 %v6890, %v6890
    %v6905 = vpack.c.bf16 %v6894, %v6894
    %v6906 = vpack.c.bf16 %v6898, %v6898
    %s6907 = scalar_lea.vmem %s1, 3712
    %v6908 = vld [vmem:[%s6907] sm:$0xf]
    %v6909 = vld [vmem:[%s6907 + $0x4] sm:$0xf]
    %v6910 = vld [vmem:[%s6907 + $0x8] sm:$0xf]
    %v6911 = vld [vmem:[%s6907 + $0xc] sm:$0xf]
    %v6912 = vld [vmem:[%s6907 + $0x10] sm:$0xf]
    %v6913 = vld [vmem:[%s6907 + $0x14] sm:$0xf]
    %v6914 = vld [vmem:[%s6907 + $0x18] sm:$0xf]
    %v6915 = vld [vmem:[%s6907 + $0x1c] sm:$0xf]
    %v6916 = vld [vmem:[%s6907 + $0x20] sm:$0xf]
    %v6917 = vld [vmem:[%s6907 + $0x24] sm:$0xf]
    %v6918 = vld [vmem:[%s6907 + $0x28] sm:$0xf]
    %v6919 = vld [vmem:[%s6907 + $0x2c] sm:$0xf]
    %v6920 = vld [vmem:[%s6907 + $0x30] sm:$0xf]
    %v6921 = vld [vmem:[%s6907 + $0x34] sm:$0xf]
    %v6922 = vld [vmem:[%s6907 + $0x38] sm:$0xf]
    %v6923 = vld [vmem:[%s6907 + $0x3c] sm:$0xf]
    %v6924 = vld [vmem:[%s6907 + $0x40] sm:$0xf]
    %v6925 = vld [vmem:[%s6907 + $0x44] sm:$0xf]
    %v6926 = vld [vmem:[%s6907 + $0x48] sm:$0xf]
    %v6927 = vld [vmem:[%s6907 + $0x4c] sm:$0xf]
    %v6928 = vld [vmem:[%s6907 + $0x50] sm:$0xf]
    %v6929 = vld [vmem:[%s6907 + $0x54] sm:$0xf]
    %v6930 = vld [vmem:[%s6907 + $0x58] sm:$0xf]
    %v6931 = vld [vmem:[%s6907 + $0x5c] sm:$0xf]
    %v6932 = vld [vmem:[%s6907 + $0x60] sm:$0xf]
    %v6933 = vld [vmem:[%s6907 + $0x64] sm:$0xf]
    %v6934 = vld [vmem:[%s6907 + $0x68] sm:$0xf]
    %v6935 = vld [vmem:[%s6907 + $0x6c] sm:$0xf]
    %v6936 = vld [vmem:[%s6907 + $0x70] sm:$0xf]
    %v6937 = vld [vmem:[%s6907 + $0x74] sm:$0xf]
    %v6938 = vld [vmem:[%s6907 + $0x78] sm:$0xf]
    %v6939 = vld [vmem:[%s6907 + $0x7c] sm:$0xf]
    %v6944 = vunpack.c.l.b16 %v6903
    %v6945 = vunpack.c.l.b16 %v6904
    %v6946 = vunpack.c.l.b16 %v6905
    %v6947 = vunpack.c.l.b16 %v6906
    %v6948 = vrot.slane %v6946, 7
    %v6949 = vsel %vm189, %v6948, %v6944
    %v6950 = vrot.slane %v6947, 7
    %v6951 = vsel %vm189, %v6950, %v6945
    %v6952 = vpack.c.b16 %v6949, %v6949
    %v6953 = vpack.c.b16 %v6951, %v6951
    %v6988 = vunpack.c.l.b16 %v6908
    %v6989 = vunpack.c.l.b16 %v6909
    %v6990 = vunpack.c.l.b16 %v6910
    %v6991 = vunpack.c.l.b16 %v6911
    %v6992 = vunpack.c.l.b16 %v6912
    %v6993 = vunpack.c.l.b16 %v6913
    %v6994 = vunpack.c.l.b16 %v6914
    %v6995 = vunpack.c.l.b16 %v6915
    %v6996 = vunpack.c.l.b16 %v6916
    %v6997 = vunpack.c.l.b16 %v6917
    %v6998 = vunpack.c.l.b16 %v6918
    %v6999 = vunpack.c.l.b16 %v6919
    %v7000 = vunpack.c.l.b16 %v6920
    %v7001 = vunpack.c.l.b16 %v6921
    %v7002 = vunpack.c.l.b16 %v6922
    %v7003 = vunpack.c.l.b16 %v6923
    %v7004 = vunpack.c.l.b16 %v6924
    %v7005 = vunpack.c.l.b16 %v6925
    %v7006 = vunpack.c.l.b16 %v6926
    %v7007 = vunpack.c.l.b16 %v6927
    %v7008 = vunpack.c.l.b16 %v6928
    %v7009 = vunpack.c.l.b16 %v6929
    %v7010 = vunpack.c.l.b16 %v6930
    %v7011 = vunpack.c.l.b16 %v6931
    %v7012 = vunpack.c.l.b16 %v6932
    %v7013 = vunpack.c.l.b16 %v6933
    %v7014 = vunpack.c.l.b16 %v6934
    %v7015 = vunpack.c.l.b16 %v6935
    %v7016 = vunpack.c.l.b16 %v6936
    %v7017 = vunpack.c.l.b16 %v6937
    %v7018 = vunpack.c.l.b16 %v6938
    %v7019 = vunpack.c.l.b16 %v6939
    %v7020 = vpack.c.b16 %v6989, %v6988
    %v7021 = vpack.c.b16 %v6991, %v6990
    %v7022 = vpack.c.b16 %v6993, %v6992
    %v7023 = vpack.c.b16 %v6995, %v6994
    %v7024 = vpack.c.b16 %v6997, %v6996
    %v7025 = vpack.c.b16 %v6999, %v6998
    %v7026 = vpack.c.b16 %v7001, %v7000
    %v7027 = vpack.c.b16 %v7003, %v7002
    %v7028 = vpack.c.b16 %v7005, %v7004
    %v7029 = vpack.c.b16 %v7007, %v7006
    %v7030 = vpack.c.b16 %v7009, %v7008
    %v7031 = vpack.c.b16 %v7011, %v7010
    %v7032 = vpack.c.b16 %v7013, %v7012
    %v7033 = vpack.c.b16 %v7015, %v7014
    %v7034 = vpack.c.b16 %v7017, %v7016
    %v7035 = vpack.c.b16 %v7019, %v7018
    %7052 = vmatprep.subr.bf16.mxu0 0
    %7053 = vmatpush1.bf16.msra.mxu0 %v7027
    %7054 = vmatprep.subr.bf16.mxu0 0
    %7055 = vmatpush1.bf16.msra.mxu0 %v7026
    %7056 = vmatprep.subr.bf16.mxu0 0
    %7057 = vmatpush1.bf16.msra.mxu0 %v7025
    %7058 = vmatprep.subr.bf16.mxu0 0
    %7059 = vmatpush1.bf16.msra.mxu0 %v7024
    %7060 = vmatprep.subr.bf16.mxu0 0
    %7061 = vmatpush1.bf16.msra.mxu0 %v7023
    %7062 = vmatprep.subr.bf16.mxu0 0
    %7063 = vmatpush1.bf16.msra.mxu0 %v7022
    %7064 = vmatprep.subr.bf16.mxu0 0
    %7065 = vmatpush1.bf16.msra.mxu0 %v7021
    %7066 = vmatprep.subr.bf16.mxu0 0
    %7067 = vmatpush1.bf16.msra.mxu0 %v7020
    %7068 = vmatprep.subr.bf16.mxu0 0
    %7069 = vmatpush2.bf16.msra.mxu0 %v7035
    %7070 = vmatprep.subr.bf16.mxu0 0
    %7071 = vmatpush2.bf16.msra.mxu0 %v7034
    %7072 = vmatprep.subr.bf16.mxu0 0
    %7073 = vmatpush2.bf16.msra.mxu0 %v7033
    %7074 = vmatprep.subr.bf16.mxu0 0
    %7075 = vmatpush2.bf16.msra.mxu0 %v7032
    %7076 = vmatprep.subr.bf16.mxu0 0
    %7077 = vmatpush2.bf16.msra.mxu0 %v7031
    %7078 = vmatprep.subr.bf16.mxu0 0
    %7079 = vmatpush2.bf16.msra.mxu0 %v7030
    %7080 = vmatprep.subr.bf16.mxu0 0
    %7081 = vmatpush2.bf16.msra.mxu0 %v7029
    %7082 = vmatprep.subr.bf16.mxu0 0
    %7083 = vmatpush2.bf16.msra.mxu0 %v7028
    %7084 = vmatprep.mubr.bf16.mxu0 %v6953
    %7085 = vmatmul.mubr.bf16.gmra.mxu0 %v6952
    %v7086 = vpop.f32.mrf.mxu0
    %v7087 = vadd.f32 0.0, %v7086
    %v7088 = vpop.f32.mrf.mxu0
    %v7089 = vpop.f32.mrf.mxu0
    %v7090 = vpop.f32.mrf.mxu0
    %7091 = vdwg.mxu0
    %v7092 = vadd.f32 %v6856, %v7087
    %s7093 = scalar_lea.vmem %s0, 320
    %v7094 = vld [vmem:[%s7093] ss:$8 sm:$0x3]
    %s7095 = scalar_lea.vmem %s7093, 416
    %v7096 = vld [vmem:[%s7095] ss:$8 sm:$0x3]
    %s7097 = scalar_lea.vmem %s7093, 1
    %v7098 = vld [vmem:[%s7097] ss:$8 sm:$0x3]
    %s7099 = scalar_lea.vmem %s7093, 417
    %v7100 = vld [vmem:[%s7099] ss:$8 sm:$0x3]
    %v7101 = vadd.f32 %v7094, %v7098
    %v7102 = vadd.f32 %v7096, %v7100
    %s7103 = scalar_lea.vmem %s0, 352
    %v7104 = vld [vmem:[%s7103] ss:$8 sm:$0x3]
    %s7105 = scalar_lea.vmem %s7103, 416
    %v7106 = vld [vmem:[%s7105] ss:$8 sm:$0x3]
    %v7107 = vadd.f32 %v7101, %v7104
    %v7108 = vadd.f32 %v7102, %v7106
    %s7109 = scalar_lea.vmem %s7103, 1
    %v7110 = vld [vmem:[%s7109] ss:$8 sm:$0x3]
    %s7111 = scalar_lea.vmem %s7103, 417
    %v7112 = vld [vmem:[%s7111] ss:$8 sm:$0x3]
    %v7113 = vadd.f32 %v7107, %v7110
    %v7114 = vadd.f32 %v7108, %v7112
    %v7115 = vmul.f32 %v7113, 0.25
    %v7116 = vmul.f32 %v7114, 0.25
    %v7119 = vlaneseq
    %v7120 = vshrl.u32 %v7119, 7
    %v7121 = vsub.s32 0, %v7120
    %v7122 = vrot.slane %v7115, %v7121
    %v7123 = vlaneseq
    %v7124 = vshrl.u32 %v7123, 7
    %v7125 = vsub.s32 1, %v7124
    %v7126 = vrot.slane %v7115, %v7125
    %v7127 = vlaneseq
    %v7128 = vshrl.u32 %v7127, 7
    %v7129 = vsub.s32 0, %v7128
    %v7130 = vrot.slane %v7116, %v7129
    %v7131 = vlaneseq
    %v7132 = vshrl.u32 %v7131, 7
    %v7133 = vsub.s32 1, %v7132
    %v7134 = vrot.slane %v7116, %v7133
    %v7139 = vpack.c.bf16 %v7122, %v7122
    %v7140 = vpack.c.bf16 %v7126, %v7126
    %v7141 = vpack.c.bf16 %v7130, %v7130
    %v7142 = vpack.c.bf16 %v7134, %v7134
    %s7143 = scalar_lea.vmem %s1, 3840
    %v7144 = vld [vmem:[%s7143] sm:$0xf]
    %v7145 = vld [vmem:[%s7143 + $0x4] sm:$0xf]
    %v7146 = vld [vmem:[%s7143 + $0x8] sm:$0xf]
    %v7147 = vld [vmem:[%s7143 + $0xc] sm:$0xf]
    %v7148 = vld [vmem:[%s7143 + $0x10] sm:$0xf]
    %v7149 = vld [vmem:[%s7143 + $0x14] sm:$0xf]
    %v7150 = vld [vmem:[%s7143 + $0x18] sm:$0xf]
    %v7151 = vld [vmem:[%s7143 + $0x1c] sm:$0xf]
    %v7152 = vld [vmem:[%s7143 + $0x20] sm:$0xf]
    %v7153 = vld [vmem:[%s7143 + $0x24] sm:$0xf]
    %v7154 = vld [vmem:[%s7143 + $0x28] sm:$0xf]
    %v7155 = vld [vmem:[%s7143 + $0x2c] sm:$0xf]
    %v7156 = vld [vmem:[%s7143 + $0x30] sm:$0xf]
    %v7157 = vld [vmem:[%s7143 + $0x34] sm:$0xf]
    %v7158 = vld [vmem:[%s7143 + $0x38] sm:$0xf]
    %v7159 = vld [vmem:[%s7143 + $0x3c] sm:$0xf]
    %v7160 = vld [vmem:[%s7143 + $0x40] sm:$0xf]
    %v7161 = vld [vmem:[%s7143 + $0x44] sm:$0xf]
    %v7162 = vld [vmem:[%s7143 + $0x48] sm:$0xf]
    %v7163 = vld [vmem:[%s7143 + $0x4c] sm:$0xf]
    %v7164 = vld [vmem:[%s7143 + $0x50] sm:$0xf]
    %v7165 = vld [vmem:[%s7143 + $0x54] sm:$0xf]
    %v7166 = vld [vmem:[%s7143 + $0x58] sm:$0xf]
    %v7167 = vld [vmem:[%s7143 + $0x5c] sm:$0xf]
    %v7168 = vld [vmem:[%s7143 + $0x60] sm:$0xf]
    %v7169 = vld [vmem:[%s7143 + $0x64] sm:$0xf]
    %v7170 = vld [vmem:[%s7143 + $0x68] sm:$0xf]
    %v7171 = vld [vmem:[%s7143 + $0x6c] sm:$0xf]
    %v7172 = vld [vmem:[%s7143 + $0x70] sm:$0xf]
    %v7173 = vld [vmem:[%s7143 + $0x74] sm:$0xf]
    %v7174 = vld [vmem:[%s7143 + $0x78] sm:$0xf]
    %v7175 = vld [vmem:[%s7143 + $0x7c] sm:$0xf]
    %v7180 = vunpack.c.l.b16 %v7139
    %v7181 = vunpack.c.l.b16 %v7140
    %v7182 = vunpack.c.l.b16 %v7141
    %v7183 = vunpack.c.l.b16 %v7142
    %v7184 = vrot.slane %v7182, 7
    %v7185 = vsel %vm189, %v7184, %v7180
    %v7186 = vrot.slane %v7183, 7
    %v7187 = vsel %vm189, %v7186, %v7181
    %v7188 = vpack.c.b16 %v7185, %v7185
    %v7189 = vpack.c.b16 %v7187, %v7187
    %v7224 = vunpack.c.l.b16 %v7144
    %v7225 = vunpack.c.l.b16 %v7145
    %v7226 = vunpack.c.l.b16 %v7146
    %v7227 = vunpack.c.l.b16 %v7147
    %v7228 = vunpack.c.l.b16 %v7148
    %v7229 = vunpack.c.l.b16 %v7149
    %v7230 = vunpack.c.l.b16 %v7150
    %v7231 = vunpack.c.l.b16 %v7151
    %v7232 = vunpack.c.l.b16 %v7152
    %v7233 = vunpack.c.l.b16 %v7153
    %v7234 = vunpack.c.l.b16 %v7154
    %v7235 = vunpack.c.l.b16 %v7155
    %v7236 = vunpack.c.l.b16 %v7156
    %v7237 = vunpack.c.l.b16 %v7157
    %v7238 = vunpack.c.l.b16 %v7158
    %v7239 = vunpack.c.l.b16 %v7159
    %v7240 = vunpack.c.l.b16 %v7160
    %v7241 = vunpack.c.l.b16 %v7161
    %v7242 = vunpack.c.l.b16 %v7162
    %v7243 = vunpack.c.l.b16 %v7163
    %v7244 = vunpack.c.l.b16 %v7164
    %v7245 = vunpack.c.l.b16 %v7165
    %v7246 = vunpack.c.l.b16 %v7166
    %v7247 = vunpack.c.l.b16 %v7167
    %v7248 = vunpack.c.l.b16 %v7168
    %v7249 = vunpack.c.l.b16 %v7169
    %v7250 = vunpack.c.l.b16 %v7170
    %v7251 = vunpack.c.l.b16 %v7171
    %v7252 = vunpack.c.l.b16 %v7172
    %v7253 = vunpack.c.l.b16 %v7173
    %v7254 = vunpack.c.l.b16 %v7174
    %v7255 = vunpack.c.l.b16 %v7175
    %v7256 = vpack.c.b16 %v7225, %v7224
    %v7257 = vpack.c.b16 %v7227, %v7226
    %v7258 = vpack.c.b16 %v7229, %v7228
    %v7259 = vpack.c.b16 %v7231, %v7230
    %v7260 = vpack.c.b16 %v7233, %v7232
    %v7261 = vpack.c.b16 %v7235, %v7234
    %v7262 = vpack.c.b16 %v7237, %v7236
    %v7263 = vpack.c.b16 %v7239, %v7238
    %v7264 = vpack.c.b16 %v7241, %v7240
    %v7265 = vpack.c.b16 %v7243, %v7242
    %v7266 = vpack.c.b16 %v7245, %v7244
    %v7267 = vpack.c.b16 %v7247, %v7246
    %v7268 = vpack.c.b16 %v7249, %v7248
    %v7269 = vpack.c.b16 %v7251, %v7250
    %v7270 = vpack.c.b16 %v7253, %v7252
    %v7271 = vpack.c.b16 %v7255, %v7254
    %7288 = vmatprep.subr.bf16.mxu0 0
    %7289 = vmatpush1.bf16.msra.mxu0 %v7263
    %7290 = vmatprep.subr.bf16.mxu0 0
    %7291 = vmatpush1.bf16.msra.mxu0 %v7262
    %7292 = vmatprep.subr.bf16.mxu0 0
    %7293 = vmatpush1.bf16.msra.mxu0 %v7261
    %7294 = vmatprep.subr.bf16.mxu0 0
    %7295 = vmatpush1.bf16.msra.mxu0 %v7260
    %7296 = vmatprep.subr.bf16.mxu0 0
    %7297 = vmatpush1.bf16.msra.mxu0 %v7259
    %7298 = vmatprep.subr.bf16.mxu0 0
    %7299 = vmatpush1.bf16.msra.mxu0 %v7258
    %7300 = vmatprep.subr.bf16.mxu0 0
    %7301 = vmatpush1.bf16.msra.mxu0 %v7257
    %7302 = vmatprep.subr.bf16.mxu0 0
    %7303 = vmatpush1.bf16.msra.mxu0 %v7256
    %7304 = vmatprep.subr.bf16.mxu0 0
    %7305 = vmatpush2.bf16.msra.mxu0 %v7271
    %7306 = vmatprep.subr.bf16.mxu0 0
    %7307 = vmatpush2.bf16.msra.mxu0 %v7270
    %7308 = vmatprep.subr.bf16.mxu0 0
    %7309 = vmatpush2.bf16.msra.mxu0 %v7269
    %7310 = vmatprep.subr.bf16.mxu0 0
    %7311 = vmatpush2.bf16.msra.mxu0 %v7268
    %7312 = vmatprep.subr.bf16.mxu0 0
    %7313 = vmatpush2.bf16.msra.mxu0 %v7267
    %7314 = vmatprep.subr.bf16.mxu0 0
    %7315 = vmatpush2.bf16.msra.mxu0 %v7266
    %7316 = vmatprep.subr.bf16.mxu0 0
    %7317 = vmatpush2.bf16.msra.mxu0 %v7265
    %7318 = vmatprep.subr.bf16.mxu0 0
    %7319 = vmatpush2.bf16.msra.mxu0 %v7264
    %7320 = vmatprep.mubr.bf16.mxu0 %v7189
    %7321 = vmatmul.mubr.bf16.gmra.mxu0 %v7188
    %v7322 = vpop.f32.mrf.mxu0
    %v7323 = vadd.f32 0.0, %v7322
    %v7324 = vpop.f32.mrf.mxu0
    %v7325 = vpop.f32.mrf.mxu0
    %v7326 = vpop.f32.mrf.mxu0
    %7327 = vdwg.mxu0
    %v7328 = vadd.f32 %v7092, %v7323
    %s7329 = scalar_lea.vmem %s7093, 2
    %v7330 = vld [vmem:[%s7329] ss:$8 sm:$0x3]
    %s7331 = scalar_lea.vmem %s7093, 418
    %v7332 = vld [vmem:[%s7331] ss:$8 sm:$0x3]
    %s7333 = scalar_lea.vmem %s7093, 3
    %v7334 = vld [vmem:[%s7333] ss:$8 sm:$0x3]
    %s7335 = scalar_lea.vmem %s7093, 419
    %v7336 = vld [vmem:[%s7335] ss:$8 sm:$0x3]
    %v7337 = vadd.f32 %v7330, %v7334
    %v7338 = vadd.f32 %v7332, %v7336
    %s7339 = scalar_lea.vmem %s7103, 2
    %v7340 = vld [vmem:[%s7339] ss:$8 sm:$0x3]
    %s7341 = scalar_lea.vmem %s7103, 418
    %v7342 = vld [vmem:[%s7341] ss:$8 sm:$0x3]
    %v7343 = vadd.f32 %v7337, %v7340
    %v7344 = vadd.f32 %v7338, %v7342
    %s7345 = scalar_lea.vmem %s7103, 3
    %v7346 = vld [vmem:[%s7345] ss:$8 sm:$0x3]
    %s7347 = scalar_lea.vmem %s7103, 419
    %v7348 = vld [vmem:[%s7347] ss:$8 sm:$0x3]
    %v7349 = vadd.f32 %v7343, %v7346
    %v7350 = vadd.f32 %v7344, %v7348
    %v7351 = vmul.f32 %v7349, 0.25
    %v7352 = vmul.f32 %v7350, 0.25
    %v7355 = vlaneseq
    %v7356 = vshrl.u32 %v7355, 7
    %v7357 = vsub.s32 0, %v7356
    %v7358 = vrot.slane %v7351, %v7357
    %v7359 = vlaneseq
    %v7360 = vshrl.u32 %v7359, 7
    %v7361 = vsub.s32 1, %v7360
    %v7362 = vrot.slane %v7351, %v7361
    %v7363 = vlaneseq
    %v7364 = vshrl.u32 %v7363, 7
    %v7365 = vsub.s32 0, %v7364
    %v7366 = vrot.slane %v7352, %v7365
    %v7367 = vlaneseq
    %v7368 = vshrl.u32 %v7367, 7
    %v7369 = vsub.s32 1, %v7368
    %v7370 = vrot.slane %v7352, %v7369
    %v7375 = vpack.c.bf16 %v7358, %v7358
    %v7376 = vpack.c.bf16 %v7362, %v7362
    %v7377 = vpack.c.bf16 %v7366, %v7366
    %v7378 = vpack.c.bf16 %v7370, %v7370
    %s7379 = scalar_lea.vmem %s1, 3968
    %v7380 = vld [vmem:[%s7379] sm:$0xf]
    %v7381 = vld [vmem:[%s7379 + $0x4] sm:$0xf]
    %v7382 = vld [vmem:[%s7379 + $0x8] sm:$0xf]
    %v7383 = vld [vmem:[%s7379 + $0xc] sm:$0xf]
    %v7384 = vld [vmem:[%s7379 + $0x10] sm:$0xf]
    %v7385 = vld [vmem:[%s7379 + $0x14] sm:$0xf]
    %v7386 = vld [vmem:[%s7379 + $0x18] sm:$0xf]
    %v7387 = vld [vmem:[%s7379 + $0x1c] sm:$0xf]
    %v7388 = vld [vmem:[%s7379 + $0x20] sm:$0xf]
    %v7389 = vld [vmem:[%s7379 + $0x24] sm:$0xf]
    %v7390 = vld [vmem:[%s7379 + $0x28] sm:$0xf]
    %v7391 = vld [vmem:[%s7379 + $0x2c] sm:$0xf]
    %v7392 = vld [vmem:[%s7379 + $0x30] sm:$0xf]
    %v7393 = vld [vmem:[%s7379 + $0x34] sm:$0xf]
    %v7394 = vld [vmem:[%s7379 + $0x38] sm:$0xf]
    %v7395 = vld [vmem:[%s7379 + $0x3c] sm:$0xf]
    %v7396 = vld [vmem:[%s7379 + $0x40] sm:$0xf]
    %v7397 = vld [vmem:[%s7379 + $0x44] sm:$0xf]
    %v7398 = vld [vmem:[%s7379 + $0x48] sm:$0xf]
    %v7399 = vld [vmem:[%s7379 + $0x4c] sm:$0xf]
    %v7400 = vld [vmem:[%s7379 + $0x50] sm:$0xf]
    %v7401 = vld [vmem:[%s7379 + $0x54] sm:$0xf]
    %v7402 = vld [vmem:[%s7379 + $0x58] sm:$0xf]
    %v7403 = vld [vmem:[%s7379 + $0x5c] sm:$0xf]
    %v7404 = vld [vmem:[%s7379 + $0x60] sm:$0xf]
    %v7405 = vld [vmem:[%s7379 + $0x64] sm:$0xf]
    %v7406 = vld [vmem:[%s7379 + $0x68] sm:$0xf]
    %v7407 = vld [vmem:[%s7379 + $0x6c] sm:$0xf]
    %v7408 = vld [vmem:[%s7379 + $0x70] sm:$0xf]
    %v7409 = vld [vmem:[%s7379 + $0x74] sm:$0xf]
    %v7410 = vld [vmem:[%s7379 + $0x78] sm:$0xf]
    %v7411 = vld [vmem:[%s7379 + $0x7c] sm:$0xf]
    %v7416 = vunpack.c.l.b16 %v7375
    %v7417 = vunpack.c.l.b16 %v7376
    %v7418 = vunpack.c.l.b16 %v7377
    %v7419 = vunpack.c.l.b16 %v7378
    %v7420 = vrot.slane %v7418, 7
    %v7421 = vsel %vm189, %v7420, %v7416
    %v7422 = vrot.slane %v7419, 7
    %v7423 = vsel %vm189, %v7422, %v7417
    %v7424 = vpack.c.b16 %v7421, %v7421
    %v7425 = vpack.c.b16 %v7423, %v7423
    %v7460 = vunpack.c.l.b16 %v7380
    %v7461 = vunpack.c.l.b16 %v7381
    %v7462 = vunpack.c.l.b16 %v7382
    %v7463 = vunpack.c.l.b16 %v7383
    %v7464 = vunpack.c.l.b16 %v7384
    %v7465 = vunpack.c.l.b16 %v7385
    %v7466 = vunpack.c.l.b16 %v7386
    %v7467 = vunpack.c.l.b16 %v7387
    %v7468 = vunpack.c.l.b16 %v7388
    %v7469 = vunpack.c.l.b16 %v7389
    %v7470 = vunpack.c.l.b16 %v7390
    %v7471 = vunpack.c.l.b16 %v7391
    %v7472 = vunpack.c.l.b16 %v7392
    %v7473 = vunpack.c.l.b16 %v7393
    %v7474 = vunpack.c.l.b16 %v7394
    %v7475 = vunpack.c.l.b16 %v7395
    %v7476 = vunpack.c.l.b16 %v7396
    %v7477 = vunpack.c.l.b16 %v7397
    %v7478 = vunpack.c.l.b16 %v7398
    %v7479 = vunpack.c.l.b16 %v7399
    %v7480 = vunpack.c.l.b16 %v7400
    %v7481 = vunpack.c.l.b16 %v7401
    %v7482 = vunpack.c.l.b16 %v7402
    %v7483 = vunpack.c.l.b16 %v7403
    %v7484 = vunpack.c.l.b16 %v7404
    %v7485 = vunpack.c.l.b16 %v7405
    %v7486 = vunpack.c.l.b16 %v7406
    %v7487 = vunpack.c.l.b16 %v7407
    %v7488 = vunpack.c.l.b16 %v7408
    %v7489 = vunpack.c.l.b16 %v7409
    %v7490 = vunpack.c.l.b16 %v7410
    %v7491 = vunpack.c.l.b16 %v7411
    %v7492 = vpack.c.b16 %v7461, %v7460
    %v7493 = vpack.c.b16 %v7463, %v7462
    %v7494 = vpack.c.b16 %v7465, %v7464
    %v7495 = vpack.c.b16 %v7467, %v7466
    %v7496 = vpack.c.b16 %v7469, %v7468
    %v7497 = vpack.c.b16 %v7471, %v7470
    %v7498 = vpack.c.b16 %v7473, %v7472
    %v7499 = vpack.c.b16 %v7475, %v7474
    %v7500 = vpack.c.b16 %v7477, %v7476
    %v7501 = vpack.c.b16 %v7479, %v7478
    %v7502 = vpack.c.b16 %v7481, %v7480
    %v7503 = vpack.c.b16 %v7483, %v7482
    %v7504 = vpack.c.b16 %v7485, %v7484
    %v7505 = vpack.c.b16 %v7487, %v7486
    %v7506 = vpack.c.b16 %v7489, %v7488
    %v7507 = vpack.c.b16 %v7491, %v7490
    %7524 = vmatprep.subr.bf16.mxu0 0
    %7525 = vmatpush1.bf16.msra.mxu0 %v7499
    %7526 = vmatprep.subr.bf16.mxu0 0
    %7527 = vmatpush1.bf16.msra.mxu0 %v7498
    %7528 = vmatprep.subr.bf16.mxu0 0
    %7529 = vmatpush1.bf16.msra.mxu0 %v7497
    %7530 = vmatprep.subr.bf16.mxu0 0
    %7531 = vmatpush1.bf16.msra.mxu0 %v7496
    %7532 = vmatprep.subr.bf16.mxu0 0
    %7533 = vmatpush1.bf16.msra.mxu0 %v7495
    %7534 = vmatprep.subr.bf16.mxu0 0
    %7535 = vmatpush1.bf16.msra.mxu0 %v7494
    %7536 = vmatprep.subr.bf16.mxu0 0
    %7537 = vmatpush1.bf16.msra.mxu0 %v7493
    %7538 = vmatprep.subr.bf16.mxu0 0
    %7539 = vmatpush1.bf16.msra.mxu0 %v7492
    %7540 = vmatprep.subr.bf16.mxu0 0
    %7541 = vmatpush2.bf16.msra.mxu0 %v7507
    %7542 = vmatprep.subr.bf16.mxu0 0
    %7543 = vmatpush2.bf16.msra.mxu0 %v7506
    %7544 = vmatprep.subr.bf16.mxu0 0
    %7545 = vmatpush2.bf16.msra.mxu0 %v7505
    %7546 = vmatprep.subr.bf16.mxu0 0
    %7547 = vmatpush2.bf16.msra.mxu0 %v7504
    %7548 = vmatprep.subr.bf16.mxu0 0
    %7549 = vmatpush2.bf16.msra.mxu0 %v7503
    %7550 = vmatprep.subr.bf16.mxu0 0
    %7551 = vmatpush2.bf16.msra.mxu0 %v7502
    %7552 = vmatprep.subr.bf16.mxu0 0
    %7553 = vmatpush2.bf16.msra.mxu0 %v7501
    %7554 = vmatprep.subr.bf16.mxu0 0
    %7555 = vmatpush2.bf16.msra.mxu0 %v7500
    %7556 = vmatprep.mubr.bf16.mxu0 %v7425
    %7557 = vmatmul.mubr.bf16.gmra.mxu0 %v7424
    %v7558 = vpop.f32.mrf.mxu0
    %v7559 = vadd.f32 0.0, %v7558
    %v7560 = vpop.f32.mrf.mxu0
    %v7561 = vpop.f32.mrf.mxu0
    %v7562 = vpop.f32.mrf.mxu0
    %7563 = vdwg.mxu0
    %v7564 = vadd.f32 %v7328, %v7559
    %s7565 = scalar_lea.vmem %s7093, 4
    %v7566 = vld [vmem:[%s7565] ss:$8 sm:$0x3]
    %s7567 = scalar_lea.vmem %s7093, 420
    %v7568 = vld [vmem:[%s7567] ss:$8 sm:$0x3]
    %s7569 = scalar_lea.vmem %s7093, 5
    %v7570 = vld [vmem:[%s7569] ss:$8 sm:$0x3]
    %s7571 = scalar_lea.vmem %s7093, 421
    %v7572 = vld [vmem:[%s7571] ss:$8 sm:$0x3]
    %v7573 = vadd.f32 %v7566, %v7570
    %v7574 = vadd.f32 %v7568, %v7572
    %s7575 = scalar_lea.vmem %s7103, 4
    %v7576 = vld [vmem:[%s7575] ss:$8 sm:$0x3]
    %s7577 = scalar_lea.vmem %s7103, 420
    %v7578 = vld [vmem:[%s7577] ss:$8 sm:$0x3]
    %v7579 = vadd.f32 %v7573, %v7576
    %v7580 = vadd.f32 %v7574, %v7578
    %s7581 = scalar_lea.vmem %s7103, 5
    %v7582 = vld [vmem:[%s7581] ss:$8 sm:$0x3]
    %s7583 = scalar_lea.vmem %s7103, 421
    %v7584 = vld [vmem:[%s7583] ss:$8 sm:$0x3]
    %v7585 = vadd.f32 %v7579, %v7582
    %v7586 = vadd.f32 %v7580, %v7584
    %v7587 = vmul.f32 %v7585, 0.25
    %v7588 = vmul.f32 %v7586, 0.25
    %v7591 = vlaneseq
    %v7592 = vshrl.u32 %v7591, 7
    %v7593 = vsub.s32 0, %v7592
    %v7594 = vrot.slane %v7587, %v7593
    %v7595 = vlaneseq
    %v7596 = vshrl.u32 %v7595, 7
    %v7597 = vsub.s32 1, %v7596
    %v7598 = vrot.slane %v7587, %v7597
    %v7599 = vlaneseq
    %v7600 = vshrl.u32 %v7599, 7
    %v7601 = vsub.s32 0, %v7600
    %v7602 = vrot.slane %v7588, %v7601
    %v7603 = vlaneseq
    %v7604 = vshrl.u32 %v7603, 7
    %v7605 = vsub.s32 1, %v7604
    %v7606 = vrot.slane %v7588, %v7605
    %v7611 = vpack.c.bf16 %v7594, %v7594
    %v7612 = vpack.c.bf16 %v7598, %v7598
    %v7613 = vpack.c.bf16 %v7602, %v7602
    %v7614 = vpack.c.bf16 %v7606, %v7606
    %s7615 = scalar_lea.vmem %s1, 4096
    %v7616 = vld [vmem:[%s7615] sm:$0xf]
    %v7617 = vld [vmem:[%s7615 + $0x4] sm:$0xf]
    %v7618 = vld [vmem:[%s7615 + $0x8] sm:$0xf]
    %v7619 = vld [vmem:[%s7615 + $0xc] sm:$0xf]
    %v7620 = vld [vmem:[%s7615 + $0x10] sm:$0xf]
    %v7621 = vld [vmem:[%s7615 + $0x14] sm:$0xf]
    %v7622 = vld [vmem:[%s7615 + $0x18] sm:$0xf]
    %v7623 = vld [vmem:[%s7615 + $0x1c] sm:$0xf]
    %v7624 = vld [vmem:[%s7615 + $0x20] sm:$0xf]
    %v7625 = vld [vmem:[%s7615 + $0x24] sm:$0xf]
    %v7626 = vld [vmem:[%s7615 + $0x28] sm:$0xf]
    %v7627 = vld [vmem:[%s7615 + $0x2c] sm:$0xf]
    %v7628 = vld [vmem:[%s7615 + $0x30] sm:$0xf]
    %v7629 = vld [vmem:[%s7615 + $0x34] sm:$0xf]
    %v7630 = vld [vmem:[%s7615 + $0x38] sm:$0xf]
    %v7631 = vld [vmem:[%s7615 + $0x3c] sm:$0xf]
    %v7632 = vld [vmem:[%s7615 + $0x40] sm:$0xf]
    %v7633 = vld [vmem:[%s7615 + $0x44] sm:$0xf]
    %v7634 = vld [vmem:[%s7615 + $0x48] sm:$0xf]
    %v7635 = vld [vmem:[%s7615 + $0x4c] sm:$0xf]
    %v7636 = vld [vmem:[%s7615 + $0x50] sm:$0xf]
    %v7637 = vld [vmem:[%s7615 + $0x54] sm:$0xf]
    %v7638 = vld [vmem:[%s7615 + $0x58] sm:$0xf]
    %v7639 = vld [vmem:[%s7615 + $0x5c] sm:$0xf]
    %v7640 = vld [vmem:[%s7615 + $0x60] sm:$0xf]
    %v7641 = vld [vmem:[%s7615 + $0x64] sm:$0xf]
    %v7642 = vld [vmem:[%s7615 + $0x68] sm:$0xf]
    %v7643 = vld [vmem:[%s7615 + $0x6c] sm:$0xf]
    %v7644 = vld [vmem:[%s7615 + $0x70] sm:$0xf]
    %v7645 = vld [vmem:[%s7615 + $0x74] sm:$0xf]
    %v7646 = vld [vmem:[%s7615 + $0x78] sm:$0xf]
    %v7647 = vld [vmem:[%s7615 + $0x7c] sm:$0xf]
    %v7652 = vunpack.c.l.b16 %v7611
    %v7653 = vunpack.c.l.b16 %v7612
    %v7654 = vunpack.c.l.b16 %v7613
    %v7655 = vunpack.c.l.b16 %v7614
    %v7656 = vrot.slane %v7654, 7
    %v7657 = vsel %vm189, %v7656, %v7652
    %v7658 = vrot.slane %v7655, 7
    %v7659 = vsel %vm189, %v7658, %v7653
    %v7660 = vpack.c.b16 %v7657, %v7657
    %v7661 = vpack.c.b16 %v7659, %v7659
    %v7696 = vunpack.c.l.b16 %v7616
    %v7697 = vunpack.c.l.b16 %v7617
    %v7698 = vunpack.c.l.b16 %v7618
    %v7699 = vunpack.c.l.b16 %v7619
    %v7700 = vunpack.c.l.b16 %v7620
    %v7701 = vunpack.c.l.b16 %v7621
    %v7702 = vunpack.c.l.b16 %v7622
    %v7703 = vunpack.c.l.b16 %v7623
    %v7704 = vunpack.c.l.b16 %v7624
    %v7705 = vunpack.c.l.b16 %v7625
    %v7706 = vunpack.c.l.b16 %v7626
    %v7707 = vunpack.c.l.b16 %v7627
    %v7708 = vunpack.c.l.b16 %v7628
    %v7709 = vunpack.c.l.b16 %v7629
    %v7710 = vunpack.c.l.b16 %v7630
    %v7711 = vunpack.c.l.b16 %v7631
    %v7712 = vunpack.c.l.b16 %v7632
    %v7713 = vunpack.c.l.b16 %v7633
    %v7714 = vunpack.c.l.b16 %v7634
    %v7715 = vunpack.c.l.b16 %v7635
    %v7716 = vunpack.c.l.b16 %v7636
    %v7717 = vunpack.c.l.b16 %v7637
    %v7718 = vunpack.c.l.b16 %v7638
    %v7719 = vunpack.c.l.b16 %v7639
    %v7720 = vunpack.c.l.b16 %v7640
    %v7721 = vunpack.c.l.b16 %v7641
    %v7722 = vunpack.c.l.b16 %v7642
    %v7723 = vunpack.c.l.b16 %v7643
    %v7724 = vunpack.c.l.b16 %v7644
    %v7725 = vunpack.c.l.b16 %v7645
    %v7726 = vunpack.c.l.b16 %v7646
    %v7727 = vunpack.c.l.b16 %v7647
    %v7728 = vpack.c.b16 %v7697, %v7696
    %v7729 = vpack.c.b16 %v7699, %v7698
    %v7730 = vpack.c.b16 %v7701, %v7700
    %v7731 = vpack.c.b16 %v7703, %v7702
    %v7732 = vpack.c.b16 %v7705, %v7704
    %v7733 = vpack.c.b16 %v7707, %v7706
    %v7734 = vpack.c.b16 %v7709, %v7708
    %v7735 = vpack.c.b16 %v7711, %v7710
    %v7736 = vpack.c.b16 %v7713, %v7712
    %v7737 = vpack.c.b16 %v7715, %v7714
    %v7738 = vpack.c.b16 %v7717, %v7716
    %v7739 = vpack.c.b16 %v7719, %v7718
    %v7740 = vpack.c.b16 %v7721, %v7720
    %v7741 = vpack.c.b16 %v7723, %v7722
    %v7742 = vpack.c.b16 %v7725, %v7724
    %v7743 = vpack.c.b16 %v7727, %v7726
    %7760 = vmatprep.subr.bf16.mxu0 0
    %7761 = vmatpush1.bf16.msra.mxu0 %v7735
    %7762 = vmatprep.subr.bf16.mxu0 0
    %7763 = vmatpush1.bf16.msra.mxu0 %v7734
    %7764 = vmatprep.subr.bf16.mxu0 0
    %7765 = vmatpush1.bf16.msra.mxu0 %v7733
    %7766 = vmatprep.subr.bf16.mxu0 0
    %7767 = vmatpush1.bf16.msra.mxu0 %v7732
    %7768 = vmatprep.subr.bf16.mxu0 0
    %7769 = vmatpush1.bf16.msra.mxu0 %v7731
    %7770 = vmatprep.subr.bf16.mxu0 0
    %7771 = vmatpush1.bf16.msra.mxu0 %v7730
    %7772 = vmatprep.subr.bf16.mxu0 0
    %7773 = vmatpush1.bf16.msra.mxu0 %v7729
    %7774 = vmatprep.subr.bf16.mxu0 0
    %7775 = vmatpush1.bf16.msra.mxu0 %v7728
    %7776 = vmatprep.subr.bf16.mxu0 0
    %7777 = vmatpush2.bf16.msra.mxu0 %v7743
    %7778 = vmatprep.subr.bf16.mxu0 0
    %7779 = vmatpush2.bf16.msra.mxu0 %v7742
    %7780 = vmatprep.subr.bf16.mxu0 0
    %7781 = vmatpush2.bf16.msra.mxu0 %v7741
    %7782 = vmatprep.subr.bf16.mxu0 0
    %7783 = vmatpush2.bf16.msra.mxu0 %v7740
    %7784 = vmatprep.subr.bf16.mxu0 0
    %7785 = vmatpush2.bf16.msra.mxu0 %v7739
    %7786 = vmatprep.subr.bf16.mxu0 0
    %7787 = vmatpush2.bf16.msra.mxu0 %v7738
    %7788 = vmatprep.subr.bf16.mxu0 0
    %7789 = vmatpush2.bf16.msra.mxu0 %v7737
    %7790 = vmatprep.subr.bf16.mxu0 0
    %7791 = vmatpush2.bf16.msra.mxu0 %v7736
    %7792 = vmatprep.mubr.bf16.mxu0 %v7661
    %7793 = vmatmul.mubr.bf16.gmra.mxu0 %v7660
    %v7794 = vpop.f32.mrf.mxu0
    %v7795 = vadd.f32 0.0, %v7794
    %v7796 = vpop.f32.mrf.mxu0
    %v7797 = vpop.f32.mrf.mxu0
    %v7798 = vpop.f32.mrf.mxu0
    %7799 = vdwg.mxu0
    %v7800 = vadd.f32 %v7564, %v7795
    %s7801 = scalar_lea.vmem %s7093, 6
    %v7802 = vld [vmem:[%s7801] ss:$8 sm:$0x3]
    %s7803 = scalar_lea.vmem %s7093, 422
    %v7804 = vld [vmem:[%s7803] ss:$8 sm:$0x3]
    %s7805 = scalar_lea.vmem %s7093, 7
    %v7806 = vld [vmem:[%s7805] ss:$8 sm:$0x3]
    %s7807 = scalar_lea.vmem %s7093, 423
    %v7808 = vld [vmem:[%s7807] ss:$8 sm:$0x3]
    %v7809 = vadd.f32 %v7802, %v7806
    %v7810 = vadd.f32 %v7804, %v7808
    %s7811 = scalar_lea.vmem %s7103, 6
    %v7812 = vld [vmem:[%s7811] ss:$8 sm:$0x3]
    %s7813 = scalar_lea.vmem %s7103, 422
    %v7814 = vld [vmem:[%s7813] ss:$8 sm:$0x3]
    %v7815 = vadd.f32 %v7809, %v7812
    %v7816 = vadd.f32 %v7810, %v7814
    %s7817 = scalar_lea.vmem %s7103, 7
    %v7818 = vld [vmem:[%s7817] ss:$8 sm:$0x3]
    %s7819 = scalar_lea.vmem %s7103, 423
    %v7820 = vld [vmem:[%s7819] ss:$8 sm:$0x3]
    %v7821 = vadd.f32 %v7815, %v7818
    %v7822 = vadd.f32 %v7816, %v7820
    %v7823 = vmul.f32 %v7821, 0.25
    %v7824 = vmul.f32 %v7822, 0.25
    %v7827 = vlaneseq
    %v7828 = vshrl.u32 %v7827, 7
    %v7829 = vsub.s32 0, %v7828
    %v7830 = vrot.slane %v7823, %v7829
    %v7831 = vlaneseq
    %v7832 = vshrl.u32 %v7831, 7
    %v7833 = vsub.s32 1, %v7832
    %v7834 = vrot.slane %v7823, %v7833
    %v7835 = vlaneseq
    %v7836 = vshrl.u32 %v7835, 7
    %v7837 = vsub.s32 0, %v7836
    %v7838 = vrot.slane %v7824, %v7837
    %v7839 = vlaneseq
    %v7840 = vshrl.u32 %v7839, 7
    %v7841 = vsub.s32 1, %v7840
    %v7842 = vrot.slane %v7824, %v7841
    %v7847 = vpack.c.bf16 %v7830, %v7830
    %v7848 = vpack.c.bf16 %v7834, %v7834
    %v7849 = vpack.c.bf16 %v7838, %v7838
    %v7850 = vpack.c.bf16 %v7842, %v7842
    %s7851 = scalar_lea.vmem %s1, 4224
    %v7852 = vld [vmem:[%s7851] sm:$0xf]
    %v7853 = vld [vmem:[%s7851 + $0x4] sm:$0xf]
    %v7854 = vld [vmem:[%s7851 + $0x8] sm:$0xf]
    %v7855 = vld [vmem:[%s7851 + $0xc] sm:$0xf]
    %v7856 = vld [vmem:[%s7851 + $0x10] sm:$0xf]
    %v7857 = vld [vmem:[%s7851 + $0x14] sm:$0xf]
    %v7858 = vld [vmem:[%s7851 + $0x18] sm:$0xf]
    %v7859 = vld [vmem:[%s7851 + $0x1c] sm:$0xf]
    %v7860 = vld [vmem:[%s7851 + $0x20] sm:$0xf]
    %v7861 = vld [vmem:[%s7851 + $0x24] sm:$0xf]
    %v7862 = vld [vmem:[%s7851 + $0x28] sm:$0xf]
    %v7863 = vld [vmem:[%s7851 + $0x2c] sm:$0xf]
    %v7864 = vld [vmem:[%s7851 + $0x30] sm:$0xf]
    %v7865 = vld [vmem:[%s7851 + $0x34] sm:$0xf]
    %v7866 = vld [vmem:[%s7851 + $0x38] sm:$0xf]
    %v7867 = vld [vmem:[%s7851 + $0x3c] sm:$0xf]
    %v7868 = vld [vmem:[%s7851 + $0x40] sm:$0xf]
    %v7869 = vld [vmem:[%s7851 + $0x44] sm:$0xf]
    %v7870 = vld [vmem:[%s7851 + $0x48] sm:$0xf]
    %v7871 = vld [vmem:[%s7851 + $0x4c] sm:$0xf]
    %v7872 = vld [vmem:[%s7851 + $0x50] sm:$0xf]
    %v7873 = vld [vmem:[%s7851 + $0x54] sm:$0xf]
    %v7874 = vld [vmem:[%s7851 + $0x58] sm:$0xf]
    %v7875 = vld [vmem:[%s7851 + $0x5c] sm:$0xf]
    %v7876 = vld [vmem:[%s7851 + $0x60] sm:$0xf]
    %v7877 = vld [vmem:[%s7851 + $0x64] sm:$0xf]
    %v7878 = vld [vmem:[%s7851 + $0x68] sm:$0xf]
    %v7879 = vld [vmem:[%s7851 + $0x6c] sm:$0xf]
    %v7880 = vld [vmem:[%s7851 + $0x70] sm:$0xf]
    %v7881 = vld [vmem:[%s7851 + $0x74] sm:$0xf]
    %v7882 = vld [vmem:[%s7851 + $0x78] sm:$0xf]
    %v7883 = vld [vmem:[%s7851 + $0x7c] sm:$0xf]
    %v7888 = vunpack.c.l.b16 %v7847
    %v7889 = vunpack.c.l.b16 %v7848
    %v7890 = vunpack.c.l.b16 %v7849
    %v7891 = vunpack.c.l.b16 %v7850
    %v7892 = vrot.slane %v7890, 7
    %v7893 = vsel %vm189, %v7892, %v7888
    %v7894 = vrot.slane %v7891, 7
    %v7895 = vsel %vm189, %v7894, %v7889
    %v7896 = vpack.c.b16 %v7893, %v7893
    %v7897 = vpack.c.b16 %v7895, %v7895
    %v7932 = vunpack.c.l.b16 %v7852
    %v7933 = vunpack.c.l.b16 %v7853
    %v7934 = vunpack.c.l.b16 %v7854
    %v7935 = vunpack.c.l.b16 %v7855
    %v7936 = vunpack.c.l.b16 %v7856
    %v7937 = vunpack.c.l.b16 %v7857
    %v7938 = vunpack.c.l.b16 %v7858
    %v7939 = vunpack.c.l.b16 %v7859
    %v7940 = vunpack.c.l.b16 %v7860
    %v7941 = vunpack.c.l.b16 %v7861
    %v7942 = vunpack.c.l.b16 %v7862
    %v7943 = vunpack.c.l.b16 %v7863
    %v7944 = vunpack.c.l.b16 %v7864
    %v7945 = vunpack.c.l.b16 %v7865
    %v7946 = vunpack.c.l.b16 %v7866
    %v7947 = vunpack.c.l.b16 %v7867
    %v7948 = vunpack.c.l.b16 %v7868
    %v7949 = vunpack.c.l.b16 %v7869
    %v7950 = vunpack.c.l.b16 %v7870
    %v7951 = vunpack.c.l.b16 %v7871
    %v7952 = vunpack.c.l.b16 %v7872
    %v7953 = vunpack.c.l.b16 %v7873
    %v7954 = vunpack.c.l.b16 %v7874
    %v7955 = vunpack.c.l.b16 %v7875
    %v7956 = vunpack.c.l.b16 %v7876
    %v7957 = vunpack.c.l.b16 %v7877
    %v7958 = vunpack.c.l.b16 %v7878
    %v7959 = vunpack.c.l.b16 %v7879
    %v7960 = vunpack.c.l.b16 %v7880
    %v7961 = vunpack.c.l.b16 %v7881
    %v7962 = vunpack.c.l.b16 %v7882
    %v7963 = vunpack.c.l.b16 %v7883
    %v7964 = vpack.c.b16 %v7933, %v7932
    %v7965 = vpack.c.b16 %v7935, %v7934
    %v7966 = vpack.c.b16 %v7937, %v7936
    %v7967 = vpack.c.b16 %v7939, %v7938
    %v7968 = vpack.c.b16 %v7941, %v7940
    %v7969 = vpack.c.b16 %v7943, %v7942
    %v7970 = vpack.c.b16 %v7945, %v7944
    %v7971 = vpack.c.b16 %v7947, %v7946
    %v7972 = vpack.c.b16 %v7949, %v7948
    %v7973 = vpack.c.b16 %v7951, %v7950
    %v7974 = vpack.c.b16 %v7953, %v7952
    %v7975 = vpack.c.b16 %v7955, %v7954
    %v7976 = vpack.c.b16 %v7957, %v7956
    %v7977 = vpack.c.b16 %v7959, %v7958
    %v7978 = vpack.c.b16 %v7961, %v7960
    %v7979 = vpack.c.b16 %v7963, %v7962
    %7996 = vmatprep.subr.bf16.mxu0 0
    %7997 = vmatpush1.bf16.msra.mxu0 %v7971
    %7998 = vmatprep.subr.bf16.mxu0 0
    %7999 = vmatpush1.bf16.msra.mxu0 %v7970
    %8000 = vmatprep.subr.bf16.mxu0 0
    %8001 = vmatpush1.bf16.msra.mxu0 %v7969
    %8002 = vmatprep.subr.bf16.mxu0 0
    %8003 = vmatpush1.bf16.msra.mxu0 %v7968
    %8004 = vmatprep.subr.bf16.mxu0 0
    %8005 = vmatpush1.bf16.msra.mxu0 %v7967
    %8006 = vmatprep.subr.bf16.mxu0 0
    %8007 = vmatpush1.bf16.msra.mxu0 %v7966
    %8008 = vmatprep.subr.bf16.mxu0 0
    %8009 = vmatpush1.bf16.msra.mxu0 %v7965
    %8010 = vmatprep.subr.bf16.mxu0 0
    %8011 = vmatpush1.bf16.msra.mxu0 %v7964
    %8012 = vmatprep.subr.bf16.mxu0 0
    %8013 = vmatpush2.bf16.msra.mxu0 %v7979
    %8014 = vmatprep.subr.bf16.mxu0 0
    %8015 = vmatpush2.bf16.msra.mxu0 %v7978
    %8016 = vmatprep.subr.bf16.mxu0 0
    %8017 = vmatpush2.bf16.msra.mxu0 %v7977
    %8018 = vmatprep.subr.bf16.mxu0 0
    %8019 = vmatpush2.bf16.msra.mxu0 %v7976
    %8020 = vmatprep.subr.bf16.mxu0 0
    %8021 = vmatpush2.bf16.msra.mxu0 %v7975
    %8022 = vmatprep.subr.bf16.mxu0 0
    %8023 = vmatpush2.bf16.msra.mxu0 %v7974
    %8024 = vmatprep.subr.bf16.mxu0 0
    %8025 = vmatpush2.bf16.msra.mxu0 %v7973
    %8026 = vmatprep.subr.bf16.mxu0 0
    %8027 = vmatpush2.bf16.msra.mxu0 %v7972
    %8028 = vmatprep.mubr.bf16.mxu0 %v7897
    %8029 = vmatmul.mubr.bf16.gmra.mxu0 %v7896
    %v8030 = vpop.f32.mrf.mxu0
    %v8031 = vadd.f32 0.0, %v8030
    %v8032 = vpop.f32.mrf.mxu0
    %v8033 = vpop.f32.mrf.mxu0
    %v8034 = vpop.f32.mrf.mxu0
    %8035 = vdwg.mxu0
    %v8036 = vadd.f32 %v7800, %v8031
    %s8037 = scalar_lea.vmem %s7093, 16
    %v8038 = vld [vmem:[%s8037] ss:$8 sm:$0x3]
    %s8039 = scalar_lea.vmem %s7093, 432
    %v8040 = vld [vmem:[%s8039] ss:$8 sm:$0x3]
    %s8041 = scalar_lea.vmem %s7093, 17
    %v8042 = vld [vmem:[%s8041] ss:$8 sm:$0x3]
    %s8043 = scalar_lea.vmem %s7093, 433
    %v8044 = vld [vmem:[%s8043] ss:$8 sm:$0x3]
    %v8045 = vadd.f32 %v8038, %v8042
    %v8046 = vadd.f32 %v8040, %v8044
    %s8047 = scalar_lea.vmem %s7103, 16
    %v8048 = vld [vmem:[%s8047] ss:$8 sm:$0x3]
    %s8049 = scalar_lea.vmem %s7103, 432
    %v8050 = vld [vmem:[%s8049] ss:$8 sm:$0x3]
    %v8051 = vadd.f32 %v8045, %v8048
    %v8052 = vadd.f32 %v8046, %v8050
    %s8053 = scalar_lea.vmem %s7103, 17
    %v8054 = vld [vmem:[%s8053] ss:$8 sm:$0x3]
    %s8055 = scalar_lea.vmem %s7103, 433
    %v8056 = vld [vmem:[%s8055] ss:$8 sm:$0x3]
    %v8057 = vadd.f32 %v8051, %v8054
    %v8058 = vadd.f32 %v8052, %v8056
    %v8059 = vmul.f32 %v8057, 0.25
    %v8060 = vmul.f32 %v8058, 0.25
    %v8063 = vlaneseq
    %v8064 = vshrl.u32 %v8063, 7
    %v8065 = vsub.s32 0, %v8064
    %v8066 = vrot.slane %v8059, %v8065
    %v8067 = vlaneseq
    %v8068 = vshrl.u32 %v8067, 7
    %v8069 = vsub.s32 1, %v8068
    %v8070 = vrot.slane %v8059, %v8069
    %v8071 = vlaneseq
    %v8072 = vshrl.u32 %v8071, 7
    %v8073 = vsub.s32 0, %v8072
    %v8074 = vrot.slane %v8060, %v8073
    %v8075 = vlaneseq
    %v8076 = vshrl.u32 %v8075, 7
    %v8077 = vsub.s32 1, %v8076
    %v8078 = vrot.slane %v8060, %v8077
    %v8083 = vpack.c.bf16 %v8066, %v8066
    %v8084 = vpack.c.bf16 %v8070, %v8070
    %v8085 = vpack.c.bf16 %v8074, %v8074
    %v8086 = vpack.c.bf16 %v8078, %v8078
    %s8087 = scalar_lea.vmem %s1, 4352
    %v8088 = vld [vmem:[%s8087] sm:$0xf]
    %v8089 = vld [vmem:[%s8087 + $0x4] sm:$0xf]
    %v8090 = vld [vmem:[%s8087 + $0x8] sm:$0xf]
    %v8091 = vld [vmem:[%s8087 + $0xc] sm:$0xf]
    %v8092 = vld [vmem:[%s8087 + $0x10] sm:$0xf]
    %v8093 = vld [vmem:[%s8087 + $0x14] sm:$0xf]
    %v8094 = vld [vmem:[%s8087 + $0x18] sm:$0xf]
    %v8095 = vld [vmem:[%s8087 + $0x1c] sm:$0xf]
    %v8096 = vld [vmem:[%s8087 + $0x20] sm:$0xf]
    %v8097 = vld [vmem:[%s8087 + $0x24] sm:$0xf]
    %v8098 = vld [vmem:[%s8087 + $0x28] sm:$0xf]
    %v8099 = vld [vmem:[%s8087 + $0x2c] sm:$0xf]
    %v8100 = vld [vmem:[%s8087 + $0x30] sm:$0xf]
    %v8101 = vld [vmem:[%s8087 + $0x34] sm:$0xf]
    %v8102 = vld [vmem:[%s8087 + $0x38] sm:$0xf]
    %v8103 = vld [vmem:[%s8087 + $0x3c] sm:$0xf]
    %v8104 = vld [vmem:[%s8087 + $0x40] sm:$0xf]
    %v8105 = vld [vmem:[%s8087 + $0x44] sm:$0xf]
    %v8106 = vld [vmem:[%s8087 + $0x48] sm:$0xf]
    %v8107 = vld [vmem:[%s8087 + $0x4c] sm:$0xf]
    %v8108 = vld [vmem:[%s8087 + $0x50] sm:$0xf]
    %v8109 = vld [vmem:[%s8087 + $0x54] sm:$0xf]
    %v8110 = vld [vmem:[%s8087 + $0x58] sm:$0xf]
    %v8111 = vld [vmem:[%s8087 + $0x5c] sm:$0xf]
    %v8112 = vld [vmem:[%s8087 + $0x60] sm:$0xf]
    %v8113 = vld [vmem:[%s8087 + $0x64] sm:$0xf]
    %v8114 = vld [vmem:[%s8087 + $0x68] sm:$0xf]
    %v8115 = vld [vmem:[%s8087 + $0x6c] sm:$0xf]
    %v8116 = vld [vmem:[%s8087 + $0x70] sm:$0xf]
    %v8117 = vld [vmem:[%s8087 + $0x74] sm:$0xf]
    %v8118 = vld [vmem:[%s8087 + $0x78] sm:$0xf]
    %v8119 = vld [vmem:[%s8087 + $0x7c] sm:$0xf]
    %v8124 = vunpack.c.l.b16 %v8083
    %v8125 = vunpack.c.l.b16 %v8084
    %v8126 = vunpack.c.l.b16 %v8085
    %v8127 = vunpack.c.l.b16 %v8086
    %v8128 = vrot.slane %v8126, 7
    %v8129 = vsel %vm189, %v8128, %v8124
    %v8130 = vrot.slane %v8127, 7
    %v8131 = vsel %vm189, %v8130, %v8125
    %v8132 = vpack.c.b16 %v8129, %v8129
    %v8133 = vpack.c.b16 %v8131, %v8131
    %v8168 = vunpack.c.l.b16 %v8088
    %v8169 = vunpack.c.l.b16 %v8089
    %v8170 = vunpack.c.l.b16 %v8090
    %v8171 = vunpack.c.l.b16 %v8091
    %v8172 = vunpack.c.l.b16 %v8092
    %v8173 = vunpack.c.l.b16 %v8093
    %v8174 = vunpack.c.l.b16 %v8094
    %v8175 = vunpack.c.l.b16 %v8095
    %v8176 = vunpack.c.l.b16 %v8096
    %v8177 = vunpack.c.l.b16 %v8097
    %v8178 = vunpack.c.l.b16 %v8098
    %v8179 = vunpack.c.l.b16 %v8099
    %v8180 = vunpack.c.l.b16 %v8100
    %v8181 = vunpack.c.l.b16 %v8101
    %v8182 = vunpack.c.l.b16 %v8102
    %v8183 = vunpack.c.l.b16 %v8103
    %v8184 = vunpack.c.l.b16 %v8104
    %v8185 = vunpack.c.l.b16 %v8105
    %v8186 = vunpack.c.l.b16 %v8106
    %v8187 = vunpack.c.l.b16 %v8107
    %v8188 = vunpack.c.l.b16 %v8108
    %v8189 = vunpack.c.l.b16 %v8109
    %v8190 = vunpack.c.l.b16 %v8110
    %v8191 = vunpack.c.l.b16 %v8111
    %v8192 = vunpack.c.l.b16 %v8112
    %v8193 = vunpack.c.l.b16 %v8113
    %v8194 = vunpack.c.l.b16 %v8114
    %v8195 = vunpack.c.l.b16 %v8115
    %v8196 = vunpack.c.l.b16 %v8116
    %v8197 = vunpack.c.l.b16 %v8117
    %v8198 = vunpack.c.l.b16 %v8118
    %v8199 = vunpack.c.l.b16 %v8119
    %v8200 = vpack.c.b16 %v8169, %v8168
    %v8201 = vpack.c.b16 %v8171, %v8170
    %v8202 = vpack.c.b16 %v8173, %v8172
    %v8203 = vpack.c.b16 %v8175, %v8174
    %v8204 = vpack.c.b16 %v8177, %v8176
    %v8205 = vpack.c.b16 %v8179, %v8178
    %v8206 = vpack.c.b16 %v8181, %v8180
    %v8207 = vpack.c.b16 %v8183, %v8182
    %v8208 = vpack.c.b16 %v8185, %v8184
    %v8209 = vpack.c.b16 %v8187, %v8186
    %v8210 = vpack.c.b16 %v8189, %v8188
    %v8211 = vpack.c.b16 %v8191, %v8190
    %v8212 = vpack.c.b16 %v8193, %v8192
    %v8213 = vpack.c.b16 %v8195, %v8194
    %v8214 = vpack.c.b16 %v8197, %v8196
    %v8215 = vpack.c.b16 %v8199, %v8198
    %8232 = vmatprep.subr.bf16.mxu0 0
    %8233 = vmatpush1.bf16.msra.mxu0 %v8207
    %8234 = vmatprep.subr.bf16.mxu0 0
    %8235 = vmatpush1.bf16.msra.mxu0 %v8206
    %8236 = vmatprep.subr.bf16.mxu0 0
    %8237 = vmatpush1.bf16.msra.mxu0 %v8205
    %8238 = vmatprep.subr.bf16.mxu0 0
    %8239 = vmatpush1.bf16.msra.mxu0 %v8204
    %8240 = vmatprep.subr.bf16.mxu0 0
    %8241 = vmatpush1.bf16.msra.mxu0 %v8203
    %8242 = vmatprep.subr.bf16.mxu0 0
    %8243 = vmatpush1.bf16.msra.mxu0 %v8202
    %8244 = vmatprep.subr.bf16.mxu0 0
    %8245 = vmatpush1.bf16.msra.mxu0 %v8201
    %8246 = vmatprep.subr.bf16.mxu0 0
    %8247 = vmatpush1.bf16.msra.mxu0 %v8200
    %8248 = vmatprep.subr.bf16.mxu0 0
    %8249 = vmatpush2.bf16.msra.mxu0 %v8215
    %8250 = vmatprep.subr.bf16.mxu0 0
    %8251 = vmatpush2.bf16.msra.mxu0 %v8214
    %8252 = vmatprep.subr.bf16.mxu0 0
    %8253 = vmatpush2.bf16.msra.mxu0 %v8213
    %8254 = vmatprep.subr.bf16.mxu0 0
    %8255 = vmatpush2.bf16.msra.mxu0 %v8212
    %8256 = vmatprep.subr.bf16.mxu0 0
    %8257 = vmatpush2.bf16.msra.mxu0 %v8211
    %8258 = vmatprep.subr.bf16.mxu0 0
    %8259 = vmatpush2.bf16.msra.mxu0 %v8210
    %8260 = vmatprep.subr.bf16.mxu0 0
    %8261 = vmatpush2.bf16.msra.mxu0 %v8209
    %8262 = vmatprep.subr.bf16.mxu0 0
    %8263 = vmatpush2.bf16.msra.mxu0 %v8208
    %8264 = vmatprep.mubr.bf16.mxu0 %v8133
    %8265 = vmatmul.mubr.bf16.gmra.mxu0 %v8132
    %v8266 = vpop.f32.mrf.mxu0
    %v8267 = vadd.f32 0.0, %v8266
    %v8268 = vpop.f32.mrf.mxu0
    %v8269 = vpop.f32.mrf.mxu0
    %v8270 = vpop.f32.mrf.mxu0
    %8271 = vdwg.mxu0
    %v8272 = vadd.f32 %v8036, %v8267
    %s8273 = scalar_lea.vmem %s7093, 18
    %v8274 = vld [vmem:[%s8273] ss:$8 sm:$0x3]
    %s8275 = scalar_lea.vmem %s7093, 434
    %v8276 = vld [vmem:[%s8275] ss:$8 sm:$0x3]
    %s8277 = scalar_lea.vmem %s7093, 19
    %v8278 = vld [vmem:[%s8277] ss:$8 sm:$0x3]
    %s8279 = scalar_lea.vmem %s7093, 435
    %v8280 = vld [vmem:[%s8279] ss:$8 sm:$0x3]
    %v8281 = vadd.f32 %v8274, %v8278
    %v8282 = vadd.f32 %v8276, %v8280
    %s8283 = scalar_lea.vmem %s7103, 18
    %v8284 = vld [vmem:[%s8283] ss:$8 sm:$0x3]
    %s8285 = scalar_lea.vmem %s7103, 434
    %v8286 = vld [vmem:[%s8285] ss:$8 sm:$0x3]
    %v8287 = vadd.f32 %v8281, %v8284
    %v8288 = vadd.f32 %v8282, %v8286
    %s8289 = scalar_lea.vmem %s7103, 19
    %v8290 = vld [vmem:[%s8289] ss:$8 sm:$0x3]
    %s8291 = scalar_lea.vmem %s7103, 435
    %v8292 = vld [vmem:[%s8291] ss:$8 sm:$0x3]
    %v8293 = vadd.f32 %v8287, %v8290
    %v8294 = vadd.f32 %v8288, %v8292
    %v8295 = vmul.f32 %v8293, 0.25
    %v8296 = vmul.f32 %v8294, 0.25
    %v8299 = vlaneseq
    %v8300 = vshrl.u32 %v8299, 7
    %v8301 = vsub.s32 0, %v8300
    %v8302 = vrot.slane %v8295, %v8301
    %v8303 = vlaneseq
    %v8304 = vshrl.u32 %v8303, 7
    %v8305 = vsub.s32 1, %v8304
    %v8306 = vrot.slane %v8295, %v8305
    %v8307 = vlaneseq
    %v8308 = vshrl.u32 %v8307, 7
    %v8309 = vsub.s32 0, %v8308
    %v8310 = vrot.slane %v8296, %v8309
    %v8311 = vlaneseq
    %v8312 = vshrl.u32 %v8311, 7
    %v8313 = vsub.s32 1, %v8312
    %v8314 = vrot.slane %v8296, %v8313
    %v8319 = vpack.c.bf16 %v8302, %v8302
    %v8320 = vpack.c.bf16 %v8306, %v8306
    %v8321 = vpack.c.bf16 %v8310, %v8310
    %v8322 = vpack.c.bf16 %v8314, %v8314
    %s8323 = scalar_lea.vmem %s1, 4480
    %v8324 = vld [vmem:[%s8323] sm:$0xf]
    %v8325 = vld [vmem:[%s8323 + $0x4] sm:$0xf]
    %v8326 = vld [vmem:[%s8323 + $0x8] sm:$0xf]
    %v8327 = vld [vmem:[%s8323 + $0xc] sm:$0xf]
    %v8328 = vld [vmem:[%s8323 + $0x10] sm:$0xf]
    %v8329 = vld [vmem:[%s8323 + $0x14] sm:$0xf]
    %v8330 = vld [vmem:[%s8323 + $0x18] sm:$0xf]
    %v8331 = vld [vmem:[%s8323 + $0x1c] sm:$0xf]
    %v8332 = vld [vmem:[%s8323 + $0x20] sm:$0xf]
    %v8333 = vld [vmem:[%s8323 + $0x24] sm:$0xf]
    %v8334 = vld [vmem:[%s8323 + $0x28] sm:$0xf]
    %v8335 = vld [vmem:[%s8323 + $0x2c] sm:$0xf]
    %v8336 = vld [vmem:[%s8323 + $0x30] sm:$0xf]
    %v8337 = vld [vmem:[%s8323 + $0x34] sm:$0xf]
    %v8338 = vld [vmem:[%s8323 + $0x38] sm:$0xf]
    %v8339 = vld [vmem:[%s8323 + $0x3c] sm:$0xf]
    %v8340 = vld [vmem:[%s8323 + $0x40] sm:$0xf]
    %v8341 = vld [vmem:[%s8323 + $0x44] sm:$0xf]
    %v8342 = vld [vmem:[%s8323 + $0x48] sm:$0xf]
    %v8343 = vld [vmem:[%s8323 + $0x4c] sm:$0xf]
    %v8344 = vld [vmem:[%s8323 + $0x50] sm:$0xf]
    %v8345 = vld [vmem:[%s8323 + $0x54] sm:$0xf]
    %v8346 = vld [vmem:[%s8323 + $0x58] sm:$0xf]
    %v8347 = vld [vmem:[%s8323 + $0x5c] sm:$0xf]
    %v8348 = vld [vmem:[%s8323 + $0x60] sm:$0xf]
    %v8349 = vld [vmem:[%s8323 + $0x64] sm:$0xf]
    %v8350 = vld [vmem:[%s8323 + $0x68] sm:$0xf]
    %v8351 = vld [vmem:[%s8323 + $0x6c] sm:$0xf]
    %v8352 = vld [vmem:[%s8323 + $0x70] sm:$0xf]
    %v8353 = vld [vmem:[%s8323 + $0x74] sm:$0xf]
    %v8354 = vld [vmem:[%s8323 + $0x78] sm:$0xf]
    %v8355 = vld [vmem:[%s8323 + $0x7c] sm:$0xf]
    %v8360 = vunpack.c.l.b16 %v8319
    %v8361 = vunpack.c.l.b16 %v8320
    %v8362 = vunpack.c.l.b16 %v8321
    %v8363 = vunpack.c.l.b16 %v8322
    %v8364 = vrot.slane %v8362, 7
    %v8365 = vsel %vm189, %v8364, %v8360
    %v8366 = vrot.slane %v8363, 7
    %v8367 = vsel %vm189, %v8366, %v8361
    %v8368 = vpack.c.b16 %v8365, %v8365
    %v8369 = vpack.c.b16 %v8367, %v8367
    %v8404 = vunpack.c.l.b16 %v8324
    %v8405 = vunpack.c.l.b16 %v8325
    %v8406 = vunpack.c.l.b16 %v8326
    %v8407 = vunpack.c.l.b16 %v8327
    %v8408 = vunpack.c.l.b16 %v8328
    %v8409 = vunpack.c.l.b16 %v8329
    %v8410 = vunpack.c.l.b16 %v8330
    %v8411 = vunpack.c.l.b16 %v8331
    %v8412 = vunpack.c.l.b16 %v8332
    %v8413 = vunpack.c.l.b16 %v8333
    %v8414 = vunpack.c.l.b16 %v8334
    %v8415 = vunpack.c.l.b16 %v8335
    %v8416 = vunpack.c.l.b16 %v8336
    %v8417 = vunpack.c.l.b16 %v8337
    %v8418 = vunpack.c.l.b16 %v8338
    %v8419 = vunpack.c.l.b16 %v8339
    %v8420 = vunpack.c.l.b16 %v8340
    %v8421 = vunpack.c.l.b16 %v8341
    %v8422 = vunpack.c.l.b16 %v8342
    %v8423 = vunpack.c.l.b16 %v8343
    %v8424 = vunpack.c.l.b16 %v8344
    %v8425 = vunpack.c.l.b16 %v8345
    %v8426 = vunpack.c.l.b16 %v8346
    %v8427 = vunpack.c.l.b16 %v8347
    %v8428 = vunpack.c.l.b16 %v8348
    %v8429 = vunpack.c.l.b16 %v8349
    %v8430 = vunpack.c.l.b16 %v8350
    %v8431 = vunpack.c.l.b16 %v8351
    %v8432 = vunpack.c.l.b16 %v8352
    %v8433 = vunpack.c.l.b16 %v8353
    %v8434 = vunpack.c.l.b16 %v8354
    %v8435 = vunpack.c.l.b16 %v8355
    %v8436 = vpack.c.b16 %v8405, %v8404
    %v8437 = vpack.c.b16 %v8407, %v8406
    %v8438 = vpack.c.b16 %v8409, %v8408
    %v8439 = vpack.c.b16 %v8411, %v8410
    %v8440 = vpack.c.b16 %v8413, %v8412
    %v8441 = vpack.c.b16 %v8415, %v8414
    %v8442 = vpack.c.b16 %v8417, %v8416
    %v8443 = vpack.c.b16 %v8419, %v8418
    %v8444 = vpack.c.b16 %v8421, %v8420
    %v8445 = vpack.c.b16 %v8423, %v8422
    %v8446 = vpack.c.b16 %v8425, %v8424
    %v8447 = vpack.c.b16 %v8427, %v8426
    %v8448 = vpack.c.b16 %v8429, %v8428
    %v8449 = vpack.c.b16 %v8431, %v8430
    %v8450 = vpack.c.b16 %v8433, %v8432
    %v8451 = vpack.c.b16 %v8435, %v8434
    %8468 = vmatprep.subr.bf16.mxu0 0
    %8469 = vmatpush1.bf16.msra.mxu0 %v8443
    %8470 = vmatprep.subr.bf16.mxu0 0
    %8471 = vmatpush1.bf16.msra.mxu0 %v8442
    %8472 = vmatprep.subr.bf16.mxu0 0
    %8473 = vmatpush1.bf16.msra.mxu0 %v8441
    %8474 = vmatprep.subr.bf16.mxu0 0
    %8475 = vmatpush1.bf16.msra.mxu0 %v8440
    %8476 = vmatprep.subr.bf16.mxu0 0
    %8477 = vmatpush1.bf16.msra.mxu0 %v8439
    %8478 = vmatprep.subr.bf16.mxu0 0
    %8479 = vmatpush1.bf16.msra.mxu0 %v8438
    %8480 = vmatprep.subr.bf16.mxu0 0
    %8481 = vmatpush1.bf16.msra.mxu0 %v8437
    %8482 = vmatprep.subr.bf16.mxu0 0
    %8483 = vmatpush1.bf16.msra.mxu0 %v8436
    %8484 = vmatprep.subr.bf16.mxu0 0
    %8485 = vmatpush2.bf16.msra.mxu0 %v8451
    %8486 = vmatprep.subr.bf16.mxu0 0
    %8487 = vmatpush2.bf16.msra.mxu0 %v8450
    %8488 = vmatprep.subr.bf16.mxu0 0
    %8489 = vmatpush2.bf16.msra.mxu0 %v8449
    %8490 = vmatprep.subr.bf16.mxu0 0
    %8491 = vmatpush2.bf16.msra.mxu0 %v8448
    %8492 = vmatprep.subr.bf16.mxu0 0
    %8493 = vmatpush2.bf16.msra.mxu0 %v8447
    %8494 = vmatprep.subr.bf16.mxu0 0
    %8495 = vmatpush2.bf16.msra.mxu0 %v8446
    %8496 = vmatprep.subr.bf16.mxu0 0
    %8497 = vmatpush2.bf16.msra.mxu0 %v8445
    %8498 = vmatprep.subr.bf16.mxu0 0
    %8499 = vmatpush2.bf16.msra.mxu0 %v8444
    %8500 = vmatprep.mubr.bf16.mxu0 %v8369
    %8501 = vmatmul.mubr.bf16.gmra.mxu0 %v8368
    %v8502 = vpop.f32.mrf.mxu0
    %v8503 = vadd.f32 0.0, %v8502
    %v8504 = vpop.f32.mrf.mxu0
    %v8505 = vpop.f32.mrf.mxu0
    %v8506 = vpop.f32.mrf.mxu0
    %8507 = vdwg.mxu0
    %v8508 = vadd.f32 %v8272, %v8503
    %v8509 = vld [vmem:[%s2] sm:$0x1]
    %v8511 = vlaneseq
    %v8512 = vshrl.u32 %v8511, 7
    %v8513 = vsub.s32 0, %v8512
    %v8514 = vrot.slane %v8509, %v8513
    %v8516 = vadd.f32 %v8508, %v8514
    %vm8517 = vcmask 74752
    %8518 = vst.msk [vmem:[#allocation2] sm:$0x3] %vm8517, %v8516
    // Predicated region
    $region14: #{reglog_forward.1} parent=1 // pred_check
      _
    $region15: #{reglog_forward.1} parent=1 // pred_check_branch
      %8520 = sbr.rel (0) target = $region17
    $region16: #{reglog_forward.1} parent=1 // pred_region
      %s8522 = ssub.s32 32, 32
      %8523 = vsyncadd [#allocation3], %s8522
      %s8525 = sshll.u32 [#allocation2], 4
      %s8526 = int_to_ptr.vmem [resolvable:$true] %s8525
      %8528 = dma.vmem_to_hbm [thread:$0]  %s8526, 32, %s3, [#allocation3]
    $region17: #{reglog_forward.1} parent=1 // pred_fallthru
      _
    // Predicated region
    $region18: #{reglog_forward.1} parent=1 // pred_check
      _
    $region19: #{reglog_forward.1} parent=1 // pred_check_branch
      %8530 = sbr.rel (0) target = $region21
    $region20: #{reglog_forward.1} parent=1 // pred_region
      %8531 = dma.done [#allocation3], 32
    $region21: #{reglog_forward.1} parent=1 // pred_fallthru
      _
    %8532 = vsyncpa [#allocation3], 1

</llo_original>
